<compile_context>
chip_gen: v5e
topology: v5e:2x2
jax: 0.10.0
libtpu: 0.0.40
codegen_flags: <defaults>
</compile_context>

<pallas_src>
import functools

import jax
import jax.numpy as jnp
import numpy as np
from jax import lax
from jax.experimental import pallas as pl
from jax.experimental.pallas import tpu as pltpu

INPUT_DIM = 16
LAYER_DIMS = (128, 64)      # gru_layer_dims
OUTPUT_DIM = 2
LN_EPS = 1e-5


# ---------------------------------------------------------------------------
# The Pallas kernel: both directions, both layers and the FC head in one call.
# Everything is VMEM-resident (grid-less pallas_call); the serial time
# recurrence is one fused, fully-unrolled fori_loop with 2 matmuls per step.
# ---------------------------------------------------------------------------
def _gru_birnn_kernel(
        x_ref,        # (T*Bp, 2*D)  bf16   rows: [x_t | x_{T-1-t}]
        w0_ih_ref,    # (2*D, 768)   bf16   block-diag over direction, gate-interleaved cols
        w0_hh_ref,    # (256, 768)   bf16   block-diag hidden->gates, layer 0
        w1_ref,       # (384, 768)   bf16   rows 0-255: ih (from h0_cat), 256-383: hh (h1_cat)
        head_w_ref,   # (256, 128)   bf16   rows 0-127: fc1 (padded), 128-255: fc2 (padded)
        consts_ref,   # (9, 768)     f32    folded biases / tiled LN params / head biases
        out_ref,      # (Bp, 128)    f32    real output in columns [:OUTPUT_DIM]
        gi0_ref,      # scratch VMEM (T*Bp, 768) f32
        *, seq_len, batch):
    T, B = seq_len, batch
    H0, H1 = LAYER_DIMS
    W0, W1 = 2 * H0, 2 * H1          # direction-concatenated state widths: 256, 128
    GW1 = 3 * W1                     # layer-1 gate width: 384

    # ---- Hoisted, non-recurrent layer-0 input projections (both directions, one MXU call)
    gi0_ref[...] = (
        jnp.dot(x_ref[...], w0_ih_ref[...], preferred_element_type=jnp.float32)
        + consts_ref[0:1, :])

    # ---- Loop-invariant constants, pre-broadcast ONCE to full (B, width) vregs
    b1_full = jnp.broadcast_to(consts_ref[1:2, :2 * GW1], (B, 2 * GW1))   # layer-1 [gi|gh] bias
    bhh0n = jnp.broadcast_to(consts_ref[2:3, :W0], (B, W0))               # layer-0 gh_n bias
    g0t = jnp.broadcast_to(consts_ref[3:4, :W0], (B, W0))                 # LN0 gamma (tiled f|b)
    be0t = jnp.broadcast_to(consts_ref[4:5, :W0], (B, W0))                # LN0 beta
    g1t = jnp.broadcast_to(consts_ref[5:6, :W1], (B, W1))                 # LN1 gamma
    be1t = jnp.broadcast_to(consts_ref[6:7, :W1], (B, W1))                # LN1 beta
    hb1 = jnp.broadcast_to(consts_ref[7:8, :W1], (B, W1))                 # fc1 bias (padded)
    hb2 = jnp.broadcast_to(consts_ref[8:9, :W1], (B, W1))                 # fc2 bias (padded)

    def ln_pair(v, hid, gamma_t, beta_t):
        """LayerNorm applied independently to each direction half of v (B, 2*hid)."""
        def norm(u):
            mu = jnp.mean(u, axis=-1, keepdims=True)
            var = jnp.mean(u * u, axis=-1, keepdims=True) - mu * mu
            return (u - mu) * lax.rsqrt(var + LN_EPS)
        vn = jnp.concatenate([norm(v[:, :hid]), norm(v[:, hid:])], axis=-1)
        return vn * gamma_t + beta_t

    def step(t, carry):
        h0, h1 = carry                              # (B, 256) f32, (B, 128) f32: [fwd | bwd]
        row = pl.multiple_of(t * B, B)
        gi0 = gi0_ref[pl.ds(row, B), :]             # (B, 768): gate-interleaved, both dirs

        # ---- layer 0: fused fwd+bwd hidden projection (one matmul)
        gh0 = jnp.dot(h0.astype(jnp.bfloat16), w0_hh_ref[...],
                      preferred_element_type=jnp.float32)                 # (B, 768)
        rz0 = jax.nn.sigmoid(gi0[:, :2 * W0] + gh0[:, :2 * W0])           # [r_f r_b z_f z_b]
        n0 = jnp.tanh(gi0[:, 2 * W0:] + rz0[:, :W0] * (gh0[:, 2 * W0:] + bhh0n))
        h0 = ln_pair((1.0 - rz0[:, W0:]) * n0 + rz0[:, W0:] * h0, H0, g0t, be0t)

        # ---- layer 1: input + hidden projections fused in ONE matmul -> [gi1 | gh1]
        lhs1 = jnp.concatenate(
            [h0.astype(jnp.bfloat16), h1.astype(jnp.bfloat16)], axis=-1)  # (B, 384)
        g1 = jnp.dot(lhs1, w1_ref[...], preferred_element_type=jnp.float32) + b1_full
        gi1 = g1[:, :GW1]
        gh1 = g1[:, GW1:]
        rz1 = jax.nn.sigmoid(gi1[:, :2 * W1] + gh1[:, :2 * W1])
        n1 = jnp.tanh(gi1[:, 2 * W1:] + rz1[:, :W1] * gh1[:, 2 * W1:])    # gh1_n has b_hh_n folded
        h1 = ln_pair((1.0 - rz1[:, W1:]) * n1 + rz1[:, W1:] * h1, H1, g1t, be1t)
        return (h0, h1)

    init = (jnp.zeros((B, W0), jnp.float32), jnp.zeros((B, W1), jnp.float32))
    # NOTE(review #7): body is light (2 dots / step); full unroll keeps LLO visibility.
    _, h1 = lax.fori_loop(0, T, step, init, unroll=True)

    # ---- Head (dropout = identity in eval); h1 layout [fwd(64)|bwd(64)] matches fc1 inputs.
    hidden = jnp.maximum(
        jnp.dot(h1.astype(jnp.bfloat16), head_w_ref[0:W1, :],
                preferred_element_type=jnp.float32) + hb1, 0.0)
    out = jnp.dot(hidden.astype(jnp.bfloat16), head_w_ref[W1:2 * W1, :],
                  preferred_element_type=jnp.float32) + hb2
    out_ref[...] = out.astype(out_ref.dtype)


# ---------------------------------------------------------------------------
# Parameter construction (deterministic, PyTorch-style shapes)
# ---------------------------------------------------------------------------
def init_params(key):
    dims = (INPUT_DIM,) + LAYER_DIMS
    keys = iter(jax.random.split(key, 64))
    params = {}
    for tag in ('f', 'b'):
        for i in range(len(LAYER_DIMS)):
            in_d, hid = dims[i], dims[i + 1]
            k = 1.0 / np.sqrt(hid)
            params[f'w_ih_{tag}{i}'] = jax.random.uniform(
                next(keys), (3 * hid, in_d), jnp.float32, -k, k)
            params[f'w_hh_{tag}{i}'] = jax.random.uniform(
                next(keys), (3 * hid, hid), jnp.float32, -k, k)
            params[f'b_ih_{tag}{i}'] = jax.random.uniform(
                next(keys), (3 * hid,), jnp.float32, -k, k)
            params[f'b_hh_{tag}{i}'] = jax.random.uniform(
                next(keys), (3 * hid,), jnp.float32, -k, k)
    for i in range(len(LAYER_DIMS)):
        params[f'ln_g_{i}'] = jnp.ones((LAYER_DIMS[i],), jnp.float32)
        params[f'ln_b_{i}'] = jnp.zeros((LAYER_DIMS[i],), jnp.float32)
    h_last = LAYER_DIMS[-1]
    k1 = 1.0 / np.sqrt(2 * h_last)
    params['fc1_w'] = jax.random.uniform(next(keys), (h_last, 2 * h_last),
                                         jnp.float32, -k1, k1)
    params['fc1_b'] = jax.random.uniform(next(keys), (h_last,), jnp.float32, -k1, k1)
    k2 = 1.0 / np.sqrt(h_last)
    params['fc2_w'] = jax.random.uniform(next(keys), (OUTPUT_DIM, h_last),
                                         jnp.float32, -k2, k2)
    params['fc2_b'] = jax.random.uniform(next(keys), (OUTPUT_DIM,), jnp.float32, -k2, k2)
    return params


# ---------------------------------------------------------------------------
# Wrapper: layout plumbing (block-diagonal, gate-interleaved bf16 weights, one
# packed f32 constants table, time-major + time-reversed x, padded batch).
# ---------------------------------------------------------------------------
@jax.jit
def gru_birnn_forward(x, params):
    B, T, D = x.shape
    H0, H1 = LAYER_DIMS
    W0, W1 = 2 * H0, 2 * H1           # 256, 128
    GW0, GW1 = 3 * W0, 3 * W1         # 768, 384
    Bp = max(8, ((B + 7) // 8) * 8)   # fill a sublane group
    bf16 = jnp.bfloat16

    def t32(name):
        return jnp.asarray(params[name], jnp.float32)

    # Gate-interleaved block-diagonal packing: columns [r_f r_b | z_f z_b | n_f n_b].
    def gate_blockdiag(wf, wb, hid):
        wf_t, wb_t = jnp.transpose(wf), jnp.transpose(wb)     # (in, 3*hid), PyTorch r|z|n
        nf, nb = wf_t.shape[0], wb_t.shape[0]
        cols = []
        for g in range(3):
            cols.append(jnp.concatenate(
                [wf_t[:, g * hid:(g + 1) * hid], jnp.zeros((nb, hid), jnp.float32)], axis=0))
            cols.append(jnp.concatenate(
                [jnp.zeros((nf, hid), jnp.float32), wb_t[:, g * hid:(g + 1) * hid]], axis=0))
        return jnp.concatenate(cols, axis=1)

    def interleave_gates(vf, vb, hid):
        parts = []
        for g in range(3):
            parts += [vf[g * hid:(g + 1) * hid], vb[g * hid:(g + 1) * hid]]
        return jnp.concatenate(parts)

    def gi_bias(tag, i, hid):
        # r/z: b_ih + b_hh folded into the input-projection bias; n: b_ih only.
        b_ih, b_hh = t32(f'b_ih_{tag}{i}'), t32(f'b_hh_{tag}{i}')
        return jnp.concatenate([b_ih[:2 * hid] + b_hh[:2 * hid], b_ih[2 * hid:]])

    # ---- bf16 weight buffers (5)
    w0_ih_bd = gate_blockdiag(t32('w_ih_f0'), t32('w_ih_b0'), H0).astype(bf16)   # (2D, 768)
    w0_hh_bd = gate_blockdiag(t32('w_hh_f0'), t32('w_hh_b0'), H0).astype(bf16)   # (256, 768)
    w1_ih_bd = gate_blockdiag(t32('w_ih_f1'), t32('w_ih_b1'), H1)                # (256, 384)
    w1_hh_bd = gate_blockdiag(t32('w_hh_f1'), t32('w_hh_b1'), H1)                # (128, 384)
    w1_comb = jnp.concatenate(
        [jnp.concatenate([w1_ih_bd, jnp.zeros((W0, GW1), jnp.float32)], axis=1),
         jnp.concatenate([jnp.zeros((W1, GW1), jnp.float32), w1_hh_bd], axis=1)],
        axis=0).astype(bf16)                                                     # (384, 768)
    fc1_t = jnp.transpose(t32('fc1_w'))                                          # (128, 64)
    fc2_t = jnp.transpose(t32('fc2_w'))                                          # (64, 2)
    head_w = jnp.concatenate(
        [jnp.pad(fc1_t, ((0, 0), (0, W1 - H1))),
         jnp.pad(fc2_t, ((0, W1 - H1), (0, W1 - OUTPUT_DIM)))],
        axis=0).astype(bf16)                                                     # (256, 128)

    # ---- single f32 constants table (9, 768)
    def pad_row(v):
        v = jnp.asarray(v, jnp.float32).reshape(-1)
        return jnp.pad(v, (0, GW0 - v.shape[0]))

    consts = jnp.stack([
        pad_row(interleave_gates(gi_bias('f', 0, H0), gi_bias('b', 0, H0), H0)),       # 0
        pad_row(jnp.concatenate([                                                      # 1
            interleave_gates(gi_bias('f', 1, H1), gi_bias('b', 1, H1), H1),
            jnp.zeros((2 * W1,), jnp.float32),
            t32('b_hh_f1')[2 * H1:], t32('b_hh_b1')[2 * H1:]])),
        pad_row(jnp.concatenate([t32('b_hh_f0')[2 * H0:], t32('b_hh_b0')[2 * H0:]])),  # 2
        pad_row(jnp.tile(t32('ln_g_0'), 2)),                                           # 3
        pad_row(jnp.tile(t32('ln_b_0'), 2)),                                           # 4
        pad_row(jnp.tile(t32('ln_g_1'), 2)),                                           # 5
        pad_row(jnp.tile(t32('ln_b_1'), 2)),                                           # 6
        pad_row(jnp.pad(t32('fc1_b'), (0, W1 - H1))),                                  # 7
        pad_row(jnp.pad(t32('fc2_b'), (0, W1 - OUTPUT_DIM))),                          # 8
    ], axis=0)

    # ---- pack x time-major alongside its time-reversal:  (T*Bp, 2*D)
    x_pad = jnp.pad(x, ((0, Bp - B), (0, 0), (0, 0)))
    x_tm = jnp.transpose(x_pad, (1, 0, 2))                       # (T, Bp, D)
    x_flat = jnp.concatenate([x_tm, x_tm[::-1]], axis=-1).reshape(T * Bp, 2 * D).astype(bf16)

    args = [x_flat, w0_ih_bd, w0_hh_bd, w1_comb, head_w, consts]   # 6 inputs total
    vmem = pl.BlockSpec(memory_space=pltpu.MemorySpace.VMEM)
    out = pl.pallas_call(
        functools.partial(_gru_birnn_kernel, seq_len=T, batch=Bp),
        out_shape=jax.ShapeDtypeStruct((Bp, W1), jnp.float32),
        in_specs=[vmem] * len(args),
        out_specs=vmem,
        scratch_shapes=[pltpu.VMEM((T * Bp, GW0), jnp.float32)],
    )(*args)
    return out[:B, :OUTPUT_DIM]


# ---------------------------------------------------------------------------
# Pure-JAX float32 reference replicating the PyTorch forward (for verification)
# ---------------------------------------------------------------------------
def reference_forward(x, params):
    B, T, D = x.shape

    def cell(xt, h, wih, whh, bih, bhh):
        hid = h.shape[-1]
        gi = xt @ wih.T + bih
        gh = h @ whh.T + bhh
        r = jax.nn.sigmoid(gi[:, :hid] + gh[:, :hid])
        z = jax.nn.sigmoid(gi[:, hid:2 * hid] + gh[:, hid:2 * hid])
        n = jnp.tanh(gi[:, 2 * hid:] + r * gh[:, 2 * hid:])
        return (1.0 - z) * n + z * h

    def ln(v, g, b):
        mu = v.mean(-1, keepdims=True)
        var = ((v - mu) ** 2).mean(-1, keepdims=True)
        return (v - mu) / jnp.sqrt(var + LN_EPS) * g + b

    hf = [jnp.zeros((B, h), jnp.float32) for h in LAYER_DIMS]
    hb = [jnp.zeros((B, h), jnp.float32) for h in LAYER_DIMS]
    for t in range(T):
        inp = x[:, t, :]
        for i in range(len(LAYER_DIMS)):
            hf[i] = ln(cell(inp, hf[i],
                            params[f'w_ih_f{i}'], params[f'w_hh_f{i}'],
                            params[f'b_ih_f{i}'], params[f'b_hh_f{i}']),
                       params[f'ln_g_{i}'], params[f'ln_b_{i}'])
            inp = hf[i]
    for t in range(T - 1, -1, -1):
        inp = x[:, t, :]
        for i in range(len(LAYER_DIMS)):
            hb[i] = ln(cell(inp, hb[i],
                            params[f'w_ih_b{i}'], params[f'w_hh_b{i}'],
                            params[f'b_ih_b{i}'], params[f'b_hh_b{i}']),
                       params[f'ln_g_{i}'], params[f'ln_b_{i}'])
            inp = hb[i]
    feat = jnp.concatenate([hf[-1], hb[-1]], axis=-1)
    hidden = jnp.maximum(feat @ params['fc1_w'].T + params['fc1_b'], 0.0)
    return hidden @ params['fc2_w'].T + params['fc2_b']


if __name__ == "__main__":
    key = jax.random.PRNGKey(0)
    kx, kp = jax.random.split(key)
    B, T = 4, 8
    x = jax.random.normal(kx, (B, T, INPUT_DIM), jnp.float32)
    params = init_params(kp)

    out = gru_birnn_forward(x, params)
    out = jax.block_until_ready(out)

    ref = reference_forward(x, params)
    # Tolerance accounts for bf16 MXU operands (f32 accumulation, f32 gate/LN/state math).
    np.testing.assert_allclose(np.asarray(out), np.asarray(ref), atol=5e-2, rtol=5e-2)
    print("KERNEL_OK")
</pallas_src>

<mosaic_0001>
module attributes {stable_mosaic.version = 11 : i64} {
  func.func @_gru_birnn_kernel(%arg0: memref<64x32xbf16, #tpu.memory_space<vmem>>, %arg1: memref<32x768xbf16, #tpu.memory_space<vmem>>, %arg2: memref<256x768xbf16, #tpu.memory_space<vmem>>, %arg3: memref<384x768xbf16, #tpu.memory_space<vmem>>, %arg4: memref<256x128xbf16, #tpu.memory_space<vmem>>, %arg5: memref<9x768xf32, #tpu.memory_space<vmem>>, %arg6: memref<8x128xf32, #tpu.memory_space<vmem>>, %arg7: memref<64x768xf32, #tpu.memory_space<vmem>>) attributes {dimension_semantics = [], scalar_prefetch = 0 : i64, scratch_operands = 1 : i64, tpu.core_type = #tpu.core_type<tc>} {
    %c0 = arith.constant 0 : index
    %c0_0 = arith.constant 0 : index
    %0 = vector.load %arg0[%c0, %c0_0] : memref<64x32xbf16, #tpu.memory_space<vmem>>, vector<64x32xbf16>
    %c0_1 = arith.constant 0 : index
    %c0_2 = arith.constant 0 : index
    %1 = vector.load %arg1[%c0_1, %c0_2] : memref<32x768xbf16, #tpu.memory_space<vmem>>, vector<32x768xbf16>
    %cst = arith.constant dense<0.000000e+00> : vector<64x768xf32>
    %2 = tpu.matmul %0, %1, %cst {dimension_numbers = #tpu.dot_dimension_numbers<[1], [0], [0], [1], [0, 0, 1, 1], [], []>} : vector<64x32xbf16>, vector<32x768xbf16>, vector<64x768xf32> -> vector<64x768xf32>
    %c0_3 = arith.constant 0 : index
    %c0_4 = arith.constant 0 : index
    %3 = vector.load %arg5[%c0_3, %c0_4] : memref<9x768xf32, #tpu.memory_space<vmem>>, vector<1x768xf32>
    %4 = vector.broadcast %3 : vector<1x768xf32> to vector<64x768xf32>
    %5 = arith.addf %2, %4 : vector<64x768xf32>
    %c0_5 = arith.constant 0 : index
    %c0_6 = arith.constant 0 : index
    %6 = vector.load %arg7[%c0_5, %c0_6] : memref<64x768xf32, #tpu.memory_space<vmem>>, vector<64x768xf32>
    tpu.vector_store %arg7[%c0_5, %c0_6], %5 {strides = array<i32>} : memref<64x768xf32, #tpu.memory_space<vmem>>, vector<64x768xf32>,
    %c1 = arith.constant 1 : index
    %c0_7 = arith.constant 0 : index
    %7 = vector.load %arg5[%c1, %c0_7] : memref<9x768xf32, #tpu.memory_space<vmem>>, vector<1x768xf32>
    %8 = vector.shape_cast %7 : vector<1x768xf32> to vector<1x768xf32>
    %9 = vector.broadcast %8 : vector<1x768xf32> to vector<8x768xf32>
    %c2 = arith.constant 2 : index
    %c0_8 = arith.constant 0 : index
    %10 = vector.load %arg5[%c2, %c0_8] : memref<9x768xf32, #tpu.memory_space<vmem>>, vector<1x256xf32>
    %11 = vector.shape_cast %10 : vector<1x256xf32> to vector<1x256xf32>
    %12 = vector.broadcast %11 : vector<1x256xf32> to vector<8x256xf32>
    %c3 = arith.constant 3 : index
    %c0_9 = arith.constant 0 : index
    %13 = vector.load %arg5[%c3, %c0_9] : memref<9x768xf32, #tpu.memory_space<vmem>>, vector<1x256xf32>
    %14 = vector.shape_cast %13 : vector<1x256xf32> to vector<1x256xf32>
    %15 = vector.broadcast %14 : vector<1x256xf32> to vector<8x256xf32>
    %c4 = arith.constant 4 : index
    %c0_10 = arith.constant 0 : index
    %16 = vector.load %arg5[%c4, %c0_10] : memref<9x768xf32, #tpu.memory_space<vmem>>, vector<1x256xf32>
    %17 = vector.shape_cast %16 : vector<1x256xf32> to vector<1x256xf32>
    %18 = vector.broadcast %17 : vector<1x256xf32> to vector<8x256xf32>
    %c5 = arith.constant 5 : index
    %c0_11 = arith.constant 0 : index
    %19 = vector.load %arg5[%c5, %c0_11] : memref<9x768xf32, #tpu.memory_space<vmem>>, vector<1x128xf32>
    %20 = vector.shape_cast %19 : vector<1x128xf32> to vector<1x128xf32>
    %21 = vector.broadcast %20 : vector<1x128xf32> to vector<8x128xf32>
    %c6 = arith.constant 6 : index
    %c0_12 = arith.constant 0 : index
    %22 = vector.load %arg5[%c6, %c0_12] : memref<9x768xf32, #tpu.memory_space<vmem>>, vector<1x128xf32>
    %23 = vector.shape_cast %22 : vector<1x128xf32> to vector<1x128xf32>
    %24 = vector.broadcast %23 : vector<1x128xf32> to vector<8x128xf32>
    %c7 = arith.constant 7 : index
    %c0_13 = arith.constant 0 : index
    %25 = vector.load %arg5[%c7, %c0_13] : memref<9x768xf32, #tpu.memory_space<vmem>>, vector<1x128xf32>
    %26 = vector.shape_cast %25 : vector<1x128xf32> to vector<1x128xf32>
    %27 = vector.broadcast %26 : vector<1x128xf32> to vector<8x128xf32>
    %c8 = arith.constant 8 : index
    %c0_14 = arith.constant 0 : index
    %28 = vector.load %arg5[%c8, %c0_14] : memref<9x768xf32, #tpu.memory_space<vmem>>, vector<1x128xf32>
    %29 = vector.shape_cast %28 : vector<1x128xf32> to vector<1x128xf32>
    %30 = vector.broadcast %29 : vector<1x128xf32> to vector<8x128xf32>
    %cst_15 = arith.constant 0.000000e+00 : f32
    %31 = vector.broadcast %cst_15 : f32 to vector<8x256xf32>
    %cst_16 = arith.constant 0.000000e+00 : f32
    %32 = vector.broadcast %cst_16 : f32 to vector<8x128xf32>
    %c0_i32 = arith.constant 0 : i32
    %c8_i32 = arith.constant 8 : i32
    %33 = arith.muli %c0_i32, %c8_i32 : i32
    %34 = tpu.assume_multiple %33, 8 : i32
    %35 = arith.index_cast %34 : i32 to index
    %c0_17 = arith.constant 0 : index
    %36 = vector.load %arg7[%35, %c0_17] : memref<64x768xf32, #tpu.memory_space<vmem>>, vector<8x768xf32>
    %37 = arith.truncf %31 : vector<8x256xf32> to vector<8x256xbf16>
    %c0_18 = arith.constant 0 : index
    %c0_19 = arith.constant 0 : index
    %38 = vector.load %arg2[%c0_18, %c0_19] : memref<256x768xbf16, #tpu.memory_space<vmem>>, vector<256x768xbf16>
    %cst_20 = arith.constant dense<0.000000e+00> : vector<8x768xf32>
    %39 = tpu.matmul %37, %38, %cst_20 {dimension_numbers = #tpu.dot_dimension_numbers<[1], [0], [0], [1], [0, 0, 1, 1], [], []>} : vector<8x256xbf16>, vector<256x768xbf16>, vector<8x768xf32> -> vector<8x768xf32>
    %40 = vector.extract_strided_slice %36 {offsets = [0, 0], sizes = [8, 512], strides = [1, 1]} : vector<8x768xf32> to vector<8x512xf32>
    %41 = vector.extract_strided_slice %39 {offsets = [0, 0], sizes = [8, 512], strides = [1, 1]} : vector<8x768xf32> to vector<8x512xf32>
    %42 = arith.addf %40, %41 : vector<8x512xf32>
    %43 = arith.negf %42 : vector<8x512xf32>
    %44 = math.exp %43 : vector<8x512xf32>
    %cst_21 = arith.constant 1.000000e+00 : f32
    %45 = vector.broadcast %cst_21 : f32 to vector<8x512xf32>
    %46 = arith.addf %45, %44 : vector<8x512xf32>
    %47 = arith.divf %45, %46 : vector<8x512xf32>
    %48 = vector.extract_strided_slice %36 {offsets = [0, 512], sizes = [8, 256], strides = [1, 1]} : vector<8x768xf32> to vector<8x256xf32>
    %49 = vector.extract_strided_slice %47 {offsets = [0, 0], sizes = [8, 256], strides = [1, 1]} : vector<8x512xf32> to vector<8x256xf32>
    %50 = vector.extract_strided_slice %39 {offsets = [0, 512], sizes = [8, 256], strides = [1, 1]} : vector<8x768xf32> to vector<8x256xf32>
    %51 = arith.addf %50, %12 : vector<8x256xf32>
    %52 = arith.mulf %49, %51 : vector<8x256xf32>
    %53 = arith.addf %48, %52 : vector<8x256xf32>
    %54 = math.tanh %53 : vector<8x256xf32>
    %55 = vector.extract_strided_slice %47 {offsets = [0, 256], sizes = [8, 256], strides = [1, 1]} : vector<8x512xf32> to vector<8x256xf32>
    %cst_22 = arith.constant 1.000000e+00 : f32
    %56 = vector.broadcast %cst_22 : f32 to vector<8x256xf32>
    %57 = arith.subf %56, %55 : vector<8x256xf32>
    %58 = arith.mulf %57, %54 : vector<8x256xf32>
    %59 = vector.extract_strided_slice %47 {offsets = [0, 256], sizes = [8, 256], strides = [1, 1]} : vector<8x512xf32> to vector<8x256xf32>
    %60 = arith.mulf %59, %31 : vector<8x256xf32>
    %61 = arith.addf %58, %60 : vector<8x256xf32>
    %62 = vector.extract_strided_slice %61 {offsets = [0, 0], sizes = [8, 128], strides = [1, 1]} : vector<8x256xf32> to vector<8x128xf32>
    %cst_23 = arith.constant dense<0.000000e+00> : vector<8xf32>
    %63 = vector.multi_reduction <add>, %62, %cst_23 [1] : vector<8x128xf32> to vector<8xf32>
    %64 = vector.shape_cast %63 : vector<8xf32> to vector<8x1xf32>
    %cst_24 = arith.constant 1.280000e+02 : f32
    %65 = vector.broadcast %cst_24 : f32 to vector<8x1xf32>
    %66 = arith.divf %64, %65 : vector<8x1xf32>
    %67 = arith.mulf %62, %62 : vector<8x128xf32>
    %cst_25 = arith.constant dense<0.000000e+00> : vector<8xf32>
    %68 = vector.multi_reduction <add>, %67, %cst_25 [1] : vector<8x128xf32> to vector<8xf32>
    %69 = vector.shape_cast %68 : vector<8xf32> to vector<8x1xf32>
    %cst_26 = arith.constant 1.280000e+02 : f32
    %70 = vector.broadcast %cst_26 : f32 to vector<8x1xf32>
    %71 = arith.divf %69, %70 : vector<8x1xf32>
    %72 = arith.mulf %66, %66 : vector<8x1xf32>
    %73 = arith.subf %71, %72 : vector<8x1xf32>
    %74 = vector.broadcast %66 : vector<8x1xf32> to vector<8x128xf32>
    %75 = arith.subf %62, %74 : vector<8x128xf32>
    %cst_27 = arith.constant 9.99999974E-6 : f32
    %76 = vector.broadcast %cst_27 : f32 to vector<8x1xf32>
    %77 = arith.addf %73, %76 : vector<8x1xf32>
    %78 = math.rsqrt %77 : vector<8x1xf32>
    %79 = vector.broadcast %78 : vector<8x1xf32> to vector<8x128xf32>
    %80 = arith.mulf %75, %79 : vector<8x128xf32>
    %81 = vector.extract_strided_slice %61 {offsets = [0, 128], sizes = [8, 128], strides = [1, 1]} : vector<8x256xf32> to vector<8x128xf32>
    %cst_28 = arith.constant dense<0.000000e+00> : vector<8xf32>
    %82 = vector.multi_reduction <add>, %81, %cst_28 [1] : vector<8x128xf32> to vector<8xf32>
    %83 = vector.shape_cast %82 : vector<8xf32> to vector<8x1xf32>
    %cst_29 = arith.constant 1.280000e+02 : f32
    %84 = vector.broadcast %cst_29 : f32 to vector<8x1xf32>
    %85 = arith.divf %83, %84 : vector<8x1xf32>
    %86 = arith.mulf %81, %81 : vector<8x128xf32>
    %cst_30 = arith.constant dense<0.000000e+00> : vector<8xf32>
    %87 = vector.multi_reduction <add>, %86, %cst_30 [1] : vector<8x128xf32> to vector<8xf32>
    %88 = vector.shape_cast %87 : vector<8xf32> to vector<8x1xf32>
    %cst_31 = arith.constant 1.280000e+02 : f32
    %89 = vector.broadcast %cst_31 : f32 to vector<8x1xf32>
    %90 = arith.divf %88, %89 : vector<8x1xf32>
    %91 = arith.mulf %85, %85 : vector<8x1xf32>
    %92 = arith.subf %90, %91 : vector<8x1xf32>
    %93 = vector.broadcast %85 : vector<8x1xf32> to vector<8x128xf32>
    %94 = arith.subf %81, %93 : vector<8x128xf32>
    %cst_32 = arith.constant 9.99999974E-6 : f32
    %95 = vector.broadcast %cst_32 : f32 to vector<8x1xf32>
    %96 = arith.addf %92, %95 : vector<8x1xf32>
    %97 = math.rsqrt %96 : vector<8x1xf32>
    %98 = vector.broadcast %97 : vector<8x1xf32> to vector<8x128xf32>
    %99 = arith.mulf %94, %98 : vector<8x128xf32>
    %100 = tpu.concatenate %80, %99 in 1 : vector<8x128xf32>, vector<8x128xf32> -> vector<8x256xf32>
    %101 = arith.mulf %100, %15 : vector<8x256xf32>
    %102 = arith.addf %101, %18 : vector<8x256xf32>
    %103 = arith.truncf %102 : vector<8x256xf32> to vector<8x256xbf16>
    %104 = arith.truncf %32 : vector<8x128xf32> to vector<8x128xbf16>
    %105 = tpu.concatenate %103, %104 in 1 : vector<8x256xbf16>, vector<8x128xbf16> -> vector<8x384xbf16>
    %c0_33 = arith.constant 0 : index
    %c0_34 = arith.constant 0 : index
    %106 = vector.load %arg3[%c0_33, %c0_34] : memref<384x768xbf16, #tpu.memory_space<vmem>>, vector<384x768xbf16>
    %cst_35 = arith.constant dense<0.000000e+00> : vector<8x768xf32>
    %107 = tpu.matmul %105, %106, %cst_35 {dimension_numbers = #tpu.dot_dimension_numbers<[1], [0], [0], [1], [0, 0, 1, 1], [], []>} : vector<8x384xbf16>, vector<384x768xbf16>, vector<8x768xf32> -> vector<8x768xf32>
    %108 = arith.addf %107, %9 : vector<8x768xf32>
    %109 = vector.extract_strided_slice %108 {offsets = [0, 0], sizes = [8, 384], strides = [1, 1]} : vector<8x768xf32> to vector<8x384xf32>
    %110 = vector.extract_strided_slice %108 {offsets = [0, 384], sizes = [8, 384], strides = [1, 1]} : vector<8x768xf32> to vector<8x384xf32>
    %111 = vector.extract_strided_slice %109 {offsets = [0, 0], sizes = [8, 256], strides = [1, 1]} : vector<8x384xf32> to vector<8x256xf32>
    %112 = vector.extract_strided_slice %110 {offsets = [0, 0], sizes = [8, 256], strides = [1, 1]} : vector<8x384xf32> to vector<8x256xf32>
    %113 = arith.addf %111, %112 : vector<8x256xf32>
    %114 = arith.negf %113 : vector<8x256xf32>
    %115 = math.exp %114 : vector<8x256xf32>
    %cst_36 = arith.constant 1.000000e+00 : f32
    %116 = vector.broadcast %cst_36 : f32 to vector<8x256xf32>
    %117 = arith.addf %116, %115 : vector<8x256xf32>
    %118 = arith.divf %116, %117 : vector<8x256xf32>
    %119 = vector.extract_strided_slice %109 {offsets = [0, 256], sizes = [8, 128], strides = [1, 1]} : vector<8x384xf32> to vector<8x128xf32>
    %120 = vector.extract_strided_slice %118 {offsets = [0, 0], sizes = [8, 128], strides = [1, 1]} : vector<8x256xf32> to vector<8x128xf32>
    %121 = vector.extract_strided_slice %110 {offsets = [0, 256], sizes = [8, 128], strides = [1, 1]} : vector<8x384xf32> to vector<8x128xf32>
    %122 = arith.mulf %120, %121 : vector<8x128xf32>
    %123 = arith.addf %119, %122 : vector<8x128xf32>
    %124 = math.tanh %123 : vector<8x128xf32>
    %125 = vector.extract_strided_slice %118 {offsets = [0, 128], sizes = [8, 128], strides = [1, 1]} : vector<8x256xf32> to vector<8x128xf32>
    %cst_37 = arith.constant 1.000000e+00 : f32
    %126 = vector.broadcast %cst_37 : f32 to vector<8x128xf32>
    %127 = arith.subf %126, %125 : vector<8x128xf32>
    %128 = arith.mulf %127, %124 : vector<8x128xf32>
    %129 = vector.extract_strided_slice %118 {offsets = [0, 128], sizes = [8, 128], strides = [1, 1]} : vector<8x256xf32> to vector<8x128xf32>
    %130 = arith.mulf %129, %32 : vector<8x128xf32>
    %131 = arith.addf %128, %130 : vector<8x128xf32>
    %132 = vector.extract_strided_slice %131 {offsets = [0, 0], sizes = [8, 64], strides = [1, 1]} : vector<8x128xf32> to vector<8x64xf32>
    %cst_38 = arith.constant dense<0.000000e+00> : vector<8xf32>
    %133 = vector.multi_reduction <add>, %132, %cst_38 [1] : vector<8x64xf32> to vector<8xf32>
    %134 = vector.shape_cast %133 : vector<8xf32> to vector<8x1xf32>
    %cst_39 = arith.constant 6.400000e+01 : f32
    %135 = vector.broadcast %cst_39 : f32 to vector<8x1xf32>
    %136 = arith.divf %134, %135 : vector<8x1xf32>
    %137 = arith.mulf %132, %132 : vector<8x64xf32>
    %cst_40 = arith.constant dense<0.000000e+00> : vector<8xf32>
    %138 = vector.multi_reduction <add>, %137, %cst_40 [1] : vector<8x64xf32> to vector<8xf32>
    %139 = vector.shape_cast %138 : vector<8xf32> to vector<8x1xf32>
    %cst_41 = arith.constant 6.400000e+01 : f32
    %140 = vector.broadcast %cst_41 : f32 to vector<8x1xf32>
    %141 = arith.divf %139, %140 : vector<8x1xf32>
    %142 = arith.mulf %136, %136 : vector<8x1xf32>
    %143 = arith.subf %141, %142 : vector<8x1xf32>
    %144 = vector.broadcast %136 : vector<8x1xf32> to vector<8x64xf32>
    %145 = arith.subf %132, %144 : vector<8x64xf32>
    %cst_42 = arith.constant 9.99999974E-6 : f32
    %146 = vector.broadcast %cst_42 : f32 to vector<8x1xf32>
    %147 = arith.addf %143, %146 : vector<8x1xf32>
    %148 = math.rsqrt %147 : vector<8x1xf32>
    %149 = vector.broadcast %148 : vector<8x1xf32> to vector<8x64xf32>
    %150 = arith.mulf %145, %149 : vector<8x64xf32>
    %151 = vector.extract_strided_slice %131 {offsets = [0, 64], sizes = [8, 64], strides = [1, 1]} : vector<8x128xf32> to vector<8x64xf32>
    %cst_43 = arith.constant dense<0.000000e+00> : vector<8xf32>
    %152 = vector.multi_reduction <add>, %151, %cst_43 [1] : vector<8x64xf32> to vector<8xf32>
    %153 = vector.shape_cast %152 : vector<8xf32> to vector<8x1xf32>
    %cst_44 = arith.constant 6.400000e+01 : f32
    %154 = vector.broadcast %cst_44 : f32 to vector<8x1xf32>
    %155 = arith.divf %153, %154 : vector<8x1xf32>
    %156 = arith.mulf %151, %151 : vector<8x64xf32>
    %cst_45 = arith.constant dense<0.000000e+00> : vector<8xf32>
    %157 = vector.multi_reduction <add>, %156, %cst_45 [1] : vector<8x64xf32> to vector<8xf32>
    %158 = vector.shape_cast %157 : vector<8xf32> to vector<8x1xf32>
    %cst_46 = arith.constant 6.400000e+01 : f32
    %159 = vector.broadcast %cst_46 : f32 to vector<8x1xf32>
    %160 = arith.divf %158, %159 : vector<8x1xf32>
    %161 = arith.mulf %155, %155 : vector<8x1xf32>
    %162 = arith.subf %160, %161 : vector<8x1xf32>
    %163 = vector.broadcast %155 : vector<8x1xf32> to vector<8x64xf32>
    %164 = arith.subf %151, %163 : vector<8x64xf32>
    %cst_47 = arith.constant 9.99999974E-6 : f32
    %165 = vector.broadcast %cst_47 : f32 to vector<8x1xf32>
    %166 = arith.addf %162, %165 : vector<8x1xf32>
    %167 = math.rsqrt %166 : vector<8x1xf32>
    %168 = vector.broadcast %167 : vector<8x1xf32> to vector<8x64xf32>
    %169 = arith.mulf %164, %168 : vector<8x64xf32>
    %170 = tpu.concatenate %150, %169 in 1 : vector<8x64xf32>, vector<8x64xf32> -> vector<8x128xf32>
    %171 = arith.mulf %170, %21 : vector<8x128xf32>
    %172 = arith.addf %171, %24 : vector<8x128xf32>
    %c1_i32 = arith.constant 1 : i32
    %c8_i32_48 = arith.constant 8 : i32
    %173 = arith.muli %c1_i32, %c8_i32_48 : i32
    %174 = tpu.assume_multiple %173, 8 : i32
    %175 = arith.index_cast %174 : i32 to index
    %c0_49 = arith.constant 0 : index
    %176 = vector.load %arg7[%175, %c0_49] : memref<64x768xf32, #tpu.memory_space<vmem>>, vector<8x768xf32>
    %177 = arith.truncf %102 : vector<8x256xf32> to vector<8x256xbf16>
    %c0_50 = arith.constant 0 : index
    %c0_51 = arith.constant 0 : index
    %178 = vector.load %arg2[%c0_50, %c0_51] : memref<256x768xbf16, #tpu.memory_space<vmem>>, vector<256x768xbf16>
    %cst_52 = arith.constant dense<0.000000e+00> : vector<8x768xf32>
    %179 = tpu.matmul %177, %178, %cst_52 {dimension_numbers = #tpu.dot_dimension_numbers<[1], [0], [0], [1], [0, 0, 1, 1], [], []>} : vector<8x256xbf16>, vector<256x768xbf16>, vector<8x768xf32> -> vector<8x768xf32>
    %180 = vector.extract_strided_slice %176 {offsets = [0, 0], sizes = [8, 512], strides = [1, 1]} : vector<8x768xf32> to vector<8x512xf32>
    %181 = vector.extract_strided_slice %179 {offsets = [0, 0], sizes = [8, 512], strides = [1, 1]} : vector<8x768xf32> to vector<8x512xf32>
    %182 = arith.addf %180, %181 : vector<8x512xf32>
    %183 = arith.negf %182 : vector<8x512xf32>
    %184 = math.exp %183 : vector<8x512xf32>
    %cst_53 = arith.constant 1.000000e+00 : f32
    %185 = vector.broadcast %cst_53 : f32 to vector<8x512xf32>
    %186 = arith.addf %185, %184 : vector<8x512xf32>
    %187 = arith.divf %185, %186 : vector<8x512xf32>
    %188 = vector.extract_strided_slice %176 {offsets = [0, 512], sizes = [8, 256], strides = [1, 1]} : vector<8x768xf32> to vector<8x256xf32>
    %189 = vector.extract_strided_slice %187 {offsets = [0, 0], sizes = [8, 256], strides = [1, 1]} : vector<8x512xf32> to vector<8x256xf32>
    %190 = vector.extract_strided_slice %179 {offsets = [0, 512], sizes = [8, 256], strides = [1, 1]} : vector<8x768xf32> to vector<8x256xf32>
    %191 = arith.addf %190, %12 : vector<8x256xf32>
    %192 = arith.mulf %189, %191 : vector<8x256xf32>
    %193 = arith.addf %188, %192 : vector<8x256xf32>
    %194 = math.tanh %193 : vector<8x256xf32>
    %195 = vector.extract_strided_slice %187 {offsets = [0, 256], sizes = [8, 256], strides = [1, 1]} : vector<8x512xf32> to vector<8x256xf32>
    %cst_54 = arith.constant 1.000000e+00 : f32
    %196 = vector.broadcast %cst_54 : f32 to vector<8x256xf32>
    %197 = arith.subf %196, %195 : vector<8x256xf32>
    %198 = arith.mulf %197, %194 : vector<8x256xf32>
    %199 = vector.extract_strided_slice %187 {offsets = [0, 256], sizes = [8, 256], strides = [1, 1]} : vector<8x512xf32> to vector<8x256xf32>
    %200 = arith.mulf %199, %102 : vector<8x256xf32>
    %201 = arith.addf %198, %200 : vector<8x256xf32>
    %202 = vector.extract_strided_slice %201 {offsets = [0, 0], sizes = [8, 128], strides = [1, 1]} : vector<8x256xf32> to vector<8x128xf32>
    %cst_55 = arith.constant dense<0.000000e+00> : vector<8xf32>
    %203 = vector.multi_reduction <add>, %202, %cst_55 [1] : vector<8x128xf32> to vector<8xf32>
    %204 = vector.shape_cast %203 : vector<8xf32> to vector<8x1xf32>
    %cst_56 = arith.constant 1.280000e+02 : f32
    %205 = vector.broadcast %cst_56 : f32 to vector<8x1xf32>
    %206 = arith.divf %204, %205 : vector<8x1xf32>
    %207 = arith.mulf %202, %202 : vector<8x128xf32>
    %cst_57 = arith.constant dense<0.000000e+00> : vector<8xf32>
    %208 = vector.multi_reduction <add>, %207, %cst_57 [1] : vector<8x128xf32> to vector<8xf32>
    %209 = vector.shape_cast %208 : vector<8xf32> to vector<8x1xf32>
    %cst_58 = arith.constant 1.280000e+02 : f32
    %210 = vector.broadcast %cst_58 : f32 to vector<8x1xf32>
    %211 = arith.divf %209, %210 : vector<8x1xf32>
    %212 = arith.mulf %206, %206 : vector<8x1xf32>
    %213 = arith.subf %211, %212 : vector<8x1xf32>
    %214 = vector.broadcast %206 : vector<8x1xf32> to vector<8x128xf32>
    %215 = arith.subf %202, %214 : vector<8x128xf32>
    %cst_59 = arith.constant 9.99999974E-6 : f32
    %216 = vector.broadcast %cst_59 : f32 to vector<8x1xf32>
    %217 = arith.addf %213, %216 : vector<8x1xf32>
    %218 = math.rsqrt %217 : vector<8x1xf32>
    %219 = vector.broadcast %218 : vector<8x1xf32> to vector<8x128xf32>
    %220 = arith.mulf %215, %219 : vector<8x128xf32>
    %221 = vector.extract_strided_slice %201 {offsets = [0, 128], sizes = [8, 128], strides = [1, 1]} : vector<8x256xf32> to vector<8x128xf32>
    %cst_60 = arith.constant dense<0.000000e+00> : vector<8xf32>
    %222 = vector.multi_reduction <add>, %221, %cst_60 [1] : vector<8x128xf32> to vector<8xf32>
    %223 = vector.shape_cast %222 : vector<8xf32> to vector<8x1xf32>
    %cst_61 = arith.constant 1.280000e+02 : f32
    %224 = vector.broadcast %cst_61 : f32 to vector<8x1xf32>
    %225 = arith.divf %223, %224 : vector<8x1xf32>
    %226 = arith.mulf %221, %221 : vector<8x128xf32>
    %cst_62 = arith.constant dense<0.000000e+00> : vector<8xf32>
    %227 = vector.multi_reduction <add>, %226, %cst_62 [1] : vector<8x128xf32> to vector<8xf32>
    %228 = vector.shape_cast %227 : vector<8xf32> to vector<8x1xf32>
    %cst_63 = arith.constant 1.280000e+02 : f32
    %229 = vector.broadcast %cst_63 : f32 to vector<8x1xf32>
    %230 = arith.divf %228, %229 : vector<8x1xf32>
    %231 = arith.mulf %225, %225 : vector<8x1xf32>
    %232 = arith.subf %230, %231 : vector<8x1xf32>
    %233 = vector.broadcast %225 : vector<8x1xf32> to vector<8x128xf32>
    %234 = arith.subf %221, %233 : vector<8x128xf32>
    %cst_64 = arith.constant 9.99999974E-6 : f32
    %235 = vector.broadcast %cst_64 : f32 to vector<8x1xf32>
    %236 = arith.addf %232, %235 : vector<8x1xf32>
    %237 = math.rsqrt %236 : vector<8x1xf32>
    %238 = vector.broadcast %237 : vector<8x1xf32> to vector<8x128xf32>
    %239 = arith.mulf %234, %238 : vector<8x128xf32>
    %240 = tpu.concatenate %220, %239 in 1 : vector<8x128xf32>, vector<8x128xf32> -> vector<8x256xf32>
    %241 = arith.mulf %240, %15 : vector<8x256xf32>
    %242 = arith.addf %241, %18 : vector<8x256xf32>
    %243 = arith.truncf %242 : vector<8x256xf32> to vector<8x256xbf16>
    %244 = arith.truncf %172 : vector<8x128xf32> to vector<8x128xbf16>
    %245 = tpu.concatenate %243, %244 in 1 : vector<8x256xbf16>, vector<8x128xbf16> -> vector<8x384xbf16>
    %c0_65 = arith.constant 0 : index
    %c0_66 = arith.constant 0 : index
    %246 = vector.load %arg3[%c0_65, %c0_66] : memref<384x768xbf16, #tpu.memory_space<vmem>>, vector<384x768xbf16>
    %cst_67 = arith.constant dense<0.000000e+00> : vector<8x768xf32>
    %247 = tpu.matmul %245, %246, %cst_67 {dimension_numbers = #tpu.dot_dimension_numbers<[1], [0], [0], [1], [0, 0, 1, 1], [], []>} : vector<8x384xbf16>, vector<384x768xbf16>, vector<8x768xf32> -> vector<8x768xf32>
    %248 = arith.addf %247, %9 : vector<8x768xf32>
    %249 = vector.extract_strided_slice %248 {offsets = [0, 0], sizes = [8, 384], strides = [1, 1]} : vector<8x768xf32> to vector<8x384xf32>
    %250 = vector.extract_strided_slice %248 {offsets = [0, 384], sizes = [8, 384], strides = [1, 1]} : vector<8x768xf32> to vector<8x384xf32>
    %251 = vector.extract_strided_slice %249 {offsets = [0, 0], sizes = [8, 256], strides = [1, 1]} : vector<8x384xf32> to vector<8x256xf32>
    %252 = vector.extract_strided_slice %250 {offsets = [0, 0], sizes = [8, 256], strides = [1, 1]} : vector<8x384xf32> to vector<8x256xf32>
    %253 = arith.addf %251, %252 : vector<8x256xf32>
    %254 = arith.negf %253 : vector<8x256xf32>
    %255 = math.exp %254 : vector<8x256xf32>
    %cst_68 = arith.constant 1.000000e+00 : f32
    %256 = vector.broadcast %cst_68 : f32 to vector<8x256xf32>
    %257 = arith.addf %256, %255 : vector<8x256xf32>
    %258 = arith.divf %256, %257 : vector<8x256xf32>
    %259 = vector.extract_strided_slice %249 {offsets = [0, 256], sizes = [8, 128], strides = [1, 1]} : vector<8x384xf32> to vector<8x128xf32>
    %260 = vector.extract_strided_slice %258 {offsets = [0, 0], sizes = [8, 128], strides = [1, 1]} : vector<8x256xf32> to vector<8x128xf32>
    %261 = vector.extract_strided_slice %250 {offsets = [0, 256], sizes = [8, 128], strides = [1, 1]} : vector<8x384xf32> to vector<8x128xf32>
    %262 = arith.mulf %260, %261 : vector<8x128xf32>
    %263 = arith.addf %259, %262 : vector<8x128xf32>
    %264 = math.tanh %263 : vector<8x128xf32>
    %265 = vector.extract_strided_slice %258 {offsets = [0, 128], sizes = [8, 128], strides = [1, 1]} : vector<8x256xf32> to vector<8x128xf32>
    %cst_69 = arith.constant 1.000000e+00 : f32
    %266 = vector.broadcast %cst_69 : f32 to vector<8x128xf32>
    %267 = arith.subf %266, %265 : vector<8x128xf32>
    %268 = arith.mulf %267, %264 : vector<8x128xf32>
    %269 = vector.extract_strided_slice %258 {offsets = [0, 128], sizes = [8, 128], strides = [1, 1]} : vector<8x256xf32> to vector<8x128xf32>
    %270 = arith.mulf %269, %172 : vector<8x128xf32>
    %271 = arith.addf %268, %270 : vector<8x128xf32>
    %272 = vector.extract_strided_slice %271 {offsets = [0, 0], sizes = [8, 64], strides = [1, 1]} : vector<8x128xf32> to vector<8x64xf32>
    %cst_70 = arith.constant dense<0.000000e+00> : vector<8xf32>
    %273 = vector.multi_reduction <add>, %272, %cst_70 [1] : vector<8x64xf32> to vector<8xf32>
    %274 = vector.shape_cast %273 : vector<8xf32> to vector<8x1xf32>
    %cst_71 = arith.constant 6.400000e+01 : f32
    %275 = vector.broadcast %cst_71 : f32 to vector<8x1xf32>
    %276 = arith.divf %274, %275 : vector<8x1xf32>
    %277 = arith.mulf %272, %272 : vector<8x64xf32>
    %cst_72 = arith.constant dense<0.000000e+00> : vector<8xf32>
    %278 = vector.multi_reduction <add>, %277, %cst_72 [1] : vector<8x64xf32> to vector<8xf32>
    %279 = vector.shape_cast %278 : vector<8xf32> to vector<8x1xf32>
    %cst_73 = arith.constant 6.400000e+01 : f32
    %280 = vector.broadcast %cst_73 : f32 to vector<8x1xf32>
    %281 = arith.divf %279, %280 : vector<8x1xf32>
    %282 = arith.mulf %276, %276 : vector<8x1xf32>
    %283 = arith.subf %281, %282 : vector<8x1xf32>
    %284 = vector.broadcast %276 : vector<8x1xf32> to vector<8x64xf32>
    %285 = arith.subf %272, %284 : vector<8x64xf32>
    %cst_74 = arith.constant 9.99999974E-6 : f32
    %286 = vector.broadcast %cst_74 : f32 to vector<8x1xf32>
    %287 = arith.addf %283, %286 : vector<8x1xf32>
    %288 = math.rsqrt %287 : vector<8x1xf32>
    %289 = vector.broadcast %288 : vector<8x1xf32> to vector<8x64xf32>
    %290 = arith.mulf %285, %289 : vector<8x64xf32>
    %291 = vector.extract_strided_slice %271 {offsets = [0, 64], sizes = [8, 64], strides = [1, 1]} : vector<8x128xf32> to vector<8x64xf32>
    %cst_75 = arith.constant dense<0.000000e+00> : vector<8xf32>
    %292 = vector.multi_reduction <add>, %291, %cst_75 [1] : vector<8x64xf32> to vector<8xf32>
    %293 = vector.shape_cast %292 : vector<8xf32> to vector<8x1xf32>
    %cst_76 = arith.constant 6.400000e+01 : f32
    %294 = vector.broadcast %cst_76 : f32 to vector<8x1xf32>
    %295 = arith.divf %293, %294 : vector<8x1xf32>
    %296 = arith.mulf %291, %291 : vector<8x64xf32>
    %cst_77 = arith.constant dense<0.000000e+00> : vector<8xf32>
    %297 = vector.multi_reduction <add>, %296, %cst_77 [1] : vector<8x64xf32> to vector<8xf32>
    %298 = vector.shape_cast %297 : vector<8xf32> to vector<8x1xf32>
    %cst_78 = arith.constant 6.400000e+01 : f32
    %299 = vector.broadcast %cst_78 : f32 to vector<8x1xf32>
    %300 = arith.divf %298, %299 : vector<8x1xf32>
    %301 = arith.mulf %295, %295 : vector<8x1xf32>
    %302 = arith.subf %300, %301 : vector<8x1xf32>
    %303 = vector.broadcast %295 : vector<8x1xf32> to vector<8x64xf32>
    %304 = arith.subf %291, %303 : vector<8x64xf32>
    %cst_79 = arith.constant 9.99999974E-6 : f32
    %305 = vector.broadcast %cst_79 : f32 to vector<8x1xf32>
    %306 = arith.addf %302, %305 : vector<8x1xf32>
    %307 = math.rsqrt %306 : vector<8x1xf32>
    %308 = vector.broadcast %307 : vector<8x1xf32> to vector<8x64xf32>
    %309 = arith.mulf %304, %308 : vector<8x64xf32>
    %310 = tpu.concatenate %290, %309 in 1 : vector<8x64xf32>, vector<8x64xf32> -> vector<8x128xf32>
    %311 = arith.mulf %310, %21 : vector<8x128xf32>
    %312 = arith.addf %311, %24 : vector<8x128xf32>
    %c2_i32 = arith.constant 2 : i32
    %c8_i32_80 = arith.constant 8 : i32
    %313 = arith.muli %c2_i32, %c8_i32_80 : i32
    %314 = tpu.assume_multiple %313, 8 : i32
    %315 = arith.index_cast %314 : i32 to index
    %c0_81 = arith.constant 0 : index
    %316 = vector.load %arg7[%315, %c0_81] : memref<64x768xf32, #tpu.memory_space<vmem>>, vector<8x768xf32>
    %317 = arith.truncf %242 : vector<8x256xf32> to vector<8x256xbf16>
    %c0_82 = arith.constant 0 : index
    %c0_83 = arith.constant 0 : index
    %318 = vector.load %arg2[%c0_82, %c0_83] : memref<256x768xbf16, #tpu.memory_space<vmem>>, vector<256x768xbf16>
    %cst_84 = arith.constant dense<0.000000e+00> : vector<8x768xf32>
    %319 = tpu.matmul %317, %318, %cst_84 {dimension_numbers = #tpu.dot_dimension_numbers<[1], [0], [0], [1], [0, 0, 1, 1], [], []>} : vector<8x256xbf16>, vector<256x768xbf16>, vector<8x768xf32> -> vector<8x768xf32>
    %320 = vector.extract_strided_slice %316 {offsets = [0, 0], sizes = [8, 512], strides = [1, 1]} : vector<8x768xf32> to vector<8x512xf32>
    %321 = vector.extract_strided_slice %319 {offsets = [0, 0], sizes = [8, 512], strides = [1, 1]} : vector<8x768xf32> to vector<8x512xf32>
    %322 = arith.addf %320, %321 : vector<8x512xf32>
    %323 = arith.negf %322 : vector<8x512xf32>
    %324 = math.exp %323 : vector<8x512xf32>
    %cst_85 = arith.constant 1.000000e+00 : f32
    %325 = vector.broadcast %cst_85 : f32 to vector<8x512xf32>
    %326 = arith.addf %325, %324 : vector<8x512xf32>
    %327 = arith.divf %325, %326 : vector<8x512xf32>
    %328 = vector.extract_strided_slice %316 {offsets = [0, 512], sizes = [8, 256], strides = [1, 1]} : vector<8x768xf32> to vector<8x256xf32>
    %329 = vector.extract_strided_slice %327 {offsets = [0, 0], sizes = [8, 256], strides = [1, 1]} : vector<8x512xf32> to vector<8x256xf32>
    %330 = vector.extract_strided_slice %319 {offsets = [0, 512], sizes = [8, 256], strides = [1, 1]} : vector<8x768xf32> to vector<8x256xf32>
    %331 = arith.addf %330, %12 : vector<8x256xf32>
    %332 = arith.mulf %329, %331 : vector<8x256xf32>
    %333 = arith.addf %328, %332 : vector<8x256xf32>
    %334 = math.tanh %333 : vector<8x256xf32>
    %335 = vector.extract_strided_slice %327 {offsets = [0, 256], sizes = [8, 256], strides = [1, 1]} : vector<8x512xf32> to vector<8x256xf32>
    %cst_86 = arith.constant 1.000000e+00 : f32
    %336 = vector.broadcast %cst_86 : f32 to vector<8x256xf32>
    %337 = arith.subf %336, %335 : vector<8x256xf32>
    %338 = arith.mulf %337, %334 : vector<8x256xf32>
    %339 = vector.extract_strided_slice %327 {offsets = [0, 256], sizes = [8, 256], strides = [1, 1]} : vector<8x512xf32> to vector<8x256xf32>
    %340 = arith.mulf %339, %242 : vector<8x256xf32>
    %341 = arith.addf %338, %340 : vector<8x256xf32>
    %342 = vector.extract_strided_slice %341 {offsets = [0, 0], sizes = [8, 128], strides = [1, 1]} : vector<8x256xf32> to vector<8x128xf32>
    %cst_87 = arith.constant dense<0.000000e+00> : vector<8xf32>
    %343 = vector.multi_reduction <add>, %342, %cst_87 [1] : vector<8x128xf32> to vector<8xf32>
    %344 = vector.shape_cast %343 : vector<8xf32> to vector<8x1xf32>
    %cst_88 = arith.constant 1.280000e+02 : f32
    %345 = vector.broadcast %cst_88 : f32 to vector<8x1xf32>
    %346 = arith.divf %344, %345 : vector<8x1xf32>
    %347 = arith.mulf %342, %342 : vector<8x128xf32>
    %cst_89 = arith.constant dense<0.000000e+00> : vector<8xf32>
    %348 = vector.multi_reduction <add>, %347, %cst_89 [1] : vector<8x128xf32> to vector<8xf32>
    %349 = vector.shape_cast %348 : vector<8xf32> to vector<8x1xf32>
    %cst_90 = arith.constant 1.280000e+02 : f32
    %350 = vector.broadcast %cst_90 : f32 to vector<8x1xf32>
    %351 = arith.divf %349, %350 : vector<8x1xf32>
    %352 = arith.mulf %346, %346 : vector<8x1xf32>
    %353 = arith.subf %351, %352 : vector<8x1xf32>
    %354 = vector.broadcast %346 : vector<8x1xf32> to vector<8x128xf32>
    %355 = arith.subf %342, %354 : vector<8x128xf32>
    %cst_91 = arith.constant 9.99999974E-6 : f32
    %356 = vector.broadcast %cst_91 : f32 to vector<8x1xf32>
    %357 = arith.addf %353, %356 : vector<8x1xf32>
    %358 = math.rsqrt %357 : vector<8x1xf32>
    %359 = vector.broadcast %358 : vector<8x1xf32> to vector<8x128xf32>
    %360 = arith.mulf %355, %359 : vector<8x128xf32>
    %361 = vector.extract_strided_slice %341 {offsets = [0, 128], sizes = [8, 128], strides = [1, 1]} : vector<8x256xf32> to vector<8x128xf32>
    %cst_92 = arith.constant dense<0.000000e+00> : vector<8xf32>
    %362 = vector.multi_reduction <add>, %361, %cst_92 [1] : vector<8x128xf32> to vector<8xf32>
    %363 = vector.shape_cast %362 : vector<8xf32> to vector<8x1xf32>
    %cst_93 = arith.constant 1.280000e+02 : f32
    %364 = vector.broadcast %cst_93 : f32 to vector<8x1xf32>
    %365 = arith.divf %363, %364 : vector<8x1xf32>
    %366 = arith.mulf %361, %361 : vector<8x128xf32>
    %cst_94 = arith.constant dense<0.000000e+00> : vector<8xf32>
    %367 = vector.multi_reduction <add>, %366, %cst_94 [1] : vector<8x128xf32> to vector<8xf32>
    %368 = vector.shape_cast %367 : vector<8xf32> to vector<8x1xf32>
    %cst_95 = arith.constant 1.280000e+02 : f32
    %369 = vector.broadcast %cst_95 : f32 to vector<8x1xf32>
    %370 = arith.divf %368, %369 : vector<8x1xf32>
    %371 = arith.mulf %365, %365 : vector<8x1xf32>
    %372 = arith.subf %370, %371 : vector<8x1xf32>
    %373 = vector.broadcast %365 : vector<8x1xf32> to vector<8x128xf32>
    %374 = arith.subf %361, %373 : vector<8x128xf32>
    %cst_96 = arith.constant 9.99999974E-6 : f32
    %375 = vector.broadcast %cst_96 : f32 to vector<8x1xf32>
    %376 = arith.addf %372, %375 : vector<8x1xf32>
    %377 = math.rsqrt %376 : vector<8x1xf32>
    %378 = vector.broadcast %377 : vector<8x1xf32> to vector<8x128xf32>
    %379 = arith.mulf %374, %378 : vector<8x128xf32>
    %380 = tpu.concatenate %360, %379 in 1 : vector<8x128xf32>, vector<8x128xf32> -> vector<8x256xf32>
    %381 = arith.mulf %380, %15 : vector<8x256xf32>
    %382 = arith.addf %381, %18 : vector<8x256xf32>
    %383 = arith.truncf %382 : vector<8x256xf32> to vector<8x256xbf16>
    %384 = arith.truncf %312 : vector<8x128xf32> to vector<8x128xbf16>
    %385 = tpu.concatenate %383, %384 in 1 : vector<8x256xbf16>, vector<8x128xbf16> -> vector<8x384xbf16>
    %c0_97 = arith.constant 0 : index
    %c0_98 = arith.constant 0 : index
    %386 = vector.load %arg3[%c0_97, %c0_98] : memref<384x768xbf16, #tpu.memory_space<vmem>>, vector<384x768xbf16>
    %cst_99 = arith.constant dense<0.000000e+00> : vector<8x768xf32>
    %387 = tpu.matmul %385, %386, %cst_99 {dimension_numbers = #tpu.dot_dimension_numbers<[1], [0], [0], [1], [0, 0, 1, 1], [], []>} : vector<8x384xbf16>, vector<384x768xbf16>, vector<8x768xf32> -> vector<8x768xf32>
    %388 = arith.addf %387, %9 : vector<8x768xf32>
    %389 = vector.extract_strided_slice %388 {offsets = [0, 0], sizes = [8, 384], strides = [1, 1]} : vector<8x768xf32> to vector<8x384xf32>
    %390 = vector.extract_strided_slice %388 {offsets = [0, 384], sizes = [8, 384], strides = [1, 1]} : vector<8x768xf32> to vector<8x384xf32>
    %391 = vector.extract_strided_slice %389 {offsets = [0, 0], sizes = [8, 256], strides = [1, 1]} : vector<8x384xf32> to vector<8x256xf32>
    %392 = vector.extract_strided_slice %390 {offsets = [0, 0], sizes = [8, 256], strides = [1, 1]} : vector<8x384xf32> to vector<8x256xf32>
    %393 = arith.addf %391, %392 : vector<8x256xf32>
    %394 = arith.negf %393 : vector<8x256xf32>
    %395 = math.exp %394 : vector<8x256xf32>
    %cst_100 = arith.constant 1.000000e+00 : f32
    %396 = vector.broadcast %cst_100 : f32 to vector<8x256xf32>
    %397 = arith.addf %396, %395 : vector<8x256xf32>
    %398 = arith.divf %396, %397 : vector<8x256xf32>
    %399 = vector.extract_strided_slice %389 {offsets = [0, 256], sizes = [8, 128], strides = [1, 1]} : vector<8x384xf32> to vector<8x128xf32>
    %400 = vector.extract_strided_slice %398 {offsets = [0, 0], sizes = [8, 128], strides = [1, 1]} : vector<8x256xf32> to vector<8x128xf32>
    %401 = vector.extract_strided_slice %390 {offsets = [0, 256], sizes = [8, 128], strides = [1, 1]} : vector<8x384xf32> to vector<8x128xf32>
    %402 = arith.mulf %400, %401 : vector<8x128xf32>
    %403 = arith.addf %399, %402 : vector<8x128xf32>
    %404 = math.tanh %403 : vector<8x128xf32>
    %405 = vector.extract_strided_slice %398 {offsets = [0, 128], sizes = [8, 128], strides = [1, 1]} : vector<8x256xf32> to vector<8x128xf32>
    %cst_101 = arith.constant 1.000000e+00 : f32
    %406 = vector.broadcast %cst_101 : f32 to vector<8x128xf32>
    %407 = arith.subf %406, %405 : vector<8x128xf32>
    %408 = arith.mulf %407, %404 : vector<8x128xf32>
    %409 = vector.extract_strided_slice %398 {offsets = [0, 128], sizes = [8, 128], strides = [1, 1]} : vector<8x256xf32> to vector<8x128xf32>
    %410 = arith.mulf %409, %312 : vector<8x128xf32>
    %411 = arith.addf %408, %410 : vector<8x128xf32>
    %412 = vector.extract_strided_slice %411 {offsets = [0, 0], sizes = [8, 64], strides = [1, 1]} : vector<8x128xf32> to vector<8x64xf32>
    %cst_102 = arith.constant dense<0.000000e+00> : vector<8xf32>
    %413 = vector.multi_reduction <add>, %412, %cst_102 [1] : vector<8x64xf32> to vector<8xf32>
    %414 = vector.shape_cast %413 : vector<8xf32> to vector<8x1xf32>
    %cst_103 = arith.constant 6.400000e+01 : f32
    %415 = vector.broadcast %cst_103 : f32 to vector<8x1xf32>
    %416 = arith.divf %414, %415 : vector<8x1xf32>
    %417 = arith.mulf %412, %412 : vector<8x64xf32>
    %cst_104 = arith.constant dense<0.000000e+00> : vector<8xf32>
    %418 = vector.multi_reduction <add>, %417, %cst_104 [1] : vector<8x64xf32> to vector<8xf32>
    %419 = vector.shape_cast %418 : vector<8xf32> to vector<8x1xf32>
    %cst_105 = arith.constant 6.400000e+01 : f32
    %420 = vector.broadcast %cst_105 : f32 to vector<8x1xf32>
    %421 = arith.divf %419, %420 : vector<8x1xf32>
    %422 = arith.mulf %416, %416 : vector<8x1xf32>
    %423 = arith.subf %421, %422 : vector<8x1xf32>
    %424 = vector.broadcast %416 : vector<8x1xf32> to vector<8x64xf32>
    %425 = arith.subf %412, %424 : vector<8x64xf32>
    %cst_106 = arith.constant 9.99999974E-6 : f32
    %426 = vector.broadcast %cst_106 : f32 to vector<8x1xf32>
    %427 = arith.addf %423, %426 : vector<8x1xf32>
    %428 = math.rsqrt %427 : vector<8x1xf32>
    %429 = vector.broadcast %428 : vector<8x1xf32> to vector<8x64xf32>
    %430 = arith.mulf %425, %429 : vector<8x64xf32>
    %431 = vector.extract_strided_slice %411 {offsets = [0, 64], sizes = [8, 64], strides = [1, 1]} : vector<8x128xf32> to vector<8x64xf32>
    %cst_107 = arith.constant dense<0.000000e+00> : vector<8xf32>
    %432 = vector.multi_reduction <add>, %431, %cst_107 [1] : vector<8x64xf32> to vector<8xf32>
    %433 = vector.shape_cast %432 : vector<8xf32> to vector<8x1xf32>
    %cst_108 = arith.constant 6.400000e+01 : f32
    %434 = vector.broadcast %cst_108 : f32 to vector<8x1xf32>
    %435 = arith.divf %433, %434 : vector<8x1xf32>
    %436 = arith.mulf %431, %431 : vector<8x64xf32>
    %cst_109 = arith.constant dense<0.000000e+00> : vector<8xf32>
    %437 = vector.multi_reduction <add>, %436, %cst_109 [1] : vector<8x64xf32> to vector<8xf32>
    %438 = vector.shape_cast %437 : vector<8xf32> to vector<8x1xf32>
    %cst_110 = arith.constant 6.400000e+01 : f32
    %439 = vector.broadcast %cst_110 : f32 to vector<8x1xf32>
    %440 = arith.divf %438, %439 : vector<8x1xf32>
    %441 = arith.mulf %435, %435 : vector<8x1xf32>
    %442 = arith.subf %440, %441 : vector<8x1xf32>
    %443 = vector.broadcast %435 : vector<8x1xf32> to vector<8x64xf32>
    %444 = arith.subf %431, %443 : vector<8x64xf32>
    %cst_111 = arith.constant 9.99999974E-6 : f32
    %445 = vector.broadcast %cst_111 : f32 to vector<8x1xf32>
    %446 = arith.addf %442, %445 : vector<8x1xf32>
    %447 = math.rsqrt %446 : vector<8x1xf32>
    %448 = vector.broadcast %447 : vector<8x1xf32> to vector<8x64xf32>
    %449 = arith.mulf %444, %448 : vector<8x64xf32>
    %450 = tpu.concatenate %430, %449 in 1 : vector<8x64xf32>, vector<8x64xf32> -> vector<8x128xf32>
    %451 = arith.mulf %450, %21 : vector<8x128xf32>
    %452 = arith.addf %451, %24 : vector<8x128xf32>
    %c3_i32 = arith.constant 3 : i32
    %c8_i32_112 = arith.constant 8 : i32
    %453 = arith.muli %c3_i32, %c8_i32_112 : i32
    %454 = tpu.assume_multiple %453, 8 : i32
    %455 = arith.index_cast %454 : i32 to index
    %c0_113 = arith.constant 0 : index
    %456 = vector.load %arg7[%455, %c0_113] : memref<64x768xf32, #tpu.memory_space<vmem>>, vector<8x768xf32>
    %457 = arith.truncf %382 : vector<8x256xf32> to vector<8x256xbf16>
    %c0_114 = arith.constant 0 : index
    %c0_115 = arith.constant 0 : index
    %458 = vector.load %arg2[%c0_114, %c0_115] : memref<256x768xbf16, #tpu.memory_space<vmem>>, vector<256x768xbf16>
    %cst_116 = arith.constant dense<0.000000e+00> : vector<8x768xf32>
    %459 = tpu.matmul %457, %458, %cst_116 {dimension_numbers = #tpu.dot_dimension_numbers<[1], [0], [0], [1], [0, 0, 1, 1], [], []>} : vector<8x256xbf16>, vector<256x768xbf16>, vector<8x768xf32> -> vector<8x768xf32>
    %460 = vector.extract_strided_slice %456 {offsets = [0, 0], sizes = [8, 512], strides = [1, 1]} : vector<8x768xf32> to vector<8x512xf32>
    %461 = vector.extract_strided_slice %459 {offsets = [0, 0], sizes = [8, 512], strides = [1, 1]} : vector<8x768xf32> to vector<8x512xf32>
    %462 = arith.addf %460, %461 : vector<8x512xf32>
    %463 = arith.negf %462 : vector<8x512xf32>
    %464 = math.exp %463 : vector<8x512xf32>
    %cst_117 = arith.constant 1.000000e+00 : f32
    %465 = vector.broadcast %cst_117 : f32 to vector<8x512xf32>
    %466 = arith.addf %465, %464 : vector<8x512xf32>
    %467 = arith.divf %465, %466 : vector<8x512xf32>
    %468 = vector.extract_strided_slice %456 {offsets = [0, 512], sizes = [8, 256], strides = [1, 1]} : vector<8x768xf32> to vector<8x256xf32>
    %469 = vector.extract_strided_slice %467 {offsets = [0, 0], sizes = [8, 256], strides = [1, 1]} : vector<8x512xf32> to vector<8x256xf32>
    %470 = vector.extract_strided_slice %459 {offsets = [0, 512], sizes = [8, 256], strides = [1, 1]} : vector<8x768xf32> to vector<8x256xf32>
    %471 = arith.addf %470, %12 : vector<8x256xf32>
    %472 = arith.mulf %469, %471 : vector<8x256xf32>
    %473 = arith.addf %468, %472 : vector<8x256xf32>
    %474 = math.tanh %473 : vector<8x256xf32>
    %475 = vector.extract_strided_slice %467 {offsets = [0, 256], sizes = [8, 256], strides = [1, 1]} : vector<8x512xf32> to vector<8x256xf32>
    %cst_118 = arith.constant 1.000000e+00 : f32
    %476 = vector.broadcast %cst_118 : f32 to vector<8x256xf32>
    %477 = arith.subf %476, %475 : vector<8x256xf32>
    %478 = arith.mulf %477, %474 : vector<8x256xf32>
    %479 = vector.extract_strided_slice %467 {offsets = [0, 256], sizes = [8, 256], strides = [1, 1]} : vector<8x512xf32> to vector<8x256xf32>
    %480 = arith.mulf %479, %382 : vector<8x256xf32>
    %481 = arith.addf %478, %480 : vector<8x256xf32>
    %482 = vector.extract_strided_slice %481 {offsets = [0, 0], sizes = [8, 128], strides = [1, 1]} : vector<8x256xf32> to vector<8x128xf32>
    %cst_119 = arith.constant dense<0.000000e+00> : vector<8xf32>
    %483 = vector.multi_reduction <add>, %482, %cst_119 [1] : vector<8x128xf32> to vector<8xf32>
    %484 = vector.shape_cast %483 : vector<8xf32> to vector<8x1xf32>
    %cst_120 = arith.constant 1.280000e+02 : f32
    %485 = vector.broadcast %cst_120 : f32 to vector<8x1xf32>
    %486 = arith.divf %484, %485 : vector<8x1xf32>
    %487 = arith.mulf %482, %482 : vector<8x128xf32>
    %cst_121 = arith.constant dense<0.000000e+00> : vector<8xf32>
    %488 = vector.multi_reduction <add>, %487, %cst_121 [1] : vector<8x128xf32> to vector<8xf32>
    %489 = vector.shape_cast %488 : vector<8xf32> to vector<8x1xf32>
    %cst_122 = arith.constant 1.280000e+02 : f32
    %490 = vector.broadcast %cst_122 : f32 to vector<8x1xf32>
    %491 = arith.divf %489, %490 : vector<8x1xf32>
    %492 = arith.mulf %486, %486 : vector<8x1xf32>
    %493 = arith.subf %491, %492 : vector<8x1xf32>
    %494 = vector.broadcast %486 : vector<8x1xf32> to vector<8x128xf32>
    %495 = arith.subf %482, %494 : vector<8x128xf32>
    %cst_123 = arith.constant 9.99999974E-6 : f32
    %496 = vector.broadcast %cst_123 : f32 to vector<8x1xf32>
    %497 = arith.addf %493, %496 : vector<8x1xf32>
    %498 = math.rsqrt %497 : vector<8x1xf32>
    %499 = vector.broadcast %498 : vector<8x1xf32> to vector<8x128xf32>
    %500 = arith.mulf %495, %499 : vector<8x128xf32>
    %501 = vector.extract_strided_slice %481 {offsets = [0, 128], sizes = [8, 128], strides = [1, 1]} : vector<8x256xf32> to vector<8x128xf32>
    %cst_124 = arith.constant dense<0.000000e+00> : vector<8xf32>
    %502 = vector.multi_reduction <add>, %501, %cst_124 [1] : vector<8x128xf32> to vector<8xf32>
    %503 = vector.shape_cast %502 : vector<8xf32> to vector<8x1xf32>
    %cst_125 = arith.constant 1.280000e+02 : f32
    %504 = vector.broadcast %cst_125 : f32 to vector<8x1xf32>
    %505 = arith.divf %503, %504 : vector<8x1xf32>
    %506 = arith.mulf %501, %501 : vector<8x128xf32>
    %cst_126 = arith.constant dense<0.000000e+00> : vector<8xf32>
    %507 = vector.multi_reduction <add>, %506, %cst_126 [1] : vector<8x128xf32> to vector<8xf32>
    %508 = vector.shape_cast %507 : vector<8xf32> to vector<8x1xf32>
    %cst_127 = arith.constant 1.280000e+02 : f32
    %509 = vector.broadcast %cst_127 : f32 to vector<8x1xf32>
    %510 = arith.divf %508, %509 : vector<8x1xf32>
    %511 = arith.mulf %505, %505 : vector<8x1xf32>
    %512 = arith.subf %510, %511 : vector<8x1xf32>
    %513 = vector.broadcast %505 : vector<8x1xf32> to vector<8x128xf32>
    %514 = arith.subf %501, %513 : vector<8x128xf32>
    %cst_128 = arith.constant 9.99999974E-6 : f32
    %515 = vector.broadcast %cst_128 : f32 to vector<8x1xf32>
    %516 = arith.addf %512, %515 : vector<8x1xf32>
    %517 = math.rsqrt %516 : vector<8x1xf32>
    %518 = vector.broadcast %517 : vector<8x1xf32> to vector<8x128xf32>
    %519 = arith.mulf %514, %518 : vector<8x128xf32>
    %520 = tpu.concatenate %500, %519 in 1 : vector<8x128xf32>, vector<8x128xf32> -> vector<8x256xf32>
    %521 = arith.mulf %520, %15 : vector<8x256xf32>
    %522 = arith.addf %521, %18 : vector<8x256xf32>
    %523 = arith.truncf %522 : vector<8x256xf32> to vector<8x256xbf16>
    %524 = arith.truncf %452 : vector<8x128xf32> to vector<8x128xbf16>
    %525 = tpu.concatenate %523, %524 in 1 : vector<8x256xbf16>, vector<8x128xbf16> -> vector<8x384xbf16>
    %c0_129 = arith.constant 0 : index
    %c0_130 = arith.constant 0 : index
    %526 = vector.load %arg3[%c0_129, %c0_130] : memref<384x768xbf16, #tpu.memory_space<vmem>>, vector<384x768xbf16>
    %cst_131 = arith.constant dense<0.000000e+00> : vector<8x768xf32>
    %527 = tpu.matmul %525, %526, %cst_131 {dimension_numbers = #tpu.dot_dimension_numbers<[1], [0], [0], [1], [0, 0, 1, 1], [], []>} : vector<8x384xbf16>, vector<384x768xbf16>, vector<8x768xf32> -> vector<8x768xf32>
    %528 = arith.addf %527, %9 : vector<8x768xf32>
    %529 = vector.extract_strided_slice %528 {offsets = [0, 0], sizes = [8, 384], strides = [1, 1]} : vector<8x768xf32> to vector<8x384xf32>
    %530 = vector.extract_strided_slice %528 {offsets = [0, 384], sizes = [8, 384], strides = [1, 1]} : vector<8x768xf32> to vector<8x384xf32>
    %531 = vector.extract_strided_slice %529 {offsets = [0, 0], sizes = [8, 256], strides = [1, 1]} : vector<8x384xf32> to vector<8x256xf32>
    %532 = vector.extract_strided_slice %530 {offsets = [0, 0], sizes = [8, 256], strides = [1, 1]} : vector<8x384xf32> to vector<8x256xf32>
    %533 = arith.addf %531, %532 : vector<8x256xf32>
    %534 = arith.negf %533 : vector<8x256xf32>
    %535 = math.exp %534 : vector<8x256xf32>
    %cst_132 = arith.constant 1.000000e+00 : f32
    %536 = vector.broadcast %cst_132 : f32 to vector<8x256xf32>
    %537 = arith.addf %536, %535 : vector<8x256xf32>
    %538 = arith.divf %536, %537 : vector<8x256xf32>
    %539 = vector.extract_strided_slice %529 {offsets = [0, 256], sizes = [8, 128], strides = [1, 1]} : vector<8x384xf32> to vector<8x128xf32>
    %540 = vector.extract_strided_slice %538 {offsets = [0, 0], sizes = [8, 128], strides = [1, 1]} : vector<8x256xf32> to vector<8x128xf32>
    %541 = vector.extract_strided_slice %530 {offsets = [0, 256], sizes = [8, 128], strides = [1, 1]} : vector<8x384xf32> to vector<8x128xf32>
    %542 = arith.mulf %540, %541 : vector<8x128xf32>
    %543 = arith.addf %539, %542 : vector<8x128xf32>
    %544 = math.tanh %543 : vector<8x128xf32>
    %545 = vector.extract_strided_slice %538 {offsets = [0, 128], sizes = [8, 128], strides = [1, 1]} : vector<8x256xf32> to vector<8x128xf32>
    %cst_133 = arith.constant 1.000000e+00 : f32
    %546 = vector.broadcast %cst_133 : f32 to vector<8x128xf32>
    %547 = arith.subf %546, %545 : vector<8x128xf32>
    %548 = arith.mulf %547, %544 : vector<8x128xf32>
    %549 = vector.extract_strided_slice %538 {offsets = [0, 128], sizes = [8, 128], strides = [1, 1]} : vector<8x256xf32> to vector<8x128xf32>
    %550 = arith.mulf %549, %452 : vector<8x128xf32>
    %551 = arith.addf %548, %550 : vector<8x128xf32>
    %552 = vector.extract_strided_slice %551 {offsets = [0, 0], sizes = [8, 64], strides = [1, 1]} : vector<8x128xf32> to vector<8x64xf32>
    %cst_134 = arith.constant dense<0.000000e+00> : vector<8xf32>
    %553 = vector.multi_reduction <add>, %552, %cst_134 [1] : vector<8x64xf32> to vector<8xf32>
    %554 = vector.shape_cast %553 : vector<8xf32> to vector<8x1xf32>
    %cst_135 = arith.constant 6.400000e+01 : f32
    %555 = vector.broadcast %cst_135 : f32 to vector<8x1xf32>
    %556 = arith.divf %554, %555 : vector<8x1xf32>
    %557 = arith.mulf %552, %552 : vector<8x64xf32>
    %cst_136 = arith.constant dense<0.000000e+00> : vector<8xf32>
    %558 = vector.multi_reduction <add>, %557, %cst_136 [1] : vector<8x64xf32> to vector<8xf32>
    %559 = vector.shape_cast %558 : vector<8xf32> to vector<8x1xf32>
    %cst_137 = arith.constant 6.400000e+01 : f32
    %560 = vector.broadcast %cst_137 : f32 to vector<8x1xf32>
    %561 = arith.divf %559, %560 : vector<8x1xf32>
    %562 = arith.mulf %556, %556 : vector<8x1xf32>
    %563 = arith.subf %561, %562 : vector<8x1xf32>
    %564 = vector.broadcast %556 : vector<8x1xf32> to vector<8x64xf32>
    %565 = arith.subf %552, %564 : vector<8x64xf32>
    %cst_138 = arith.constant 9.99999974E-6 : f32
    %566 = vector.broadcast %cst_138 : f32 to vector<8x1xf32>
    %567 = arith.addf %563, %566 : vector<8x1xf32>
    %568 = math.rsqrt %567 : vector<8x1xf32>
    %569 = vector.broadcast %568 : vector<8x1xf32> to vector<8x64xf32>
    %570 = arith.mulf %565, %569 : vector<8x64xf32>
    %571 = vector.extract_strided_slice %551 {offsets = [0, 64], sizes = [8, 64], strides = [1, 1]} : vector<8x128xf32> to vector<8x64xf32>
    %cst_139 = arith.constant dense<0.000000e+00> : vector<8xf32>
    %572 = vector.multi_reduction <add>, %571, %cst_139 [1] : vector<8x64xf32> to vector<8xf32>
    %573 = vector.shape_cast %572 : vector<8xf32> to vector<8x1xf32>
    %cst_140 = arith.constant 6.400000e+01 : f32
    %574 = vector.broadcast %cst_140 : f32 to vector<8x1xf32>
    %575 = arith.divf %573, %574 : vector<8x1xf32>
    %576 = arith.mulf %571, %571 : vector<8x64xf32>
    %cst_141 = arith.constant dense<0.000000e+00> : vector<8xf32>
    %577 = vector.multi_reduction <add>, %576, %cst_141 [1] : vector<8x64xf32> to vector<8xf32>
    %578 = vector.shape_cast %577 : vector<8xf32> to vector<8x1xf32>
    %cst_142 = arith.constant 6.400000e+01 : f32
    %579 = vector.broadcast %cst_142 : f32 to vector<8x1xf32>
    %580 = arith.divf %578, %579 : vector<8x1xf32>
    %581 = arith.mulf %575, %575 : vector<8x1xf32>
    %582 = arith.subf %580, %581 : vector<8x1xf32>
    %583 = vector.broadcast %575 : vector<8x1xf32> to vector<8x64xf32>
    %584 = arith.subf %571, %583 : vector<8x64xf32>
    %cst_143 = arith.constant 9.99999974E-6 : f32
    %585 = vector.broadcast %cst_143 : f32 to vector<8x1xf32>
    %586 = arith.addf %582, %585 : vector<8x1xf32>
    %587 = math.rsqrt %586 : vector<8x1xf32>
    %588 = vector.broadcast %587 : vector<8x1xf32> to vector<8x64xf32>
    %589 = arith.mulf %584, %588 : vector<8x64xf32>
    %590 = tpu.concatenate %570, %589 in 1 : vector<8x64xf32>, vector<8x64xf32> -> vector<8x128xf32>
    %591 = arith.mulf %590, %21 : vector<8x128xf32>
    %592 = arith.addf %591, %24 : vector<8x128xf32>
    %c4_i32 = arith.constant 4 : i32
    %c8_i32_144 = arith.constant 8 : i32
    %593 = arith.muli %c4_i32, %c8_i32_144 : i32
    %594 = tpu.assume_multiple %593, 8 : i32
    %595 = arith.index_cast %594 : i32 to index
    %c0_145 = arith.constant 0 : index
    %596 = vector.load %arg7[%595, %c0_145] : memref<64x768xf32, #tpu.memory_space<vmem>>, vector<8x768xf32>
    %597 = arith.truncf %522 : vector<8x256xf32> to vector<8x256xbf16>
    %c0_146 = arith.constant 0 : index
    %c0_147 = arith.constant 0 : index
    %598 = vector.load %arg2[%c0_146, %c0_147] : memref<256x768xbf16, #tpu.memory_space<vmem>>, vector<256x768xbf16>
    %cst_148 = arith.constant dense<0.000000e+00> : vector<8x768xf32>
    %599 = tpu.matmul %597, %598, %cst_148 {dimension_numbers = #tpu.dot_dimension_numbers<[1], [0], [0], [1], [0, 0, 1, 1], [], []>} : vector<8x256xbf16>, vector<256x768xbf16>, vector<8x768xf32> -> vector<8x768xf32>
    %600 = vector.extract_strided_slice %596 {offsets = [0, 0], sizes = [8, 512], strides = [1, 1]} : vector<8x768xf32> to vector<8x512xf32>
    %601 = vector.extract_strided_slice %599 {offsets = [0, 0], sizes = [8, 512], strides = [1, 1]} : vector<8x768xf32> to vector<8x512xf32>
    %602 = arith.addf %600, %601 : vector<8x512xf32>
    %603 = arith.negf %602 : vector<8x512xf32>
    %604 = math.exp %603 : vector<8x512xf32>
    %cst_149 = arith.constant 1.000000e+00 : f32
    %605 = vector.broadcast %cst_149 : f32 to vector<8x512xf32>
    %606 = arith.addf %605, %604 : vector<8x512xf32>
    %607 = arith.divf %605, %606 : vector<8x512xf32>
    %608 = vector.extract_strided_slice %596 {offsets = [0, 512], sizes = [8, 256], strides = [1, 1]} : vector<8x768xf32> to vector<8x256xf32>
    %609 = vector.extract_strided_slice %607 {offsets = [0, 0], sizes = [8, 256], strides = [1, 1]} : vector<8x512xf32> to vector<8x256xf32>
    %610 = vector.extract_strided_slice %599 {offsets = [0, 512], sizes = [8, 256], strides = [1, 1]} : vector<8x768xf32> to vector<8x256xf32>
    %611 = arith.addf %610, %12 : vector<8x256xf32>
    %612 = arith.mulf %609, %611 : vector<8x256xf32>
    %613 = arith.addf %608, %612 : vector<8x256xf32>
    %614 = math.tanh %613 : vector<8x256xf32>
    %615 = vector.extract_strided_slice %607 {offsets = [0, 256], sizes = [8, 256], strides = [1, 1]} : vector<8x512xf32> to vector<8x256xf32>
    %cst_150 = arith.constant 1.000000e+00 : f32
    %616 = vector.broadcast %cst_150 : f32 to vector<8x256xf32>
    %617 = arith.subf %616, %615 : vector<8x256xf32>
    %618 = arith.mulf %617, %614 : vector<8x256xf32>
    %619 = vector.extract_strided_slice %607 {offsets = [0, 256], sizes = [8, 256], strides = [1, 1]} : vector<8x512xf32> to vector<8x256xf32>
    %620 = arith.mulf %619, %522 : vector<8x256xf32>
    %621 = arith.addf %618, %620 : vector<8x256xf32>
    %622 = vector.extract_strided_slice %621 {offsets = [0, 0], sizes = [8, 128], strides = [1, 1]} : vector<8x256xf32> to vector<8x128xf32>
    %cst_151 = arith.constant dense<0.000000e+00> : vector<8xf32>
    %623 = vector.multi_reduction <add>, %622, %cst_151 [1] : vector<8x128xf32> to vector<8xf32>
    %624 = vector.shape_cast %623 : vector<8xf32> to vector<8x1xf32>
    %cst_152 = arith.constant 1.280000e+02 : f32
    %625 = vector.broadcast %cst_152 : f32 to vector<8x1xf32>
    %626 = arith.divf %624, %625 : vector<8x1xf32>
    %627 = arith.mulf %622, %622 : vector<8x128xf32>
    %cst_153 = arith.constant dense<0.000000e+00> : vector<8xf32>
    %628 = vector.multi_reduction <add>, %627, %cst_153 [1] : vector<8x128xf32> to vector<8xf32>
    %629 = vector.shape_cast %628 : vector<8xf32> to vector<8x1xf32>
    %cst_154 = arith.constant 1.280000e+02 : f32
    %630 = vector.broadcast %cst_154 : f32 to vector<8x1xf32>
    %631 = arith.divf %629, %630 : vector<8x1xf32>
    %632 = arith.mulf %626, %626 : vector<8x1xf32>
    %633 = arith.subf %631, %632 : vector<8x1xf32>
    %634 = vector.broadcast %626 : vector<8x1xf32> to vector<8x128xf32>
    %635 = arith.subf %622, %634 : vector<8x128xf32>
    %cst_155 = arith.constant 9.99999974E-6 : f32
    %636 = vector.broadcast %cst_155 : f32 to vector<8x1xf32>
    %637 = arith.addf %633, %636 : vector<8x1xf32>
    %638 = math.rsqrt %637 : vector<8x1xf32>
    %639 = vector.broadcast %638 : vector<8x1xf32> to vector<8x128xf32>
    %640 = arith.mulf %635, %639 : vector<8x128xf32>
    %641 = vector.extract_strided_slice %621 {offsets = [0, 128], sizes = [8, 128], strides = [1, 1]} : vector<8x256xf32> to vector<8x128xf32>
    %cst_156 = arith.constant dense<0.000000e+00> : vector<8xf32>
    %642 = vector.multi_reduction <add>, %641, %cst_156 [1] : vector<8x128xf32> to vector<8xf32>
    %643 = vector.shape_cast %642 : vector<8xf32> to vector<8x1xf32>
    %cst_157 = arith.constant 1.280000e+02 : f32
    %644 = vector.broadcast %cst_157 : f32 to vector<8x1xf32>
    %645 = arith.divf %643, %644 : vector<8x1xf32>
    %646 = arith.mulf %641, %641 : vector<8x128xf32>
    %cst_158 = arith.constant dense<0.000000e+00> : vector<8xf32>
    %647 = vector.multi_reduction <add>, %646, %cst_158 [1] : vector<8x128xf32> to vector<8xf32>
    %648 = vector.shape_cast %647 : vector<8xf32> to vector<8x1xf32>
    %cst_159 = arith.constant 1.280000e+02 : f32
    %649 = vector.broadcast %cst_159 : f32 to vector<8x1xf32>
    %650 = arith.divf %648, %649 : vector<8x1xf32>
    %651 = arith.mulf %645, %645 : vector<8x1xf32>
    %652 = arith.subf %650, %651 : vector<8x1xf32>
    %653 = vector.broadcast %645 : vector<8x1xf32> to vector<8x128xf32>
    %654 = arith.subf %641, %653 : vector<8x128xf32>
    %cst_160 = arith.constant 9.99999974E-6 : f32
    %655 = vector.broadcast %cst_160 : f32 to vector<8x1xf32>
    %656 = arith.addf %652, %655 : vector<8x1xf32>
    %657 = math.rsqrt %656 : vector<8x1xf32>
    %658 = vector.broadcast %657 : vector<8x1xf32> to vector<8x128xf32>
    %659 = arith.mulf %654, %658 : vector<8x128xf32>
    %660 = tpu.concatenate %640, %659 in 1 : vector<8x128xf32>, vector<8x128xf32> -> vector<8x256xf32>
    %661 = arith.mulf %660, %15 : vector<8x256xf32>
    %662 = arith.addf %661, %18 : vector<8x256xf32>
    %663 = arith.truncf %662 : vector<8x256xf32> to vector<8x256xbf16>
    %664 = arith.truncf %592 : vector<8x128xf32> to vector<8x128xbf16>
    %665 = tpu.concatenate %663, %664 in 1 : vector<8x256xbf16>, vector<8x128xbf16> -> vector<8x384xbf16>
    %c0_161 = arith.constant 0 : index
    %c0_162 = arith.constant 0 : index
    %666 = vector.load %arg3[%c0_161, %c0_162] : memref<384x768xbf16, #tpu.memory_space<vmem>>, vector<384x768xbf16>
    %cst_163 = arith.constant dense<0.000000e+00> : vector<8x768xf32>
    %667 = tpu.matmul %665, %666, %cst_163 {dimension_numbers = #tpu.dot_dimension_numbers<[1], [0], [0], [1], [0, 0, 1, 1], [], []>} : vector<8x384xbf16>, vector<384x768xbf16>, vector<8x768xf32> -> vector<8x768xf32>
    %668 = arith.addf %667, %9 : vector<8x768xf32>
    %669 = vector.extract_strided_slice %668 {offsets = [0, 0], sizes = [8, 384], strides = [1, 1]} : vector<8x768xf32> to vector<8x384xf32>
    %670 = vector.extract_strided_slice %668 {offsets = [0, 384], sizes = [8, 384], strides = [1, 1]} : vector<8x768xf32> to vector<8x384xf32>
    %671 = vector.extract_strided_slice %669 {offsets = [0, 0], sizes = [8, 256], strides = [1, 1]} : vector<8x384xf32> to vector<8x256xf32>
    %672 = vector.extract_strided_slice %670 {offsets = [0, 0], sizes = [8, 256], strides = [1, 1]} : vector<8x384xf32> to vector<8x256xf32>
    %673 = arith.addf %671, %672 : vector<8x256xf32>
    %674 = arith.negf %673 : vector<8x256xf32>
    %675 = math.exp %674 : vector<8x256xf32>
    %cst_164 = arith.constant 1.000000e+00 : f32
    %676 = vector.broadcast %cst_164 : f32 to vector<8x256xf32>
    %677 = arith.addf %676, %675 : vector<8x256xf32>
    %678 = arith.divf %676, %677 : vector<8x256xf32>
    %679 = vector.extract_strided_slice %669 {offsets = [0, 256], sizes = [8, 128], strides = [1, 1]} : vector<8x384xf32> to vector<8x128xf32>
    %680 = vector.extract_strided_slice %678 {offsets = [0, 0], sizes = [8, 128], strides = [1, 1]} : vector<8x256xf32> to vector<8x128xf32>
    %681 = vector.extract_strided_slice %670 {offsets = [0, 256], sizes = [8, 128], strides = [1, 1]} : vector<8x384xf32> to vector<8x128xf32>
    %682 = arith.mulf %680, %681 : vector<8x128xf32>
    %683 = arith.addf %679, %682 : vector<8x128xf32>
    %684 = math.tanh %683 : vector<8x128xf32>
    %685 = vector.extract_strided_slice %678 {offsets = [0, 128], sizes = [8, 128], strides = [1, 1]} : vector<8x256xf32> to vector<8x128xf32>
    %cst_165 = arith.constant 1.000000e+00 : f32
    %686 = vector.broadcast %cst_165 : f32 to vector<8x128xf32>
    %687 = arith.subf %686, %685 : vector<8x128xf32>
    %688 = arith.mulf %687, %684 : vector<8x128xf32>
    %689 = vector.extract_strided_slice %678 {offsets = [0, 128], sizes = [8, 128], strides = [1, 1]} : vector<8x256xf32> to vector<8x128xf32>
    %690 = arith.mulf %689, %592 : vector<8x128xf32>
    %691 = arith.addf %688, %690 : vector<8x128xf32>
    %692 = vector.extract_strided_slice %691 {offsets = [0, 0], sizes = [8, 64], strides = [1, 1]} : vector<8x128xf32> to vector<8x64xf32>
    %cst_166 = arith.constant dense<0.000000e+00> : vector<8xf32>
    %693 = vector.multi_reduction <add>, %692, %cst_166 [1] : vector<8x64xf32> to vector<8xf32>
    %694 = vector.shape_cast %693 : vector<8xf32> to vector<8x1xf32>
    %cst_167 = arith.constant 6.400000e+01 : f32
    %695 = vector.broadcast %cst_167 : f32 to vector<8x1xf32>
    %696 = arith.divf %694, %695 : vector<8x1xf32>
    %697 = arith.mulf %692, %692 : vector<8x64xf32>
    %cst_168 = arith.constant dense<0.000000e+00> : vector<8xf32>
    %698 = vector.multi_reduction <add>, %697, %cst_168 [1] : vector<8x64xf32> to vector<8xf32>
    %699 = vector.shape_cast %698 : vector<8xf32> to vector<8x1xf32>
    %cst_169 = arith.constant 6.400000e+01 : f32
    %700 = vector.broadcast %cst_169 : f32 to vector<8x1xf32>
    %701 = arith.divf %699, %700 : vector<8x1xf32>
    %702 = arith.mulf %696, %696 : vector<8x1xf32>
    %703 = arith.subf %701, %702 : vector<8x1xf32>
    %704 = vector.broadcast %696 : vector<8x1xf32> to vector<8x64xf32>
    %705 = arith.subf %692, %704 : vector<8x64xf32>
    %cst_170 = arith.constant 9.99999974E-6 : f32
    %706 = vector.broadcast %cst_170 : f32 to vector<8x1xf32>
    %707 = arith.addf %703, %706 : vector<8x1xf32>
    %708 = math.rsqrt %707 : vector<8x1xf32>
    %709 = vector.broadcast %708 : vector<8x1xf32> to vector<8x64xf32>
    %710 = arith.mulf %705, %709 : vector<8x64xf32>
    %711 = vector.extract_strided_slice %691 {offsets = [0, 64], sizes = [8, 64], strides = [1, 1]} : vector<8x128xf32> to vector<8x64xf32>
    %cst_171 = arith.constant dense<0.000000e+00> : vector<8xf32>
    %712 = vector.multi_reduction <add>, %711, %cst_171 [1] : vector<8x64xf32> to vector<8xf32>
    %713 = vector.shape_cast %712 : vector<8xf32> to vector<8x1xf32>
    %cst_172 = arith.constant 6.400000e+01 : f32
    %714 = vector.broadcast %cst_172 : f32 to vector<8x1xf32>
    %715 = arith.divf %713, %714 : vector<8x1xf32>
    %716 = arith.mulf %711, %711 : vector<8x64xf32>
    %cst_173 = arith.constant dense<0.000000e+00> : vector<8xf32>
    %717 = vector.multi_reduction <add>, %716, %cst_173 [1] : vector<8x64xf32> to vector<8xf32>
    %718 = vector.shape_cast %717 : vector<8xf32> to vector<8x1xf32>
    %cst_174 = arith.constant 6.400000e+01 : f32
    %719 = vector.broadcast %cst_174 : f32 to vector<8x1xf32>
    %720 = arith.divf %718, %719 : vector<8x1xf32>
    %721 = arith.mulf %715, %715 : vector<8x1xf32>
    %722 = arith.subf %720, %721 : vector<8x1xf32>
    %723 = vector.broadcast %715 : vector<8x1xf32> to vector<8x64xf32>
    %724 = arith.subf %711, %723 : vector<8x64xf32>
    %cst_175 = arith.constant 9.99999974E-6 : f32
    %725 = vector.broadcast %cst_175 : f32 to vector<8x1xf32>
    %726 = arith.addf %722, %725 : vector<8x1xf32>
    %727 = math.rsqrt %726 : vector<8x1xf32>
    %728 = vector.broadcast %727 : vector<8x1xf32> to vector<8x64xf32>
    %729 = arith.mulf %724, %728 : vector<8x64xf32>
    %730 = tpu.concatenate %710, %729 in 1 : vector<8x64xf32>, vector<8x64xf32> -> vector<8x128xf32>
    %731 = arith.mulf %730, %21 : vector<8x128xf32>
    %732 = arith.addf %731, %24 : vector<8x128xf32>
    %c5_i32 = arith.constant 5 : i32
    %c8_i32_176 = arith.constant 8 : i32
    %733 = arith.muli %c5_i32, %c8_i32_176 : i32
    %734 = tpu.assume_multiple %733, 8 : i32
    %735 = arith.index_cast %734 : i32 to index
    %c0_177 = arith.constant 0 : index
    %736 = vector.load %arg7[%735, %c0_177] : memref<64x768xf32, #tpu.memory_space<vmem>>, vector<8x768xf32>
    %737 = arith.truncf %662 : vector<8x256xf32> to vector<8x256xbf16>
    %c0_178 = arith.constant 0 : index
    %c0_179 = arith.constant 0 : index
    %738 = vector.load %arg2[%c0_178, %c0_179] : memref<256x768xbf16, #tpu.memory_space<vmem>>, vector<256x768xbf16>
    %cst_180 = arith.constant dense<0.000000e+00> : vector<8x768xf32>
    %739 = tpu.matmul %737, %738, %cst_180 {dimension_numbers = #tpu.dot_dimension_numbers<[1], [0], [0], [1], [0, 0, 1, 1], [], []>} : vector<8x256xbf16>, vector<256x768xbf16>, vector<8x768xf32> -> vector<8x768xf32>
    %740 = vector.extract_strided_slice %736 {offsets = [0, 0], sizes = [8, 512], strides = [1, 1]} : vector<8x768xf32> to vector<8x512xf32>
    %741 = vector.extract_strided_slice %739 {offsets = [0, 0], sizes = [8, 512], strides = [1, 1]} : vector<8x768xf32> to vector<8x512xf32>
    %742 = arith.addf %740, %741 : vector<8x512xf32>
    %743 = arith.negf %742 : vector<8x512xf32>
    %744 = math.exp %743 : vector<8x512xf32>
    %cst_181 = arith.constant 1.000000e+00 : f32
    %745 = vector.broadcast %cst_181 : f32 to vector<8x512xf32>
    %746 = arith.addf %745, %744 : vector<8x512xf32>
    %747 = arith.divf %745, %746 : vector<8x512xf32>
    %748 = vector.extract_strided_slice %736 {offsets = [0, 512], sizes = [8, 256], strides = [1, 1]} : vector<8x768xf32> to vector<8x256xf32>
    %749 = vector.extract_strided_slice %747 {offsets = [0, 0], sizes = [8, 256], strides = [1, 1]} : vector<8x512xf32> to vector<8x256xf32>
    %750 = vector.extract_strided_slice %739 {offsets = [0, 512], sizes = [8, 256], strides = [1, 1]} : vector<8x768xf32> to vector<8x256xf32>
    %751 = arith.addf %750, %12 : vector<8x256xf32>
    %752 = arith.mulf %749, %751 : vector<8x256xf32>
    %753 = arith.addf %748, %752 : vector<8x256xf32>
    %754 = math.tanh %753 : vector<8x256xf32>
    %755 = vector.extract_strided_slice %747 {offsets = [0, 256], sizes = [8, 256], strides = [1, 1]} : vector<8x512xf32> to vector<8x256xf32>
    %cst_182 = arith.constant 1.000000e+00 : f32
    %756 = vector.broadcast %cst_182 : f32 to vector<8x256xf32>
    %757 = arith.subf %756, %755 : vector<8x256xf32>
    %758 = arith.mulf %757, %754 : vector<8x256xf32>
    %759 = vector.extract_strided_slice %747 {offsets = [0, 256], sizes = [8, 256], strides = [1, 1]} : vector<8x512xf32> to vector<8x256xf32>
    %760 = arith.mulf %759, %662 : vector<8x256xf32>
    %761 = arith.addf %758, %760 : vector<8x256xf32>
    %762 = vector.extract_strided_slice %761 {offsets = [0, 0], sizes = [8, 128], strides = [1, 1]} : vector<8x256xf32> to vector<8x128xf32>
    %cst_183 = arith.constant dense<0.000000e+00> : vector<8xf32>
    %763 = vector.multi_reduction <add>, %762, %cst_183 [1] : vector<8x128xf32> to vector<8xf32>
    %764 = vector.shape_cast %763 : vector<8xf32> to vector<8x1xf32>
    %cst_184 = arith.constant 1.280000e+02 : f32
    %765 = vector.broadcast %cst_184 : f32 to vector<8x1xf32>
    %766 = arith.divf %764, %765 : vector<8x1xf32>
    %767 = arith.mulf %762, %762 : vector<8x128xf32>
    %cst_185 = arith.constant dense<0.000000e+00> : vector<8xf32>
    %768 = vector.multi_reduction <add>, %767, %cst_185 [1] : vector<8x128xf32> to vector<8xf32>
    %769 = vector.shape_cast %768 : vector<8xf32> to vector<8x1xf32>
    %cst_186 = arith.constant 1.280000e+02 : f32
    %770 = vector.broadcast %cst_186 : f32 to vector<8x1xf32>
    %771 = arith.divf %769, %770 : vector<8x1xf32>
    %772 = arith.mulf %766, %766 : vector<8x1xf32>
    %773 = arith.subf %771, %772 : vector<8x1xf32>
    %774 = vector.broadcast %766 : vector<8x1xf32> to vector<8x128xf32>
    %775 = arith.subf %762, %774 : vector<8x128xf32>
    %cst_187 = arith.constant 9.99999974E-6 : f32
    %776 = vector.broadcast %cst_187 : f32 to vector<8x1xf32>
    %777 = arith.addf %773, %776 : vector<8x1xf32>
    %778 = math.rsqrt %777 : vector<8x1xf32>
    %779 = vector.broadcast %778 : vector<8x1xf32> to vector<8x128xf32>
    %780 = arith.mulf %775, %779 : vector<8x128xf32>
    %781 = vector.extract_strided_slice %761 {offsets = [0, 128], sizes = [8, 128], strides = [1, 1]} : vector<8x256xf32> to vector<8x128xf32>
    %cst_188 = arith.constant dense<0.000000e+00> : vector<8xf32>
    %782 = vector.multi_reduction <add>, %781, %cst_188 [1] : vector<8x128xf32> to vector<8xf32>
    %783 = vector.shape_cast %782 : vector<8xf32> to vector<8x1xf32>
    %cst_189 = arith.constant 1.280000e+02 : f32
    %784 = vector.broadcast %cst_189 : f32 to vector<8x1xf32>
    %785 = arith.divf %783, %784 : vector<8x1xf32>
    %786 = arith.mulf %781, %781 : vector<8x128xf32>
    %cst_190 = arith.constant dense<0.000000e+00> : vector<8xf32>
    %787 = vector.multi_reduction <add>, %786, %cst_190 [1] : vector<8x128xf32> to vector<8xf32>
    %788 = vector.shape_cast %787 : vector<8xf32> to vector<8x1xf32>
    %cst_191 = arith.constant 1.280000e+02 : f32
    %789 = vector.broadcast %cst_191 : f32 to vector<8x1xf32>
    %790 = arith.divf %788, %789 : vector<8x1xf32>
    %791 = arith.mulf %785, %785 : vector<8x1xf32>
    %792 = arith.subf %790, %791 : vector<8x1xf32>
    %793 = vector.broadcast %785 : vector<8x1xf32> to vector<8x128xf32>
    %794 = arith.subf %781, %793 : vector<8x128xf32>
    %cst_192 = arith.constant 9.99999974E-6 : f32
    %795 = vector.broadcast %cst_192 : f32 to vector<8x1xf32>
    %796 = arith.addf %792, %795 : vector<8x1xf32>
    %797 = math.rsqrt %796 : vector<8x1xf32>
    %798 = vector.broadcast %797 : vector<8x1xf32> to vector<8x128xf32>
    %799 = arith.mulf %794, %798 : vector<8x128xf32>
    %800 = tpu.concatenate %780, %799 in 1 : vector<8x128xf32>, vector<8x128xf32> -> vector<8x256xf32>
    %801 = arith.mulf %800, %15 : vector<8x256xf32>
    %802 = arith.addf %801, %18 : vector<8x256xf32>
    %803 = arith.truncf %802 : vector<8x256xf32> to vector<8x256xbf16>
    %804 = arith.truncf %732 : vector<8x128xf32> to vector<8x128xbf16>
    %805 = tpu.concatenate %803, %804 in 1 : vector<8x256xbf16>, vector<8x128xbf16> -> vector<8x384xbf16>
    %c0_193 = arith.constant 0 : index
    %c0_194 = arith.constant 0 : index
    %806 = vector.load %arg3[%c0_193, %c0_194] : memref<384x768xbf16, #tpu.memory_space<vmem>>, vector<384x768xbf16>
    %cst_195 = arith.constant dense<0.000000e+00> : vector<8x768xf32>
    %807 = tpu.matmul %805, %806, %cst_195 {dimension_numbers = #tpu.dot_dimension_numbers<[1], [0], [0], [1], [0, 0, 1, 1], [], []>} : vector<8x384xbf16>, vector<384x768xbf16>, vector<8x768xf32> -> vector<8x768xf32>
    %808 = arith.addf %807, %9 : vector<8x768xf32>
    %809 = vector.extract_strided_slice %808 {offsets = [0, 0], sizes = [8, 384], strides = [1, 1]} : vector<8x768xf32> to vector<8x384xf32>
    %810 = vector.extract_strided_slice %808 {offsets = [0, 384], sizes = [8, 384], strides = [1, 1]} : vector<8x768xf32> to vector<8x384xf32>
    %811 = vector.extract_strided_slice %809 {offsets = [0, 0], sizes = [8, 256], strides = [1, 1]} : vector<8x384xf32> to vector<8x256xf32>
    %812 = vector.extract_strided_slice %810 {offsets = [0, 0], sizes = [8, 256], strides = [1, 1]} : vector<8x384xf32> to vector<8x256xf32>
    %813 = arith.addf %811, %812 : vector<8x256xf32>
    %814 = arith.negf %813 : vector<8x256xf32>
    %815 = math.exp %814 : vector<8x256xf32>
    %cst_196 = arith.constant 1.000000e+00 : f32
    %816 = vector.broadcast %cst_196 : f32 to vector<8x256xf32>
    %817 = arith.addf %816, %815 : vector<8x256xf32>
    %818 = arith.divf %816, %817 : vector<8x256xf32>
    %819 = vector.extract_strided_slice %809 {offsets = [0, 256], sizes = [8, 128], strides = [1, 1]} : vector<8x384xf32> to vector<8x128xf32>
    %820 = vector.extract_strided_slice %818 {offsets = [0, 0], sizes = [8, 128], strides = [1, 1]} : vector<8x256xf32> to vector<8x128xf32>
    %821 = vector.extract_strided_slice %810 {offsets = [0, 256], sizes = [8, 128], strides = [1, 1]} : vector<8x384xf32> to vector<8x128xf32>
    %822 = arith.mulf %820, %821 : vector<8x128xf32>
    %823 = arith.addf %819, %822 : vector<8x128xf32>
    %824 = math.tanh %823 : vector<8x128xf32>
    %825 = vector.extract_strided_slice %818 {offsets = [0, 128], sizes = [8, 128], strides = [1, 1]} : vector<8x256xf32> to vector<8x128xf32>
    %cst_197 = arith.constant 1.000000e+00 : f32
    %826 = vector.broadcast %cst_197 : f32 to vector<8x128xf32>
    %827 = arith.subf %826, %825 : vector<8x128xf32>
    %828 = arith.mulf %827, %824 : vector<8x128xf32>
    %829 = vector.extract_strided_slice %818 {offsets = [0, 128], sizes = [8, 128], strides = [1, 1]} : vector<8x256xf32> to vector<8x128xf32>
    %830 = arith.mulf %829, %732 : vector<8x128xf32>
    %831 = arith.addf %828, %830 : vector<8x128xf32>
    %832 = vector.extract_strided_slice %831 {offsets = [0, 0], sizes = [8, 64], strides = [1, 1]} : vector<8x128xf32> to vector<8x64xf32>
    %cst_198 = arith.constant dense<0.000000e+00> : vector<8xf32>
    %833 = vector.multi_reduction <add>, %832, %cst_198 [1] : vector<8x64xf32> to vector<8xf32>
    %834 = vector.shape_cast %833 : vector<8xf32> to vector<8x1xf32>
    %cst_199 = arith.constant 6.400000e+01 : f32
    %835 = vector.broadcast %cst_199 : f32 to vector<8x1xf32>
    %836 = arith.divf %834, %835 : vector<8x1xf32>
    %837 = arith.mulf %832, %832 : vector<8x64xf32>
    %cst_200 = arith.constant dense<0.000000e+00> : vector<8xf32>
    %838 = vector.multi_reduction <add>, %837, %cst_200 [1] : vector<8x64xf32> to vector<8xf32>
    %839 = vector.shape_cast %838 : vector<8xf32> to vector<8x1xf32>
    %cst_201 = arith.constant 6.400000e+01 : f32
    %840 = vector.broadcast %cst_201 : f32 to vector<8x1xf32>
    %841 = arith.divf %839, %840 : vector<8x1xf32>
    %842 = arith.mulf %836, %836 : vector<8x1xf32>
    %843 = arith.subf %841, %842 : vector<8x1xf32>
    %844 = vector.broadcast %836 : vector<8x1xf32> to vector<8x64xf32>
    %845 = arith.subf %832, %844 : vector<8x64xf32>
    %cst_202 = arith.constant 9.99999974E-6 : f32
    %846 = vector.broadcast %cst_202 : f32 to vector<8x1xf32>
    %847 = arith.addf %843, %846 : vector<8x1xf32>
    %848 = math.rsqrt %847 : vector<8x1xf32>
    %849 = vector.broadcast %848 : vector<8x1xf32> to vector<8x64xf32>
    %850 = arith.mulf %845, %849 : vector<8x64xf32>
    %851 = vector.extract_strided_slice %831 {offsets = [0, 64], sizes = [8, 64], strides = [1, 1]} : vector<8x128xf32> to vector<8x64xf32>
    %cst_203 = arith.constant dense<0.000000e+00> : vector<8xf32>
    %852 = vector.multi_reduction <add>, %851, %cst_203 [1] : vector<8x64xf32> to vector<8xf32>
    %853 = vector.shape_cast %852 : vector<8xf32> to vector<8x1xf32>
    %cst_204 = arith.constant 6.400000e+01 : f32
    %854 = vector.broadcast %cst_204 : f32 to vector<8x1xf32>
    %855 = arith.divf %853, %854 : vector<8x1xf32>
    %856 = arith.mulf %851, %851 : vector<8x64xf32>
    %cst_205 = arith.constant dense<0.000000e+00> : vector<8xf32>
    %857 = vector.multi_reduction <add>, %856, %cst_205 [1] : vector<8x64xf32> to vector<8xf32>
    %858 = vector.shape_cast %857 : vector<8xf32> to vector<8x1xf32>
    %cst_206 = arith.constant 6.400000e+01 : f32
    %859 = vector.broadcast %cst_206 : f32 to vector<8x1xf32>
    %860 = arith.divf %858, %859 : vector<8x1xf32>
    %861 = arith.mulf %855, %855 : vector<8x1xf32>
    %862 = arith.subf %860, %861 : vector<8x1xf32>
    %863 = vector.broadcast %855 : vector<8x1xf32> to vector<8x64xf32>
    %864 = arith.subf %851, %863 : vector<8x64xf32>
    %cst_207 = arith.constant 9.99999974E-6 : f32
    %865 = vector.broadcast %cst_207 : f32 to vector<8x1xf32>
    %866 = arith.addf %862, %865 : vector<8x1xf32>
    %867 = math.rsqrt %866 : vector<8x1xf32>
    %868 = vector.broadcast %867 : vector<8x1xf32> to vector<8x64xf32>
    %869 = arith.mulf %864, %868 : vector<8x64xf32>
    %870 = tpu.concatenate %850, %869 in 1 : vector<8x64xf32>, vector<8x64xf32> -> vector<8x128xf32>
    %871 = arith.mulf %870, %21 : vector<8x128xf32>
    %872 = arith.addf %871, %24 : vector<8x128xf32>
    %c6_i32 = arith.constant 6 : i32
    %c8_i32_208 = arith.constant 8 : i32
    %873 = arith.muli %c6_i32, %c8_i32_208 : i32
    %874 = tpu.assume_multiple %873, 8 : i32
    %875 = arith.index_cast %874 : i32 to index
    %c0_209 = arith.constant 0 : index
    %876 = vector.load %arg7[%875, %c0_209] : memref<64x768xf32, #tpu.memory_space<vmem>>, vector<8x768xf32>
    %877 = arith.truncf %802 : vector<8x256xf32> to vector<8x256xbf16>
    %c0_210 = arith.constant 0 : index
    %c0_211 = arith.constant 0 : index
    %878 = vector.load %arg2[%c0_210, %c0_211] : memref<256x768xbf16, #tpu.memory_space<vmem>>, vector<256x768xbf16>
    %cst_212 = arith.constant dense<0.000000e+00> : vector<8x768xf32>
    %879 = tpu.matmul %877, %878, %cst_212 {dimension_numbers = #tpu.dot_dimension_numbers<[1], [0], [0], [1], [0, 0, 1, 1], [], []>} : vector<8x256xbf16>, vector<256x768xbf16>, vector<8x768xf32> -> vector<8x768xf32>
    %880 = vector.extract_strided_slice %876 {offsets = [0, 0], sizes = [8, 512], strides = [1, 1]} : vector<8x768xf32> to vector<8x512xf32>
    %881 = vector.extract_strided_slice %879 {offsets = [0, 0], sizes = [8, 512], strides = [1, 1]} : vector<8x768xf32> to vector<8x512xf32>
    %882 = arith.addf %880, %881 : vector<8x512xf32>
    %883 = arith.negf %882 : vector<8x512xf32>
    %884 = math.exp %883 : vector<8x512xf32>
    %cst_213 = arith.constant 1.000000e+00 : f32
    %885 = vector.broadcast %cst_213 : f32 to vector<8x512xf32>
    %886 = arith.addf %885, %884 : vector<8x512xf32>
    %887 = arith.divf %885, %886 : vector<8x512xf32>
    %888 = vector.extract_strided_slice %876 {offsets = [0, 512], sizes = [8, 256], strides = [1, 1]} : vector<8x768xf32> to vector<8x256xf32>
    %889 = vector.extract_strided_slice %887 {offsets = [0, 0], sizes = [8, 256], strides = [1, 1]} : vector<8x512xf32> to vector<8x256xf32>
    %890 = vector.extract_strided_slice %879 {offsets = [0, 512], sizes = [8, 256], strides = [1, 1]} : vector<8x768xf32> to vector<8x256xf32>
    %891 = arith.addf %890, %12 : vector<8x256xf32>
    %892 = arith.mulf %889, %891 : vector<8x256xf32>
    %893 = arith.addf %888, %892 : vector<8x256xf32>
    %894 = math.tanh %893 : vector<8x256xf32>
    %895 = vector.extract_strided_slice %887 {offsets = [0, 256], sizes = [8, 256], strides = [1, 1]} : vector<8x512xf32> to vector<8x256xf32>
    %cst_214 = arith.constant 1.000000e+00 : f32
    %896 = vector.broadcast %cst_214 : f32 to vector<8x256xf32>
    %897 = arith.subf %896, %895 : vector<8x256xf32>
    %898 = arith.mulf %897, %894 : vector<8x256xf32>
    %899 = vector.extract_strided_slice %887 {offsets = [0, 256], sizes = [8, 256], strides = [1, 1]} : vector<8x512xf32> to vector<8x256xf32>
    %900 = arith.mulf %899, %802 : vector<8x256xf32>
    %901 = arith.addf %898, %900 : vector<8x256xf32>
    %902 = vector.extract_strided_slice %901 {offsets = [0, 0], sizes = [8, 128], strides = [1, 1]} : vector<8x256xf32> to vector<8x128xf32>
    %cst_215 = arith.constant dense<0.000000e+00> : vector<8xf32>
    %903 = vector.multi_reduction <add>, %902, %cst_215 [1] : vector<8x128xf32> to vector<8xf32>
    %904 = vector.shape_cast %903 : vector<8xf32> to vector<8x1xf32>
    %cst_216 = arith.constant 1.280000e+02 : f32
    %905 = vector.broadcast %cst_216 : f32 to vector<8x1xf32>
    %906 = arith.divf %904, %905 : vector<8x1xf32>
    %907 = arith.mulf %902, %902 : vector<8x128xf32>
    %cst_217 = arith.constant dense<0.000000e+00> : vector<8xf32>
    %908 = vector.multi_reduction <add>, %907, %cst_217 [1] : vector<8x128xf32> to vector<8xf32>
    %909 = vector.shape_cast %908 : vector<8xf32> to vector<8x1xf32>
    %cst_218 = arith.constant 1.280000e+02 : f32
    %910 = vector.broadcast %cst_218 : f32 to vector<8x1xf32>
    %911 = arith.divf %909, %910 : vector<8x1xf32>
    %912 = arith.mulf %906, %906 : vector<8x1xf32>
    %913 = arith.subf %911, %912 : vector<8x1xf32>
    %914 = vector.broadcast %906 : vector<8x1xf32> to vector<8x128xf32>
    %915 = arith.subf %902, %914 : vector<8x128xf32>
    %cst_219 = arith.constant 9.99999974E-6 : f32
    %916 = vector.broadcast %cst_219 : f32 to vector<8x1xf32>
    %917 = arith.addf %913, %916 : vector<8x1xf32>
    %918 = math.rsqrt %917 : vector<8x1xf32>
    %919 = vector.broadcast %918 : vector<8x1xf32> to vector<8x128xf32>
    %920 = arith.mulf %915, %919 : vector<8x128xf32>
    %921 = vector.extract_strided_slice %901 {offsets = [0, 128], sizes = [8, 128], strides = [1, 1]} : vector<8x256xf32> to vector<8x128xf32>
    %cst_220 = arith.constant dense<0.000000e+00> : vector<8xf32>
    %922 = vector.multi_reduction <add>, %921, %cst_220 [1] : vector<8x128xf32> to vector<8xf32>
    %923 = vector.shape_cast %922 : vector<8xf32> to vector<8x1xf32>
    %cst_221 = arith.constant 1.280000e+02 : f32
    %924 = vector.broadcast %cst_221 : f32 to vector<8x1xf32>
    %925 = arith.divf %923, %924 : vector<8x1xf32>
    %926 = arith.mulf %921, %921 : vector<8x128xf32>
    %cst_222 = arith.constant dense<0.000000e+00> : vector<8xf32>
    %927 = vector.multi_reduction <add>, %926, %cst_222 [1] : vector<8x128xf32> to vector<8xf32>
    %928 = vector.shape_cast %927 : vector<8xf32> to vector<8x1xf32>
    %cst_223 = arith.constant 1.280000e+02 : f32
    %929 = vector.broadcast %cst_223 : f32 to vector<8x1xf32>
    %930 = arith.divf %928, %929 : vector<8x1xf32>
    %931 = arith.mulf %925, %925 : vector<8x1xf32>
    %932 = arith.subf %930, %931 : vector<8x1xf32>
    %933 = vector.broadcast %925 : vector<8x1xf32> to vector<8x128xf32>
    %934 = arith.subf %921, %933 : vector<8x128xf32>
    %cst_224 = arith.constant 9.99999974E-6 : f32
    %935 = vector.broadcast %cst_224 : f32 to vector<8x1xf32>
    %936 = arith.addf %932, %935 : vector<8x1xf32>
    %937 = math.rsqrt %936 : vector<8x1xf32>
    %938 = vector.broadcast %937 : vector<8x1xf32> to vector<8x128xf32>
    %939 = arith.mulf %934, %938 : vector<8x128xf32>
    %940 = tpu.concatenate %920, %939 in 1 : vector<8x128xf32>, vector<8x128xf32> -> vector<8x256xf32>
    %941 = arith.mulf %940, %15 : vector<8x256xf32>
    %942 = arith.addf %941, %18 : vector<8x256xf32>
    %943 = arith.truncf %942 : vector<8x256xf32> to vector<8x256xbf16>
    %944 = arith.truncf %872 : vector<8x128xf32> to vector<8x128xbf16>
    %945 = tpu.concatenate %943, %944 in 1 : vector<8x256xbf16>, vector<8x128xbf16> -> vector<8x384xbf16>
    %c0_225 = arith.constant 0 : index
    %c0_226 = arith.constant 0 : index
    %946 = vector.load %arg3[%c0_225, %c0_226] : memref<384x768xbf16, #tpu.memory_space<vmem>>, vector<384x768xbf16>
    %cst_227 = arith.constant dense<0.000000e+00> : vector<8x768xf32>
    %947 = tpu.matmul %945, %946, %cst_227 {dimension_numbers = #tpu.dot_dimension_numbers<[1], [0], [0], [1], [0, 0, 1, 1], [], []>} : vector<8x384xbf16>, vector<384x768xbf16>, vector<8x768xf32> -> vector<8x768xf32>
    %948 = arith.addf %947, %9 : vector<8x768xf32>
    %949 = vector.extract_strided_slice %948 {offsets = [0, 0], sizes = [8, 384], strides = [1, 1]} : vector<8x768xf32> to vector<8x384xf32>
    %950 = vector.extract_strided_slice %948 {offsets = [0, 384], sizes = [8, 384], strides = [1, 1]} : vector<8x768xf32> to vector<8x384xf32>
    %951 = vector.extract_strided_slice %949 {offsets = [0, 0], sizes = [8, 256], strides = [1, 1]} : vector<8x384xf32> to vector<8x256xf32>
    %952 = vector.extract_strided_slice %950 {offsets = [0, 0], sizes = [8, 256], strides = [1, 1]} : vector<8x384xf32> to vector<8x256xf32>
    %953 = arith.addf %951, %952 : vector<8x256xf32>
    %954 = arith.negf %953 : vector<8x256xf32>
    %955 = math.exp %954 : vector<8x256xf32>
    %cst_228 = arith.constant 1.000000e+00 : f32
    %956 = vector.broadcast %cst_228 : f32 to vector<8x256xf32>
    %957 = arith.addf %956, %955 : vector<8x256xf32>
    %958 = arith.divf %956, %957 : vector<8x256xf32>
    %959 = vector.extract_strided_slice %949 {offsets = [0, 256], sizes = [8, 128], strides = [1, 1]} : vector<8x384xf32> to vector<8x128xf32>
    %960 = vector.extract_strided_slice %958 {offsets = [0, 0], sizes = [8, 128], strides = [1, 1]} : vector<8x256xf32> to vector<8x128xf32>
    %961 = vector.extract_strided_slice %950 {offsets = [0, 256], sizes = [8, 128], strides = [1, 1]} : vector<8x384xf32> to vector<8x128xf32>
    %962 = arith.mulf %960, %961 : vector<8x128xf32>
    %963 = arith.addf %959, %962 : vector<8x128xf32>
    %964 = math.tanh %963 : vector<8x128xf32>
    %965 = vector.extract_strided_slice %958 {offsets = [0, 128], sizes = [8, 128], strides = [1, 1]} : vector<8x256xf32> to vector<8x128xf32>
    %cst_229 = arith.constant 1.000000e+00 : f32
    %966 = vector.broadcast %cst_229 : f32 to vector<8x128xf32>
    %967 = arith.subf %966, %965 : vector<8x128xf32>
    %968 = arith.mulf %967, %964 : vector<8x128xf32>
    %969 = vector.extract_strided_slice %958 {offsets = [0, 128], sizes = [8, 128], strides = [1, 1]} : vector<8x256xf32> to vector<8x128xf32>
    %970 = arith.mulf %969, %872 : vector<8x128xf32>
    %971 = arith.addf %968, %970 : vector<8x128xf32>
    %972 = vector.extract_strided_slice %971 {offsets = [0, 0], sizes = [8, 64], strides = [1, 1]} : vector<8x128xf32> to vector<8x64xf32>
    %cst_230 = arith.constant dense<0.000000e+00> : vector<8xf32>
    %973 = vector.multi_reduction <add>, %972, %cst_230 [1] : vector<8x64xf32> to vector<8xf32>
    %974 = vector.shape_cast %973 : vector<8xf32> to vector<8x1xf32>
    %cst_231 = arith.constant 6.400000e+01 : f32
    %975 = vector.broadcast %cst_231 : f32 to vector<8x1xf32>
    %976 = arith.divf %974, %975 : vector<8x1xf32>
    %977 = arith.mulf %972, %972 : vector<8x64xf32>
    %cst_232 = arith.constant dense<0.000000e+00> : vector<8xf32>
    %978 = vector.multi_reduction <add>, %977, %cst_232 [1] : vector<8x64xf32> to vector<8xf32>
    %979 = vector.shape_cast %978 : vector<8xf32> to vector<8x1xf32>
    %cst_233 = arith.constant 6.400000e+01 : f32
    %980 = vector.broadcast %cst_233 : f32 to vector<8x1xf32>
    %981 = arith.divf %979, %980 : vector<8x1xf32>
    %982 = arith.mulf %976, %976 : vector<8x1xf32>
    %983 = arith.subf %981, %982 : vector<8x1xf32>
    %984 = vector.broadcast %976 : vector<8x1xf32> to vector<8x64xf32>
    %985 = arith.subf %972, %984 : vector<8x64xf32>
    %cst_234 = arith.constant 9.99999974E-6 : f32
    %986 = vector.broadcast %cst_234 : f32 to vector<8x1xf32>
    %987 = arith.addf %983, %986 : vector<8x1xf32>
    %988 = math.rsqrt %987 : vector<8x1xf32>
    %989 = vector.broadcast %988 : vector<8x1xf32> to vector<8x64xf32>
    %990 = arith.mulf %985, %989 : vector<8x64xf32>
    %991 = vector.extract_strided_slice %971 {offsets = [0, 64], sizes = [8, 64], strides = [1, 1]} : vector<8x128xf32> to vector<8x64xf32>
    %cst_235 = arith.constant dense<0.000000e+00> : vector<8xf32>
    %992 = vector.multi_reduction <add>, %991, %cst_235 [1] : vector<8x64xf32> to vector<8xf32>
    %993 = vector.shape_cast %992 : vector<8xf32> to vector<8x1xf32>
    %cst_236 = arith.constant 6.400000e+01 : f32
    %994 = vector.broadcast %cst_236 : f32 to vector<8x1xf32>
    %995 = arith.divf %993, %994 : vector<8x1xf32>
    %996 = arith.mulf %991, %991 : vector<8x64xf32>
    %cst_237 = arith.constant dense<0.000000e+00> : vector<8xf32>
    %997 = vector.multi_reduction <add>, %996, %cst_237 [1] : vector<8x64xf32> to vector<8xf32>
    %998 = vector.shape_cast %997 : vector<8xf32> to vector<8x1xf32>
    %cst_238 = arith.constant 6.400000e+01 : f32
    %999 = vector.broadcast %cst_238 : f32 to vector<8x1xf32>
    %1000 = arith.divf %998, %999 : vector<8x1xf32>
    %1001 = arith.mulf %995, %995 : vector<8x1xf32>
    %1002 = arith.subf %1000, %1001 : vector<8x1xf32>
    %1003 = vector.broadcast %995 : vector<8x1xf32> to vector<8x64xf32>
    %1004 = arith.subf %991, %1003 : vector<8x64xf32>
    %cst_239 = arith.constant 9.99999974E-6 : f32
    %1005 = vector.broadcast %cst_239 : f32 to vector<8x1xf32>
    %1006 = arith.addf %1002, %1005 : vector<8x1xf32>
    %1007 = math.rsqrt %1006 : vector<8x1xf32>
    %1008 = vector.broadcast %1007 : vector<8x1xf32> to vector<8x64xf32>
    %1009 = arith.mulf %1004, %1008 : vector<8x64xf32>
    %1010 = tpu.concatenate %990, %1009 in 1 : vector<8x64xf32>, vector<8x64xf32> -> vector<8x128xf32>
    %1011 = arith.mulf %1010, %21 : vector<8x128xf32>
    %1012 = arith.addf %1011, %24 : vector<8x128xf32>
    %c7_i32 = arith.constant 7 : i32
    %c8_i32_240 = arith.constant 8 : i32
    %1013 = arith.muli %c7_i32, %c8_i32_240 : i32
    %1014 = tpu.assume_multiple %1013, 8 : i32
    %1015 = arith.index_cast %1014 : i32 to index
    %c0_241 = arith.constant 0 : index
    %1016 = vector.load %arg7[%1015, %c0_241] : memref<64x768xf32, #tpu.memory_space<vmem>>, vector<8x768xf32>
    %1017 = arith.truncf %942 : vector<8x256xf32> to vector<8x256xbf16>
    %c0_242 = arith.constant 0 : index
    %c0_243 = arith.constant 0 : index
    %1018 = vector.load %arg2[%c0_242, %c0_243] : memref<256x768xbf16, #tpu.memory_space<vmem>>, vector<256x768xbf16>
    %cst_244 = arith.constant dense<0.000000e+00> : vector<8x768xf32>
    %1019 = tpu.matmul %1017, %1018, %cst_244 {dimension_numbers = #tpu.dot_dimension_numbers<[1], [0], [0], [1], [0, 0, 1, 1], [], []>} : vector<8x256xbf16>, vector<256x768xbf16>, vector<8x768xf32> -> vector<8x768xf32>
    %1020 = vector.extract_strided_slice %1016 {offsets = [0, 0], sizes = [8, 512], strides = [1, 1]} : vector<8x768xf32> to vector<8x512xf32>
    %1021 = vector.extract_strided_slice %1019 {offsets = [0, 0], sizes = [8, 512], strides = [1, 1]} : vector<8x768xf32> to vector<8x512xf32>
    %1022 = arith.addf %1020, %1021 : vector<8x512xf32>
    %1023 = arith.negf %1022 : vector<8x512xf32>
    %1024 = math.exp %1023 : vector<8x512xf32>
    %cst_245 = arith.constant 1.000000e+00 : f32
    %1025 = vector.broadcast %cst_245 : f32 to vector<8x512xf32>
    %1026 = arith.addf %1025, %1024 : vector<8x512xf32>
    %1027 = arith.divf %1025, %1026 : vector<8x512xf32>
    %1028 = vector.extract_strided_slice %1016 {offsets = [0, 512], sizes = [8, 256], strides = [1, 1]} : vector<8x768xf32> to vector<8x256xf32>
    %1029 = vector.extract_strided_slice %1027 {offsets = [0, 0], sizes = [8, 256], strides = [1, 1]} : vector<8x512xf32> to vector<8x256xf32>
    %1030 = vector.extract_strided_slice %1019 {offsets = [0, 512], sizes = [8, 256], strides = [1, 1]} : vector<8x768xf32> to vector<8x256xf32>
    %1031 = arith.addf %1030, %12 : vector<8x256xf32>
    %1032 = arith.mulf %1029, %1031 : vector<8x256xf32>
    %1033 = arith.addf %1028, %1032 : vector<8x256xf32>
    %1034 = math.tanh %1033 : vector<8x256xf32>
    %1035 = vector.extract_strided_slice %1027 {offsets = [0, 256], sizes = [8, 256], strides = [1, 1]} : vector<8x512xf32> to vector<8x256xf32>
    %cst_246 = arith.constant 1.000000e+00 : f32
    %1036 = vector.broadcast %cst_246 : f32 to vector<8x256xf32>
    %1037 = arith.subf %1036, %1035 : vector<8x256xf32>
    %1038 = arith.mulf %1037, %1034 : vector<8x256xf32>
    %1039 = vector.extract_strided_slice %1027 {offsets = [0, 256], sizes = [8, 256], strides = [1, 1]} : vector<8x512xf32> to vector<8x256xf32>
    %1040 = arith.mulf %1039, %942 : vector<8x256xf32>
    %1041 = arith.addf %1038, %1040 : vector<8x256xf32>
    %1042 = vector.extract_strided_slice %1041 {offsets = [0, 0], sizes = [8, 128], strides = [1, 1]} : vector<8x256xf32> to vector<8x128xf32>
    %cst_247 = arith.constant dense<0.000000e+00> : vector<8xf32>
    %1043 = vector.multi_reduction <add>, %1042, %cst_247 [1] : vector<8x128xf32> to vector<8xf32>
    %1044 = vector.shape_cast %1043 : vector<8xf32> to vector<8x1xf32>
    %cst_248 = arith.constant 1.280000e+02 : f32
    %1045 = vector.broadcast %cst_248 : f32 to vector<8x1xf32>
    %1046 = arith.divf %1044, %1045 : vector<8x1xf32>
    %1047 = arith.mulf %1042, %1042 : vector<8x128xf32>
    %cst_249 = arith.constant dense<0.000000e+00> : vector<8xf32>
    %1048 = vector.multi_reduction <add>, %1047, %cst_249 [1] : vector<8x128xf32> to vector<8xf32>
    %1049 = vector.shape_cast %1048 : vector<8xf32> to vector<8x1xf32>
    %cst_250 = arith.constant 1.280000e+02 : f32
    %1050 = vector.broadcast %cst_250 : f32 to vector<8x1xf32>
    %1051 = arith.divf %1049, %1050 : vector<8x1xf32>
    %1052 = arith.mulf %1046, %1046 : vector<8x1xf32>
    %1053 = arith.subf %1051, %1052 : vector<8x1xf32>
    %1054 = vector.broadcast %1046 : vector<8x1xf32> to vector<8x128xf32>
    %1055 = arith.subf %1042, %1054 : vector<8x128xf32>
    %cst_251 = arith.constant 9.99999974E-6 : f32
    %1056 = vector.broadcast %cst_251 : f32 to vector<8x1xf32>
    %1057 = arith.addf %1053, %1056 : vector<8x1xf32>
    %1058 = math.rsqrt %1057 : vector<8x1xf32>
    %1059 = vector.broadcast %1058 : vector<8x1xf32> to vector<8x128xf32>
    %1060 = arith.mulf %1055, %1059 : vector<8x128xf32>
    %1061 = vector.extract_strided_slice %1041 {offsets = [0, 128], sizes = [8, 128], strides = [1, 1]} : vector<8x256xf32> to vector<8x128xf32>
    %cst_252 = arith.constant dense<0.000000e+00> : vector<8xf32>
    %1062 = vector.multi_reduction <add>, %1061, %cst_252 [1] : vector<8x128xf32> to vector<8xf32>
    %1063 = vector.shape_cast %1062 : vector<8xf32> to vector<8x1xf32>
    %cst_253 = arith.constant 1.280000e+02 : f32
    %1064 = vector.broadcast %cst_253 : f32 to vector<8x1xf32>
    %1065 = arith.divf %1063, %1064 : vector<8x1xf32>
    %1066 = arith.mulf %1061, %1061 : vector<8x128xf32>
    %cst_254 = arith.constant dense<0.000000e+00> : vector<8xf32>
    %1067 = vector.multi_reduction <add>, %1066, %cst_254 [1] : vector<8x128xf32> to vector<8xf32>
    %1068 = vector.shape_cast %1067 : vector<8xf32> to vector<8x1xf32>
    %cst_255 = arith.constant 1.280000e+02 : f32
    %1069 = vector.broadcast %cst_255 : f32 to vector<8x1xf32>
    %1070 = arith.divf %1068, %1069 : vector<8x1xf32>
    %1071 = arith.mulf %1065, %1065 : vector<8x1xf32>
    %1072 = arith.subf %1070, %1071 : vector<8x1xf32>
    %1073 = vector.broadcast %1065 : vector<8x1xf32> to vector<8x128xf32>
    %1074 = arith.subf %1061, %1073 : vector<8x128xf32>
    %cst_256 = arith.constant 9.99999974E-6 : f32
    %1075 = vector.broadcast %cst_256 : f32 to vector<8x1xf32>
    %1076 = arith.addf %1072, %1075 : vector<8x1xf32>
    %1077 = math.rsqrt %1076 : vector<8x1xf32>
    %1078 = vector.broadcast %1077 : vector<8x1xf32> to vector<8x128xf32>
    %1079 = arith.mulf %1074, %1078 : vector<8x128xf32>
    %1080 = tpu.concatenate %1060, %1079 in 1 : vector<8x128xf32>, vector<8x128xf32> -> vector<8x256xf32>
    %1081 = arith.mulf %1080, %15 : vector<8x256xf32>
    %1082 = arith.addf %1081, %18 : vector<8x256xf32>
    %1083 = arith.truncf %1082 : vector<8x256xf32> to vector<8x256xbf16>
    %1084 = arith.truncf %1012 : vector<8x128xf32> to vector<8x128xbf16>
    %1085 = tpu.concatenate %1083, %1084 in 1 : vector<8x256xbf16>, vector<8x128xbf16> -> vector<8x384xbf16>
    %c0_257 = arith.constant 0 : index
    %c0_258 = arith.constant 0 : index
    %1086 = vector.load %arg3[%c0_257, %c0_258] : memref<384x768xbf16, #tpu.memory_space<vmem>>, vector<384x768xbf16>
    %cst_259 = arith.constant dense<0.000000e+00> : vector<8x768xf32>
    %1087 = tpu.matmul %1085, %1086, %cst_259 {dimension_numbers = #tpu.dot_dimension_numbers<[1], [0], [0], [1], [0, 0, 1, 1], [], []>} : vector<8x384xbf16>, vector<384x768xbf16>, vector<8x768xf32> -> vector<8x768xf32>
    %1088 = arith.addf %1087, %9 : vector<8x768xf32>
    %1089 = vector.extract_strided_slice %1088 {offsets = [0, 0], sizes = [8, 384], strides = [1, 1]} : vector<8x768xf32> to vector<8x384xf32>
    %1090 = vector.extract_strided_slice %1088 {offsets = [0, 384], sizes = [8, 384], strides = [1, 1]} : vector<8x768xf32> to vector<8x384xf32>
    %1091 = vector.extract_strided_slice %1089 {offsets = [0, 0], sizes = [8, 256], strides = [1, 1]} : vector<8x384xf32> to vector<8x256xf32>
    %1092 = vector.extract_strided_slice %1090 {offsets = [0, 0], sizes = [8, 256], strides = [1, 1]} : vector<8x384xf32> to vector<8x256xf32>
    %1093 = arith.addf %1091, %1092 : vector<8x256xf32>
    %1094 = arith.negf %1093 : vector<8x256xf32>
    %1095 = math.exp %1094 : vector<8x256xf32>
    %cst_260 = arith.constant 1.000000e+00 : f32
    %1096 = vector.broadcast %cst_260 : f32 to vector<8x256xf32>
    %1097 = arith.addf %1096, %1095 : vector<8x256xf32>
    %1098 = arith.divf %1096, %1097 : vector<8x256xf32>
    %1099 = vector.extract_strided_slice %1089 {offsets = [0, 256], sizes = [8, 128], strides = [1, 1]} : vector<8x384xf32> to vector<8x128xf32>
    %1100 = vector.extract_strided_slice %1098 {offsets = [0, 0], sizes = [8, 128], strides = [1, 1]} : vector<8x256xf32> to vector<8x128xf32>
    %1101 = vector.extract_strided_slice %1090 {offsets = [0, 256], sizes = [8, 128], strides = [1, 1]} : vector<8x384xf32> to vector<8x128xf32>
    %1102 = arith.mulf %1100, %1101 : vector<8x128xf32>
    %1103 = arith.addf %1099, %1102 : vector<8x128xf32>
    %1104 = math.tanh %1103 : vector<8x128xf32>
    %1105 = vector.extract_strided_slice %1098 {offsets = [0, 128], sizes = [8, 128], strides = [1, 1]} : vector<8x256xf32> to vector<8x128xf32>
    %cst_261 = arith.constant 1.000000e+00 : f32
    %1106 = vector.broadcast %cst_261 : f32 to vector<8x128xf32>
    %1107 = arith.subf %1106, %1105 : vector<8x128xf32>
    %1108 = arith.mulf %1107, %1104 : vector<8x128xf32>
    %1109 = vector.extract_strided_slice %1098 {offsets = [0, 128], sizes = [8, 128], strides = [1, 1]} : vector<8x256xf32> to vector<8x128xf32>
    %1110 = arith.mulf %1109, %1012 : vector<8x128xf32>
    %1111 = arith.addf %1108, %1110 : vector<8x128xf32>
    %1112 = vector.extract_strided_slice %1111 {offsets = [0, 0], sizes = [8, 64], strides = [1, 1]} : vector<8x128xf32> to vector<8x64xf32>
    %cst_262 = arith.constant dense<0.000000e+00> : vector<8xf32>
    %1113 = vector.multi_reduction <add>, %1112, %cst_262 [1] : vector<8x64xf32> to vector<8xf32>
    %1114 = vector.shape_cast %1113 : vector<8xf32> to vector<8x1xf32>
    %cst_263 = arith.constant 6.400000e+01 : f32
    %1115 = vector.broadcast %cst_263 : f32 to vector<8x1xf32>
    %1116 = arith.divf %1114, %1115 : vector<8x1xf32>
    %1117 = arith.mulf %1112, %1112 : vector<8x64xf32>
    %cst_264 = arith.constant dense<0.000000e+00> : vector<8xf32>
    %1118 = vector.multi_reduction <add>, %1117, %cst_264 [1] : vector<8x64xf32> to vector<8xf32>
    %1119 = vector.shape_cast %1118 : vector<8xf32> to vector<8x1xf32>
    %cst_265 = arith.constant 6.400000e+01 : f32
    %1120 = vector.broadcast %cst_265 : f32 to vector<8x1xf32>
    %1121 = arith.divf %1119, %1120 : vector<8x1xf32>
    %1122 = arith.mulf %1116, %1116 : vector<8x1xf32>
    %1123 = arith.subf %1121, %1122 : vector<8x1xf32>
    %1124 = vector.broadcast %1116 : vector<8x1xf32> to vector<8x64xf32>
    %1125 = arith.subf %1112, %1124 : vector<8x64xf32>
    %cst_266 = arith.constant 9.99999974E-6 : f32
    %1126 = vector.broadcast %cst_266 : f32 to vector<8x1xf32>
    %1127 = arith.addf %1123, %1126 : vector<8x1xf32>
    %1128 = math.rsqrt %1127 : vector<8x1xf32>
    %1129 = vector.broadcast %1128 : vector<8x1xf32> to vector<8x64xf32>
    %1130 = arith.mulf %1125, %1129 : vector<8x64xf32>
    %1131 = vector.extract_strided_slice %1111 {offsets = [0, 64], sizes = [8, 64], strides = [1, 1]} : vector<8x128xf32> to vector<8x64xf32>
    %cst_267 = arith.constant dense<0.000000e+00> : vector<8xf32>
    %1132 = vector.multi_reduction <add>, %1131, %cst_267 [1] : vector<8x64xf32> to vector<8xf32>
    %1133 = vector.shape_cast %1132 : vector<8xf32> to vector<8x1xf32>
    %cst_268 = arith.constant 6.400000e+01 : f32
    %1134 = vector.broadcast %cst_268 : f32 to vector<8x1xf32>
    %1135 = arith.divf %1133, %1134 : vector<8x1xf32>
    %1136 = arith.mulf %1131, %1131 : vector<8x64xf32>
    %cst_269 = arith.constant dense<0.000000e+00> : vector<8xf32>
    %1137 = vector.multi_reduction <add>, %1136, %cst_269 [1] : vector<8x64xf32> to vector<8xf32>
    %1138 = vector.shape_cast %1137 : vector<8xf32> to vector<8x1xf32>
    %cst_270 = arith.constant 6.400000e+01 : f32
    %1139 = vector.broadcast %cst_270 : f32 to vector<8x1xf32>
    %1140 = arith.divf %1138, %1139 : vector<8x1xf32>
    %1141 = arith.mulf %1135, %1135 : vector<8x1xf32>
    %1142 = arith.subf %1140, %1141 : vector<8x1xf32>
    %1143 = vector.broadcast %1135 : vector<8x1xf32> to vector<8x64xf32>
    %1144 = arith.subf %1131, %1143 : vector<8x64xf32>
    %cst_271 = arith.constant 9.99999974E-6 : f32
    %1145 = vector.broadcast %cst_271 : f32 to vector<8x1xf32>
    %1146 = arith.addf %1142, %1145 : vector<8x1xf32>
    %1147 = math.rsqrt %1146 : vector<8x1xf32>
    %1148 = vector.broadcast %1147 : vector<8x1xf32> to vector<8x64xf32>
    %1149 = arith.mulf %1144, %1148 : vector<8x64xf32>
    %1150 = tpu.concatenate %1130, %1149 in 1 : vector<8x64xf32>, vector<8x64xf32> -> vector<8x128xf32>
    %1151 = arith.mulf %1150, %21 : vector<8x128xf32>
    %1152 = arith.addf %1151, %24 : vector<8x128xf32>
    %c8_i32_272 = arith.constant 8 : i32
    %1153 = arith.truncf %1152 : vector<8x128xf32> to vector<8x128xbf16>
    %c0_273 = arith.constant 0 : index
    %c0_274 = arith.constant 0 : index
    %1154 = vector.load %arg4[%c0_273, %c0_274] : memref<256x128xbf16, #tpu.memory_space<vmem>>, vector<128x128xbf16>
    %cst_275 = arith.constant dense<0.000000e+00> : vector<8x128xf32>
    %1155 = tpu.matmul %1153, %1154, %cst_275 {dimension_numbers = #tpu.dot_dimension_numbers<[1], [0], [0], [1], [0, 0, 1, 1], [], []>} : vector<8x128xbf16>, vector<128x128xbf16>, vector<8x128xf32> -> vector<8x128xf32>
    %1156 = arith.addf %1155, %27 : vector<8x128xf32>
    %cst_276 = arith.constant 0.000000e+00 : f32
    %1157 = vector.broadcast %cst_276 : f32 to vector<8x128xf32>
    %1158 = arith.maximumf %1156, %1157 : vector<8x128xf32>
    %1159 = arith.truncf %1158 : vector<8x128xf32> to vector<8x128xbf16>
    %c128 = arith.constant 128 : index
    %c0_277 = arith.constant 0 : index
    %1160 = vector.load %arg4[%c128, %c0_277] : memref<256x128xbf16, #tpu.memory_space<vmem>>, vector<128x128xbf16>
    %cst_278 = arith.constant dense<0.000000e+00> : vector<8x128xf32>
    %1161 = tpu.matmul %1159, %1160, %cst_278 {dimension_numbers = #tpu.dot_dimension_numbers<[1], [0], [0], [1], [0, 0, 1, 1], [], []>} : vector<8x128xbf16>, vector<128x128xbf16>, vector<8x128xf32> -> vector<8x128xf32>
    %1162 = arith.addf %1161, %30 : vector<8x128xf32>
    %c0_279 = arith.constant 0 : index
    %c0_280 = arith.constant 0 : index
    %1163 = vector.load %arg6[%c0_279, %c0_280] : memref<8x128xf32, #tpu.memory_space<vmem>>, vector<8x128xf32>
    tpu.vector_store %arg6[%c0_279, %c0_280], %1162 {strides = array<i32>} : memref<8x128xf32, #tpu.memory_space<vmem>>, vector<8x128xf32>,
    return
  }
}

</mosaic_0001>

<llo_original>
// kernel: custom-call
$region0: #{custom-call}
  %s0 = inlined_call_operand.vmem [shape: f32[768], index: 0, kind: output, shape index: {}]

// kernel: tile.33
$region0: #{tile.33}
  #allocation0 [shape = 's32[1]{0}', space=sflag, size = 0x4, scoped, tag = 'scoped memory for tile.33']
  %s0 = inlined_call_operand.vmem [shape: f32[64], index: 0, kind: input, shape index: {}]
  %s1 = inlined_call_operand.vmem [shape: f32[2,64], index: 1, kind: output, shape index: {}]
  // Predicated region
  $region2: #{tile.33} parent=0 // pred_check
    _
  $region3: #{tile.33} parent=0 // pred_check_branch
    %3 = sbr.rel (0) target = $region5
  $region4: #{tile.33} parent=0 // pred_region
    _
  $region5: #{tile.33} parent=0 // pred_fallthru
    _
  %v4 = vld [vmem:[%s0] ss:$0 sm:$0xff]
  %5 = vst [vmem:[%s1] sm:$0x3] %v4

// kernel: tile.34
$region0: #{tile.34}
  %s0 = inlined_call_operand.vmem [shape: f32[2,64], index: 0, kind: input, shape index: {}]
  %s1 = inlined_call_operand.vmem [shape: f32[128], index: 1, kind: output, shape index: {}]
  $region1: #{tile.34} parent=0
    #allocation0 [shape = 'u8[4096]{0}', space=vmem, size = 0x1000, scoped, tag = 'scoped mem for output reshape']
    #allocation1 [shape = 'u8[4096]{0}', space=vmem, size = 0x1000, scoped, tag = 'scoped mem for input reshape']
    %s3 = ssub.s32 4, 1
    %v4 = vld [vmem:[%s0] sm:%s3]
    %5 = vst [vmem:[#allocation1] sm:%s3] %v4
    %v6 = vld [vmem:[#allocation1] sm:$0x1]
    %vm7 = vcmask 523264
    %8 = vst.msk [vmem:[#allocation0] sm:$0x1] %vm7, %v6
    %s9 = scalar_lea.vmem [#allocation1], 1
    %v10 = vld [vmem:[%s9] sm:$0x1]
    %11 = vrot.lane.b32.xlu0 %v10, 64
    %v12 = vpop.permute.xlu0 %11
    %vm13 = vcmask 1048064
    %14 = vst.msk [vmem:[#allocation0] sm:$0x1] %vm13, %v12
    %s16 = ssub.s32 2, 1
    %v17 = vld [vmem:[#allocation0] sm:%s16]
    %s19 = ssub.s32 2, 1
    %20 = vst [vmem:[%s1] sm:%s19] %v17

// kernel: gru_birnn_forward.1
$region0: #{gru_birnn_forward.1}
  #allocation0 [shape = 'u32[]', space=smem, size = 0x4, offset = 0x4, fixed_abs, tag = 'smem constant byte address 0x4 - core index']
  #allocation1 [shape = 'u32[72,128]{1,0:T(1,128)}', space=vmem, size = 0x9000, scoped, tag = 'internal scratch']
  #allocation2 [shape = 'f32[64,768]{1,0:T(8,128)}', space=vmem, size = 0x30000, scoped, tag = 'scratch operand']
  %s0 = inlined_call_operand.vmem [shape: bf16[64,32], index: 0, kind: input, shape index: {}]
  %s1 = inlined_call_operand.vmem [shape: bf16[32,768], index: 1, kind: input, shape index: {}]
  %s2 = inlined_call_operand.vmem [shape: bf16[256,768], index: 2, kind: input, shape index: {}]
  %s3 = inlined_call_operand.vmem [shape: bf16[384,768], index: 3, kind: input, shape index: {}]
  %s4 = inlined_call_operand.vmem [shape: bf16[256,128], index: 4, kind: input, shape index: {}]
  %s5 = inlined_call_operand.vmem [shape: f32[9,768], index: 5, kind: input, shape index: {}]
  %s6 = inlined_call_operand.vmem [shape: f32[8,128], index: 6, kind: output, shape index: {}]
  %s7 = sld [smem:[#allocation0]]
  $region34: #{gru_birnn_forward.1} parent=0
    _
  %s9 = ssub.s32 1, %s7
  %s10 = scalar_select 0, %s9, %s7
  // Predicated region
  $region2: #{gru_birnn_forward.1} parent=0 // pred_check
    _
  $region3: #{gru_birnn_forward.1} parent=0 // pred_check_branch
    %12 = sbr.rel (0) target = $region5
  $region4: #{gru_birnn_forward.1} parent=0 // pred_region
    _
  $region5: #{gru_birnn_forward.1} parent=0 // pred_fallthru
    _
  // Predicated region
  $region6: #{gru_birnn_forward.1} parent=0 // pred_check
    _
  $region7: #{gru_birnn_forward.1} parent=0 // pred_check_branch
    %14 = sbr.rel (0) target = $region9
  $region8: #{gru_birnn_forward.1} parent=0 // pred_region
    _
  $region9: #{gru_birnn_forward.1} parent=0 // pred_fallthru
    _
  // Predicated region
  $region10: #{gru_birnn_forward.1} parent=0 // pred_check
    _
  $region11: #{gru_birnn_forward.1} parent=0 // pred_check_branch
    %16 = sbr.rel (0) target = $region13
  $region12: #{gru_birnn_forward.1} parent=0 // pred_region
    _
  $region13: #{gru_birnn_forward.1} parent=0 // pred_fallthru
    _
  // Predicated region
  $region14: #{gru_birnn_forward.1} parent=0 // pred_check
    _
  $region15: #{gru_birnn_forward.1} parent=0 // pred_check_branch
    %18 = sbr.rel (0) target = $region17
  $region16: #{gru_birnn_forward.1} parent=0 // pred_region
    _
  $region17: #{gru_birnn_forward.1} parent=0 // pred_fallthru
    _
  // Predicated region
  $region18: #{gru_birnn_forward.1} parent=0 // pred_check
    _
  $region19: #{gru_birnn_forward.1} parent=0 // pred_check_branch
    %20 = sbr.rel (0) target = $region21
  $region20: #{gru_birnn_forward.1} parent=0 // pred_region
    _
  $region21: #{gru_birnn_forward.1} parent=0 // pred_fallthru
    _
  // Predicated region
  $region22: #{gru_birnn_forward.1} parent=0 // pred_check
    _
  $region23: #{gru_birnn_forward.1} parent=0 // pred_check_branch
    %22 = sbr.rel (0) target = $region25
  $region24: #{gru_birnn_forward.1} parent=0 // pred_region
    _
  $region25: #{gru_birnn_forward.1} parent=0 // pred_fallthru
    _
  %v24 = vld [vmem:[%s0] sm:$0xf]
  %v25 = vld [vmem:[%s0 + $0x4] sm:$0xf]
  %v26 = vld [vmem:[%s0 + $0x8] sm:$0xf]
  %v27 = vld [vmem:[%s0 + $0xc] sm:$0xf]
  %v28 = vld [vmem:[%s0 + $0x10] sm:$0xf]
  %v29 = vld [vmem:[%s0 + $0x14] sm:$0xf]
  %v30 = vld [vmem:[%s0 + $0x18] sm:$0xf]
  %v31 = vld [vmem:[%s0 + $0x1c] sm:$0xf]
  %v32 = vld [vmem:[%s1] sm:$0xff]
  %v33 = vld [vmem:[%s1 + $0x8] sm:$0xff]
  %v34 = vld [vmem:[%s1 + $0x10] sm:$0xff]
  %v35 = vld [vmem:[%s1 + $0x18] sm:$0xff]
  %v36 = vld [vmem:[%s1 + $0x20] sm:$0xff]
  %v37 = vld [vmem:[%s1 + $0x28] sm:$0xff]
  %v38 = vld [vmem:[%s1 + $0x30] sm:$0xff]
  %v39 = vld [vmem:[%s1 + $0x38] sm:$0xff]
  %v40 = vld [vmem:[%s1 + $0x40] sm:$0xff]
  %v41 = vld [vmem:[%s1 + $0x48] sm:$0xff]
  %v42 = vld [vmem:[%s1 + $0x50] sm:$0xff]
  %v43 = vld [vmem:[%s1 + $0x58] sm:$0xff]
  %v44 = vld [vmem:[%s5] ss:$8 sm:$0xf]
  %v45 = vld [vmem:[%s5] ss:$8 sm:$0x30]
  %v46 = vor.u32 %v44, %v45
  %v48 = vperm.slane %v46, 0
  %v49 = vperm.slane %v46, 1
  %v50 = vperm.slane %v46, 2
  %v51 = vperm.slane %v46, 3
  %v52 = vperm.slane %v46, 4
  %v53 = vperm.slane %v46, 5
  %v68 = vunpack.c.l.b16 %v24
  %v69 = vunpack.c.l.b16 %v25
  %v70 = vunpack.c.l.b16 %v26
  %v71 = vunpack.c.l.b16 %v27
  %v72 = vunpack.c.l.b16 %v28
  %v73 = vunpack.c.l.b16 %v29
  %v74 = vunpack.c.l.b16 %v30
  %v75 = vunpack.c.l.b16 %v31
  %v76 = vpack.c.b16 %v69, %v68
  %v77 = vpack.c.b16 %v71, %v70
  %v78 = vpack.c.b16 %v73, %v72
  %v79 = vpack.c.b16 %v75, %v74
  %v92 = vunpack.c.l.b16 %v32
  %v93 = vunpack.c.h.b16 %v32
  %v94 = vunpack.c.l.b16 %v33
  %v95 = vunpack.c.h.b16 %v33
  %v96 = vunpack.c.l.b16 %v34
  %v97 = vunpack.c.h.b16 %v34
  %v98 = vunpack.c.l.b16 %v35
  %v99 = vunpack.c.h.b16 %v35
  %v100 = vunpack.c.l.b16 %v36
  %v101 = vunpack.c.h.b16 %v36
  %v102 = vunpack.c.l.b16 %v37
  %v103 = vunpack.c.h.b16 %v37
  %v104 = vunpack.c.l.b16 %v38
  %v105 = vunpack.c.h.b16 %v38
  %v106 = vunpack.c.l.b16 %v39
  %v107 = vunpack.c.h.b16 %v39
  %v108 = vunpack.c.l.b16 %v40
  %v109 = vunpack.c.h.b16 %v40
  %v110 = vunpack.c.l.b16 %v41
  %v111 = vunpack.c.h.b16 %v41
  %v112 = vunpack.c.l.b16 %v42
  %v113 = vunpack.c.h.b16 %v42
  %v114 = vunpack.c.l.b16 %v43
  %v115 = vunpack.c.h.b16 %v43
  %v116 = vpack.c.b16 %v98, %v92
  %v117 = vpack.c.b16 %v99, %v93
  %v118 = vpack.c.b16 %v100, %v94
  %v119 = vpack.c.b16 %v101, %v95
  %v120 = vpack.c.b16 %v102, %v96
  %v121 = vpack.c.b16 %v103, %v97
  %v122 = vpack.c.b16 %v110, %v104
  %v123 = vpack.c.b16 %v111, %v105
  %v124 = vpack.c.b16 %v112, %v106
  %v125 = vpack.c.b16 %v113, %v107
  %v126 = vpack.c.b16 %v114, %v108
  %v127 = vpack.c.b16 %v115, %v109
  %vm140 = vcmask 261120
  %v142 = vsel %vm140, %v76, 0
  %v145 = vsel %vm140, %v77, 0
  %v148 = vsel %vm140, %v78, 0
  %v151 = vsel %vm140, %v79, 0
  %153 = vmatpush.bf16.msra.mxu0 0
  %154 = vmatpush.bf16.msra.mxu0 0
  %155 = vmatpush.bf16.msra.mxu0 0
  %156 = vmatpush.bf16.msra.mxu0 0
  %157 = vmatpush.bf16.msra.mxu0 0
  %158 = vmatpush.bf16.msra.mxu0 0
  %159 = vmatpush.bf16.msra.mxu0 %v122
  %160 = vmatpush.bf16.msra.mxu0 %v116
  %161 = vmatmul.bf16.gmra.mxu0 %v142
  %v162 = vpop.f32.mrf.mxu0
  %v163 = vadd.f32 %v48, %v162
  %v164 = vpop.f32.mrf.mxu0
  %v165 = vadd.f32 %v48, %v164
  %166 = vmatmul.bf16.gmra.mxu0 %v145
  %v167 = vpop.f32.mrf.mxu0
  %v168 = vadd.f32 %v48, %v167
  %v169 = vpop.f32.mrf.mxu0
  %v170 = vadd.f32 %v48, %v169
  %171 = vmatmul.bf16.gmra.mxu0 %v148
  %v172 = vpop.f32.mrf.mxu0
  %v173 = vadd.f32 %v48, %v172
  %v174 = vpop.f32.mrf.mxu0
  %v175 = vadd.f32 %v48, %v174
  %176 = vmatmul.bf16.gmra.mxu0 %v151
  %v177 = vpop.f32.mrf.mxu0
  %v178 = vadd.f32 %v48, %v177
  %v179 = vpop.f32.mrf.mxu0
  %v180 = vadd.f32 %v48, %v179
  %181 = vdwg.mxu0
  %182 = vmatpush.bf16.msra.mxu0 0
  %183 = vmatpush.bf16.msra.mxu0 0
  %184 = vmatpush.bf16.msra.mxu0 0
  %185 = vmatpush.bf16.msra.mxu0 0
  %186 = vmatpush.bf16.msra.mxu0 0
  %187 = vmatpush.bf16.msra.mxu0 0
  %188 = vmatpush.bf16.msra.mxu0 %v123
  %189 = vmatpush.bf16.msra.mxu0 %v117
  %190 = vmatmul.bf16.gmra.mxu0 %v142
  %v191 = vpop.f32.mrf.mxu0
  %v192 = vadd.f32 %v49, %v191
  %v193 = vpop.f32.mrf.mxu0
  %v194 = vadd.f32 %v49, %v193
  %195 = vmatmul.bf16.gmra.mxu0 %v145
  %v196 = vpop.f32.mrf.mxu0
  %v197 = vadd.f32 %v49, %v196
  %v198 = vpop.f32.mrf.mxu0
  %v199 = vadd.f32 %v49, %v198
  %200 = vmatmul.bf16.gmra.mxu0 %v148
  %v201 = vpop.f32.mrf.mxu0
  %v202 = vadd.f32 %v49, %v201
  %v203 = vpop.f32.mrf.mxu0
  %v204 = vadd.f32 %v49, %v203
  %205 = vmatmul.bf16.gmra.mxu0 %v151
  %v206 = vpop.f32.mrf.mxu0
  %v207 = vadd.f32 %v49, %v206
  %v208 = vpop.f32.mrf.mxu0
  %v209 = vadd.f32 %v49, %v208
  %210 = vdwg.mxu0
  %211 = vmatpush.bf16.msra.mxu0 0
  %212 = vmatpush.bf16.msra.mxu0 0
  %213 = vmatpush.bf16.msra.mxu0 0
  %214 = vmatpush.bf16.msra.mxu0 0
  %215 = vmatpush.bf16.msra.mxu0 0
  %216 = vmatpush.bf16.msra.mxu0 0
  %217 = vmatpush.bf16.msra.mxu0 %v124
  %218 = vmatpush.bf16.msra.mxu0 %v118
  %219 = vmatmul.bf16.gmra.mxu0 %v142
  %v220 = vpop.f32.mrf.mxu0
  %v221 = vadd.f32 %v50, %v220
  %v222 = vpop.f32.mrf.mxu0
  %v223 = vadd.f32 %v50, %v222
  %224 = vmatmul.bf16.gmra.mxu0 %v145
  %v225 = vpop.f32.mrf.mxu0
  %v226 = vadd.f32 %v50, %v225
  %v227 = vpop.f32.mrf.mxu0
  %v228 = vadd.f32 %v50, %v227
  %229 = vmatmul.bf16.gmra.mxu0 %v148
  %v230 = vpop.f32.mrf.mxu0
  %v231 = vadd.f32 %v50, %v230
  %v232 = vpop.f32.mrf.mxu0
  %v233 = vadd.f32 %v50, %v232
  %234 = vmatmul.bf16.gmra.mxu0 %v151
  %v235 = vpop.f32.mrf.mxu0
  %v236 = vadd.f32 %v50, %v235
  %v237 = vpop.f32.mrf.mxu0
  %v238 = vadd.f32 %v50, %v237
  %239 = vdwg.mxu0
  %240 = vmatpush.bf16.msra.mxu0 0
  %241 = vmatpush.bf16.msra.mxu0 0
  %242 = vmatpush.bf16.msra.mxu0 0
  %243 = vmatpush.bf16.msra.mxu0 0
  %244 = vmatpush.bf16.msra.mxu0 0
  %245 = vmatpush.bf16.msra.mxu0 0
  %246 = vmatpush.bf16.msra.mxu0 %v125
  %247 = vmatpush.bf16.msra.mxu0 %v119
  %248 = vmatmul.bf16.gmra.mxu0 %v142
  %v249 = vpop.f32.mrf.mxu0
  %v250 = vadd.f32 %v51, %v249
  %v251 = vpop.f32.mrf.mxu0
  %v252 = vadd.f32 %v51, %v251
  %253 = vmatmul.bf16.gmra.mxu0 %v145
  %v254 = vpop.f32.mrf.mxu0
  %v255 = vadd.f32 %v51, %v254
  %v256 = vpop.f32.mrf.mxu0
  %v257 = vadd.f32 %v51, %v256
  %258 = vmatmul.bf16.gmra.mxu0 %v148
  %v259 = vpop.f32.mrf.mxu0
  %v260 = vadd.f32 %v51, %v259
  %v261 = vpop.f32.mrf.mxu0
  %v262 = vadd.f32 %v51, %v261
  %263 = vmatmul.bf16.gmra.mxu0 %v151
  %v264 = vpop.f32.mrf.mxu0
  %v265 = vadd.f32 %v51, %v264
  %v266 = vpop.f32.mrf.mxu0
  %v267 = vadd.f32 %v51, %v266
  %268 = vdwg.mxu0
  %269 = vmatpush.bf16.msra.mxu0 0
  %270 = vmatpush.bf16.msra.mxu0 0
  %271 = vmatpush.bf16.msra.mxu0 0
  %272 = vmatpush.bf16.msra.mxu0 0
  %273 = vmatpush.bf16.msra.mxu0 0
  %274 = vmatpush.bf16.msra.mxu0 0
  %275 = vmatpush.bf16.msra.mxu0 %v126
  %276 = vmatpush.bf16.msra.mxu0 %v120
  %277 = vmatmul.bf16.gmra.mxu0 %v142
  %v278 = vpop.f32.mrf.mxu0
  %v279 = vadd.f32 %v52, %v278
  %v280 = vpop.f32.mrf.mxu0
  %v281 = vadd.f32 %v52, %v280
  %282 = vmatmul.bf16.gmra.mxu0 %v145
  %v283 = vpop.f32.mrf.mxu0
  %v284 = vadd.f32 %v52, %v283
  %v285 = vpop.f32.mrf.mxu0
  %v286 = vadd.f32 %v52, %v285
  %287 = vmatmul.bf16.gmra.mxu0 %v148
  %v288 = vpop.f32.mrf.mxu0
  %v289 = vadd.f32 %v52, %v288
  %v290 = vpop.f32.mrf.mxu0
  %v291 = vadd.f32 %v52, %v290
  %292 = vmatmul.bf16.gmra.mxu0 %v151
  %v293 = vpop.f32.mrf.mxu0
  %v294 = vadd.f32 %v52, %v293
  %v295 = vpop.f32.mrf.mxu0
  %v296 = vadd.f32 %v52, %v295
  %297 = vdwg.mxu0
  %298 = vmatpush.bf16.msra.mxu0 0
  %299 = vmatpush.bf16.msra.mxu0 0
  %300 = vmatpush.bf16.msra.mxu0 0
  %301 = vmatpush.bf16.msra.mxu0 0
  %302 = vmatpush.bf16.msra.mxu0 0
  %303 = vmatpush.bf16.msra.mxu0 0
  %304 = vmatpush.bf16.msra.mxu0 %v127
  %305 = vmatpush.bf16.msra.mxu0 %v121
  %306 = vmatmul.bf16.gmra.mxu0 %v142
  %v307 = vpop.f32.mrf.mxu0
  %v308 = vadd.f32 %v53, %v307
  %v309 = vpop.f32.mrf.mxu0
  %v310 = vadd.f32 %v53, %v309
  %311 = vmatmul.bf16.gmra.mxu0 %v145
  %v312 = vpop.f32.mrf.mxu0
  %v313 = vadd.f32 %v53, %v312
  %v314 = vpop.f32.mrf.mxu0
  %v315 = vadd.f32 %v53, %v314
  %316 = vmatmul.bf16.gmra.mxu0 %v148
  %v317 = vpop.f32.mrf.mxu0
  %v318 = vadd.f32 %v53, %v317
  %v319 = vpop.f32.mrf.mxu0
  %v320 = vadd.f32 %v53, %v319
  %321 = vmatmul.bf16.gmra.mxu0 %v151
  %v322 = vpop.f32.mrf.mxu0
  %v323 = vadd.f32 %v53, %v322
  %v324 = vpop.f32.mrf.mxu0
  %v325 = vadd.f32 %v53, %v324
  %326 = vdwg.mxu0
  %327 = vst [vmem:[#allocation2] sm:$0xff] %v163
  %328 = vst [vmem:[#allocation2 + $0x8] sm:$0xff] %v192
  %329 = vst [vmem:[#allocation2 + $0x10] sm:$0xff] %v221
  %330 = vst [vmem:[#allocation2 + $0x18] sm:$0xff] %v250
  %331 = vst [vmem:[#allocation2 + $0x20] sm:$0xff] %v279
  %332 = vst [vmem:[#allocation2 + $0x28] sm:$0xff] %v308
  %333 = vst [vmem:[#allocation2 + $0x30] sm:$0xff] %v165
  %334 = vst [vmem:[#allocation2 + $0x38] sm:$0xff] %v194
  %335 = vst [vmem:[#allocation2 + $0x40] sm:$0xff] %v223
  %336 = vst [vmem:[#allocation2 + $0x48] sm:$0xff] %v252
  %337 = vst [vmem:[#allocation2 + $0x50] sm:$0xff] %v281
  %338 = vst [vmem:[#allocation2 + $0x58] sm:$0xff] %v310
  %339 = vst [vmem:[#allocation2 + $0x60] sm:$0xff] %v168
  %340 = vst [vmem:[#allocation2 + $0x68] sm:$0xff] %v197
  %341 = vst [vmem:[#allocation2 + $0x70] sm:$0xff] %v226
  %342 = vst [vmem:[#allocation2 + $0x78] sm:$0xff] %v255
  %343 = vst [vmem:[#allocation2 + $0x80] sm:$0xff] %v284
  %344 = vst [vmem:[#allocation2 + $0x88] sm:$0xff] %v313
  %345 = vst [vmem:[#allocation2 + $0x90] sm:$0xff] %v170
  %346 = vst [vmem:[#allocation2 + $0x98] sm:$0xff] %v199
  %347 = vst [vmem:[#allocation2 + $0xa0] sm:$0xff] %v228
  %348 = vst [vmem:[#allocation2 + $0xa8] sm:$0xff] %v257
  %349 = vst [vmem:[#allocation2 + $0xb0] sm:$0xff] %v286
  %350 = vst [vmem:[#allocation2 + $0xb8] sm:$0xff] %v315
  %351 = vst [vmem:[#allocation2 + $0xc0] sm:$0xff] %v173
  %352 = vst [vmem:[#allocation2 + $0xc8] sm:$0xff] %v202
  %353 = vst [vmem:[#allocation2 + $0xd0] sm:$0xff] %v231
  %354 = vst [vmem:[#allocation2 + $0xd8] sm:$0xff] %v260
  %355 = vst [vmem:[#allocation2 + $0xe0] sm:$0xff] %v289
  %356 = vst [vmem:[#allocation2 + $0xe8] sm:$0xff] %v318
  %357 = vst [vmem:[#allocation2 + $0xf0] sm:$0xff] %v175
  %358 = vst [vmem:[#allocation2 + $0xf8] sm:$0xff] %v204
  %359 = vst [vmem:[#allocation2 + $0x100] sm:$0xff] %v233
  %360 = vst [vmem:[#allocation2 + $0x108] sm:$0xff] %v262
  %361 = vst [vmem:[#allocation2 + $0x110] sm:$0xff] %v291
  %362 = vst [vmem:[#allocation2 + $0x118] sm:$0xff] %v320
  %363 = vst [vmem:[#allocation2 + $0x120] sm:$0xff] %v178
  %364 = vst [vmem:[#allocation2 + $0x128] sm:$0xff] %v207
  %365 = vst [vmem:[#allocation2 + $0x130] sm:$0xff] %v236
  %366 = vst [vmem:[#allocation2 + $0x138] sm:$0xff] %v265
  %367 = vst [vmem:[#allocation2 + $0x140] sm:$0xff] %v294
  %368 = vst [vmem:[#allocation2 + $0x148] sm:$0xff] %v323
  %369 = vst [vmem:[#allocation2 + $0x150] sm:$0xff] %v180
  %370 = vst [vmem:[#allocation2 + $0x158] sm:$0xff] %v209
  %371 = vst [vmem:[#allocation2 + $0x160] sm:$0xff] %v238
  %372 = vst [vmem:[#allocation2 + $0x168] sm:$0xff] %v267
  %373 = vst [vmem:[#allocation2 + $0x170] sm:$0xff] %v296
  %374 = vst [vmem:[#allocation2 + $0x178] sm:$0xff] %v325
  %s375 = scalar_lea.vmem %s5, 1
  %v376 = vld [vmem:[%s375] ss:$8 sm:$0xf]
  %v377 = vld [vmem:[%s375] ss:$8 sm:$0x30]
  %v378 = vor.u32 %v376, %v377
  %v380 = vperm.slane %v378, 0
  %v381 = vperm.slane %v378, 1
  %v382 = vperm.slane %v378, 2
  %v383 = vperm.slane %v378, 3
  %v384 = vperm.slane %v378, 4
  %v385 = vperm.slane %v378, 5
  %s392 = scalar_lea.vmem %s5, 2
  %v393 = vld [vmem:[%s392] ss:$8 sm:$0x3]
  %v395 = vperm.slane %v393, 0
  %v396 = vperm.slane %v393, 1
  %s399 = scalar_lea.vmem %s5, 3
  %v400 = vld [vmem:[%s399] ss:$8 sm:$0x3]
  %v402 = vperm.slane %v400, 0
  %v403 = vperm.slane %v400, 1
  %s406 = scalar_lea.vmem %s5, 4
  %v407 = vld [vmem:[%s406] ss:$8 sm:$0x3]
  %v409 = vperm.slane %v407, 0
  %v410 = vperm.slane %v407, 1
  %v413 = vld [vmem:[%s5 + $0x5] ss:$0 sm:$0xff]
  %v414 = vld [vmem:[%s5 + $0x6] ss:$0 sm:$0xff]
  %v415 = vld [vmem:[%s5 + $0x7] ss:$0 sm:$0xff]
  %v416 = vld [vmem:[%s5 + $0x30] ss:$0 sm:$0xff]
  %s417 = smul.u32 0, 6
  %s418 = smul.addr %s417, 8
  %s419 = scalar_lea.vmem [#allocation2], %s418
  %v420 = vld [vmem:[%s419] sm:$0xff]
  %v421 = vld [vmem:[%s419 + $0x8] sm:$0xff]
  %v422 = vld [vmem:[%s419 + $0x10] sm:$0xff]
  %v423 = vld [vmem:[%s419 + $0x18] sm:$0xff]
  %v424 = vld [vmem:[%s419 + $0x20] sm:$0xff]
  %v425 = vld [vmem:[%s419 + $0x28] sm:$0xff]
  %v426 = vld [vmem:[%s2] sm:$0xff]
  %v427 = vld [vmem:[%s2 + $0x8] sm:$0xff]
  %v428 = vld [vmem:[%s2 + $0x10] sm:$0xff]
  %v429 = vld [vmem:[%s2 + $0x18] sm:$0xff]
  %v430 = vld [vmem:[%s2 + $0x20] sm:$0xff]
  %v431 = vld [vmem:[%s2 + $0x28] sm:$0xff]
  %v432 = vld [vmem:[%s2 + $0x30] sm:$0xff]
  %v433 = vld [vmem:[%s2 + $0x38] sm:$0xff]
  %v434 = vld [vmem:[%s2 + $0x40] sm:$0xff]
  %v435 = vld [vmem:[%s2 + $0x48] sm:$0xff]
  %v436 = vld [vmem:[%s2 + $0x50] sm:$0xff]
  %v437 = vld [vmem:[%s2 + $0x58] sm:$0xff]
  %v438 = vld [vmem:[%s2 + $0x60] sm:$0xff]
  %v439 = vld [vmem:[%s2 + $0x68] sm:$0xff]
  %v440 = vld [vmem:[%s2 + $0x70] sm:$0xff]
  %v441 = vld [vmem:[%s2 + $0x78] sm:$0xff]
  %v442 = vld [vmem:[%s2 + $0x80] sm:$0xff]
  %v443 = vld [vmem:[%s2 + $0x88] sm:$0xff]
  %v444 = vld [vmem:[%s2 + $0x90] sm:$0xff]
  %v445 = vld [vmem:[%s2 + $0x98] sm:$0xff]
  %v446 = vld [vmem:[%s2 + $0xa0] sm:$0xff]
  %v447 = vld [vmem:[%s2 + $0xa8] sm:$0xff]
  %v448 = vld [vmem:[%s2 + $0xb0] sm:$0xff]
  %v449 = vld [vmem:[%s2 + $0xb8] sm:$0xff]
  %v450 = vld [vmem:[%s2 + $0xc0] sm:$0xff]
  %v451 = vld [vmem:[%s2 + $0xc8] sm:$0xff]
  %v452 = vld [vmem:[%s2 + $0xd0] sm:$0xff]
  %v453 = vld [vmem:[%s2 + $0xd8] sm:$0xff]
  %v454 = vld [vmem:[%s2 + $0xe0] sm:$0xff]
  %v455 = vld [vmem:[%s2 + $0xe8] sm:$0xff]
  %v456 = vld [vmem:[%s2 + $0xf0] sm:$0xff]
  %v457 = vld [vmem:[%s2 + $0xf8] sm:$0xff]
  %v458 = vld [vmem:[%s2 + $0x100] sm:$0xff]
  %v459 = vld [vmem:[%s2 + $0x108] sm:$0xff]
  %v460 = vld [vmem:[%s2 + $0x110] sm:$0xff]
  %v461 = vld [vmem:[%s2 + $0x118] sm:$0xff]
  %v462 = vld [vmem:[%s2 + $0x120] sm:$0xff]
  %v463 = vld [vmem:[%s2 + $0x128] sm:$0xff]
  %v464 = vld [vmem:[%s2 + $0x130] sm:$0xff]
  %v465 = vld [vmem:[%s2 + $0x138] sm:$0xff]
  %v466 = vld [vmem:[%s2 + $0x140] sm:$0xff]
  %v467 = vld [vmem:[%s2 + $0x148] sm:$0xff]
  %v468 = vld [vmem:[%s2 + $0x150] sm:$0xff]
  %v469 = vld [vmem:[%s2 + $0x158] sm:$0xff]
  %v470 = vld [vmem:[%s2 + $0x160] sm:$0xff]
  %v471 = vld [vmem:[%s2 + $0x168] sm:$0xff]
  %v472 = vld [vmem:[%s2 + $0x170] sm:$0xff]
  %v473 = vld [vmem:[%s2 + $0x178] sm:$0xff]
  %v474 = vld [vmem:[%s2 + $0x180] sm:$0xff]
  %v475 = vld [vmem:[%s2 + $0x188] sm:$0xff]
  %v476 = vld [vmem:[%s2 + $0x190] sm:$0xff]
  %v477 = vld [vmem:[%s2 + $0x198] sm:$0xff]
  %v478 = vld [vmem:[%s2 + $0x1a0] sm:$0xff]
  %v479 = vld [vmem:[%s2 + $0x1a8] sm:$0xff]
  %v480 = vld [vmem:[%s2 + $0x1b0] sm:$0xff]
  %v481 = vld [vmem:[%s2 + $0x1b8] sm:$0xff]
  %v482 = vld [vmem:[%s2 + $0x1c0] sm:$0xff]
  %v483 = vld [vmem:[%s2 + $0x1c8] sm:$0xff]
  %v484 = vld [vmem:[%s2 + $0x1d0] sm:$0xff]
  %v485 = vld [vmem:[%s2 + $0x1d8] sm:$0xff]
  %v486 = vld [vmem:[%s2 + $0x1e0] sm:$0xff]
  %v487 = vld [vmem:[%s2 + $0x1e8] sm:$0xff]
  %v488 = vld [vmem:[%s2 + $0x1f0] sm:$0xff]
  %v489 = vld [vmem:[%s2 + $0x1f8] sm:$0xff]
  %v490 = vld [vmem:[%s2 + $0x200] sm:$0xff]
  %v491 = vld [vmem:[%s2 + $0x208] sm:$0xff]
  %v492 = vld [vmem:[%s2 + $0x210] sm:$0xff]
  %v493 = vld [vmem:[%s2 + $0x218] sm:$0xff]
  %v494 = vld [vmem:[%s2 + $0x220] sm:$0xff]
  %v495 = vld [vmem:[%s2 + $0x228] sm:$0xff]
  %v496 = vld [vmem:[%s2 + $0x230] sm:$0xff]
  %v497 = vld [vmem:[%s2 + $0x238] sm:$0xff]
  %v498 = vld [vmem:[%s2 + $0x240] sm:$0xff]
  %v499 = vld [vmem:[%s2 + $0x248] sm:$0xff]
  %v500 = vld [vmem:[%s2 + $0x250] sm:$0xff]
  %v501 = vld [vmem:[%s2 + $0x258] sm:$0xff]
  %v502 = vld [vmem:[%s2 + $0x260] sm:$0xff]
  %v503 = vld [vmem:[%s2 + $0x268] sm:$0xff]
  %v504 = vld [vmem:[%s2 + $0x270] sm:$0xff]
  %v505 = vld [vmem:[%s2 + $0x278] sm:$0xff]
  %v506 = vld [vmem:[%s2 + $0x280] sm:$0xff]
  %v507 = vld [vmem:[%s2 + $0x288] sm:$0xff]
  %v508 = vld [vmem:[%s2 + $0x290] sm:$0xff]
  %v509 = vld [vmem:[%s2 + $0x298] sm:$0xff]
  %v510 = vld [vmem:[%s2 + $0x2a0] sm:$0xff]
  %v511 = vld [vmem:[%s2 + $0x2a8] sm:$0xff]
  %v512 = vld [vmem:[%s2 + $0x2b0] sm:$0xff]
  %v513 = vld [vmem:[%s2 + $0x2b8] sm:$0xff]
  %v514 = vld [vmem:[%s2 + $0x2c0] sm:$0xff]
  %v515 = vld [vmem:[%s2 + $0x2c8] sm:$0xff]
  %v516 = vld [vmem:[%s2 + $0x2d0] sm:$0xff]
  %v517 = vld [vmem:[%s2 + $0x2d8] sm:$0xff]
  %v518 = vld [vmem:[%s2 + $0x2e0] sm:$0xff]
  %v519 = vld [vmem:[%s2 + $0x2e8] sm:$0xff]
  %v520 = vld [vmem:[%s2 + $0x2f0] sm:$0xff]
  %v521 = vld [vmem:[%s2 + $0x2f8] sm:$0xff]
  %v618 = vunpack.c.l.b16 %v426
  %v619 = vunpack.c.h.b16 %v426
  %v620 = vunpack.c.l.b16 %v427
  %v621 = vunpack.c.h.b16 %v427
  %v622 = vunpack.c.l.b16 %v428
  %v623 = vunpack.c.h.b16 %v428
  %v624 = vunpack.c.l.b16 %v429
  %v625 = vunpack.c.h.b16 %v429
  %v626 = vunpack.c.l.b16 %v430
  %v627 = vunpack.c.h.b16 %v430
  %v628 = vunpack.c.l.b16 %v431
  %v629 = vunpack.c.h.b16 %v431
  %v630 = vunpack.c.l.b16 %v432
  %v631 = vunpack.c.h.b16 %v432
  %v632 = vunpack.c.l.b16 %v433
  %v633 = vunpack.c.h.b16 %v433
  %v634 = vunpack.c.l.b16 %v434
  %v635 = vunpack.c.h.b16 %v434
  %v636 = vunpack.c.l.b16 %v435
  %v637 = vunpack.c.h.b16 %v435
  %v638 = vunpack.c.l.b16 %v436
  %v639 = vunpack.c.h.b16 %v436
  %v640 = vunpack.c.l.b16 %v437
  %v641 = vunpack.c.h.b16 %v437
  %v642 = vunpack.c.l.b16 %v438
  %v643 = vunpack.c.h.b16 %v438
  %v644 = vunpack.c.l.b16 %v439
  %v645 = vunpack.c.h.b16 %v439
  %v646 = vunpack.c.l.b16 %v440
  %v647 = vunpack.c.h.b16 %v440
  %v648 = vunpack.c.l.b16 %v441
  %v649 = vunpack.c.h.b16 %v441
  %v650 = vunpack.c.l.b16 %v442
  %v651 = vunpack.c.h.b16 %v442
  %v652 = vunpack.c.l.b16 %v443
  %v653 = vunpack.c.h.b16 %v443
  %v654 = vunpack.c.l.b16 %v444
  %v655 = vunpack.c.h.b16 %v444
  %v656 = vunpack.c.l.b16 %v445
  %v657 = vunpack.c.h.b16 %v445
  %v658 = vunpack.c.l.b16 %v446
  %v659 = vunpack.c.h.b16 %v446
  %v660 = vunpack.c.l.b16 %v447
  %v661 = vunpack.c.h.b16 %v447
  %v662 = vunpack.c.l.b16 %v448
  %v663 = vunpack.c.h.b16 %v448
  %v664 = vunpack.c.l.b16 %v449
  %v665 = vunpack.c.h.b16 %v449
  %v666 = vunpack.c.l.b16 %v450
  %v667 = vunpack.c.h.b16 %v450
  %v668 = vunpack.c.l.b16 %v451
  %v669 = vunpack.c.h.b16 %v451
  %v670 = vunpack.c.l.b16 %v452
  %v671 = vunpack.c.h.b16 %v452
  %v672 = vunpack.c.l.b16 %v453
  %v673 = vunpack.c.h.b16 %v453
  %v674 = vunpack.c.l.b16 %v454
  %v675 = vunpack.c.h.b16 %v454
  %v676 = vunpack.c.l.b16 %v455
  %v677 = vunpack.c.h.b16 %v455
  %v678 = vunpack.c.l.b16 %v456
  %v679 = vunpack.c.h.b16 %v456
  %v680 = vunpack.c.l.b16 %v457
  %v681 = vunpack.c.h.b16 %v457
  %v682 = vunpack.c.l.b16 %v458
  %v683 = vunpack.c.h.b16 %v458
  %v684 = vunpack.c.l.b16 %v459
  %v685 = vunpack.c.h.b16 %v459
  %v686 = vunpack.c.l.b16 %v460
  %v687 = vunpack.c.h.b16 %v460
  %v688 = vunpack.c.l.b16 %v461
  %v689 = vunpack.c.h.b16 %v461
  %v690 = vunpack.c.l.b16 %v462
  %v691 = vunpack.c.h.b16 %v462
  %v692 = vunpack.c.l.b16 %v463
  %v693 = vunpack.c.h.b16 %v463
  %v694 = vunpack.c.l.b16 %v464
  %v695 = vunpack.c.h.b16 %v464
  %v696 = vunpack.c.l.b16 %v465
  %v697 = vunpack.c.h.b16 %v465
  %v698 = vunpack.c.l.b16 %v466
  %v699 = vunpack.c.h.b16 %v466
  %v700 = vunpack.c.l.b16 %v467
  %v701 = vunpack.c.h.b16 %v467
  %v702 = vunpack.c.l.b16 %v468
  %v703 = vunpack.c.h.b16 %v468
  %v704 = vunpack.c.l.b16 %v469
  %v705 = vunpack.c.h.b16 %v469
  %v706 = vunpack.c.l.b16 %v470
  %v707 = vunpack.c.h.b16 %v470
  %v708 = vunpack.c.l.b16 %v471
  %v709 = vunpack.c.h.b16 %v471
  %v710 = vunpack.c.l.b16 %v472
  %v711 = vunpack.c.h.b16 %v472
  %v712 = vunpack.c.l.b16 %v473
  %v713 = vunpack.c.h.b16 %v473
  %v714 = vunpack.c.l.b16 %v474
  %v715 = vunpack.c.h.b16 %v474
  %v716 = vunpack.c.l.b16 %v475
  %v717 = vunpack.c.h.b16 %v475
  %v718 = vunpack.c.l.b16 %v476
  %v719 = vunpack.c.h.b16 %v476
  %v720 = vunpack.c.l.b16 %v477
  %v721 = vunpack.c.h.b16 %v477
  %v722 = vunpack.c.l.b16 %v478
  %v723 = vunpack.c.h.b16 %v478
  %v724 = vunpack.c.l.b16 %v479
  %v725 = vunpack.c.h.b16 %v479
  %v726 = vunpack.c.l.b16 %v480
  %v727 = vunpack.c.h.b16 %v480
  %v728 = vunpack.c.l.b16 %v481
  %v729 = vunpack.c.h.b16 %v481
  %v730 = vunpack.c.l.b16 %v482
  %v731 = vunpack.c.h.b16 %v482
  %v732 = vunpack.c.l.b16 %v483
  %v733 = vunpack.c.h.b16 %v483
  %v734 = vunpack.c.l.b16 %v484
  %v735 = vunpack.c.h.b16 %v484
  %v736 = vunpack.c.l.b16 %v485
  %v737 = vunpack.c.h.b16 %v485
  %v738 = vunpack.c.l.b16 %v486
  %v739 = vunpack.c.h.b16 %v486
  %v740 = vunpack.c.l.b16 %v487
  %v741 = vunpack.c.h.b16 %v487
  %v742 = vunpack.c.l.b16 %v488
  %v743 = vunpack.c.h.b16 %v488
  %v744 = vunpack.c.l.b16 %v489
  %v745 = vunpack.c.h.b16 %v489
  %v746 = vunpack.c.l.b16 %v490
  %v747 = vunpack.c.h.b16 %v490
  %v748 = vunpack.c.l.b16 %v491
  %v749 = vunpack.c.h.b16 %v491
  %v750 = vunpack.c.l.b16 %v492
  %v751 = vunpack.c.h.b16 %v492
  %v752 = vunpack.c.l.b16 %v493
  %v753 = vunpack.c.h.b16 %v493
  %v754 = vunpack.c.l.b16 %v494
  %v755 = vunpack.c.h.b16 %v494
  %v756 = vunpack.c.l.b16 %v495
  %v757 = vunpack.c.h.b16 %v495
  %v758 = vunpack.c.l.b16 %v496
  %v759 = vunpack.c.h.b16 %v496
  %v760 = vunpack.c.l.b16 %v497
  %v761 = vunpack.c.h.b16 %v497
  %v762 = vunpack.c.l.b16 %v498
  %v763 = vunpack.c.h.b16 %v498
  %v764 = vunpack.c.l.b16 %v499
  %v765 = vunpack.c.h.b16 %v499
  %v766 = vunpack.c.l.b16 %v500
  %v767 = vunpack.c.h.b16 %v500
  %v768 = vunpack.c.l.b16 %v501
  %v769 = vunpack.c.h.b16 %v501
  %v770 = vunpack.c.l.b16 %v502
  %v771 = vunpack.c.h.b16 %v502
  %v772 = vunpack.c.l.b16 %v503
  %v773 = vunpack.c.h.b16 %v503
  %v774 = vunpack.c.l.b16 %v504
  %v775 = vunpack.c.h.b16 %v504
  %v776 = vunpack.c.l.b16 %v505
  %v777 = vunpack.c.h.b16 %v505
  %v778 = vunpack.c.l.b16 %v506
  %v779 = vunpack.c.h.b16 %v506
  %v780 = vunpack.c.l.b16 %v507
  %v781 = vunpack.c.h.b16 %v507
  %v782 = vunpack.c.l.b16 %v508
  %v783 = vunpack.c.h.b16 %v508
  %v784 = vunpack.c.l.b16 %v509
  %v785 = vunpack.c.h.b16 %v509
  %v786 = vunpack.c.l.b16 %v510
  %v787 = vunpack.c.h.b16 %v510
  %v788 = vunpack.c.l.b16 %v511
  %v789 = vunpack.c.h.b16 %v511
  %v790 = vunpack.c.l.b16 %v512
  %v791 = vunpack.c.h.b16 %v512
  %v792 = vunpack.c.l.b16 %v513
  %v793 = vunpack.c.h.b16 %v513
  %v794 = vunpack.c.l.b16 %v514
  %v795 = vunpack.c.h.b16 %v514
  %v796 = vunpack.c.l.b16 %v515
  %v797 = vunpack.c.h.b16 %v515
  %v798 = vunpack.c.l.b16 %v516
  %v799 = vunpack.c.h.b16 %v516
  %v800 = vunpack.c.l.b16 %v517
  %v801 = vunpack.c.h.b16 %v517
  %v802 = vunpack.c.l.b16 %v518
  %v803 = vunpack.c.h.b16 %v518
  %v804 = vunpack.c.l.b16 %v519
  %v805 = vunpack.c.h.b16 %v519
  %v806 = vunpack.c.l.b16 %v520
  %v807 = vunpack.c.h.b16 %v520
  %v808 = vunpack.c.l.b16 %v521
  %v809 = vunpack.c.h.b16 %v521
  %v810 = vpack.c.b16 %v624, %v618
  %v811 = vpack.c.b16 %v625, %v619
  %v812 = vpack.c.b16 %v626, %v620
  %v813 = vpack.c.b16 %v627, %v621
  %v814 = vpack.c.b16 %v628, %v622
  %v815 = vpack.c.b16 %v629, %v623
  %v816 = vpack.c.b16 %v636, %v630
  %v817 = vpack.c.b16 %v637, %v631
  %v818 = vpack.c.b16 %v638, %v632
  %v819 = vpack.c.b16 %v639, %v633
  %v820 = vpack.c.b16 %v640, %v634
  %v821 = vpack.c.b16 %v641, %v635
  %v822 = vpack.c.b16 %v648, %v642
  %v823 = vpack.c.b16 %v649, %v643
  %v824 = vpack.c.b16 %v650, %v644
  %v825 = vpack.c.b16 %v651, %v645
  %v826 = vpack.c.b16 %v652, %v646
  %v827 = vpack.c.b16 %v653, %v647
  %v828 = vpack.c.b16 %v660, %v654
  %v829 = vpack.c.b16 %v661, %v655
  %v830 = vpack.c.b16 %v662, %v656
  %v831 = vpack.c.b16 %v663, %v657
  %v832 = vpack.c.b16 %v664, %v658
  %v833 = vpack.c.b16 %v665, %v659
  %v834 = vpack.c.b16 %v672, %v666
  %v835 = vpack.c.b16 %v673, %v667
  %v836 = vpack.c.b16 %v674, %v668
  %v837 = vpack.c.b16 %v675, %v669
  %v838 = vpack.c.b16 %v676, %v670
  %v839 = vpack.c.b16 %v677, %v671
  %v840 = vpack.c.b16 %v684, %v678
  %v841 = vpack.c.b16 %v685, %v679
  %v842 = vpack.c.b16 %v686, %v680
  %v843 = vpack.c.b16 %v687, %v681
  %v844 = vpack.c.b16 %v688, %v682
  %v845 = vpack.c.b16 %v689, %v683
  %v846 = vpack.c.b16 %v696, %v690
  %v847 = vpack.c.b16 %v697, %v691
  %v848 = vpack.c.b16 %v698, %v692
  %v849 = vpack.c.b16 %v699, %v693
  %v850 = vpack.c.b16 %v700, %v694
  %v851 = vpack.c.b16 %v701, %v695
  %v852 = vpack.c.b16 %v708, %v702
  %v853 = vpack.c.b16 %v709, %v703
  %v854 = vpack.c.b16 %v710, %v704
  %v855 = vpack.c.b16 %v711, %v705
  %v856 = vpack.c.b16 %v712, %v706
  %v857 = vpack.c.b16 %v713, %v707
  %v858 = vpack.c.b16 %v720, %v714
  %v859 = vpack.c.b16 %v721, %v715
  %v860 = vpack.c.b16 %v722, %v716
  %v861 = vpack.c.b16 %v723, %v717
  %v862 = vpack.c.b16 %v724, %v718
  %v863 = vpack.c.b16 %v725, %v719
  %v864 = vpack.c.b16 %v732, %v726
  %v865 = vpack.c.b16 %v733, %v727
  %v866 = vpack.c.b16 %v734, %v728
  %v867 = vpack.c.b16 %v735, %v729
  %v868 = vpack.c.b16 %v736, %v730
  %v869 = vpack.c.b16 %v737, %v731
  %v870 = vpack.c.b16 %v744, %v738
  %v871 = vpack.c.b16 %v745, %v739
  %v872 = vpack.c.b16 %v746, %v740
  %v873 = vpack.c.b16 %v747, %v741
  %v874 = vpack.c.b16 %v748, %v742
  %v875 = vpack.c.b16 %v749, %v743
  %v876 = vpack.c.b16 %v756, %v750
  %v877 = vpack.c.b16 %v757, %v751
  %v878 = vpack.c.b16 %v758, %v752
  %v879 = vpack.c.b16 %v759, %v753
  %v880 = vpack.c.b16 %v760, %v754
  %v881 = vpack.c.b16 %v761, %v755
  %v882 = vpack.c.b16 %v768, %v762
  %v883 = vpack.c.b16 %v769, %v763
  %v884 = vpack.c.b16 %v770, %v764
  %v885 = vpack.c.b16 %v771, %v765
  %v886 = vpack.c.b16 %v772, %v766
  %v887 = vpack.c.b16 %v773, %v767
  %v888 = vpack.c.b16 %v780, %v774
  %v889 = vpack.c.b16 %v781, %v775
  %v890 = vpack.c.b16 %v782, %v776
  %v891 = vpack.c.b16 %v783, %v777
  %v892 = vpack.c.b16 %v784, %v778
  %v893 = vpack.c.b16 %v785, %v779
  %v894 = vpack.c.b16 %v792, %v786
  %v895 = vpack.c.b16 %v793, %v787
  %v896 = vpack.c.b16 %v794, %v788
  %v897 = vpack.c.b16 %v795, %v789
  %v898 = vpack.c.b16 %v796, %v790
  %v899 = vpack.c.b16 %v797, %v791
  %v900 = vpack.c.b16 %v804, %v798
  %v901 = vpack.c.b16 %v805, %v799
  %v902 = vpack.c.b16 %v806, %v800
  %v903 = vpack.c.b16 %v807, %v801
  %v904 = vpack.c.b16 %v808, %v802
  %v905 = vpack.c.b16 %v809, %v803
  %1002 = vmatpush.bf16.msra.mxu0 %v852
  %1003 = vmatpush.bf16.msra.mxu0 %v846
  %1004 = vmatpush.bf16.msra.mxu0 %v840
  %1005 = vmatpush.bf16.msra.mxu0 %v834
  %1006 = vmatpush.bf16.msra.mxu0 %v828
  %1007 = vmatpush.bf16.msra.mxu0 %v822
  %1008 = vmatpush.bf16.msra.mxu0 %v816
  %1009 = vmatpush.bf16.msra.mxu0 %v810
  %1010 = vmatmul.bf16.gmra.mxu0 0
  %v1011 = vpop.f32.mrf.mxu0
  %v1012 = vadd.f32 0.0, %v1011
  %v1013 = vpop.f32.mrf.mxu0
  %1014 = vdwg.mxu0
  %1015 = vmatpush.bf16.msra.mxu0 %v900
  %1016 = vmatpush.bf16.msra.mxu0 %v894
  %1017 = vmatpush.bf16.msra.mxu0 %v888
  %1018 = vmatpush.bf16.msra.mxu0 %v882
  %1019 = vmatpush.bf16.msra.mxu0 %v876
  %1020 = vmatpush.bf16.msra.mxu0 %v870
  %1021 = vmatpush.bf16.msra.mxu0 %v864
  %1022 = vmatpush.bf16.msra.mxu0 %v858
  %1023 = vmatmul.bf16.gmra.mxu0 0
  %v1024 = vpop.f32.mrf.mxu0
  %v1025 = vadd.f32 %v1012, %v1024
  %v1026 = vpop.f32.mrf.mxu0
  %1027 = vdwg.mxu0
  %1028 = vmatpush.bf16.msra.mxu0 %v853
  %1029 = vmatpush.bf16.msra.mxu0 %v847
  %1030 = vmatpush.bf16.msra.mxu0 %v841
  %1031 = vmatpush.bf16.msra.mxu0 %v835
  %1032 = vmatpush.bf16.msra.mxu0 %v829
  %1033 = vmatpush.bf16.msra.mxu0 %v823
  %1034 = vmatpush.bf16.msra.mxu0 %v817
  %1035 = vmatpush.bf16.msra.mxu0 %v811
  %1036 = vmatmul.bf16.gmra.mxu0 0
  %v1037 = vpop.f32.mrf.mxu0
  %v1038 = vadd.f32 0.0, %v1037
  %v1039 = vpop.f32.mrf.mxu0
  %1040 = vdwg.mxu0
  %1041 = vmatpush.bf16.msra.mxu0 %v901
  %1042 = vmatpush.bf16.msra.mxu0 %v895
  %1043 = vmatpush.bf16.msra.mxu0 %v889
  %1044 = vmatpush.bf16.msra.mxu0 %v883
  %1045 = vmatpush.bf16.msra.mxu0 %v877
  %1046 = vmatpush.bf16.msra.mxu0 %v871
  %1047 = vmatpush.bf16.msra.mxu0 %v865
  %1048 = vmatpush.bf16.msra.mxu0 %v859
  %1049 = vmatmul.bf16.gmra.mxu0 0
  %v1050 = vpop.f32.mrf.mxu0
  %v1051 = vadd.f32 %v1038, %v1050
  %v1052 = vpop.f32.mrf.mxu0
  %1053 = vdwg.mxu0
  %1054 = vmatpush.bf16.msra.mxu0 %v854
  %1055 = vmatpush.bf16.msra.mxu0 %v848
  %1056 = vmatpush.bf16.msra.mxu0 %v842
  %1057 = vmatpush.bf16.msra.mxu0 %v836
  %1058 = vmatpush.bf16.msra.mxu0 %v830
  %1059 = vmatpush.bf16.msra.mxu0 %v824
  %1060 = vmatpush.bf16.msra.mxu0 %v818
  %1061 = vmatpush.bf16.msra.mxu0 %v812
  %1062 = vmatmul.bf16.gmra.mxu0 0
  %v1063 = vpop.f32.mrf.mxu0
  %v1064 = vadd.f32 0.0, %v1063
  %v1065 = vpop.f32.mrf.mxu0
  %1066 = vdwg.mxu0
  %1067 = vmatpush.bf16.msra.mxu0 %v902
  %1068 = vmatpush.bf16.msra.mxu0 %v896
  %1069 = vmatpush.bf16.msra.mxu0 %v890
  %1070 = vmatpush.bf16.msra.mxu0 %v884
  %1071 = vmatpush.bf16.msra.mxu0 %v878
  %1072 = vmatpush.bf16.msra.mxu0 %v872
  %1073 = vmatpush.bf16.msra.mxu0 %v866
  %1074 = vmatpush.bf16.msra.mxu0 %v860
  %1075 = vmatmul.bf16.gmra.mxu0 0
  %v1076 = vpop.f32.mrf.mxu0
  %v1077 = vadd.f32 %v1064, %v1076
  %v1078 = vpop.f32.mrf.mxu0
  %1079 = vdwg.mxu0
  %1080 = vmatpush.bf16.msra.mxu0 %v855
  %1081 = vmatpush.bf16.msra.mxu0 %v849
  %1082 = vmatpush.bf16.msra.mxu0 %v843
  %1083 = vmatpush.bf16.msra.mxu0 %v837
  %1084 = vmatpush.bf16.msra.mxu0 %v831
  %1085 = vmatpush.bf16.msra.mxu0 %v825
  %1086 = vmatpush.bf16.msra.mxu0 %v819
  %1087 = vmatpush.bf16.msra.mxu0 %v813
  %1088 = vmatmul.bf16.gmra.mxu0 0
  %v1089 = vpop.f32.mrf.mxu0
  %v1090 = vadd.f32 0.0, %v1089
  %v1091 = vpop.f32.mrf.mxu0
  %1092 = vdwg.mxu0
  %1093 = vmatpush.bf16.msra.mxu0 %v903
  %1094 = vmatpush.bf16.msra.mxu0 %v897
  %1095 = vmatpush.bf16.msra.mxu0 %v891
  %1096 = vmatpush.bf16.msra.mxu0 %v885
  %1097 = vmatpush.bf16.msra.mxu0 %v879
  %1098 = vmatpush.bf16.msra.mxu0 %v873
  %1099 = vmatpush.bf16.msra.mxu0 %v867
  %1100 = vmatpush.bf16.msra.mxu0 %v861
  %1101 = vmatmul.bf16.gmra.mxu0 0
  %v1102 = vpop.f32.mrf.mxu0
  %v1103 = vadd.f32 %v1090, %v1102
  %v1104 = vpop.f32.mrf.mxu0
  %1105 = vdwg.mxu0
  %1106 = vmatpush.bf16.msra.mxu0 %v856
  %1107 = vmatpush.bf16.msra.mxu0 %v850
  %1108 = vmatpush.bf16.msra.mxu0 %v844
  %1109 = vmatpush.bf16.msra.mxu0 %v838
  %1110 = vmatpush.bf16.msra.mxu0 %v832
  %1111 = vmatpush.bf16.msra.mxu0 %v826
  %1112 = vmatpush.bf16.msra.mxu0 %v820
  %1113 = vmatpush.bf16.msra.mxu0 %v814
  %1114 = vmatmul.bf16.gmra.mxu0 0
  %v1115 = vpop.f32.mrf.mxu0
  %v1116 = vadd.f32 0.0, %v1115
  %v1117 = vpop.f32.mrf.mxu0
  %1118 = vdwg.mxu0
  %1119 = vmatpush.bf16.msra.mxu0 %v904
  %1120 = vmatpush.bf16.msra.mxu0 %v898
  %1121 = vmatpush.bf16.msra.mxu0 %v892
  %1122 = vmatpush.bf16.msra.mxu0 %v886
  %1123 = vmatpush.bf16.msra.mxu0 %v880
  %1124 = vmatpush.bf16.msra.mxu0 %v874
  %1125 = vmatpush.bf16.msra.mxu0 %v868
  %1126 = vmatpush.bf16.msra.mxu0 %v862
  %1127 = vmatmul.bf16.gmra.mxu0 0
  %v1128 = vpop.f32.mrf.mxu0
  %v1129 = vadd.f32 %v1116, %v1128
  %v1130 = vpop.f32.mrf.mxu0
  %1131 = vdwg.mxu0
  %1132 = vmatpush.bf16.msra.mxu0 %v857
  %1133 = vmatpush.bf16.msra.mxu0 %v851
  %1134 = vmatpush.bf16.msra.mxu0 %v845
  %1135 = vmatpush.bf16.msra.mxu0 %v839
  %1136 = vmatpush.bf16.msra.mxu0 %v833
  %1137 = vmatpush.bf16.msra.mxu0 %v827
  %1138 = vmatpush.bf16.msra.mxu0 %v821
  %1139 = vmatpush.bf16.msra.mxu0 %v815
  %1140 = vmatmul.bf16.gmra.mxu0 0
  %v1141 = vpop.f32.mrf.mxu0
  %v1142 = vadd.f32 0.0, %v1141
  %v1143 = vpop.f32.mrf.mxu0
  %1144 = vdwg.mxu0
  %1145 = vmatpush.bf16.msra.mxu0 %v905
  %1146 = vmatpush.bf16.msra.mxu0 %v899
  %1147 = vmatpush.bf16.msra.mxu0 %v893
  %1148 = vmatpush.bf16.msra.mxu0 %v887
  %1149 = vmatpush.bf16.msra.mxu0 %v881
  %1150 = vmatpush.bf16.msra.mxu0 %v875
  %1151 = vmatpush.bf16.msra.mxu0 %v869
  %1152 = vmatpush.bf16.msra.mxu0 %v863
  %1153 = vmatmul.bf16.gmra.mxu0 0
  %v1154 = vpop.f32.mrf.mxu0
  %v1155 = vadd.f32 %v1142, %v1154
  %v1156 = vpop.f32.mrf.mxu0
  %1157 = vdwg.mxu0
  %v1158 = vadd.f32 %v420, %v1025
  %v1159 = vadd.f32 %v421, %v1051
  %v1160 = vadd.f32 %v422, %v1077
  %v1161 = vadd.f32 %v423, %v1103
  %v1162 = vxor.u32 %v1158, 2147483648
  %v1163 = vxor.u32 %v1159, 2147483648
  %v1164 = vxor.u32 %v1160, 2147483648
  %v1165 = vxor.u32 %v1161, 2147483648
  %v1166 = vmul.f32 %v1162, 1.442695
  %v1167 = vpow.pop %v1166
  %v1168 = vmul.f32 %v1163, 1.442695
  %v1169 = vpow.pop %v1168
  %v1170 = vmul.f32 %v1164, 1.442695
  %v1171 = vpow.pop %v1170
  %v1172 = vmul.f32 %v1165, 1.442695
  %v1173 = vpow.pop %v1172
  %v1174 = vadd.f32 %v1167, 1.0
  %v1175 = vadd.f32 %v1169, 1.0
  %v1176 = vadd.f32 %v1171, 1.0
  %v1177 = vadd.f32 %v1173, 1.0
  %v1178 = vrcp.pop %v1174
  %v1179 = vmul.f32 %v1174, %v1178
  %v1180 = vsub.f32 1.0, %v1179
  %v1181 = vmul.f32 %v1178, %v1180
  %v1182 = vadd.f32 %v1178, %v1181
  %vm1183 = vweird.f32 %v1174
  %vm1184 = vweird.f32 %v1178
  %vm1185 = vmor %vm1183, %vm1184
  %v1186 = vsel %vm1185, %v1178, %v1182
  %v1187 = vand.u32 2147483647, %v1174
  %vm1188 = vcmp.eq.f32.partialorder %v1187, 8.507059e+37
  %v1189 = vand.u32 %v1174, 2147483648
  %v1190 = vor.u32 1.1754944e-38, %v1189
  %v1191 = vsel %vm1188, %v1190, %v1186
  %v1192 = vmul.f32 1.0, %v1191
  %v1193 = vrcp.pop %v1175
  %v1194 = vmul.f32 %v1175, %v1193
  %v1195 = vsub.f32 1.0, %v1194
  %v1196 = vmul.f32 %v1193, %v1195
  %v1197 = vadd.f32 %v1193, %v1196
  %vm1198 = vweird.f32 %v1175
  %vm1199 = vweird.f32 %v1193
  %vm1200 = vmor %vm1198, %vm1199
  %v1201 = vsel %vm1200, %v1193, %v1197
  %v1202 = vand.u32 2147483647, %v1175
  %vm1203 = vcmp.eq.f32.partialorder %v1202, 8.507059e+37
  %v1204 = vand.u32 %v1175, 2147483648
  %v1205 = vor.u32 1.1754944e-38, %v1204
  %v1206 = vsel %vm1203, %v1205, %v1201
  %v1207 = vmul.f32 1.0, %v1206
  %v1208 = vrcp.pop %v1176
  %v1209 = vmul.f32 %v1176, %v1208
  %v1210 = vsub.f32 1.0, %v1209
  %v1211 = vmul.f32 %v1208, %v1210
  %v1212 = vadd.f32 %v1208, %v1211
  %vm1213 = vweird.f32 %v1176
  %vm1214 = vweird.f32 %v1208
  %vm1215 = vmor %vm1213, %vm1214
  %v1216 = vsel %vm1215, %v1208, %v1212
  %v1217 = vand.u32 2147483647, %v1176
  %vm1218 = vcmp.eq.f32.partialorder %v1217, 8.507059e+37
  %v1219 = vand.u32 %v1176, 2147483648
  %v1220 = vor.u32 1.1754944e-38, %v1219
  %v1221 = vsel %vm1218, %v1220, %v1216
  %v1222 = vmul.f32 1.0, %v1221
  %v1223 = vrcp.pop %v1177
  %v1224 = vmul.f32 %v1177, %v1223
  %v1225 = vsub.f32 1.0, %v1224
  %v1226 = vmul.f32 %v1223, %v1225
  %v1227 = vadd.f32 %v1223, %v1226
  %vm1228 = vweird.f32 %v1177
  %vm1229 = vweird.f32 %v1223
  %vm1230 = vmor %vm1228, %vm1229
  %v1231 = vsel %vm1230, %v1223, %v1227
  %v1232 = vand.u32 2147483647, %v1177
  %vm1233 = vcmp.eq.f32.partialorder %v1232, 8.507059e+37
  %v1234 = vand.u32 %v1177, 2147483648
  %v1235 = vor.u32 1.1754944e-38, %v1234
  %v1236 = vsel %vm1233, %v1235, %v1231
  %v1237 = vmul.f32 1.0, %v1236
  %v1238 = vadd.f32 %v1129, %v395
  %v1239 = vadd.f32 %v1155, %v396
  %v1240 = vmul.f32 %v1192, %v1238
  %v1241 = vmul.f32 %v1207, %v1239
  %v1242 = vadd.f32 %v424, %v1240
  %v1243 = vadd.f32 %v425, %v1241
  %v1244 = vtanh.pop %v1242
  %v1245 = vtanh.pop %v1243
  %v1246 = vsub.f32 1.0, %v1222
  %v1247 = vsub.f32 1.0, %v1237
  %v1248 = vmul.f32 %v1246, %v1244
  %v1249 = vmul.f32 %v1247, %v1245
  %v1250 = vmul.f32 %v1222, 0.0
  %v1251 = vmul.f32 %v1237, 0.0
  %v1252 = vadd.f32 %v1248, %v1250
  %v1253 = vadd.f32 %v1249, %v1251
  %1254 = vadd.xlane.f32.xlu0 %v1252
  %v1255 = vpop.xlane.xlu0 %1254
  %v1256 = vrcp.pop 128.0
  %v1257 = vmul.f32 128.0, %v1256
  %v1258 = vsub.f32 1.0, %v1257
  %v1259 = vmul.f32 %v1256, %v1258
  %v1260 = vadd.f32 %v1256, %v1259
  %vm1261 = vweird.f32 %v1256
  %v1262 = vsel %vm1261, %v1256, %v1260
  %v1263 = vmul.f32 %v1255, %v1262
  %v1264 = vmul.f32 %v1252, %v1252
  %1265 = vadd.xlane.f32.xlu0 %v1264
  %v1266 = vpop.xlane.xlu0 %1265
  %v1267 = vmul.f32 %v1266, %v1262
  %v1268 = vmul.f32 %v1263, %v1263
  %v1269 = vsub.f32 %v1267, %v1268
  %v1270 = vsub.f32 %v1252, %v1263
  %v1271 = vadd.f32 %v1269, 1e-05
  %v1272 = vrsqrt.pop %v1271
  %v1273 = vmul.f32 %v1272, %v1271
  %v1274 = vmul.f32 %v1273, %v1272
  %v1275 = vmul.f32 0.5, %v1274
  %v1276 = vsub.f32 1.5, %v1275
  %v1277 = vmul.f32 %v1272, %v1276
  %vm1278 = vweird.f32 %v1271
  %vm1279 = vweird.f32 %v1272
  %vm1280 = vmor %vm1278, %vm1279
  %v1281 = vsel %vm1280, %v1272, %v1277
  %v1282 = vmul.f32 %v1270, %v1281
  %1283 = vadd.xlane.f32.xlu0 %v1253
  %v1284 = vpop.xlane.xlu0 %1283
  %v1285 = vmul.f32 %v1284, %v1262
  %v1286 = vmul.f32 %v1253, %v1253
  %1287 = vadd.xlane.f32.xlu0 %v1286
  %v1288 = vpop.xlane.xlu0 %1287
  %v1289 = vmul.f32 %v1288, %v1262
  %v1290 = vmul.f32 %v1285, %v1285
  %v1291 = vsub.f32 %v1289, %v1290
  %v1292 = vsub.f32 %v1253, %v1285
  %v1293 = vadd.f32 %v1291, 1e-05
  %v1294 = vrsqrt.pop %v1293
  %v1295 = vmul.f32 %v1294, %v1293
  %v1296 = vmul.f32 %v1295, %v1294
  %v1297 = vmul.f32 0.5, %v1296
  %v1298 = vsub.f32 1.5, %v1297
  %v1299 = vmul.f32 %v1294, %v1298
  %vm1300 = vweird.f32 %v1293
  %vm1301 = vweird.f32 %v1294
  %vm1302 = vmor %vm1300, %vm1301
  %v1303 = vsel %vm1302, %v1294, %v1299
  %v1304 = vmul.f32 %v1292, %v1303
  %v1305 = vmul.f32 %v1282, %v402
  %v1306 = vmul.f32 %v1304, %v403
  %v1307 = vadd.f32 %v1305, %v409
  %v1308 = vadd.f32 %v1306, %v410
  %v1309 = vpack.c.bf16 %v1308, %v1307
  %v1311 = vunpack.c.l.b16 %v1309
  %v1312 = vunpack.c.h.b16 %v1309
  %v1313 = vpack.c.b16 %v1311, %v1311
  %v1314 = vpack.c.b16 %v1312, %v1312
  %v1317 = vld [vmem:[%s3] sm:$0xff]
  %v1318 = vld [vmem:[%s3 + $0x8] sm:$0xff]
  %v1319 = vld [vmem:[%s3 + $0x10] sm:$0xff]
  %v1320 = vld [vmem:[%s3 + $0x18] sm:$0xff]
  %v1321 = vld [vmem:[%s3 + $0x20] sm:$0xff]
  %v1322 = vld [vmem:[%s3 + $0x28] sm:$0xff]
  %v1323 = vld [vmem:[%s3 + $0x30] sm:$0xff]
  %v1324 = vld [vmem:[%s3 + $0x38] sm:$0xff]
  %v1325 = vld [vmem:[%s3 + $0x40] sm:$0xff]
  %v1326 = vld [vmem:[%s3 + $0x48] sm:$0xff]
  %v1327 = vld [vmem:[%s3 + $0x50] sm:$0xff]
  %v1328 = vld [vmem:[%s3 + $0x58] sm:$0xff]
  %v1329 = vld [vmem:[%s3 + $0x60] sm:$0xff]
  %v1330 = vld [vmem:[%s3 + $0x68] sm:$0xff]
  %v1331 = vld [vmem:[%s3 + $0x70] sm:$0xff]
  %v1332 = vld [vmem:[%s3 + $0x78] sm:$0xff]
  %v1333 = vld [vmem:[%s3 + $0x80] sm:$0xff]
  %v1334 = vld [vmem:[%s3 + $0x88] sm:$0xff]
  %v1335 = vld [vmem:[%s3 + $0x90] sm:$0xff]
  %v1336 = vld [vmem:[%s3 + $0x98] sm:$0xff]
  %v1337 = vld [vmem:[%s3 + $0xa0] sm:$0xff]
  %v1338 = vld [vmem:[%s3 + $0xa8] sm:$0xff]
  %v1339 = vld [vmem:[%s3 + $0xb0] sm:$0xff]
  %v1340 = vld [vmem:[%s3 + $0xb8] sm:$0xff]
  %v1341 = vld [vmem:[%s3 + $0xc0] sm:$0xff]
  %v1342 = vld [vmem:[%s3 + $0xc8] sm:$0xff]
  %v1343 = vld [vmem:[%s3 + $0xd0] sm:$0xff]
  %v1344 = vld [vmem:[%s3 + $0xd8] sm:$0xff]
  %v1345 = vld [vmem:[%s3 + $0xe0] sm:$0xff]
  %v1346 = vld [vmem:[%s3 + $0xe8] sm:$0xff]
  %v1347 = vld [vmem:[%s3 + $0xf0] sm:$0xff]
  %v1348 = vld [vmem:[%s3 + $0xf8] sm:$0xff]
  %v1349 = vld [vmem:[%s3 + $0x100] sm:$0xff]
  %v1350 = vld [vmem:[%s3 + $0x108] sm:$0xff]
  %v1351 = vld [vmem:[%s3 + $0x110] sm:$0xff]
  %v1352 = vld [vmem:[%s3 + $0x118] sm:$0xff]
  %v1353 = vld [vmem:[%s3 + $0x120] sm:$0xff]
  %v1354 = vld [vmem:[%s3 + $0x128] sm:$0xff]
  %v1355 = vld [vmem:[%s3 + $0x130] sm:$0xff]
  %v1356 = vld [vmem:[%s3 + $0x138] sm:$0xff]
  %v1357 = vld [vmem:[%s3 + $0x140] sm:$0xff]
  %v1358 = vld [vmem:[%s3 + $0x148] sm:$0xff]
  %v1359 = vld [vmem:[%s3 + $0x150] sm:$0xff]
  %v1360 = vld [vmem:[%s3 + $0x158] sm:$0xff]
  %v1361 = vld [vmem:[%s3 + $0x160] sm:$0xff]
  %v1362 = vld [vmem:[%s3 + $0x168] sm:$0xff]
  %v1363 = vld [vmem:[%s3 + $0x170] sm:$0xff]
  %v1364 = vld [vmem:[%s3 + $0x178] sm:$0xff]
  %v1365 = vld [vmem:[%s3 + $0x180] sm:$0xff]
  %v1366 = vld [vmem:[%s3 + $0x188] sm:$0xff]
  %v1367 = vld [vmem:[%s3 + $0x190] sm:$0xff]
  %v1368 = vld [vmem:[%s3 + $0x198] sm:$0xff]
  %v1369 = vld [vmem:[%s3 + $0x1a0] sm:$0xff]
  %v1370 = vld [vmem:[%s3 + $0x1a8] sm:$0xff]
  %v1371 = vld [vmem:[%s3 + $0x1b0] sm:$0xff]
  %v1372 = vld [vmem:[%s3 + $0x1b8] sm:$0xff]
  %v1373 = vld [vmem:[%s3 + $0x1c0] sm:$0xff]
  %v1374 = vld [vmem:[%s3 + $0x1c8] sm:$0xff]
  %v1375 = vld [vmem:[%s3 + $0x1d0] sm:$0xff]
  %v1376 = vld [vmem:[%s3 + $0x1d8] sm:$0xff]
  %v1377 = vld [vmem:[%s3 + $0x1e0] sm:$0xff]
  %v1378 = vld [vmem:[%s3 + $0x1e8] sm:$0xff]
  %v1379 = vld [vmem:[%s3 + $0x1f0] sm:$0xff]
  %v1380 = vld [vmem:[%s3 + $0x1f8] sm:$0xff]
  %v1381 = vld [vmem:[%s3 + $0x200] sm:$0xff]
  %v1382 = vld [vmem:[%s3 + $0x208] sm:$0xff]
  %v1383 = vld [vmem:[%s3 + $0x210] sm:$0xff]
  %v1384 = vld [vmem:[%s3 + $0x218] sm:$0xff]
  %v1385 = vld [vmem:[%s3 + $0x220] sm:$0xff]
  %v1386 = vld [vmem:[%s3 + $0x228] sm:$0xff]
  %v1387 = vld [vmem:[%s3 + $0x230] sm:$0xff]
  %v1388 = vld [vmem:[%s3 + $0x238] sm:$0xff]
  %v1389 = vld [vmem:[%s3 + $0x240] sm:$0xff]
  %v1390 = vld [vmem:[%s3 + $0x248] sm:$0xff]
  %v1391 = vld [vmem:[%s3 + $0x250] sm:$0xff]
  %v1392 = vld [vmem:[%s3 + $0x258] sm:$0xff]
  %v1393 = vld [vmem:[%s3 + $0x260] sm:$0xff]
  %v1394 = vld [vmem:[%s3 + $0x268] sm:$0xff]
  %v1395 = vld [vmem:[%s3 + $0x270] sm:$0xff]
  %v1396 = vld [vmem:[%s3 + $0x278] sm:$0xff]
  %v1397 = vld [vmem:[%s3 + $0x280] sm:$0xff]
  %v1398 = vld [vmem:[%s3 + $0x288] sm:$0xff]
  %v1399 = vld [vmem:[%s3 + $0x290] sm:$0xff]
  %v1400 = vld [vmem:[%s3 + $0x298] sm:$0xff]
  %v1401 = vld [vmem:[%s3 + $0x2a0] sm:$0xff]
  %v1402 = vld [vmem:[%s3 + $0x2a8] sm:$0xff]
  %v1403 = vld [vmem:[%s3 + $0x2b0] sm:$0xff]
  %v1404 = vld [vmem:[%s3 + $0x2b8] sm:$0xff]
  %v1405 = vld [vmem:[%s3 + $0x2c0] sm:$0xff]
  %v1406 = vld [vmem:[%s3 + $0x2c8] sm:$0xff]
  %v1407 = vld [vmem:[%s3 + $0x2d0] sm:$0xff]
  %v1408 = vld [vmem:[%s3 + $0x2d8] sm:$0xff]
  %v1409 = vld [vmem:[%s3 + $0x2e0] sm:$0xff]
  %v1410 = vld [vmem:[%s3 + $0x2e8] sm:$0xff]
  %v1411 = vld [vmem:[%s3 + $0x2f0] sm:$0xff]
  %v1412 = vld [vmem:[%s3 + $0x2f8] sm:$0xff]
  %v1413 = vld [vmem:[%s3 + $0x300] sm:$0xff]
  %v1414 = vld [vmem:[%s3 + $0x308] sm:$0xff]
  %v1415 = vld [vmem:[%s3 + $0x310] sm:$0xff]
  %v1416 = vld [vmem:[%s3 + $0x318] sm:$0xff]
  %v1417 = vld [vmem:[%s3 + $0x320] sm:$0xff]
  %v1418 = vld [vmem:[%s3 + $0x328] sm:$0xff]
  %v1419 = vld [vmem:[%s3 + $0x330] sm:$0xff]
  %v1420 = vld [vmem:[%s3 + $0x338] sm:$0xff]
  %v1421 = vld [vmem:[%s3 + $0x340] sm:$0xff]
  %v1422 = vld [vmem:[%s3 + $0x348] sm:$0xff]
  %v1423 = vld [vmem:[%s3 + $0x350] sm:$0xff]
  %v1424 = vld [vmem:[%s3 + $0x358] sm:$0xff]
  %v1425 = vld [vmem:[%s3 + $0x360] sm:$0xff]
  %v1426 = vld [vmem:[%s3 + $0x368] sm:$0xff]
  %v1427 = vld [vmem:[%s3 + $0x370] sm:$0xff]
  %v1428 = vld [vmem:[%s3 + $0x378] sm:$0xff]
  %v1429 = vld [vmem:[%s3 + $0x380] sm:$0xff]
  %v1430 = vld [vmem:[%s3 + $0x388] sm:$0xff]
  %v1431 = vld [vmem:[%s3 + $0x390] sm:$0xff]
  %v1432 = vld [vmem:[%s3 + $0x398] sm:$0xff]
  %v1433 = vld [vmem:[%s3 + $0x3a0] sm:$0xff]
  %v1434 = vld [vmem:[%s3 + $0x3a8] sm:$0xff]
  %v1435 = vld [vmem:[%s3 + $0x3b0] sm:$0xff]
  %v1436 = vld [vmem:[%s3 + $0x3b8] sm:$0xff]
  %v1437 = vld [vmem:[%s3 + $0x3c0] sm:$0xff]
  %v1438 = vld [vmem:[%s3 + $0x3c8] sm:$0xff]
  %v1439 = vld [vmem:[%s3 + $0x3d0] sm:$0xff]
  %v1440 = vld [vmem:[%s3 + $0x3d8] sm:$0xff]
  %v1441 = vld [vmem:[%s3 + $0x3e0] sm:$0xff]
  %v1442 = vld [vmem:[%s3 + $0x3e8] sm:$0xff]
  %v1443 = vld [vmem:[%s3 + $0x3f0] sm:$0xff]
  %v1444 = vld [vmem:[%s3 + $0x3f8] sm:$0xff]
  %v1445 = vld [vmem:[%s3 + $0x400] sm:$0xff]
  %v1446 = vld [vmem:[%s3 + $0x408] sm:$0xff]
  %v1447 = vld [vmem:[%s3 + $0x410] sm:$0xff]
  %v1448 = vld [vmem:[%s3 + $0x418] sm:$0xff]
  %v1449 = vld [vmem:[%s3 + $0x420] sm:$0xff]
  %v1450 = vld [vmem:[%s3 + $0x428] sm:$0xff]
  %v1451 = vld [vmem:[%s3 + $0x430] sm:$0xff]
  %v1452 = vld [vmem:[%s3 + $0x438] sm:$0xff]
  %v1453 = vld [vmem:[%s3 + $0x440] sm:$0xff]
  %v1454 = vld [vmem:[%s3 + $0x448] sm:$0xff]
  %v1455 = vld [vmem:[%s3 + $0x450] sm:$0xff]
  %v1456 = vld [vmem:[%s3 + $0x458] sm:$0xff]
  %v1457 = vld [vmem:[%s3 + $0x460] sm:$0xff]
  %v1458 = vld [vmem:[%s3 + $0x468] sm:$0xff]
  %v1459 = vld [vmem:[%s3 + $0x470] sm:$0xff]
  %v1460 = vld [vmem:[%s3 + $0x478] sm:$0xff]
  %v1605 = vunpack.c.l.b16 %v1317
  %v1606 = vunpack.c.h.b16 %v1317
  %v1607 = vunpack.c.l.b16 %v1318
  %v1608 = vunpack.c.h.b16 %v1318
  %v1609 = vunpack.c.l.b16 %v1319
  %v1610 = vunpack.c.h.b16 %v1319
  %v1611 = vunpack.c.l.b16 %v1320
  %v1612 = vunpack.c.h.b16 %v1320
  %v1613 = vunpack.c.l.b16 %v1321
  %v1614 = vunpack.c.h.b16 %v1321
  %v1615 = vunpack.c.l.b16 %v1322
  %v1616 = vunpack.c.h.b16 %v1322
  %v1617 = vunpack.c.l.b16 %v1323
  %v1618 = vunpack.c.h.b16 %v1323
  %v1619 = vunpack.c.l.b16 %v1324
  %v1620 = vunpack.c.h.b16 %v1324
  %v1621 = vunpack.c.l.b16 %v1325
  %v1622 = vunpack.c.h.b16 %v1325
  %v1623 = vunpack.c.l.b16 %v1326
  %v1624 = vunpack.c.h.b16 %v1326
  %v1625 = vunpack.c.l.b16 %v1327
  %v1626 = vunpack.c.h.b16 %v1327
  %v1627 = vunpack.c.l.b16 %v1328
  %v1628 = vunpack.c.h.b16 %v1328
  %v1629 = vunpack.c.l.b16 %v1329
  %v1630 = vunpack.c.h.b16 %v1329
  %v1631 = vunpack.c.l.b16 %v1330
  %v1632 = vunpack.c.h.b16 %v1330
  %v1633 = vunpack.c.l.b16 %v1331
  %v1634 = vunpack.c.h.b16 %v1331
  %v1635 = vunpack.c.l.b16 %v1332
  %v1636 = vunpack.c.h.b16 %v1332
  %v1637 = vunpack.c.l.b16 %v1333
  %v1638 = vunpack.c.h.b16 %v1333
  %v1639 = vunpack.c.l.b16 %v1334
  %v1640 = vunpack.c.h.b16 %v1334
  %v1641 = vunpack.c.l.b16 %v1335
  %v1642 = vunpack.c.h.b16 %v1335
  %v1643 = vunpack.c.l.b16 %v1336
  %v1644 = vunpack.c.h.b16 %v1336
  %v1645 = vunpack.c.l.b16 %v1337
  %v1646 = vunpack.c.h.b16 %v1337
  %v1647 = vunpack.c.l.b16 %v1338
  %v1648 = vunpack.c.h.b16 %v1338
  %v1649 = vunpack.c.l.b16 %v1339
  %v1650 = vunpack.c.h.b16 %v1339
  %v1651 = vunpack.c.l.b16 %v1340
  %v1652 = vunpack.c.h.b16 %v1340
  %v1653 = vunpack.c.l.b16 %v1341
  %v1654 = vunpack.c.h.b16 %v1341
  %v1655 = vunpack.c.l.b16 %v1342
  %v1656 = vunpack.c.h.b16 %v1342
  %v1657 = vunpack.c.l.b16 %v1343
  %v1658 = vunpack.c.h.b16 %v1343
  %v1659 = vunpack.c.l.b16 %v1344
  %v1660 = vunpack.c.h.b16 %v1344
  %v1661 = vunpack.c.l.b16 %v1345
  %v1662 = vunpack.c.h.b16 %v1345
  %v1663 = vunpack.c.l.b16 %v1346
  %v1664 = vunpack.c.h.b16 %v1346
  %v1665 = vunpack.c.l.b16 %v1347
  %v1666 = vunpack.c.h.b16 %v1347
  %v1667 = vunpack.c.l.b16 %v1348
  %v1668 = vunpack.c.h.b16 %v1348
  %v1669 = vunpack.c.l.b16 %v1349
  %v1670 = vunpack.c.h.b16 %v1349
  %v1671 = vunpack.c.l.b16 %v1350
  %v1672 = vunpack.c.h.b16 %v1350
  %v1673 = vunpack.c.l.b16 %v1351
  %v1674 = vunpack.c.h.b16 %v1351
  %v1675 = vunpack.c.l.b16 %v1352
  %v1676 = vunpack.c.h.b16 %v1352
  %v1677 = vunpack.c.l.b16 %v1353
  %v1678 = vunpack.c.h.b16 %v1353
  %v1679 = vunpack.c.l.b16 %v1354
  %v1680 = vunpack.c.h.b16 %v1354
  %v1681 = vunpack.c.l.b16 %v1355
  %v1682 = vunpack.c.h.b16 %v1355
  %v1683 = vunpack.c.l.b16 %v1356
  %v1684 = vunpack.c.h.b16 %v1356
  %v1685 = vunpack.c.l.b16 %v1357
  %v1686 = vunpack.c.h.b16 %v1357
  %v1687 = vunpack.c.l.b16 %v1358
  %v1688 = vunpack.c.h.b16 %v1358
  %v1689 = vunpack.c.l.b16 %v1359
  %v1690 = vunpack.c.h.b16 %v1359
  %v1691 = vunpack.c.l.b16 %v1360
  %v1692 = vunpack.c.h.b16 %v1360
  %v1693 = vunpack.c.l.b16 %v1361
  %v1694 = vunpack.c.h.b16 %v1361
  %v1695 = vunpack.c.l.b16 %v1362
  %v1696 = vunpack.c.h.b16 %v1362
  %v1697 = vunpack.c.l.b16 %v1363
  %v1698 = vunpack.c.h.b16 %v1363
  %v1699 = vunpack.c.l.b16 %v1364
  %v1700 = vunpack.c.h.b16 %v1364
  %v1701 = vunpack.c.l.b16 %v1365
  %v1702 = vunpack.c.h.b16 %v1365
  %v1703 = vunpack.c.l.b16 %v1366
  %v1704 = vunpack.c.h.b16 %v1366
  %v1705 = vunpack.c.l.b16 %v1367
  %v1706 = vunpack.c.h.b16 %v1367
  %v1707 = vunpack.c.l.b16 %v1368
  %v1708 = vunpack.c.h.b16 %v1368
  %v1709 = vunpack.c.l.b16 %v1369
  %v1710 = vunpack.c.h.b16 %v1369
  %v1711 = vunpack.c.l.b16 %v1370
  %v1712 = vunpack.c.h.b16 %v1370
  %v1713 = vunpack.c.l.b16 %v1371
  %v1714 = vunpack.c.h.b16 %v1371
  %v1715 = vunpack.c.l.b16 %v1372
  %v1716 = vunpack.c.h.b16 %v1372
  %v1717 = vunpack.c.l.b16 %v1373
  %v1718 = vunpack.c.h.b16 %v1373
  %v1719 = vunpack.c.l.b16 %v1374
  %v1720 = vunpack.c.h.b16 %v1374
  %v1721 = vunpack.c.l.b16 %v1375
  %v1722 = vunpack.c.h.b16 %v1375
  %v1723 = vunpack.c.l.b16 %v1376
  %v1724 = vunpack.c.h.b16 %v1376
  %v1725 = vunpack.c.l.b16 %v1377
  %v1726 = vunpack.c.h.b16 %v1377
  %v1727 = vunpack.c.l.b16 %v1378
  %v1728 = vunpack.c.h.b16 %v1378
  %v1729 = vunpack.c.l.b16 %v1379
  %v1730 = vunpack.c.h.b16 %v1379
  %v1731 = vunpack.c.l.b16 %v1380
  %v1732 = vunpack.c.h.b16 %v1380
  %v1733 = vunpack.c.l.b16 %v1381
  %v1734 = vunpack.c.h.b16 %v1381
  %v1735 = vunpack.c.l.b16 %v1382
  %v1736 = vunpack.c.h.b16 %v1382
  %v1737 = vunpack.c.l.b16 %v1383
  %v1738 = vunpack.c.h.b16 %v1383
  %v1739 = vunpack.c.l.b16 %v1384
  %v1740 = vunpack.c.h.b16 %v1384
  %v1741 = vunpack.c.l.b16 %v1385
  %v1742 = vunpack.c.h.b16 %v1385
  %v1743 = vunpack.c.l.b16 %v1386
  %v1744 = vunpack.c.h.b16 %v1386
  %v1745 = vunpack.c.l.b16 %v1387
  %v1746 = vunpack.c.h.b16 %v1387
  %v1747 = vunpack.c.l.b16 %v1388
  %v1748 = vunpack.c.h.b16 %v1388
  %v1749 = vunpack.c.l.b16 %v1389
  %v1750 = vunpack.c.h.b16 %v1389
  %v1751 = vunpack.c.l.b16 %v1390
  %v1752 = vunpack.c.h.b16 %v1390
  %v1753 = vunpack.c.l.b16 %v1391
  %v1754 = vunpack.c.h.b16 %v1391
  %v1755 = vunpack.c.l.b16 %v1392
  %v1756 = vunpack.c.h.b16 %v1392
  %v1757 = vunpack.c.l.b16 %v1393
  %v1758 = vunpack.c.h.b16 %v1393
  %v1759 = vunpack.c.l.b16 %v1394
  %v1760 = vunpack.c.h.b16 %v1394
  %v1761 = vunpack.c.l.b16 %v1395
  %v1762 = vunpack.c.h.b16 %v1395
  %v1763 = vunpack.c.l.b16 %v1396
  %v1764 = vunpack.c.h.b16 %v1396
  %v1765 = vunpack.c.l.b16 %v1397
  %v1766 = vunpack.c.h.b16 %v1397
  %v1767 = vunpack.c.l.b16 %v1398
  %v1768 = vunpack.c.h.b16 %v1398
  %v1769 = vunpack.c.l.b16 %v1399
  %v1770 = vunpack.c.h.b16 %v1399
  %v1771 = vunpack.c.l.b16 %v1400
  %v1772 = vunpack.c.h.b16 %v1400
  %v1773 = vunpack.c.l.b16 %v1401
  %v1774 = vunpack.c.h.b16 %v1401
  %v1775 = vunpack.c.l.b16 %v1402
  %v1776 = vunpack.c.h.b16 %v1402
  %v1777 = vunpack.c.l.b16 %v1403
  %v1778 = vunpack.c.h.b16 %v1403
  %v1779 = vunpack.c.l.b16 %v1404
  %v1780 = vunpack.c.h.b16 %v1404
  %v1781 = vunpack.c.l.b16 %v1405
  %v1782 = vunpack.c.h.b16 %v1405
  %v1783 = vunpack.c.l.b16 %v1406
  %v1784 = vunpack.c.h.b16 %v1406
  %v1785 = vunpack.c.l.b16 %v1407
  %v1786 = vunpack.c.h.b16 %v1407
  %v1787 = vunpack.c.l.b16 %v1408
  %v1788 = vunpack.c.h.b16 %v1408
  %v1789 = vunpack.c.l.b16 %v1409
  %v1790 = vunpack.c.h.b16 %v1409
  %v1791 = vunpack.c.l.b16 %v1410
  %v1792 = vunpack.c.h.b16 %v1410
  %v1793 = vunpack.c.l.b16 %v1411
  %v1794 = vunpack.c.h.b16 %v1411
  %v1795 = vunpack.c.l.b16 %v1412
  %v1796 = vunpack.c.h.b16 %v1412
  %v1797 = vunpack.c.l.b16 %v1413
  %v1798 = vunpack.c.h.b16 %v1413
  %v1799 = vunpack.c.l.b16 %v1414
  %v1800 = vunpack.c.h.b16 %v1414
  %v1801 = vunpack.c.l.b16 %v1415
  %v1802 = vunpack.c.h.b16 %v1415
  %v1803 = vunpack.c.l.b16 %v1416
  %v1804 = vunpack.c.h.b16 %v1416
  %v1805 = vunpack.c.l.b16 %v1417
  %v1806 = vunpack.c.h.b16 %v1417
  %v1807 = vunpack.c.l.b16 %v1418
  %v1808 = vunpack.c.h.b16 %v1418
  %v1809 = vunpack.c.l.b16 %v1419
  %v1810 = vunpack.c.h.b16 %v1419
  %v1811 = vunpack.c.l.b16 %v1420
  %v1812 = vunpack.c.h.b16 %v1420
  %v1813 = vunpack.c.l.b16 %v1421
  %v1814 = vunpack.c.h.b16 %v1421
  %v1815 = vunpack.c.l.b16 %v1422
  %v1816 = vunpack.c.h.b16 %v1422
  %v1817 = vunpack.c.l.b16 %v1423
  %v1818 = vunpack.c.h.b16 %v1423
  %v1819 = vunpack.c.l.b16 %v1424
  %v1820 = vunpack.c.h.b16 %v1424
  %v1821 = vunpack.c.l.b16 %v1425
  %v1822 = vunpack.c.h.b16 %v1425
  %v1823 = vunpack.c.l.b16 %v1426
  %v1824 = vunpack.c.h.b16 %v1426
  %v1825 = vunpack.c.l.b16 %v1427
  %v1826 = vunpack.c.h.b16 %v1427
  %v1827 = vunpack.c.l.b16 %v1428
  %v1828 = vunpack.c.h.b16 %v1428
  %v1829 = vunpack.c.l.b16 %v1429
  %v1830 = vunpack.c.h.b16 %v1429
  %v1831 = vunpack.c.l.b16 %v1430
  %v1832 = vunpack.c.h.b16 %v1430
  %v1833 = vunpack.c.l.b16 %v1431
  %v1834 = vunpack.c.h.b16 %v1431
  %v1835 = vunpack.c.l.b16 %v1432
  %v1836 = vunpack.c.h.b16 %v1432
  %v1837 = vunpack.c.l.b16 %v1433
  %v1838 = vunpack.c.h.b16 %v1433
  %v1839 = vunpack.c.l.b16 %v1434
  %v1840 = vunpack.c.h.b16 %v1434
  %v1841 = vunpack.c.l.b16 %v1435
  %v1842 = vunpack.c.h.b16 %v1435
  %v1843 = vunpack.c.l.b16 %v1436
  %v1844 = vunpack.c.h.b16 %v1436
  %v1845 = vunpack.c.l.b16 %v1437
  %v1846 = vunpack.c.h.b16 %v1437
  %v1847 = vunpack.c.l.b16 %v1438
  %v1848 = vunpack.c.h.b16 %v1438
  %v1849 = vunpack.c.l.b16 %v1439
  %v1850 = vunpack.c.h.b16 %v1439
  %v1851 = vunpack.c.l.b16 %v1440
  %v1852 = vunpack.c.h.b16 %v1440
  %v1853 = vunpack.c.l.b16 %v1441
  %v1854 = vunpack.c.h.b16 %v1441
  %v1855 = vunpack.c.l.b16 %v1442
  %v1856 = vunpack.c.h.b16 %v1442
  %v1857 = vunpack.c.l.b16 %v1443
  %v1858 = vunpack.c.h.b16 %v1443
  %v1859 = vunpack.c.l.b16 %v1444
  %v1860 = vunpack.c.h.b16 %v1444
  %v1861 = vunpack.c.l.b16 %v1445
  %v1862 = vunpack.c.h.b16 %v1445
  %v1863 = vunpack.c.l.b16 %v1446
  %v1864 = vunpack.c.h.b16 %v1446
  %v1865 = vunpack.c.l.b16 %v1447
  %v1866 = vunpack.c.h.b16 %v1447
  %v1867 = vunpack.c.l.b16 %v1448
  %v1868 = vunpack.c.h.b16 %v1448
  %v1869 = vunpack.c.l.b16 %v1449
  %v1870 = vunpack.c.h.b16 %v1449
  %v1871 = vunpack.c.l.b16 %v1450
  %v1872 = vunpack.c.h.b16 %v1450
  %v1873 = vunpack.c.l.b16 %v1451
  %v1874 = vunpack.c.h.b16 %v1451
  %v1875 = vunpack.c.l.b16 %v1452
  %v1876 = vunpack.c.h.b16 %v1452
  %v1877 = vunpack.c.l.b16 %v1453
  %v1878 = vunpack.c.h.b16 %v1453
  %v1879 = vunpack.c.l.b16 %v1454
  %v1880 = vunpack.c.h.b16 %v1454
  %v1881 = vunpack.c.l.b16 %v1455
  %v1882 = vunpack.c.h.b16 %v1455
  %v1883 = vunpack.c.l.b16 %v1456
  %v1884 = vunpack.c.h.b16 %v1456
  %v1885 = vunpack.c.l.b16 %v1457
  %v1886 = vunpack.c.h.b16 %v1457
  %v1887 = vunpack.c.l.b16 %v1458
  %v1888 = vunpack.c.h.b16 %v1458
  %v1889 = vunpack.c.l.b16 %v1459
  %v1890 = vunpack.c.h.b16 %v1459
  %v1891 = vunpack.c.l.b16 %v1460
  %v1892 = vunpack.c.h.b16 %v1460
  %v1893 = vpack.c.b16 %v1611, %v1605
  %v1894 = vpack.c.b16 %v1612, %v1606
  %v1895 = vpack.c.b16 %v1613, %v1607
  %v1896 = vpack.c.b16 %v1614, %v1608
  %v1897 = vpack.c.b16 %v1615, %v1609
  %v1898 = vpack.c.b16 %v1616, %v1610
  %v1899 = vpack.c.b16 %v1623, %v1617
  %v1900 = vpack.c.b16 %v1624, %v1618
  %v1901 = vpack.c.b16 %v1625, %v1619
  %v1902 = vpack.c.b16 %v1626, %v1620
  %v1903 = vpack.c.b16 %v1627, %v1621
  %v1904 = vpack.c.b16 %v1628, %v1622
  %v1905 = vpack.c.b16 %v1635, %v1629
  %v1906 = vpack.c.b16 %v1636, %v1630
  %v1907 = vpack.c.b16 %v1637, %v1631
  %v1908 = vpack.c.b16 %v1638, %v1632
  %v1909 = vpack.c.b16 %v1639, %v1633
  %v1910 = vpack.c.b16 %v1640, %v1634
  %v1911 = vpack.c.b16 %v1647, %v1641
  %v1912 = vpack.c.b16 %v1648, %v1642
  %v1913 = vpack.c.b16 %v1649, %v1643
  %v1914 = vpack.c.b16 %v1650, %v1644
  %v1915 = vpack.c.b16 %v1651, %v1645
  %v1916 = vpack.c.b16 %v1652, %v1646
  %v1917 = vpack.c.b16 %v1659, %v1653
  %v1918 = vpack.c.b16 %v1660, %v1654
  %v1919 = vpack.c.b16 %v1661, %v1655
  %v1920 = vpack.c.b16 %v1662, %v1656
  %v1921 = vpack.c.b16 %v1663, %v1657
  %v1922 = vpack.c.b16 %v1664, %v1658
  %v1923 = vpack.c.b16 %v1671, %v1665
  %v1924 = vpack.c.b16 %v1672, %v1666
  %v1925 = vpack.c.b16 %v1673, %v1667
  %v1926 = vpack.c.b16 %v1674, %v1668
  %v1927 = vpack.c.b16 %v1675, %v1669
  %v1928 = vpack.c.b16 %v1676, %v1670
  %v1929 = vpack.c.b16 %v1683, %v1677
  %v1930 = vpack.c.b16 %v1684, %v1678
  %v1931 = vpack.c.b16 %v1685, %v1679
  %v1932 = vpack.c.b16 %v1686, %v1680
  %v1933 = vpack.c.b16 %v1687, %v1681
  %v1934 = vpack.c.b16 %v1688, %v1682
  %v1935 = vpack.c.b16 %v1695, %v1689
  %v1936 = vpack.c.b16 %v1696, %v1690
  %v1937 = vpack.c.b16 %v1697, %v1691
  %v1938 = vpack.c.b16 %v1698, %v1692
  %v1939 = vpack.c.b16 %v1699, %v1693
  %v1940 = vpack.c.b16 %v1700, %v1694
  %v1941 = vpack.c.b16 %v1707, %v1701
  %v1942 = vpack.c.b16 %v1708, %v1702
  %v1943 = vpack.c.b16 %v1709, %v1703
  %v1944 = vpack.c.b16 %v1710, %v1704
  %v1945 = vpack.c.b16 %v1711, %v1705
  %v1946 = vpack.c.b16 %v1712, %v1706
  %v1947 = vpack.c.b16 %v1719, %v1713
  %v1948 = vpack.c.b16 %v1720, %v1714
  %v1949 = vpack.c.b16 %v1721, %v1715
  %v1950 = vpack.c.b16 %v1722, %v1716
  %v1951 = vpack.c.b16 %v1723, %v1717
  %v1952 = vpack.c.b16 %v1724, %v1718
  %v1953 = vpack.c.b16 %v1731, %v1725
  %v1954 = vpack.c.b16 %v1732, %v1726
  %v1955 = vpack.c.b16 %v1733, %v1727
  %v1956 = vpack.c.b16 %v1734, %v1728
  %v1957 = vpack.c.b16 %v1735, %v1729
  %v1958 = vpack.c.b16 %v1736, %v1730
  %v1959 = vpack.c.b16 %v1743, %v1737
  %v1960 = vpack.c.b16 %v1744, %v1738
  %v1961 = vpack.c.b16 %v1745, %v1739
  %v1962 = vpack.c.b16 %v1746, %v1740
  %v1963 = vpack.c.b16 %v1747, %v1741
  %v1964 = vpack.c.b16 %v1748, %v1742
  %v1965 = vpack.c.b16 %v1755, %v1749
  %v1966 = vpack.c.b16 %v1756, %v1750
  %v1967 = vpack.c.b16 %v1757, %v1751
  %v1968 = vpack.c.b16 %v1758, %v1752
  %v1969 = vpack.c.b16 %v1759, %v1753
  %v1970 = vpack.c.b16 %v1760, %v1754
  %v1971 = vpack.c.b16 %v1767, %v1761
  %v1972 = vpack.c.b16 %v1768, %v1762
  %v1973 = vpack.c.b16 %v1769, %v1763
  %v1974 = vpack.c.b16 %v1770, %v1764
  %v1975 = vpack.c.b16 %v1771, %v1765
  %v1976 = vpack.c.b16 %v1772, %v1766
  %v1977 = vpack.c.b16 %v1779, %v1773
  %v1978 = vpack.c.b16 %v1780, %v1774
  %v1979 = vpack.c.b16 %v1781, %v1775
  %v1980 = vpack.c.b16 %v1782, %v1776
  %v1981 = vpack.c.b16 %v1783, %v1777
  %v1982 = vpack.c.b16 %v1784, %v1778
  %v1983 = vpack.c.b16 %v1791, %v1785
  %v1984 = vpack.c.b16 %v1792, %v1786
  %v1985 = vpack.c.b16 %v1793, %v1787
  %v1986 = vpack.c.b16 %v1794, %v1788
  %v1987 = vpack.c.b16 %v1795, %v1789
  %v1988 = vpack.c.b16 %v1796, %v1790
  %v1989 = vpack.c.b16 %v1803, %v1797
  %v1990 = vpack.c.b16 %v1804, %v1798
  %v1991 = vpack.c.b16 %v1805, %v1799
  %v1992 = vpack.c.b16 %v1806, %v1800
  %v1993 = vpack.c.b16 %v1807, %v1801
  %v1994 = vpack.c.b16 %v1808, %v1802
  %v1995 = vpack.c.b16 %v1815, %v1809
  %v1996 = vpack.c.b16 %v1816, %v1810
  %v1997 = vpack.c.b16 %v1817, %v1811
  %v1998 = vpack.c.b16 %v1818, %v1812
  %v1999 = vpack.c.b16 %v1819, %v1813
  %v2000 = vpack.c.b16 %v1820, %v1814
  %v2001 = vpack.c.b16 %v1827, %v1821
  %v2002 = vpack.c.b16 %v1828, %v1822
  %v2003 = vpack.c.b16 %v1829, %v1823
  %v2004 = vpack.c.b16 %v1830, %v1824
  %v2005 = vpack.c.b16 %v1831, %v1825
  %v2006 = vpack.c.b16 %v1832, %v1826
  %v2007 = vpack.c.b16 %v1839, %v1833
  %v2008 = vpack.c.b16 %v1840, %v1834
  %v2009 = vpack.c.b16 %v1841, %v1835
  %v2010 = vpack.c.b16 %v1842, %v1836
  %v2011 = vpack.c.b16 %v1843, %v1837
  %v2012 = vpack.c.b16 %v1844, %v1838
  %v2013 = vpack.c.b16 %v1851, %v1845
  %v2014 = vpack.c.b16 %v1852, %v1846
  %v2015 = vpack.c.b16 %v1853, %v1847
  %v2016 = vpack.c.b16 %v1854, %v1848
  %v2017 = vpack.c.b16 %v1855, %v1849
  %v2018 = vpack.c.b16 %v1856, %v1850
  %v2019 = vpack.c.b16 %v1863, %v1857
  %v2020 = vpack.c.b16 %v1864, %v1858
  %v2021 = vpack.c.b16 %v1865, %v1859
  %v2022 = vpack.c.b16 %v1866, %v1860
  %v2023 = vpack.c.b16 %v1867, %v1861
  %v2024 = vpack.c.b16 %v1868, %v1862
  %v2025 = vpack.c.b16 %v1875, %v1869
  %v2026 = vpack.c.b16 %v1876, %v1870
  %v2027 = vpack.c.b16 %v1877, %v1871
  %v2028 = vpack.c.b16 %v1878, %v1872
  %v2029 = vpack.c.b16 %v1879, %v1873
  %v2030 = vpack.c.b16 %v1880, %v1874
  %v2031 = vpack.c.b16 %v1887, %v1881
  %v2032 = vpack.c.b16 %v1888, %v1882
  %v2033 = vpack.c.b16 %v1889, %v1883
  %v2034 = vpack.c.b16 %v1890, %v1884
  %v2035 = vpack.c.b16 %v1891, %v1885
  %v2036 = vpack.c.b16 %v1892, %v1886
  %2181 = vmatpush.bf16.msra.mxu0 %v1935
  %2182 = vmatpush.bf16.msra.mxu0 %v1929
  %2183 = vmatpush.bf16.msra.mxu0 %v1923
  %2184 = vmatpush.bf16.msra.mxu0 %v1917
  %2185 = vmatpush.bf16.msra.mxu0 %v1911
  %2186 = vmatpush.bf16.msra.mxu0 %v1905
  %2187 = vmatpush.bf16.msra.mxu0 %v1899
  %2188 = vmatpush.bf16.msra.mxu0 %v1893
  %2189 = vmatmul.bf16.gmra.mxu0 %v1313
  %v2190 = vpop.f32.mrf.mxu0
  %v2191 = vadd.f32 %v380, %v2190
  %v2192 = vpop.f32.mrf.mxu0
  %2193 = vdwg.mxu0
  %2194 = vmatpush.bf16.msra.mxu0 %v1983
  %2195 = vmatpush.bf16.msra.mxu0 %v1977
  %2196 = vmatpush.bf16.msra.mxu0 %v1971
  %2197 = vmatpush.bf16.msra.mxu0 %v1965
  %2198 = vmatpush.bf16.msra.mxu0 %v1959
  %2199 = vmatpush.bf16.msra.mxu0 %v1953
  %2200 = vmatpush.bf16.msra.mxu0 %v1947
  %2201 = vmatpush.bf16.msra.mxu0 %v1941
  %2202 = vmatmul.bf16.gmra.mxu0 %v1314
  %v2203 = vpop.f32.mrf.mxu0
  %v2204 = vadd.f32 %v2191, %v2203
  %v2205 = vpop.f32.mrf.mxu0
  %2206 = vdwg.mxu0
  %2207 = vmatpush.bf16.msra.mxu0 %v2031
  %2208 = vmatpush.bf16.msra.mxu0 %v2025
  %2209 = vmatpush.bf16.msra.mxu0 %v2019
  %2210 = vmatpush.bf16.msra.mxu0 %v2013
  %2211 = vmatpush.bf16.msra.mxu0 %v2007
  %2212 = vmatpush.bf16.msra.mxu0 %v2001
  %2213 = vmatpush.bf16.msra.mxu0 %v1995
  %2214 = vmatpush.bf16.msra.mxu0 %v1989
  %2215 = vmatmul.bf16.gmra.mxu0 0
  %v2216 = vpop.f32.mrf.mxu0
  %v2217 = vadd.f32 %v2204, %v2216
  %v2218 = vpop.f32.mrf.mxu0
  %2219 = vdwg.mxu0
  %2220 = vmatpush.bf16.msra.mxu0 %v1936
  %2221 = vmatpush.bf16.msra.mxu0 %v1930
  %2222 = vmatpush.bf16.msra.mxu0 %v1924
  %2223 = vmatpush.bf16.msra.mxu0 %v1918
  %2224 = vmatpush.bf16.msra.mxu0 %v1912
  %2225 = vmatpush.bf16.msra.mxu0 %v1906
  %2226 = vmatpush.bf16.msra.mxu0 %v1900
  %2227 = vmatpush.bf16.msra.mxu0 %v1894
  %2228 = vmatmul.bf16.gmra.mxu0 %v1313
  %v2229 = vpop.f32.mrf.mxu0
  %v2230 = vadd.f32 %v381, %v2229
  %v2231 = vpop.f32.mrf.mxu0
  %2232 = vdwg.mxu0
  %2233 = vmatpush.bf16.msra.mxu0 %v1984
  %2234 = vmatpush.bf16.msra.mxu0 %v1978
  %2235 = vmatpush.bf16.msra.mxu0 %v1972
  %2236 = vmatpush.bf16.msra.mxu0 %v1966
  %2237 = vmatpush.bf16.msra.mxu0 %v1960
  %2238 = vmatpush.bf16.msra.mxu0 %v1954
  %2239 = vmatpush.bf16.msra.mxu0 %v1948
  %2240 = vmatpush.bf16.msra.mxu0 %v1942
  %2241 = vmatmul.bf16.gmra.mxu0 %v1314
  %v2242 = vpop.f32.mrf.mxu0
  %v2243 = vadd.f32 %v2230, %v2242
  %v2244 = vpop.f32.mrf.mxu0
  %2245 = vdwg.mxu0
  %2246 = vmatpush.bf16.msra.mxu0 %v2032
  %2247 = vmatpush.bf16.msra.mxu0 %v2026
  %2248 = vmatpush.bf16.msra.mxu0 %v2020
  %2249 = vmatpush.bf16.msra.mxu0 %v2014
  %2250 = vmatpush.bf16.msra.mxu0 %v2008
  %2251 = vmatpush.bf16.msra.mxu0 %v2002
  %2252 = vmatpush.bf16.msra.mxu0 %v1996
  %2253 = vmatpush.bf16.msra.mxu0 %v1990
  %2254 = vmatmul.bf16.gmra.mxu0 0
  %v2255 = vpop.f32.mrf.mxu0
  %v2256 = vadd.f32 %v2243, %v2255
  %v2257 = vpop.f32.mrf.mxu0
  %2258 = vdwg.mxu0
  %2259 = vmatpush.bf16.msra.mxu0 %v1937
  %2260 = vmatpush.bf16.msra.mxu0 %v1931
  %2261 = vmatpush.bf16.msra.mxu0 %v1925
  %2262 = vmatpush.bf16.msra.mxu0 %v1919
  %2263 = vmatpush.bf16.msra.mxu0 %v1913
  %2264 = vmatpush.bf16.msra.mxu0 %v1907
  %2265 = vmatpush.bf16.msra.mxu0 %v1901
  %2266 = vmatpush.bf16.msra.mxu0 %v1895
  %2267 = vmatmul.bf16.gmra.mxu0 %v1313
  %v2268 = vpop.f32.mrf.mxu0
  %v2269 = vadd.f32 %v382, %v2268
  %v2270 = vpop.f32.mrf.mxu0
  %2271 = vdwg.mxu0
  %2272 = vmatpush.bf16.msra.mxu0 %v1985
  %2273 = vmatpush.bf16.msra.mxu0 %v1979
  %2274 = vmatpush.bf16.msra.mxu0 %v1973
  %2275 = vmatpush.bf16.msra.mxu0 %v1967
  %2276 = vmatpush.bf16.msra.mxu0 %v1961
  %2277 = vmatpush.bf16.msra.mxu0 %v1955
  %2278 = vmatpush.bf16.msra.mxu0 %v1949
  %2279 = vmatpush.bf16.msra.mxu0 %v1943
  %2280 = vmatmul.bf16.gmra.mxu0 %v1314
  %v2281 = vpop.f32.mrf.mxu0
  %v2282 = vadd.f32 %v2269, %v2281
  %v2283 = vpop.f32.mrf.mxu0
  %2284 = vdwg.mxu0
  %2285 = vmatpush.bf16.msra.mxu0 %v2033
  %2286 = vmatpush.bf16.msra.mxu0 %v2027
  %2287 = vmatpush.bf16.msra.mxu0 %v2021
  %2288 = vmatpush.bf16.msra.mxu0 %v2015
  %2289 = vmatpush.bf16.msra.mxu0 %v2009
  %2290 = vmatpush.bf16.msra.mxu0 %v2003
  %2291 = vmatpush.bf16.msra.mxu0 %v1997
  %2292 = vmatpush.bf16.msra.mxu0 %v1991
  %2293 = vmatmul.bf16.gmra.mxu0 0
  %v2294 = vpop.f32.mrf.mxu0
  %v2295 = vadd.f32 %v2282, %v2294
  %v2296 = vpop.f32.mrf.mxu0
  %2297 = vdwg.mxu0
  %2298 = vmatpush.bf16.msra.mxu0 %v1938
  %2299 = vmatpush.bf16.msra.mxu0 %v1932
  %2300 = vmatpush.bf16.msra.mxu0 %v1926
  %2301 = vmatpush.bf16.msra.mxu0 %v1920
  %2302 = vmatpush.bf16.msra.mxu0 %v1914
  %2303 = vmatpush.bf16.msra.mxu0 %v1908
  %2304 = vmatpush.bf16.msra.mxu0 %v1902
  %2305 = vmatpush.bf16.msra.mxu0 %v1896
  %2306 = vmatmul.bf16.gmra.mxu0 %v1313
  %v2307 = vpop.f32.mrf.mxu0
  %v2308 = vadd.f32 %v383, %v2307
  %v2309 = vpop.f32.mrf.mxu0
  %2310 = vdwg.mxu0
  %2311 = vmatpush.bf16.msra.mxu0 %v1986
  %2312 = vmatpush.bf16.msra.mxu0 %v1980
  %2313 = vmatpush.bf16.msra.mxu0 %v1974
  %2314 = vmatpush.bf16.msra.mxu0 %v1968
  %2315 = vmatpush.bf16.msra.mxu0 %v1962
  %2316 = vmatpush.bf16.msra.mxu0 %v1956
  %2317 = vmatpush.bf16.msra.mxu0 %v1950
  %2318 = vmatpush.bf16.msra.mxu0 %v1944
  %2319 = vmatmul.bf16.gmra.mxu0 %v1314
  %v2320 = vpop.f32.mrf.mxu0
  %v2321 = vadd.f32 %v2308, %v2320
  %v2322 = vpop.f32.mrf.mxu0
  %2323 = vdwg.mxu0
  %2324 = vmatpush.bf16.msra.mxu0 %v2034
  %2325 = vmatpush.bf16.msra.mxu0 %v2028
  %2326 = vmatpush.bf16.msra.mxu0 %v2022
  %2327 = vmatpush.bf16.msra.mxu0 %v2016
  %2328 = vmatpush.bf16.msra.mxu0 %v2010
  %2329 = vmatpush.bf16.msra.mxu0 %v2004
  %2330 = vmatpush.bf16.msra.mxu0 %v1998
  %2331 = vmatpush.bf16.msra.mxu0 %v1992
  %2332 = vmatmul.bf16.gmra.mxu0 0
  %v2333 = vpop.f32.mrf.mxu0
  %v2334 = vadd.f32 %v2321, %v2333
  %v2335 = vpop.f32.mrf.mxu0
  %2336 = vdwg.mxu0
  %2337 = vmatpush.bf16.msra.mxu0 %v1939
  %2338 = vmatpush.bf16.msra.mxu0 %v1933
  %2339 = vmatpush.bf16.msra.mxu0 %v1927
  %2340 = vmatpush.bf16.msra.mxu0 %v1921
  %2341 = vmatpush.bf16.msra.mxu0 %v1915
  %2342 = vmatpush.bf16.msra.mxu0 %v1909
  %2343 = vmatpush.bf16.msra.mxu0 %v1903
  %2344 = vmatpush.bf16.msra.mxu0 %v1897
  %2345 = vmatmul.bf16.gmra.mxu0 %v1313
  %v2346 = vpop.f32.mrf.mxu0
  %v2347 = vadd.f32 %v384, %v2346
  %v2348 = vpop.f32.mrf.mxu0
  %2349 = vdwg.mxu0
  %2350 = vmatpush.bf16.msra.mxu0 %v1987
  %2351 = vmatpush.bf16.msra.mxu0 %v1981
  %2352 = vmatpush.bf16.msra.mxu0 %v1975
  %2353 = vmatpush.bf16.msra.mxu0 %v1969
  %2354 = vmatpush.bf16.msra.mxu0 %v1963
  %2355 = vmatpush.bf16.msra.mxu0 %v1957
  %2356 = vmatpush.bf16.msra.mxu0 %v1951
  %2357 = vmatpush.bf16.msra.mxu0 %v1945
  %2358 = vmatmul.bf16.gmra.mxu0 %v1314
  %v2359 = vpop.f32.mrf.mxu0
  %v2360 = vadd.f32 %v2347, %v2359
  %v2361 = vpop.f32.mrf.mxu0
  %2362 = vdwg.mxu0
  %2363 = vmatpush.bf16.msra.mxu0 %v2035
  %2364 = vmatpush.bf16.msra.mxu0 %v2029
  %2365 = vmatpush.bf16.msra.mxu0 %v2023
  %2366 = vmatpush.bf16.msra.mxu0 %v2017
  %2367 = vmatpush.bf16.msra.mxu0 %v2011
  %2368 = vmatpush.bf16.msra.mxu0 %v2005
  %2369 = vmatpush.bf16.msra.mxu0 %v1999
  %2370 = vmatpush.bf16.msra.mxu0 %v1993
  %2371 = vmatmul.bf16.gmra.mxu0 0
  %v2372 = vpop.f32.mrf.mxu0
  %v2373 = vadd.f32 %v2360, %v2372
  %v2374 = vpop.f32.mrf.mxu0
  %2375 = vdwg.mxu0
  %2376 = vmatpush.bf16.msra.mxu0 %v1940
  %2377 = vmatpush.bf16.msra.mxu0 %v1934
  %2378 = vmatpush.bf16.msra.mxu0 %v1928
  %2379 = vmatpush.bf16.msra.mxu0 %v1922
  %2380 = vmatpush.bf16.msra.mxu0 %v1916
  %2381 = vmatpush.bf16.msra.mxu0 %v1910
  %2382 = vmatpush.bf16.msra.mxu0 %v1904
  %2383 = vmatpush.bf16.msra.mxu0 %v1898
  %2384 = vmatmul.bf16.gmra.mxu0 %v1313
  %v2385 = vpop.f32.mrf.mxu0
  %v2386 = vadd.f32 %v385, %v2385
  %v2387 = vpop.f32.mrf.mxu0
  %2388 = vdwg.mxu0
  %2389 = vmatpush.bf16.msra.mxu0 %v1988
  %2390 = vmatpush.bf16.msra.mxu0 %v1982
  %2391 = vmatpush.bf16.msra.mxu0 %v1976
  %2392 = vmatpush.bf16.msra.mxu0 %v1970
  %2393 = vmatpush.bf16.msra.mxu0 %v1964
  %2394 = vmatpush.bf16.msra.mxu0 %v1958
  %2395 = vmatpush.bf16.msra.mxu0 %v1952
  %2396 = vmatpush.bf16.msra.mxu0 %v1946
  %2397 = vmatmul.bf16.gmra.mxu0 %v1314
  %v2398 = vpop.f32.mrf.mxu0
  %v2399 = vadd.f32 %v2386, %v2398
  %v2400 = vpop.f32.mrf.mxu0
  %2401 = vdwg.mxu0
  %2402 = vmatpush.bf16.msra.mxu0 %v2036
  %2403 = vmatpush.bf16.msra.mxu0 %v2030
  %2404 = vmatpush.bf16.msra.mxu0 %v2024
  %2405 = vmatpush.bf16.msra.mxu0 %v2018
  %2406 = vmatpush.bf16.msra.mxu0 %v2012
  %2407 = vmatpush.bf16.msra.mxu0 %v2006
  %2408 = vmatpush.bf16.msra.mxu0 %v2000
  %2409 = vmatpush.bf16.msra.mxu0 %v1994
  %2410 = vmatmul.bf16.gmra.mxu0 0
  %v2411 = vpop.f32.mrf.mxu0
  %v2412 = vadd.f32 %v2399, %v2411
  %v2413 = vpop.f32.mrf.mxu0
  %2414 = vdwg.mxu0
  %v2415 = vadd.f32 %v2217, %v2334
  %v2416 = vadd.f32 %v2256, %v2373
  %v2417 = vxor.u32 %v2415, 2147483648
  %v2418 = vxor.u32 %v2416, 2147483648
  %v2419 = vmul.f32 %v2417, 1.442695
  %v2420 = vpow.pop %v2419
  %v2421 = vmul.f32 %v2418, 1.442695
  %v2422 = vpow.pop %v2421
  %v2423 = vadd.f32 %v2420, 1.0
  %v2424 = vadd.f32 %v2422, 1.0
  %v2425 = vrcp.pop %v2423
  %v2426 = vmul.f32 %v2423, %v2425
  %v2427 = vsub.f32 1.0, %v2426
  %v2428 = vmul.f32 %v2425, %v2427
  %v2429 = vadd.f32 %v2425, %v2428
  %vm2430 = vweird.f32 %v2423
  %vm2431 = vweird.f32 %v2425
  %vm2432 = vmor %vm2430, %vm2431
  %v2433 = vsel %vm2432, %v2425, %v2429
  %v2434 = vand.u32 2147483647, %v2423
  %vm2435 = vcmp.eq.f32.partialorder %v2434, 8.507059e+37
  %v2436 = vand.u32 %v2423, 2147483648
  %v2437 = vor.u32 1.1754944e-38, %v2436
  %v2438 = vsel %vm2435, %v2437, %v2433
  %v2439 = vmul.f32 1.0, %v2438
  %v2440 = vrcp.pop %v2424
  %v2441 = vmul.f32 %v2424, %v2440
  %v2442 = vsub.f32 1.0, %v2441
  %v2443 = vmul.f32 %v2440, %v2442
  %v2444 = vadd.f32 %v2440, %v2443
  %vm2445 = vweird.f32 %v2424
  %vm2446 = vweird.f32 %v2440
  %vm2447 = vmor %vm2445, %vm2446
  %v2448 = vsel %vm2447, %v2440, %v2444
  %v2449 = vand.u32 2147483647, %v2424
  %vm2450 = vcmp.eq.f32.partialorder %v2449, 8.507059e+37
  %v2451 = vand.u32 %v2424, 2147483648
  %v2452 = vor.u32 1.1754944e-38, %v2451
  %v2453 = vsel %vm2450, %v2452, %v2448
  %v2454 = vmul.f32 1.0, %v2453
  %v2455 = vmul.f32 %v2439, %v2412
  %v2456 = vadd.f32 %v2295, %v2455
  %v2457 = vtanh.pop %v2456
  %v2458 = vsub.f32 1.0, %v2454
  %v2459 = vmul.f32 %v2458, %v2457
  %v2460 = vmul.f32 %v2454, 0.0
  %v2461 = vadd.f32 %v2459, %v2460
  %vm2462 = vcmask 523264
  %v2463 = vsel %vm2462, %v2461, 0.0
  %2464 = vadd.xlane.f32.xlu0 %v2463
  %v2465 = vpop.xlane.xlu0 %2464
  %v2466 = vrcp.pop 64.0
  %v2467 = vmul.f32 64.0, %v2466
  %v2468 = vsub.f32 1.0, %v2467
  %v2469 = vmul.f32 %v2466, %v2468
  %v2470 = vadd.f32 %v2466, %v2469
  %vm2471 = vweird.f32 %v2466
  %v2472 = vsel %vm2471, %v2466, %v2470
  %v2473 = vmul.f32 %v2465, %v2472
  %v2474 = vmul.f32 %v2461, %v2461
  %v2475 = vsel %vm2462, %v2474, 0.0
  %2476 = vadd.xlane.f32.xlu0 %v2475
  %v2477 = vpop.xlane.xlu0 %2476
  %v2478 = vmul.f32 %v2477, %v2472
  %v2479 = vmul.f32 %v2473, %v2473
  %v2480 = vsub.f32 %v2478, %v2479
  %v2481 = vsub.f32 %v2461, %v2473
  %v2482 = vadd.f32 %v2480, 1e-05
  %v2483 = vrsqrt.pop %v2482
  %v2484 = vmul.f32 %v2483, %v2482
  %v2485 = vmul.f32 %v2484, %v2483
  %v2486 = vmul.f32 0.5, %v2485
  %v2487 = vsub.f32 1.5, %v2486
  %v2488 = vmul.f32 %v2483, %v2487
  %vm2489 = vweird.f32 %v2482
  %vm2490 = vweird.f32 %v2483
  %vm2491 = vmor %vm2489, %vm2490
  %v2492 = vsel %vm2491, %v2483, %v2488
  %v2493 = vmul.f32 %v2481, %v2492
  %2495 = vrot.lane.b32.xlu0 %v2461, 64
  %v2496 = vpop.permute.xlu0 %2495
  %v2498 = vsel %vm2462, %v2496, 0.0
  %2499 = vadd.xlane.f32.xlu0 %v2498
  %v2500 = vpop.xlane.xlu0 %2499
  %v2501 = vmul.f32 %v2500, %v2472
  %2503 = vrot.lane.b32.xlu0 %v2474, 64
  %v2504 = vpop.permute.xlu0 %2503
  %v2506 = vsel %vm2462, %v2504, 0.0
  %2507 = vadd.xlane.f32.xlu0 %v2506
  %v2508 = vpop.xlane.xlu0 %2507
  %v2509 = vmul.f32 %v2508, %v2472
  %v2510 = vmul.f32 %v2501, %v2501
  %v2511 = vsub.f32 %v2509, %v2510
  %v2512 = vsub.f32 %v2461, %v2501
  %v2513 = vadd.f32 %v2511, 1e-05
  %v2514 = vrsqrt.pop %v2513
  %v2515 = vmul.f32 %v2514, %v2513
  %v2516 = vmul.f32 %v2515, %v2514
  %v2517 = vmul.f32 0.5, %v2516
  %v2518 = vsub.f32 1.5, %v2517
  %v2519 = vmul.f32 %v2514, %v2518
  %vm2520 = vweird.f32 %v2513
  %vm2521 = vweird.f32 %v2514
  %vm2522 = vmor %vm2520, %vm2521
  %v2523 = vsel %vm2522, %v2514, %v2519
  %v2524 = vmul.f32 %v2512, %v2523
  %v2525 = vsel %vm2462, %v2493, %v2524
  %v2526 = vmul.f32 %v2525, %v413
  %v2527 = vadd.f32 %v2526, %v414
  %s2528 = smul.u32 1, 6
  %s2529 = smul.addr %s2528, 8
  %s2530 = scalar_lea.vmem [#allocation2], %s2529
  %v2531 = vld [vmem:[%s2530] sm:$0xff]
  %v2532 = vld [vmem:[%s2530 + $0x8] sm:$0xff]
  %v2533 = vld [vmem:[%s2530 + $0x10] sm:$0xff]
  %v2534 = vld [vmem:[%s2530 + $0x18] sm:$0xff]
  %v2535 = vld [vmem:[%s2530 + $0x20] sm:$0xff]
  %v2536 = vld [vmem:[%s2530 + $0x28] sm:$0xff]
  %2537 = vmatpush.bf16.msra.mxu0 %v852
  %2538 = vmatpush.bf16.msra.mxu0 %v846
  %2539 = vmatpush.bf16.msra.mxu0 %v840
  %2540 = vmatpush.bf16.msra.mxu0 %v834
  %2541 = vmatpush.bf16.msra.mxu0 %v828
  %2542 = vmatpush.bf16.msra.mxu0 %v822
  %2543 = vmatpush.bf16.msra.mxu0 %v816
  %2544 = vmatpush.bf16.msra.mxu0 %v810
  %2545 = vmatmul.bf16.gmra.mxu0 %v1313
  %v2546 = vpop.f32.mrf.mxu0
  %v2547 = vadd.f32 0.0, %v2546
  %v2548 = vpop.f32.mrf.mxu0
  %2549 = vdwg.mxu0
  %2550 = vmatpush.bf16.msra.mxu0 %v900
  %2551 = vmatpush.bf16.msra.mxu0 %v894
  %2552 = vmatpush.bf16.msra.mxu0 %v888
  %2553 = vmatpush.bf16.msra.mxu0 %v882
  %2554 = vmatpush.bf16.msra.mxu0 %v876
  %2555 = vmatpush.bf16.msra.mxu0 %v870
  %2556 = vmatpush.bf16.msra.mxu0 %v864
  %2557 = vmatpush.bf16.msra.mxu0 %v858
  %2558 = vmatmul.bf16.gmra.mxu0 %v1314
  %v2559 = vpop.f32.mrf.mxu0
  %v2560 = vadd.f32 %v2547, %v2559
  %v2561 = vpop.f32.mrf.mxu0
  %2562 = vdwg.mxu0
  %2563 = vmatpush.bf16.msra.mxu0 %v853
  %2564 = vmatpush.bf16.msra.mxu0 %v847
  %2565 = vmatpush.bf16.msra.mxu0 %v841
  %2566 = vmatpush.bf16.msra.mxu0 %v835
  %2567 = vmatpush.bf16.msra.mxu0 %v829
  %2568 = vmatpush.bf16.msra.mxu0 %v823
  %2569 = vmatpush.bf16.msra.mxu0 %v817
  %2570 = vmatpush.bf16.msra.mxu0 %v811
  %2571 = vmatmul.bf16.gmra.mxu0 %v1313
  %v2572 = vpop.f32.mrf.mxu0
  %v2573 = vadd.f32 0.0, %v2572
  %v2574 = vpop.f32.mrf.mxu0
  %2575 = vdwg.mxu0
  %2576 = vmatpush.bf16.msra.mxu0 %v901
  %2577 = vmatpush.bf16.msra.mxu0 %v895
  %2578 = vmatpush.bf16.msra.mxu0 %v889
  %2579 = vmatpush.bf16.msra.mxu0 %v883
  %2580 = vmatpush.bf16.msra.mxu0 %v877
  %2581 = vmatpush.bf16.msra.mxu0 %v871
  %2582 = vmatpush.bf16.msra.mxu0 %v865
  %2583 = vmatpush.bf16.msra.mxu0 %v859
  %2584 = vmatmul.bf16.gmra.mxu0 %v1314
  %v2585 = vpop.f32.mrf.mxu0
  %v2586 = vadd.f32 %v2573, %v2585
  %v2587 = vpop.f32.mrf.mxu0
  %2588 = vdwg.mxu0
  %2589 = vmatpush.bf16.msra.mxu0 %v854
  %2590 = vmatpush.bf16.msra.mxu0 %v848
  %2591 = vmatpush.bf16.msra.mxu0 %v842
  %2592 = vmatpush.bf16.msra.mxu0 %v836
  %2593 = vmatpush.bf16.msra.mxu0 %v830
  %2594 = vmatpush.bf16.msra.mxu0 %v824
  %2595 = vmatpush.bf16.msra.mxu0 %v818
  %2596 = vmatpush.bf16.msra.mxu0 %v812
  %2597 = vmatmul.bf16.gmra.mxu0 %v1313
  %v2598 = vpop.f32.mrf.mxu0
  %v2599 = vadd.f32 0.0, %v2598
  %v2600 = vpop.f32.mrf.mxu0
  %2601 = vdwg.mxu0
  %2602 = vmatpush.bf16.msra.mxu0 %v902
  %2603 = vmatpush.bf16.msra.mxu0 %v896
  %2604 = vmatpush.bf16.msra.mxu0 %v890
  %2605 = vmatpush.bf16.msra.mxu0 %v884
  %2606 = vmatpush.bf16.msra.mxu0 %v878
  %2607 = vmatpush.bf16.msra.mxu0 %v872
  %2608 = vmatpush.bf16.msra.mxu0 %v866
  %2609 = vmatpush.bf16.msra.mxu0 %v860
  %2610 = vmatmul.bf16.gmra.mxu0 %v1314
  %v2611 = vpop.f32.mrf.mxu0
  %v2612 = vadd.f32 %v2599, %v2611
  %v2613 = vpop.f32.mrf.mxu0
  %2614 = vdwg.mxu0
  %2615 = vmatpush.bf16.msra.mxu0 %v855
  %2616 = vmatpush.bf16.msra.mxu0 %v849
  %2617 = vmatpush.bf16.msra.mxu0 %v843
  %2618 = vmatpush.bf16.msra.mxu0 %v837
  %2619 = vmatpush.bf16.msra.mxu0 %v831
  %2620 = vmatpush.bf16.msra.mxu0 %v825
  %2621 = vmatpush.bf16.msra.mxu0 %v819
  %2622 = vmatpush.bf16.msra.mxu0 %v813
  %2623 = vmatmul.bf16.gmra.mxu0 %v1313
  %v2624 = vpop.f32.mrf.mxu0
  %v2625 = vadd.f32 0.0, %v2624
  %v2626 = vpop.f32.mrf.mxu0
  %2627 = vdwg.mxu0
  %2628 = vmatpush.bf16.msra.mxu0 %v903
  %2629 = vmatpush.bf16.msra.mxu0 %v897
  %2630 = vmatpush.bf16.msra.mxu0 %v891
  %2631 = vmatpush.bf16.msra.mxu0 %v885
  %2632 = vmatpush.bf16.msra.mxu0 %v879
  %2633 = vmatpush.bf16.msra.mxu0 %v873
  %2634 = vmatpush.bf16.msra.mxu0 %v867
  %2635 = vmatpush.bf16.msra.mxu0 %v861
  %2636 = vmatmul.bf16.gmra.mxu0 %v1314
  %v2637 = vpop.f32.mrf.mxu0
  %v2638 = vadd.f32 %v2625, %v2637
  %v2639 = vpop.f32.mrf.mxu0
  %2640 = vdwg.mxu0
  %2641 = vmatpush.bf16.msra.mxu0 %v856
  %2642 = vmatpush.bf16.msra.mxu0 %v850
  %2643 = vmatpush.bf16.msra.mxu0 %v844
  %2644 = vmatpush.bf16.msra.mxu0 %v838
  %2645 = vmatpush.bf16.msra.mxu0 %v832
  %2646 = vmatpush.bf16.msra.mxu0 %v826
  %2647 = vmatpush.bf16.msra.mxu0 %v820
  %2648 = vmatpush.bf16.msra.mxu0 %v814
  %2649 = vmatmul.bf16.gmra.mxu0 %v1313
  %v2650 = vpop.f32.mrf.mxu0
  %v2651 = vadd.f32 0.0, %v2650
  %v2652 = vpop.f32.mrf.mxu0
  %2653 = vdwg.mxu0
  %2654 = vmatpush.bf16.msra.mxu0 %v904
  %2655 = vmatpush.bf16.msra.mxu0 %v898
  %2656 = vmatpush.bf16.msra.mxu0 %v892
  %2657 = vmatpush.bf16.msra.mxu0 %v886
  %2658 = vmatpush.bf16.msra.mxu0 %v880
  %2659 = vmatpush.bf16.msra.mxu0 %v874
  %2660 = vmatpush.bf16.msra.mxu0 %v868
  %2661 = vmatpush.bf16.msra.mxu0 %v862
  %2662 = vmatmul.bf16.gmra.mxu0 %v1314
  %v2663 = vpop.f32.mrf.mxu0
  %v2664 = vadd.f32 %v2651, %v2663
  %v2665 = vpop.f32.mrf.mxu0
  %2666 = vdwg.mxu0
  %2667 = vmatpush.bf16.msra.mxu0 %v857
  %2668 = vmatpush.bf16.msra.mxu0 %v851
  %2669 = vmatpush.bf16.msra.mxu0 %v845
  %2670 = vmatpush.bf16.msra.mxu0 %v839
  %2671 = vmatpush.bf16.msra.mxu0 %v833
  %2672 = vmatpush.bf16.msra.mxu0 %v827
  %2673 = vmatpush.bf16.msra.mxu0 %v821
  %2674 = vmatpush.bf16.msra.mxu0 %v815
  %2675 = vmatmul.bf16.gmra.mxu0 %v1313
  %v2676 = vpop.f32.mrf.mxu0
  %v2677 = vadd.f32 0.0, %v2676
  %v2678 = vpop.f32.mrf.mxu0
  %2679 = vdwg.mxu0
  %2680 = vmatpush.bf16.msra.mxu0 %v905
  %2681 = vmatpush.bf16.msra.mxu0 %v899
  %2682 = vmatpush.bf16.msra.mxu0 %v893
  %2683 = vmatpush.bf16.msra.mxu0 %v887
  %2684 = vmatpush.bf16.msra.mxu0 %v881
  %2685 = vmatpush.bf16.msra.mxu0 %v875
  %2686 = vmatpush.bf16.msra.mxu0 %v869
  %2687 = vmatpush.bf16.msra.mxu0 %v863
  %2688 = vmatmul.bf16.gmra.mxu0 %v1314
  %v2689 = vpop.f32.mrf.mxu0
  %v2690 = vadd.f32 %v2677, %v2689
  %v2691 = vpop.f32.mrf.mxu0
  %2692 = vdwg.mxu0
  %v2693 = vadd.f32 %v2531, %v2560
  %v2694 = vadd.f32 %v2532, %v2586
  %v2695 = vadd.f32 %v2533, %v2612
  %v2696 = vadd.f32 %v2534, %v2638
  %v2697 = vxor.u32 %v2693, 2147483648
  %v2698 = vxor.u32 %v2694, 2147483648
  %v2699 = vxor.u32 %v2695, 2147483648
  %v2700 = vxor.u32 %v2696, 2147483648
  %v2701 = vmul.f32 %v2697, 1.442695
  %v2702 = vpow.pop %v2701
  %v2703 = vmul.f32 %v2698, 1.442695
  %v2704 = vpow.pop %v2703
  %v2705 = vmul.f32 %v2699, 1.442695
  %v2706 = vpow.pop %v2705
  %v2707 = vmul.f32 %v2700, 1.442695
  %v2708 = vpow.pop %v2707
  %v2709 = vadd.f32 %v2702, 1.0
  %v2710 = vadd.f32 %v2704, 1.0
  %v2711 = vadd.f32 %v2706, 1.0
  %v2712 = vadd.f32 %v2708, 1.0
  %v2713 = vrcp.pop %v2709
  %v2714 = vmul.f32 %v2709, %v2713
  %v2715 = vsub.f32 1.0, %v2714
  %v2716 = vmul.f32 %v2713, %v2715
  %v2717 = vadd.f32 %v2713, %v2716
  %vm2718 = vweird.f32 %v2709
  %vm2719 = vweird.f32 %v2713
  %vm2720 = vmor %vm2718, %vm2719
  %v2721 = vsel %vm2720, %v2713, %v2717
  %v2722 = vand.u32 2147483647, %v2709
  %vm2723 = vcmp.eq.f32.partialorder %v2722, 8.507059e+37
  %v2724 = vand.u32 %v2709, 2147483648
  %v2725 = vor.u32 1.1754944e-38, %v2724
  %v2726 = vsel %vm2723, %v2725, %v2721
  %v2727 = vmul.f32 1.0, %v2726
  %v2728 = vrcp.pop %v2710
  %v2729 = vmul.f32 %v2710, %v2728
  %v2730 = vsub.f32 1.0, %v2729
  %v2731 = vmul.f32 %v2728, %v2730
  %v2732 = vadd.f32 %v2728, %v2731
  %vm2733 = vweird.f32 %v2710
  %vm2734 = vweird.f32 %v2728
  %vm2735 = vmor %vm2733, %vm2734
  %v2736 = vsel %vm2735, %v2728, %v2732
  %v2737 = vand.u32 2147483647, %v2710
  %vm2738 = vcmp.eq.f32.partialorder %v2737, 8.507059e+37
  %v2739 = vand.u32 %v2710, 2147483648
  %v2740 = vor.u32 1.1754944e-38, %v2739
  %v2741 = vsel %vm2738, %v2740, %v2736
  %v2742 = vmul.f32 1.0, %v2741
  %v2743 = vrcp.pop %v2711
  %v2744 = vmul.f32 %v2711, %v2743
  %v2745 = vsub.f32 1.0, %v2744
  %v2746 = vmul.f32 %v2743, %v2745
  %v2747 = vadd.f32 %v2743, %v2746
  %vm2748 = vweird.f32 %v2711
  %vm2749 = vweird.f32 %v2743
  %vm2750 = vmor %vm2748, %vm2749
  %v2751 = vsel %vm2750, %v2743, %v2747
  %v2752 = vand.u32 2147483647, %v2711
  %vm2753 = vcmp.eq.f32.partialorder %v2752, 8.507059e+37
  %v2754 = vand.u32 %v2711, 2147483648
  %v2755 = vor.u32 1.1754944e-38, %v2754
  %v2756 = vsel %vm2753, %v2755, %v2751
  %v2757 = vmul.f32 1.0, %v2756
  %v2758 = vrcp.pop %v2712
  %v2759 = vmul.f32 %v2712, %v2758
  %v2760 = vsub.f32 1.0, %v2759
  %v2761 = vmul.f32 %v2758, %v2760
  %v2762 = vadd.f32 %v2758, %v2761
  %vm2763 = vweird.f32 %v2712
  %vm2764 = vweird.f32 %v2758
  %vm2765 = vmor %vm2763, %vm2764
  %v2766 = vsel %vm2765, %v2758, %v2762
  %v2767 = vand.u32 2147483647, %v2712
  %vm2768 = vcmp.eq.f32.partialorder %v2767, 8.507059e+37
  %v2769 = vand.u32 %v2712, 2147483648
  %v2770 = vor.u32 1.1754944e-38, %v2769
  %v2771 = vsel %vm2768, %v2770, %v2766
  %v2772 = vmul.f32 1.0, %v2771
  %v2773 = vadd.f32 %v2664, %v395
  %v2774 = vadd.f32 %v2690, %v396
  %v2775 = vmul.f32 %v2727, %v2773
  %v2776 = vmul.f32 %v2742, %v2774
  %v2777 = vadd.f32 %v2535, %v2775
  %v2778 = vadd.f32 %v2536, %v2776
  %v2779 = vtanh.pop %v2777
  %v2780 = vtanh.pop %v2778
  %v2781 = vsub.f32 1.0, %v2757
  %v2782 = vsub.f32 1.0, %v2772
  %v2783 = vmul.f32 %v2781, %v2779
  %v2784 = vmul.f32 %v2782, %v2780
  %v2785 = vmul.f32 %v2757, %v1307
  %v2786 = vmul.f32 %v2772, %v1308
  %v2787 = vadd.f32 %v2783, %v2785
  %v2788 = vadd.f32 %v2784, %v2786
  %2789 = vadd.xlane.f32.xlu0 %v2787
  %v2790 = vpop.xlane.xlu0 %2789
  %v2791 = vmul.f32 %v2790, %v1262
  %v2792 = vmul.f32 %v2787, %v2787
  %2793 = vadd.xlane.f32.xlu0 %v2792
  %v2794 = vpop.xlane.xlu0 %2793
  %v2795 = vmul.f32 %v2794, %v1262
  %v2796 = vmul.f32 %v2791, %v2791
  %v2797 = vsub.f32 %v2795, %v2796
  %v2798 = vsub.f32 %v2787, %v2791
  %v2799 = vadd.f32 %v2797, 1e-05
  %v2800 = vrsqrt.pop %v2799
  %v2801 = vmul.f32 %v2800, %v2799
  %v2802 = vmul.f32 %v2801, %v2800
  %v2803 = vmul.f32 0.5, %v2802
  %v2804 = vsub.f32 1.5, %v2803
  %v2805 = vmul.f32 %v2800, %v2804
  %vm2806 = vweird.f32 %v2799
  %vm2807 = vweird.f32 %v2800
  %vm2808 = vmor %vm2806, %vm2807
  %v2809 = vsel %vm2808, %v2800, %v2805
  %v2810 = vmul.f32 %v2798, %v2809
  %2811 = vadd.xlane.f32.xlu0 %v2788
  %v2812 = vpop.xlane.xlu0 %2811
  %v2813 = vmul.f32 %v2812, %v1262
  %v2814 = vmul.f32 %v2788, %v2788
  %2815 = vadd.xlane.f32.xlu0 %v2814
  %v2816 = vpop.xlane.xlu0 %2815
  %v2817 = vmul.f32 %v2816, %v1262
  %v2818 = vmul.f32 %v2813, %v2813
  %v2819 = vsub.f32 %v2817, %v2818
  %v2820 = vsub.f32 %v2788, %v2813
  %v2821 = vadd.f32 %v2819, 1e-05
  %v2822 = vrsqrt.pop %v2821
  %v2823 = vmul.f32 %v2822, %v2821
  %v2824 = vmul.f32 %v2823, %v2822
  %v2825 = vmul.f32 0.5, %v2824
  %v2826 = vsub.f32 1.5, %v2825
  %v2827 = vmul.f32 %v2822, %v2826
  %vm2828 = vweird.f32 %v2821
  %vm2829 = vweird.f32 %v2822
  %vm2830 = vmor %vm2828, %vm2829
  %v2831 = vsel %vm2830, %v2822, %v2827
  %v2832 = vmul.f32 %v2820, %v2831
  %v2833 = vmul.f32 %v2810, %v402
  %v2834 = vmul.f32 %v2832, %v403
  %v2835 = vadd.f32 %v2833, %v409
  %v2836 = vadd.f32 %v2834, %v410
  %v2837 = vpack.c.bf16 %v2836, %v2835
  %v2838 = vpack.c.bf16 %v2527, %v2527
  %v2840 = vunpack.c.l.b16 %v2837
  %v2841 = vunpack.c.h.b16 %v2837
  %v2842 = vpack.c.b16 %v2840, %v2840
  %v2843 = vpack.c.b16 %v2841, %v2841
  %2846 = vmatpush.bf16.msra.mxu0 %v1935
  %2847 = vmatpush.bf16.msra.mxu0 %v1929
  %2848 = vmatpush.bf16.msra.mxu0 %v1923
  %2849 = vmatpush.bf16.msra.mxu0 %v1917
  %2850 = vmatpush.bf16.msra.mxu0 %v1911
  %2851 = vmatpush.bf16.msra.mxu0 %v1905
  %2852 = vmatpush.bf16.msra.mxu0 %v1899
  %2853 = vmatpush.bf16.msra.mxu0 %v1893
  %2854 = vmatmul.bf16.gmra.mxu0 %v2842
  %v2855 = vpop.f32.mrf.mxu0
  %v2856 = vadd.f32 %v380, %v2855
  %v2857 = vpop.f32.mrf.mxu0
  %2858 = vdwg.mxu0
  %2859 = vmatpush.bf16.msra.mxu0 %v1983
  %2860 = vmatpush.bf16.msra.mxu0 %v1977
  %2861 = vmatpush.bf16.msra.mxu0 %v1971
  %2862 = vmatpush.bf16.msra.mxu0 %v1965
  %2863 = vmatpush.bf16.msra.mxu0 %v1959
  %2864 = vmatpush.bf16.msra.mxu0 %v1953
  %2865 = vmatpush.bf16.msra.mxu0 %v1947
  %2866 = vmatpush.bf16.msra.mxu0 %v1941
  %2867 = vmatmul.bf16.gmra.mxu0 %v2843
  %v2868 = vpop.f32.mrf.mxu0
  %v2869 = vadd.f32 %v2856, %v2868
  %v2870 = vpop.f32.mrf.mxu0
  %2871 = vdwg.mxu0
  %2872 = vmatpush.bf16.msra.mxu0 %v2031
  %2873 = vmatpush.bf16.msra.mxu0 %v2025
  %2874 = vmatpush.bf16.msra.mxu0 %v2019
  %2875 = vmatpush.bf16.msra.mxu0 %v2013
  %2876 = vmatpush.bf16.msra.mxu0 %v2007
  %2877 = vmatpush.bf16.msra.mxu0 %v2001
  %2878 = vmatpush.bf16.msra.mxu0 %v1995
  %2879 = vmatpush.bf16.msra.mxu0 %v1989
  %2880 = vmatmul.bf16.gmra.mxu0 %v2838
  %v2881 = vpop.f32.mrf.mxu0
  %v2882 = vadd.f32 %v2869, %v2881
  %v2883 = vpop.f32.mrf.mxu0
  %2884 = vdwg.mxu0
  %2885 = vmatpush.bf16.msra.mxu0 %v1936
  %2886 = vmatpush.bf16.msra.mxu0 %v1930
  %2887 = vmatpush.bf16.msra.mxu0 %v1924
  %2888 = vmatpush.bf16.msra.mxu0 %v1918
  %2889 = vmatpush.bf16.msra.mxu0 %v1912
  %2890 = vmatpush.bf16.msra.mxu0 %v1906
  %2891 = vmatpush.bf16.msra.mxu0 %v1900
  %2892 = vmatpush.bf16.msra.mxu0 %v1894
  %2893 = vmatmul.bf16.gmra.mxu0 %v2842
  %v2894 = vpop.f32.mrf.mxu0
  %v2895 = vadd.f32 %v381, %v2894
  %v2896 = vpop.f32.mrf.mxu0
  %2897 = vdwg.mxu0
  %2898 = vmatpush.bf16.msra.mxu0 %v1984
  %2899 = vmatpush.bf16.msra.mxu0 %v1978
  %2900 = vmatpush.bf16.msra.mxu0 %v1972
  %2901 = vmatpush.bf16.msra.mxu0 %v1966
  %2902 = vmatpush.bf16.msra.mxu0 %v1960
  %2903 = vmatpush.bf16.msra.mxu0 %v1954
  %2904 = vmatpush.bf16.msra.mxu0 %v1948
  %2905 = vmatpush.bf16.msra.mxu0 %v1942
  %2906 = vmatmul.bf16.gmra.mxu0 %v2843
  %v2907 = vpop.f32.mrf.mxu0
  %v2908 = vadd.f32 %v2895, %v2907
  %v2909 = vpop.f32.mrf.mxu0
  %2910 = vdwg.mxu0
  %2911 = vmatpush.bf16.msra.mxu0 %v2032
  %2912 = vmatpush.bf16.msra.mxu0 %v2026
  %2913 = vmatpush.bf16.msra.mxu0 %v2020
  %2914 = vmatpush.bf16.msra.mxu0 %v2014
  %2915 = vmatpush.bf16.msra.mxu0 %v2008
  %2916 = vmatpush.bf16.msra.mxu0 %v2002
  %2917 = vmatpush.bf16.msra.mxu0 %v1996
  %2918 = vmatpush.bf16.msra.mxu0 %v1990
  %2919 = vmatmul.bf16.gmra.mxu0 %v2838
  %v2920 = vpop.f32.mrf.mxu0
  %v2921 = vadd.f32 %v2908, %v2920
  %v2922 = vpop.f32.mrf.mxu0
  %2923 = vdwg.mxu0
  %2924 = vmatpush.bf16.msra.mxu0 %v1937
  %2925 = vmatpush.bf16.msra.mxu0 %v1931
  %2926 = vmatpush.bf16.msra.mxu0 %v1925
  %2927 = vmatpush.bf16.msra.mxu0 %v1919
  %2928 = vmatpush.bf16.msra.mxu0 %v1913
  %2929 = vmatpush.bf16.msra.mxu0 %v1907
  %2930 = vmatpush.bf16.msra.mxu0 %v1901
  %2931 = vmatpush.bf16.msra.mxu0 %v1895
  %2932 = vmatmul.bf16.gmra.mxu0 %v2842
  %v2933 = vpop.f32.mrf.mxu0
  %v2934 = vadd.f32 %v382, %v2933
  %v2935 = vpop.f32.mrf.mxu0
  %2936 = vdwg.mxu0
  %2937 = vmatpush.bf16.msra.mxu0 %v1985
  %2938 = vmatpush.bf16.msra.mxu0 %v1979
  %2939 = vmatpush.bf16.msra.mxu0 %v1973
  %2940 = vmatpush.bf16.msra.mxu0 %v1967
  %2941 = vmatpush.bf16.msra.mxu0 %v1961
  %2942 = vmatpush.bf16.msra.mxu0 %v1955
  %2943 = vmatpush.bf16.msra.mxu0 %v1949
  %2944 = vmatpush.bf16.msra.mxu0 %v1943
  %2945 = vmatmul.bf16.gmra.mxu0 %v2843
  %v2946 = vpop.f32.mrf.mxu0
  %v2947 = vadd.f32 %v2934, %v2946
  %v2948 = vpop.f32.mrf.mxu0
  %2949 = vdwg.mxu0
  %2950 = vmatpush.bf16.msra.mxu0 %v2033
  %2951 = vmatpush.bf16.msra.mxu0 %v2027
  %2952 = vmatpush.bf16.msra.mxu0 %v2021
  %2953 = vmatpush.bf16.msra.mxu0 %v2015
  %2954 = vmatpush.bf16.msra.mxu0 %v2009
  %2955 = vmatpush.bf16.msra.mxu0 %v2003
  %2956 = vmatpush.bf16.msra.mxu0 %v1997
  %2957 = vmatpush.bf16.msra.mxu0 %v1991
  %2958 = vmatmul.bf16.gmra.mxu0 %v2838
  %v2959 = vpop.f32.mrf.mxu0
  %v2960 = vadd.f32 %v2947, %v2959
  %v2961 = vpop.f32.mrf.mxu0
  %2962 = vdwg.mxu0
  %2963 = vmatpush.bf16.msra.mxu0 %v1938
  %2964 = vmatpush.bf16.msra.mxu0 %v1932
  %2965 = vmatpush.bf16.msra.mxu0 %v1926
  %2966 = vmatpush.bf16.msra.mxu0 %v1920
  %2967 = vmatpush.bf16.msra.mxu0 %v1914
  %2968 = vmatpush.bf16.msra.mxu0 %v1908
  %2969 = vmatpush.bf16.msra.mxu0 %v1902
  %2970 = vmatpush.bf16.msra.mxu0 %v1896
  %2971 = vmatmul.bf16.gmra.mxu0 %v2842
  %v2972 = vpop.f32.mrf.mxu0
  %v2973 = vadd.f32 %v383, %v2972
  %v2974 = vpop.f32.mrf.mxu0
  %2975 = vdwg.mxu0
  %2976 = vmatpush.bf16.msra.mxu0 %v1986
  %2977 = vmatpush.bf16.msra.mxu0 %v1980
  %2978 = vmatpush.bf16.msra.mxu0 %v1974
  %2979 = vmatpush.bf16.msra.mxu0 %v1968
  %2980 = vmatpush.bf16.msra.mxu0 %v1962
  %2981 = vmatpush.bf16.msra.mxu0 %v1956
  %2982 = vmatpush.bf16.msra.mxu0 %v1950
  %2983 = vmatpush.bf16.msra.mxu0 %v1944
  %2984 = vmatmul.bf16.gmra.mxu0 %v2843
  %v2985 = vpop.f32.mrf.mxu0
  %v2986 = vadd.f32 %v2973, %v2985
  %v2987 = vpop.f32.mrf.mxu0
  %2988 = vdwg.mxu0
  %2989 = vmatpush.bf16.msra.mxu0 %v2034
  %2990 = vmatpush.bf16.msra.mxu0 %v2028
  %2991 = vmatpush.bf16.msra.mxu0 %v2022
  %2992 = vmatpush.bf16.msra.mxu0 %v2016
  %2993 = vmatpush.bf16.msra.mxu0 %v2010
  %2994 = vmatpush.bf16.msra.mxu0 %v2004
  %2995 = vmatpush.bf16.msra.mxu0 %v1998
  %2996 = vmatpush.bf16.msra.mxu0 %v1992
  %2997 = vmatmul.bf16.gmra.mxu0 %v2838
  %v2998 = vpop.f32.mrf.mxu0
  %v2999 = vadd.f32 %v2986, %v2998
  %v3000 = vpop.f32.mrf.mxu0
  %3001 = vdwg.mxu0
  %3002 = vmatpush.bf16.msra.mxu0 %v1939
  %3003 = vmatpush.bf16.msra.mxu0 %v1933
  %3004 = vmatpush.bf16.msra.mxu0 %v1927
  %3005 = vmatpush.bf16.msra.mxu0 %v1921
  %3006 = vmatpush.bf16.msra.mxu0 %v1915
  %3007 = vmatpush.bf16.msra.mxu0 %v1909
  %3008 = vmatpush.bf16.msra.mxu0 %v1903
  %3009 = vmatpush.bf16.msra.mxu0 %v1897
  %3010 = vmatmul.bf16.gmra.mxu0 %v2842
  %v3011 = vpop.f32.mrf.mxu0
  %v3012 = vadd.f32 %v384, %v3011
  %v3013 = vpop.f32.mrf.mxu0
  %3014 = vdwg.mxu0
  %3015 = vmatpush.bf16.msra.mxu0 %v1987
  %3016 = vmatpush.bf16.msra.mxu0 %v1981
  %3017 = vmatpush.bf16.msra.mxu0 %v1975
  %3018 = vmatpush.bf16.msra.mxu0 %v1969
  %3019 = vmatpush.bf16.msra.mxu0 %v1963
  %3020 = vmatpush.bf16.msra.mxu0 %v1957
  %3021 = vmatpush.bf16.msra.mxu0 %v1951
  %3022 = vmatpush.bf16.msra.mxu0 %v1945
  %3023 = vmatmul.bf16.gmra.mxu0 %v2843
  %v3024 = vpop.f32.mrf.mxu0
  %v3025 = vadd.f32 %v3012, %v3024
  %v3026 = vpop.f32.mrf.mxu0
  %3027 = vdwg.mxu0
  %3028 = vmatpush.bf16.msra.mxu0 %v2035
  %3029 = vmatpush.bf16.msra.mxu0 %v2029
  %3030 = vmatpush.bf16.msra.mxu0 %v2023
  %3031 = vmatpush.bf16.msra.mxu0 %v2017
  %3032 = vmatpush.bf16.msra.mxu0 %v2011
  %3033 = vmatpush.bf16.msra.mxu0 %v2005
  %3034 = vmatpush.bf16.msra.mxu0 %v1999
  %3035 = vmatpush.bf16.msra.mxu0 %v1993
  %3036 = vmatmul.bf16.gmra.mxu0 %v2838
  %v3037 = vpop.f32.mrf.mxu0
  %v3038 = vadd.f32 %v3025, %v3037
  %v3039 = vpop.f32.mrf.mxu0
  %3040 = vdwg.mxu0
  %3041 = vmatpush.bf16.msra.mxu0 %v1940
  %3042 = vmatpush.bf16.msra.mxu0 %v1934
  %3043 = vmatpush.bf16.msra.mxu0 %v1928
  %3044 = vmatpush.bf16.msra.mxu0 %v1922
  %3045 = vmatpush.bf16.msra.mxu0 %v1916
  %3046 = vmatpush.bf16.msra.mxu0 %v1910
  %3047 = vmatpush.bf16.msra.mxu0 %v1904
  %3048 = vmatpush.bf16.msra.mxu0 %v1898
  %3049 = vmatmul.bf16.gmra.mxu0 %v2842
  %v3050 = vpop.f32.mrf.mxu0
  %v3051 = vadd.f32 %v385, %v3050
  %v3052 = vpop.f32.mrf.mxu0
  %3053 = vdwg.mxu0
  %3054 = vmatpush.bf16.msra.mxu0 %v1988
  %3055 = vmatpush.bf16.msra.mxu0 %v1982
  %3056 = vmatpush.bf16.msra.mxu0 %v1976
  %3057 = vmatpush.bf16.msra.mxu0 %v1970
  %3058 = vmatpush.bf16.msra.mxu0 %v1964
  %3059 = vmatpush.bf16.msra.mxu0 %v1958
  %3060 = vmatpush.bf16.msra.mxu0 %v1952
  %3061 = vmatpush.bf16.msra.mxu0 %v1946
  %3062 = vmatmul.bf16.gmra.mxu0 %v2843
  %v3063 = vpop.f32.mrf.mxu0
  %v3064 = vadd.f32 %v3051, %v3063
  %v3065 = vpop.f32.mrf.mxu0
  %3066 = vdwg.mxu0
  %3067 = vmatpush.bf16.msra.mxu0 %v2036
  %3068 = vmatpush.bf16.msra.mxu0 %v2030
  %3069 = vmatpush.bf16.msra.mxu0 %v2024
  %3070 = vmatpush.bf16.msra.mxu0 %v2018
  %3071 = vmatpush.bf16.msra.mxu0 %v2012
  %3072 = vmatpush.bf16.msra.mxu0 %v2006
  %3073 = vmatpush.bf16.msra.mxu0 %v2000
  %3074 = vmatpush.bf16.msra.mxu0 %v1994
  %3075 = vmatmul.bf16.gmra.mxu0 %v2838
  %v3076 = vpop.f32.mrf.mxu0
  %v3077 = vadd.f32 %v3064, %v3076
  %v3078 = vpop.f32.mrf.mxu0
  %3079 = vdwg.mxu0
  %v3080 = vadd.f32 %v2882, %v2999
  %v3081 = vadd.f32 %v2921, %v3038
  %v3082 = vxor.u32 %v3080, 2147483648
  %v3083 = vxor.u32 %v3081, 2147483648
  %v3084 = vmul.f32 %v3082, 1.442695
  %v3085 = vpow.pop %v3084
  %v3086 = vmul.f32 %v3083, 1.442695
  %v3087 = vpow.pop %v3086
  %v3088 = vadd.f32 %v3085, 1.0
  %v3089 = vadd.f32 %v3087, 1.0
  %v3090 = vrcp.pop %v3088
  %v3091 = vmul.f32 %v3088, %v3090
  %v3092 = vsub.f32 1.0, %v3091
  %v3093 = vmul.f32 %v3090, %v3092
  %v3094 = vadd.f32 %v3090, %v3093
  %vm3095 = vweird.f32 %v3088
  %vm3096 = vweird.f32 %v3090
  %vm3097 = vmor %vm3095, %vm3096
  %v3098 = vsel %vm3097, %v3090, %v3094
  %v3099 = vand.u32 2147483647, %v3088
  %vm3100 = vcmp.eq.f32.partialorder %v3099, 8.507059e+37
  %v3101 = vand.u32 %v3088, 2147483648
  %v3102 = vor.u32 1.1754944e-38, %v3101
  %v3103 = vsel %vm3100, %v3102, %v3098
  %v3104 = vmul.f32 1.0, %v3103
  %v3105 = vrcp.pop %v3089
  %v3106 = vmul.f32 %v3089, %v3105
  %v3107 = vsub.f32 1.0, %v3106
  %v3108 = vmul.f32 %v3105, %v3107
  %v3109 = vadd.f32 %v3105, %v3108
  %vm3110 = vweird.f32 %v3089
  %vm3111 = vweird.f32 %v3105
  %vm3112 = vmor %vm3110, %vm3111
  %v3113 = vsel %vm3112, %v3105, %v3109
  %v3114 = vand.u32 2147483647, %v3089
  %vm3115 = vcmp.eq.f32.partialorder %v3114, 8.507059e+37
  %v3116 = vand.u32 %v3089, 2147483648
  %v3117 = vor.u32 1.1754944e-38, %v3116
  %v3118 = vsel %vm3115, %v3117, %v3113
  %v3119 = vmul.f32 1.0, %v3118
  %v3120 = vmul.f32 %v3104, %v3077
  %v3121 = vadd.f32 %v2960, %v3120
  %v3122 = vtanh.pop %v3121
  %v3123 = vsub.f32 1.0, %v3119
  %v3124 = vmul.f32 %v3123, %v3122
  %v3125 = vmul.f32 %v3119, %v2527
  %v3126 = vadd.f32 %v3124, %v3125
  %v3127 = vsel %vm2462, %v3126, 0.0
  %3128 = vadd.xlane.f32.xlu0 %v3127
  %v3129 = vpop.xlane.xlu0 %3128
  %v3130 = vmul.f32 %v3129, %v2472
  %v3131 = vmul.f32 %v3126, %v3126
  %v3132 = vsel %vm2462, %v3131, 0.0
  %3133 = vadd.xlane.f32.xlu0 %v3132
  %v3134 = vpop.xlane.xlu0 %3133
  %v3135 = vmul.f32 %v3134, %v2472
  %v3136 = vmul.f32 %v3130, %v3130
  %v3137 = vsub.f32 %v3135, %v3136
  %v3138 = vsub.f32 %v3126, %v3130
  %v3139 = vadd.f32 %v3137, 1e-05
  %v3140 = vrsqrt.pop %v3139
  %v3141 = vmul.f32 %v3140, %v3139
  %v3142 = vmul.f32 %v3141, %v3140
  %v3143 = vmul.f32 0.5, %v3142
  %v3144 = vsub.f32 1.5, %v3143
  %v3145 = vmul.f32 %v3140, %v3144
  %vm3146 = vweird.f32 %v3139
  %vm3147 = vweird.f32 %v3140
  %vm3148 = vmor %vm3146, %vm3147
  %v3149 = vsel %vm3148, %v3140, %v3145
  %v3150 = vmul.f32 %v3138, %v3149
  %3152 = vrot.lane.b32.xlu0 %v3126, 64
  %v3153 = vpop.permute.xlu0 %3152
  %v3155 = vsel %vm2462, %v3153, 0.0
  %3156 = vadd.xlane.f32.xlu0 %v3155
  %v3157 = vpop.xlane.xlu0 %3156
  %v3158 = vmul.f32 %v3157, %v2472
  %3160 = vrot.lane.b32.xlu0 %v3131, 64
  %v3161 = vpop.permute.xlu0 %3160
  %v3163 = vsel %vm2462, %v3161, 0.0
  %3164 = vadd.xlane.f32.xlu0 %v3163
  %v3165 = vpop.xlane.xlu0 %3164
  %v3166 = vmul.f32 %v3165, %v2472
  %v3167 = vmul.f32 %v3158, %v3158
  %v3168 = vsub.f32 %v3166, %v3167
  %v3169 = vsub.f32 %v3126, %v3158
  %v3170 = vadd.f32 %v3168, 1e-05
  %v3171 = vrsqrt.pop %v3170
  %v3172 = vmul.f32 %v3171, %v3170
  %v3173 = vmul.f32 %v3172, %v3171
  %v3174 = vmul.f32 0.5, %v3173
  %v3175 = vsub.f32 1.5, %v3174
  %v3176 = vmul.f32 %v3171, %v3175
  %vm3177 = vweird.f32 %v3170
  %vm3178 = vweird.f32 %v3171
  %vm3179 = vmor %vm3177, %vm3178
  %v3180 = vsel %vm3179, %v3171, %v3176
  %v3181 = vmul.f32 %v3169, %v3180
  %v3182 = vsel %vm2462, %v3150, %v3181
  %v3183 = vmul.f32 %v3182, %v413
  %v3184 = vadd.f32 %v3183, %v414
  %s3185 = smul.u32 2, 6
  %s3186 = smul.addr %s3185, 8
  %s3187 = scalar_lea.vmem [#allocation2], %s3186
  %v3188 = vld [vmem:[%s3187] sm:$0xff]
  %v3189 = vld [vmem:[%s3187 + $0x8] sm:$0xff]
  %v3190 = vld [vmem:[%s3187 + $0x10] sm:$0xff]
  %v3191 = vld [vmem:[%s3187 + $0x18] sm:$0xff]
  %v3192 = vld [vmem:[%s3187 + $0x20] sm:$0xff]
  %v3193 = vld [vmem:[%s3187 + $0x28] sm:$0xff]
  %3194 = vmatpush.bf16.msra.mxu0 %v852
  %3195 = vmatpush.bf16.msra.mxu0 %v846
  %3196 = vmatpush.bf16.msra.mxu0 %v840
  %3197 = vmatpush.bf16.msra.mxu0 %v834
  %3198 = vmatpush.bf16.msra.mxu0 %v828
  %3199 = vmatpush.bf16.msra.mxu0 %v822
  %3200 = vmatpush.bf16.msra.mxu0 %v816
  %3201 = vmatpush.bf16.msra.mxu0 %v810
  %3202 = vmatmul.bf16.gmra.mxu0 %v2842
  %v3203 = vpop.f32.mrf.mxu0
  %v3204 = vadd.f32 0.0, %v3203
  %v3205 = vpop.f32.mrf.mxu0
  %3206 = vdwg.mxu0
  %3207 = vmatpush.bf16.msra.mxu0 %v900
  %3208 = vmatpush.bf16.msra.mxu0 %v894
  %3209 = vmatpush.bf16.msra.mxu0 %v888
  %3210 = vmatpush.bf16.msra.mxu0 %v882
  %3211 = vmatpush.bf16.msra.mxu0 %v876
  %3212 = vmatpush.bf16.msra.mxu0 %v870
  %3213 = vmatpush.bf16.msra.mxu0 %v864
  %3214 = vmatpush.bf16.msra.mxu0 %v858
  %3215 = vmatmul.bf16.gmra.mxu0 %v2843
  %v3216 = vpop.f32.mrf.mxu0
  %v3217 = vadd.f32 %v3204, %v3216
  %v3218 = vpop.f32.mrf.mxu0
  %3219 = vdwg.mxu0
  %3220 = vmatpush.bf16.msra.mxu0 %v853
  %3221 = vmatpush.bf16.msra.mxu0 %v847
  %3222 = vmatpush.bf16.msra.mxu0 %v841
  %3223 = vmatpush.bf16.msra.mxu0 %v835
  %3224 = vmatpush.bf16.msra.mxu0 %v829
  %3225 = vmatpush.bf16.msra.mxu0 %v823
  %3226 = vmatpush.bf16.msra.mxu0 %v817
  %3227 = vmatpush.bf16.msra.mxu0 %v811
  %3228 = vmatmul.bf16.gmra.mxu0 %v2842
  %v3229 = vpop.f32.mrf.mxu0
  %v3230 = vadd.f32 0.0, %v3229
  %v3231 = vpop.f32.mrf.mxu0
  %3232 = vdwg.mxu0
  %3233 = vmatpush.bf16.msra.mxu0 %v901
  %3234 = vmatpush.bf16.msra.mxu0 %v895
  %3235 = vmatpush.bf16.msra.mxu0 %v889
  %3236 = vmatpush.bf16.msra.mxu0 %v883
  %3237 = vmatpush.bf16.msra.mxu0 %v877
  %3238 = vmatpush.bf16.msra.mxu0 %v871
  %3239 = vmatpush.bf16.msra.mxu0 %v865
  %3240 = vmatpush.bf16.msra.mxu0 %v859
  %3241 = vmatmul.bf16.gmra.mxu0 %v2843
  %v3242 = vpop.f32.mrf.mxu0
  %v3243 = vadd.f32 %v3230, %v3242
  %v3244 = vpop.f32.mrf.mxu0
  %3245 = vdwg.mxu0
  %3246 = vmatpush.bf16.msra.mxu0 %v854
  %3247 = vmatpush.bf16.msra.mxu0 %v848
  %3248 = vmatpush.bf16.msra.mxu0 %v842
  %3249 = vmatpush.bf16.msra.mxu0 %v836
  %3250 = vmatpush.bf16.msra.mxu0 %v830
  %3251 = vmatpush.bf16.msra.mxu0 %v824
  %3252 = vmatpush.bf16.msra.mxu0 %v818
  %3253 = vmatpush.bf16.msra.mxu0 %v812
  %3254 = vmatmul.bf16.gmra.mxu0 %v2842
  %v3255 = vpop.f32.mrf.mxu0
  %v3256 = vadd.f32 0.0, %v3255
  %v3257 = vpop.f32.mrf.mxu0
  %3258 = vdwg.mxu0
  %3259 = vmatpush.bf16.msra.mxu0 %v902
  %3260 = vmatpush.bf16.msra.mxu0 %v896
  %3261 = vmatpush.bf16.msra.mxu0 %v890
  %3262 = vmatpush.bf16.msra.mxu0 %v884
  %3263 = vmatpush.bf16.msra.mxu0 %v878
  %3264 = vmatpush.bf16.msra.mxu0 %v872
  %3265 = vmatpush.bf16.msra.mxu0 %v866
  %3266 = vmatpush.bf16.msra.mxu0 %v860
  %3267 = vmatmul.bf16.gmra.mxu0 %v2843
  %v3268 = vpop.f32.mrf.mxu0
  %v3269 = vadd.f32 %v3256, %v3268
  %v3270 = vpop.f32.mrf.mxu0
  %3271 = vdwg.mxu0
  %3272 = vmatpush.bf16.msra.mxu0 %v855
  %3273 = vmatpush.bf16.msra.mxu0 %v849
  %3274 = vmatpush.bf16.msra.mxu0 %v843
  %3275 = vmatpush.bf16.msra.mxu0 %v837
  %3276 = vmatpush.bf16.msra.mxu0 %v831
  %3277 = vmatpush.bf16.msra.mxu0 %v825
  %3278 = vmatpush.bf16.msra.mxu0 %v819
  %3279 = vmatpush.bf16.msra.mxu0 %v813
  %3280 = vmatmul.bf16.gmra.mxu0 %v2842
  %v3281 = vpop.f32.mrf.mxu0
  %v3282 = vadd.f32 0.0, %v3281
  %v3283 = vpop.f32.mrf.mxu0
  %3284 = vdwg.mxu0
  %3285 = vmatpush.bf16.msra.mxu0 %v903
  %3286 = vmatpush.bf16.msra.mxu0 %v897
  %3287 = vmatpush.bf16.msra.mxu0 %v891
  %3288 = vmatpush.bf16.msra.mxu0 %v885
  %3289 = vmatpush.bf16.msra.mxu0 %v879
  %3290 = vmatpush.bf16.msra.mxu0 %v873
  %3291 = vmatpush.bf16.msra.mxu0 %v867
  %3292 = vmatpush.bf16.msra.mxu0 %v861
  %3293 = vmatmul.bf16.gmra.mxu0 %v2843
  %v3294 = vpop.f32.mrf.mxu0
  %v3295 = vadd.f32 %v3282, %v3294
  %v3296 = vpop.f32.mrf.mxu0
  %3297 = vdwg.mxu0
  %3298 = vmatpush.bf16.msra.mxu0 %v856
  %3299 = vmatpush.bf16.msra.mxu0 %v850
  %3300 = vmatpush.bf16.msra.mxu0 %v844
  %3301 = vmatpush.bf16.msra.mxu0 %v838
  %3302 = vmatpush.bf16.msra.mxu0 %v832
  %3303 = vmatpush.bf16.msra.mxu0 %v826
  %3304 = vmatpush.bf16.msra.mxu0 %v820
  %3305 = vmatpush.bf16.msra.mxu0 %v814
  %3306 = vmatmul.bf16.gmra.mxu0 %v2842
  %v3307 = vpop.f32.mrf.mxu0
  %v3308 = vadd.f32 0.0, %v3307
  %v3309 = vpop.f32.mrf.mxu0
  %3310 = vdwg.mxu0
  %3311 = vmatpush.bf16.msra.mxu0 %v904
  %3312 = vmatpush.bf16.msra.mxu0 %v898
  %3313 = vmatpush.bf16.msra.mxu0 %v892
  %3314 = vmatpush.bf16.msra.mxu0 %v886
  %3315 = vmatpush.bf16.msra.mxu0 %v880
  %3316 = vmatpush.bf16.msra.mxu0 %v874
  %3317 = vmatpush.bf16.msra.mxu0 %v868
  %3318 = vmatpush.bf16.msra.mxu0 %v862
  %3319 = vmatmul.bf16.gmra.mxu0 %v2843
  %v3320 = vpop.f32.mrf.mxu0
  %v3321 = vadd.f32 %v3308, %v3320
  %v3322 = vpop.f32.mrf.mxu0
  %3323 = vdwg.mxu0
  %3324 = vmatpush.bf16.msra.mxu0 %v857
  %3325 = vmatpush.bf16.msra.mxu0 %v851
  %3326 = vmatpush.bf16.msra.mxu0 %v845
  %3327 = vmatpush.bf16.msra.mxu0 %v839
  %3328 = vmatpush.bf16.msra.mxu0 %v833
  %3329 = vmatpush.bf16.msra.mxu0 %v827
  %3330 = vmatpush.bf16.msra.mxu0 %v821
  %3331 = vmatpush.bf16.msra.mxu0 %v815
  %3332 = vmatmul.bf16.gmra.mxu0 %v2842
  %v3333 = vpop.f32.mrf.mxu0
  %v3334 = vadd.f32 0.0, %v3333
  %v3335 = vpop.f32.mrf.mxu0
  %3336 = vdwg.mxu0
  %3337 = vmatpush.bf16.msra.mxu0 %v905
  %3338 = vmatpush.bf16.msra.mxu0 %v899
  %3339 = vmatpush.bf16.msra.mxu0 %v893
  %3340 = vmatpush.bf16.msra.mxu0 %v887
  %3341 = vmatpush.bf16.msra.mxu0 %v881
  %3342 = vmatpush.bf16.msra.mxu0 %v875
  %3343 = vmatpush.bf16.msra.mxu0 %v869
  %3344 = vmatpush.bf16.msra.mxu0 %v863
  %3345 = vmatmul.bf16.gmra.mxu0 %v2843
  %v3346 = vpop.f32.mrf.mxu0
  %v3347 = vadd.f32 %v3334, %v3346
  %v3348 = vpop.f32.mrf.mxu0
  %3349 = vdwg.mxu0
  %v3350 = vadd.f32 %v3188, %v3217
  %v3351 = vadd.f32 %v3189, %v3243
  %v3352 = vadd.f32 %v3190, %v3269
  %v3353 = vadd.f32 %v3191, %v3295
  %v3354 = vxor.u32 %v3350, 2147483648
  %v3355 = vxor.u32 %v3351, 2147483648
  %v3356 = vxor.u32 %v3352, 2147483648
  %v3357 = vxor.u32 %v3353, 2147483648
  %v3358 = vmul.f32 %v3354, 1.442695
  %v3359 = vpow.pop %v3358
  %v3360 = vmul.f32 %v3355, 1.442695
  %v3361 = vpow.pop %v3360
  %v3362 = vmul.f32 %v3356, 1.442695
  %v3363 = vpow.pop %v3362
  %v3364 = vmul.f32 %v3357, 1.442695
  %v3365 = vpow.pop %v3364
  %v3366 = vadd.f32 %v3359, 1.0
  %v3367 = vadd.f32 %v3361, 1.0
  %v3368 = vadd.f32 %v3363, 1.0
  %v3369 = vadd.f32 %v3365, 1.0
  %v3370 = vrcp.pop %v3366
  %v3371 = vmul.f32 %v3366, %v3370
  %v3372 = vsub.f32 1.0, %v3371
  %v3373 = vmul.f32 %v3370, %v3372
  %v3374 = vadd.f32 %v3370, %v3373
  %vm3375 = vweird.f32 %v3366
  %vm3376 = vweird.f32 %v3370
  %vm3377 = vmor %vm3375, %vm3376
  %v3378 = vsel %vm3377, %v3370, %v3374
  %v3379 = vand.u32 2147483647, %v3366
  %vm3380 = vcmp.eq.f32.partialorder %v3379, 8.507059e+37
  %v3381 = vand.u32 %v3366, 2147483648
  %v3382 = vor.u32 1.1754944e-38, %v3381
  %v3383 = vsel %vm3380, %v3382, %v3378
  %v3384 = vmul.f32 1.0, %v3383
  %v3385 = vrcp.pop %v3367
  %v3386 = vmul.f32 %v3367, %v3385
  %v3387 = vsub.f32 1.0, %v3386
  %v3388 = vmul.f32 %v3385, %v3387
  %v3389 = vadd.f32 %v3385, %v3388
  %vm3390 = vweird.f32 %v3367
  %vm3391 = vweird.f32 %v3385
  %vm3392 = vmor %vm3390, %vm3391
  %v3393 = vsel %vm3392, %v3385, %v3389
  %v3394 = vand.u32 2147483647, %v3367
  %vm3395 = vcmp.eq.f32.partialorder %v3394, 8.507059e+37
  %v3396 = vand.u32 %v3367, 2147483648
  %v3397 = vor.u32 1.1754944e-38, %v3396
  %v3398 = vsel %vm3395, %v3397, %v3393
  %v3399 = vmul.f32 1.0, %v3398
  %v3400 = vrcp.pop %v3368
  %v3401 = vmul.f32 %v3368, %v3400
  %v3402 = vsub.f32 1.0, %v3401
  %v3403 = vmul.f32 %v3400, %v3402
  %v3404 = vadd.f32 %v3400, %v3403
  %vm3405 = vweird.f32 %v3368
  %vm3406 = vweird.f32 %v3400
  %vm3407 = vmor %vm3405, %vm3406
  %v3408 = vsel %vm3407, %v3400, %v3404
  %v3409 = vand.u32 2147483647, %v3368
  %vm3410 = vcmp.eq.f32.partialorder %v3409, 8.507059e+37
  %v3411 = vand.u32 %v3368, 2147483648
  %v3412 = vor.u32 1.1754944e-38, %v3411
  %v3413 = vsel %vm3410, %v3412, %v3408
  %v3414 = vmul.f32 1.0, %v3413
  %v3415 = vrcp.pop %v3369
  %v3416 = vmul.f32 %v3369, %v3415
  %v3417 = vsub.f32 1.0, %v3416
  %v3418 = vmul.f32 %v3415, %v3417
  %v3419 = vadd.f32 %v3415, %v3418
  %vm3420 = vweird.f32 %v3369
  %vm3421 = vweird.f32 %v3415
  %vm3422 = vmor %vm3420, %vm3421
  %v3423 = vsel %vm3422, %v3415, %v3419
  %v3424 = vand.u32 2147483647, %v3369
  %vm3425 = vcmp.eq.f32.partialorder %v3424, 8.507059e+37
  %v3426 = vand.u32 %v3369, 2147483648
  %v3427 = vor.u32 1.1754944e-38, %v3426
  %v3428 = vsel %vm3425, %v3427, %v3423
  %v3429 = vmul.f32 1.0, %v3428
  %v3430 = vadd.f32 %v3321, %v395
  %v3431 = vadd.f32 %v3347, %v396
  %v3432 = vmul.f32 %v3384, %v3430
  %v3433 = vmul.f32 %v3399, %v3431
  %v3434 = vadd.f32 %v3192, %v3432
  %v3435 = vadd.f32 %v3193, %v3433
  %v3436 = vtanh.pop %v3434
  %v3437 = vtanh.pop %v3435
  %v3438 = vsub.f32 1.0, %v3414
  %v3439 = vsub.f32 1.0, %v3429
  %v3440 = vmul.f32 %v3438, %v3436
  %v3441 = vmul.f32 %v3439, %v3437
  %v3442 = vmul.f32 %v3414, %v2835
  %v3443 = vmul.f32 %v3429, %v2836
  %v3444 = vadd.f32 %v3440, %v3442
  %v3445 = vadd.f32 %v3441, %v3443
  %3446 = vadd.xlane.f32.xlu0 %v3444
  %v3447 = vpop.xlane.xlu0 %3446
  %v3448 = vmul.f32 %v3447, %v1262
  %v3449 = vmul.f32 %v3444, %v3444
  %3450 = vadd.xlane.f32.xlu0 %v3449
  %v3451 = vpop.xlane.xlu0 %3450
  %v3452 = vmul.f32 %v3451, %v1262
  %v3453 = vmul.f32 %v3448, %v3448
  %v3454 = vsub.f32 %v3452, %v3453
  %v3455 = vsub.f32 %v3444, %v3448
  %v3456 = vadd.f32 %v3454, 1e-05
  %v3457 = vrsqrt.pop %v3456
  %v3458 = vmul.f32 %v3457, %v3456
  %v3459 = vmul.f32 %v3458, %v3457
  %v3460 = vmul.f32 0.5, %v3459
  %v3461 = vsub.f32 1.5, %v3460
  %v3462 = vmul.f32 %v3457, %v3461
  %vm3463 = vweird.f32 %v3456
  %vm3464 = vweird.f32 %v3457
  %vm3465 = vmor %vm3463, %vm3464
  %v3466 = vsel %vm3465, %v3457, %v3462
  %v3467 = vmul.f32 %v3455, %v3466
  %3468 = vadd.xlane.f32.xlu0 %v3445
  %v3469 = vpop.xlane.xlu0 %3468
  %v3470 = vmul.f32 %v3469, %v1262
  %v3471 = vmul.f32 %v3445, %v3445
  %3472 = vadd.xlane.f32.xlu0 %v3471
  %v3473 = vpop.xlane.xlu0 %3472
  %v3474 = vmul.f32 %v3473, %v1262
  %v3475 = vmul.f32 %v3470, %v3470
  %v3476 = vsub.f32 %v3474, %v3475
  %v3477 = vsub.f32 %v3445, %v3470
  %v3478 = vadd.f32 %v3476, 1e-05
  %v3479 = vrsqrt.pop %v3478
  %v3480 = vmul.f32 %v3479, %v3478
  %v3481 = vmul.f32 %v3480, %v3479
  %v3482 = vmul.f32 0.5, %v3481
  %v3483 = vsub.f32 1.5, %v3482
  %v3484 = vmul.f32 %v3479, %v3483
  %vm3485 = vweird.f32 %v3478
  %vm3486 = vweird.f32 %v3479
  %vm3487 = vmor %vm3485, %vm3486
  %v3488 = vsel %vm3487, %v3479, %v3484
  %v3489 = vmul.f32 %v3477, %v3488
  %v3490 = vmul.f32 %v3467, %v402
  %v3491 = vmul.f32 %v3489, %v403
  %v3492 = vadd.f32 %v3490, %v409
  %v3493 = vadd.f32 %v3491, %v410
  %v3494 = vpack.c.bf16 %v3493, %v3492
  %v3495 = vpack.c.bf16 %v3184, %v3184
  %v3497 = vunpack.c.l.b16 %v3494
  %v3498 = vunpack.c.h.b16 %v3494
  %v3499 = vpack.c.b16 %v3497, %v3497
  %v3500 = vpack.c.b16 %v3498, %v3498
  %3503 = vmatpush.bf16.msra.mxu0 %v1935
  %3504 = vmatpush.bf16.msra.mxu0 %v1929
  %3505 = vmatpush.bf16.msra.mxu0 %v1923
  %3506 = vmatpush.bf16.msra.mxu0 %v1917
  %3507 = vmatpush.bf16.msra.mxu0 %v1911
  %3508 = vmatpush.bf16.msra.mxu0 %v1905
  %3509 = vmatpush.bf16.msra.mxu0 %v1899
  %3510 = vmatpush.bf16.msra.mxu0 %v1893
  %3511 = vmatmul.bf16.gmra.mxu0 %v3499
  %v3512 = vpop.f32.mrf.mxu0
  %v3513 = vadd.f32 %v380, %v3512
  %v3514 = vpop.f32.mrf.mxu0
  %3515 = vdwg.mxu0
  %3516 = vmatpush.bf16.msra.mxu0 %v1983
  %3517 = vmatpush.bf16.msra.mxu0 %v1977
  %3518 = vmatpush.bf16.msra.mxu0 %v1971
  %3519 = vmatpush.bf16.msra.mxu0 %v1965
  %3520 = vmatpush.bf16.msra.mxu0 %v1959
  %3521 = vmatpush.bf16.msra.mxu0 %v1953
  %3522 = vmatpush.bf16.msra.mxu0 %v1947
  %3523 = vmatpush.bf16.msra.mxu0 %v1941
  %3524 = vmatmul.bf16.gmra.mxu0 %v3500
  %v3525 = vpop.f32.mrf.mxu0
  %v3526 = vadd.f32 %v3513, %v3525
  %v3527 = vpop.f32.mrf.mxu0
  %3528 = vdwg.mxu0
  %3529 = vmatpush.bf16.msra.mxu0 %v2031
  %3530 = vmatpush.bf16.msra.mxu0 %v2025
  %3531 = vmatpush.bf16.msra.mxu0 %v2019
  %3532 = vmatpush.bf16.msra.mxu0 %v2013
  %3533 = vmatpush.bf16.msra.mxu0 %v2007
  %3534 = vmatpush.bf16.msra.mxu0 %v2001
  %3535 = vmatpush.bf16.msra.mxu0 %v1995
  %3536 = vmatpush.bf16.msra.mxu0 %v1989
  %3537 = vmatmul.bf16.gmra.mxu0 %v3495
  %v3538 = vpop.f32.mrf.mxu0
  %v3539 = vadd.f32 %v3526, %v3538
  %v3540 = vpop.f32.mrf.mxu0
  %3541 = vdwg.mxu0
  %3542 = vmatpush.bf16.msra.mxu0 %v1936
  %3543 = vmatpush.bf16.msra.mxu0 %v1930
  %3544 = vmatpush.bf16.msra.mxu0 %v1924
  %3545 = vmatpush.bf16.msra.mxu0 %v1918
  %3546 = vmatpush.bf16.msra.mxu0 %v1912
  %3547 = vmatpush.bf16.msra.mxu0 %v1906
  %3548 = vmatpush.bf16.msra.mxu0 %v1900
  %3549 = vmatpush.bf16.msra.mxu0 %v1894
  %3550 = vmatmul.bf16.gmra.mxu0 %v3499
  %v3551 = vpop.f32.mrf.mxu0
  %v3552 = vadd.f32 %v381, %v3551
  %v3553 = vpop.f32.mrf.mxu0
  %3554 = vdwg.mxu0
  %3555 = vmatpush.bf16.msra.mxu0 %v1984
  %3556 = vmatpush.bf16.msra.mxu0 %v1978
  %3557 = vmatpush.bf16.msra.mxu0 %v1972
  %3558 = vmatpush.bf16.msra.mxu0 %v1966
  %3559 = vmatpush.bf16.msra.mxu0 %v1960
  %3560 = vmatpush.bf16.msra.mxu0 %v1954
  %3561 = vmatpush.bf16.msra.mxu0 %v1948
  %3562 = vmatpush.bf16.msra.mxu0 %v1942
  %3563 = vmatmul.bf16.gmra.mxu0 %v3500
  %v3564 = vpop.f32.mrf.mxu0
  %v3565 = vadd.f32 %v3552, %v3564
  %v3566 = vpop.f32.mrf.mxu0
  %3567 = vdwg.mxu0
  %3568 = vmatpush.bf16.msra.mxu0 %v2032
  %3569 = vmatpush.bf16.msra.mxu0 %v2026
  %3570 = vmatpush.bf16.msra.mxu0 %v2020
  %3571 = vmatpush.bf16.msra.mxu0 %v2014
  %3572 = vmatpush.bf16.msra.mxu0 %v2008
  %3573 = vmatpush.bf16.msra.mxu0 %v2002
  %3574 = vmatpush.bf16.msra.mxu0 %v1996
  %3575 = vmatpush.bf16.msra.mxu0 %v1990
  %3576 = vmatmul.bf16.gmra.mxu0 %v3495
  %v3577 = vpop.f32.mrf.mxu0
  %v3578 = vadd.f32 %v3565, %v3577
  %v3579 = vpop.f32.mrf.mxu0
  %3580 = vdwg.mxu0
  %3581 = vmatpush.bf16.msra.mxu0 %v1937
  %3582 = vmatpush.bf16.msra.mxu0 %v1931
  %3583 = vmatpush.bf16.msra.mxu0 %v1925
  %3584 = vmatpush.bf16.msra.mxu0 %v1919
  %3585 = vmatpush.bf16.msra.mxu0 %v1913
  %3586 = vmatpush.bf16.msra.mxu0 %v1907
  %3587 = vmatpush.bf16.msra.mxu0 %v1901
  %3588 = vmatpush.bf16.msra.mxu0 %v1895
  %3589 = vmatmul.bf16.gmra.mxu0 %v3499
  %v3590 = vpop.f32.mrf.mxu0
  %v3591 = vadd.f32 %v382, %v3590
  %v3592 = vpop.f32.mrf.mxu0
  %3593 = vdwg.mxu0
  %3594 = vmatpush.bf16.msra.mxu0 %v1985
  %3595 = vmatpush.bf16.msra.mxu0 %v1979
  %3596 = vmatpush.bf16.msra.mxu0 %v1973
  %3597 = vmatpush.bf16.msra.mxu0 %v1967
  %3598 = vmatpush.bf16.msra.mxu0 %v1961
  %3599 = vmatpush.bf16.msra.mxu0 %v1955
  %3600 = vmatpush.bf16.msra.mxu0 %v1949
  %3601 = vmatpush.bf16.msra.mxu0 %v1943
  %3602 = vmatmul.bf16.gmra.mxu0 %v3500
  %v3603 = vpop.f32.mrf.mxu0
  %v3604 = vadd.f32 %v3591, %v3603
  %v3605 = vpop.f32.mrf.mxu0
  %3606 = vdwg.mxu0
  %3607 = vmatpush.bf16.msra.mxu0 %v2033
  %3608 = vmatpush.bf16.msra.mxu0 %v2027
  %3609 = vmatpush.bf16.msra.mxu0 %v2021
  %3610 = vmatpush.bf16.msra.mxu0 %v2015
  %3611 = vmatpush.bf16.msra.mxu0 %v2009
  %3612 = vmatpush.bf16.msra.mxu0 %v2003
  %3613 = vmatpush.bf16.msra.mxu0 %v1997
  %3614 = vmatpush.bf16.msra.mxu0 %v1991
  %3615 = vmatmul.bf16.gmra.mxu0 %v3495
  %v3616 = vpop.f32.mrf.mxu0
  %v3617 = vadd.f32 %v3604, %v3616
  %v3618 = vpop.f32.mrf.mxu0
  %3619 = vdwg.mxu0
  %3620 = vmatpush.bf16.msra.mxu0 %v1938
  %3621 = vmatpush.bf16.msra.mxu0 %v1932
  %3622 = vmatpush.bf16.msra.mxu0 %v1926
  %3623 = vmatpush.bf16.msra.mxu0 %v1920
  %3624 = vmatpush.bf16.msra.mxu0 %v1914
  %3625 = vmatpush.bf16.msra.mxu0 %v1908
  %3626 = vmatpush.bf16.msra.mxu0 %v1902
  %3627 = vmatpush.bf16.msra.mxu0 %v1896
  %3628 = vmatmul.bf16.gmra.mxu0 %v3499
  %v3629 = vpop.f32.mrf.mxu0
  %v3630 = vadd.f32 %v383, %v3629
  %v3631 = vpop.f32.mrf.mxu0
  %3632 = vdwg.mxu0
  %3633 = vmatpush.bf16.msra.mxu0 %v1986
  %3634 = vmatpush.bf16.msra.mxu0 %v1980
  %3635 = vmatpush.bf16.msra.mxu0 %v1974
  %3636 = vmatpush.bf16.msra.mxu0 %v1968
  %3637 = vmatpush.bf16.msra.mxu0 %v1962
  %3638 = vmatpush.bf16.msra.mxu0 %v1956
  %3639 = vmatpush.bf16.msra.mxu0 %v1950
  %3640 = vmatpush.bf16.msra.mxu0 %v1944
  %3641 = vmatmul.bf16.gmra.mxu0 %v3500
  %v3642 = vpop.f32.mrf.mxu0
  %v3643 = vadd.f32 %v3630, %v3642
  %v3644 = vpop.f32.mrf.mxu0
  %3645 = vdwg.mxu0
  %3646 = vmatpush.bf16.msra.mxu0 %v2034
  %3647 = vmatpush.bf16.msra.mxu0 %v2028
  %3648 = vmatpush.bf16.msra.mxu0 %v2022
  %3649 = vmatpush.bf16.msra.mxu0 %v2016
  %3650 = vmatpush.bf16.msra.mxu0 %v2010
  %3651 = vmatpush.bf16.msra.mxu0 %v2004
  %3652 = vmatpush.bf16.msra.mxu0 %v1998
  %3653 = vmatpush.bf16.msra.mxu0 %v1992
  %3654 = vmatmul.bf16.gmra.mxu0 %v3495
  %v3655 = vpop.f32.mrf.mxu0
  %v3656 = vadd.f32 %v3643, %v3655
  %v3657 = vpop.f32.mrf.mxu0
  %3658 = vdwg.mxu0
  %3659 = vmatpush.bf16.msra.mxu0 %v1939
  %3660 = vmatpush.bf16.msra.mxu0 %v1933
  %3661 = vmatpush.bf16.msra.mxu0 %v1927
  %3662 = vmatpush.bf16.msra.mxu0 %v1921
  %3663 = vmatpush.bf16.msra.mxu0 %v1915
  %3664 = vmatpush.bf16.msra.mxu0 %v1909
  %3665 = vmatpush.bf16.msra.mxu0 %v1903
  %3666 = vmatpush.bf16.msra.mxu0 %v1897
  %3667 = vmatmul.bf16.gmra.mxu0 %v3499
  %v3668 = vpop.f32.mrf.mxu0
  %v3669 = vadd.f32 %v384, %v3668
  %v3670 = vpop.f32.mrf.mxu0
  %3671 = vdwg.mxu0
  %3672 = vmatpush.bf16.msra.mxu0 %v1987
  %3673 = vmatpush.bf16.msra.mxu0 %v1981
  %3674 = vmatpush.bf16.msra.mxu0 %v1975
  %3675 = vmatpush.bf16.msra.mxu0 %v1969
  %3676 = vmatpush.bf16.msra.mxu0 %v1963
  %3677 = vmatpush.bf16.msra.mxu0 %v1957
  %3678 = vmatpush.bf16.msra.mxu0 %v1951
  %3679 = vmatpush.bf16.msra.mxu0 %v1945
  %3680 = vmatmul.bf16.gmra.mxu0 %v3500
  %v3681 = vpop.f32.mrf.mxu0
  %v3682 = vadd.f32 %v3669, %v3681
  %v3683 = vpop.f32.mrf.mxu0
  %3684 = vdwg.mxu0
  %3685 = vmatpush.bf16.msra.mxu0 %v2035
  %3686 = vmatpush.bf16.msra.mxu0 %v2029
  %3687 = vmatpush.bf16.msra.mxu0 %v2023
  %3688 = vmatpush.bf16.msra.mxu0 %v2017
  %3689 = vmatpush.bf16.msra.mxu0 %v2011
  %3690 = vmatpush.bf16.msra.mxu0 %v2005
  %3691 = vmatpush.bf16.msra.mxu0 %v1999
  %3692 = vmatpush.bf16.msra.mxu0 %v1993
  %3693 = vmatmul.bf16.gmra.mxu0 %v3495
  %v3694 = vpop.f32.mrf.mxu0
  %v3695 = vadd.f32 %v3682, %v3694
  %v3696 = vpop.f32.mrf.mxu0
  %3697 = vdwg.mxu0
  %3698 = vmatpush.bf16.msra.mxu0 %v1940
  %3699 = vmatpush.bf16.msra.mxu0 %v1934
  %3700 = vmatpush.bf16.msra.mxu0 %v1928
  %3701 = vmatpush.bf16.msra.mxu0 %v1922
  %3702 = vmatpush.bf16.msra.mxu0 %v1916
  %3703 = vmatpush.bf16.msra.mxu0 %v1910
  %3704 = vmatpush.bf16.msra.mxu0 %v1904
  %3705 = vmatpush.bf16.msra.mxu0 %v1898
  %3706 = vmatmul.bf16.gmra.mxu0 %v3499
  %v3707 = vpop.f32.mrf.mxu0
  %v3708 = vadd.f32 %v385, %v3707
  %v3709 = vpop.f32.mrf.mxu0
  %3710 = vdwg.mxu0
  %3711 = vmatpush.bf16.msra.mxu0 %v1988
  %3712 = vmatpush.bf16.msra.mxu0 %v1982
  %3713 = vmatpush.bf16.msra.mxu0 %v1976
  %3714 = vmatpush.bf16.msra.mxu0 %v1970
  %3715 = vmatpush.bf16.msra.mxu0 %v1964
  %3716 = vmatpush.bf16.msra.mxu0 %v1958
  %3717 = vmatpush.bf16.msra.mxu0 %v1952
  %3718 = vmatpush.bf16.msra.mxu0 %v1946
  %3719 = vmatmul.bf16.gmra.mxu0 %v3500
  %v3720 = vpop.f32.mrf.mxu0
  %v3721 = vadd.f32 %v3708, %v3720
  %v3722 = vpop.f32.mrf.mxu0
  %3723 = vdwg.mxu0
  %3724 = vmatpush.bf16.msra.mxu0 %v2036
  %3725 = vmatpush.bf16.msra.mxu0 %v2030
  %3726 = vmatpush.bf16.msra.mxu0 %v2024
  %3727 = vmatpush.bf16.msra.mxu0 %v2018
  %3728 = vmatpush.bf16.msra.mxu0 %v2012
  %3729 = vmatpush.bf16.msra.mxu0 %v2006
  %3730 = vmatpush.bf16.msra.mxu0 %v2000
  %3731 = vmatpush.bf16.msra.mxu0 %v1994
  %3732 = vmatmul.bf16.gmra.mxu0 %v3495
  %v3733 = vpop.f32.mrf.mxu0
  %v3734 = vadd.f32 %v3721, %v3733
  %v3735 = vpop.f32.mrf.mxu0
  %3736 = vdwg.mxu0
  %v3737 = vadd.f32 %v3539, %v3656
  %v3738 = vadd.f32 %v3578, %v3695
  %v3739 = vxor.u32 %v3737, 2147483648
  %v3740 = vxor.u32 %v3738, 2147483648
  %v3741 = vmul.f32 %v3739, 1.442695
  %v3742 = vpow.pop %v3741
  %v3743 = vmul.f32 %v3740, 1.442695
  %v3744 = vpow.pop %v3743
  %v3745 = vadd.f32 %v3742, 1.0
  %v3746 = vadd.f32 %v3744, 1.0
  %v3747 = vrcp.pop %v3745
  %v3748 = vmul.f32 %v3745, %v3747
  %v3749 = vsub.f32 1.0, %v3748
  %v3750 = vmul.f32 %v3747, %v3749
  %v3751 = vadd.f32 %v3747, %v3750
  %vm3752 = vweird.f32 %v3745
  %vm3753 = vweird.f32 %v3747
  %vm3754 = vmor %vm3752, %vm3753
  %v3755 = vsel %vm3754, %v3747, %v3751
  %v3756 = vand.u32 2147483647, %v3745
  %vm3757 = vcmp.eq.f32.partialorder %v3756, 8.507059e+37
  %v3758 = vand.u32 %v3745, 2147483648
  %v3759 = vor.u32 1.1754944e-38, %v3758
  %v3760 = vsel %vm3757, %v3759, %v3755
  %v3761 = vmul.f32 1.0, %v3760
  %v3762 = vrcp.pop %v3746
  %v3763 = vmul.f32 %v3746, %v3762
  %v3764 = vsub.f32 1.0, %v3763
  %v3765 = vmul.f32 %v3762, %v3764
  %v3766 = vadd.f32 %v3762, %v3765
  %vm3767 = vweird.f32 %v3746
  %vm3768 = vweird.f32 %v3762
  %vm3769 = vmor %vm3767, %vm3768
  %v3770 = vsel %vm3769, %v3762, %v3766
  %v3771 = vand.u32 2147483647, %v3746
  %vm3772 = vcmp.eq.f32.partialorder %v3771, 8.507059e+37
  %v3773 = vand.u32 %v3746, 2147483648
  %v3774 = vor.u32 1.1754944e-38, %v3773
  %v3775 = vsel %vm3772, %v3774, %v3770
  %v3776 = vmul.f32 1.0, %v3775
  %v3777 = vmul.f32 %v3761, %v3734
  %v3778 = vadd.f32 %v3617, %v3777
  %v3779 = vtanh.pop %v3778
  %v3780 = vsub.f32 1.0, %v3776
  %v3781 = vmul.f32 %v3780, %v3779
  %v3782 = vmul.f32 %v3776, %v3184
  %v3783 = vadd.f32 %v3781, %v3782
  %v3784 = vsel %vm2462, %v3783, 0.0
  %3785 = vadd.xlane.f32.xlu0 %v3784
  %v3786 = vpop.xlane.xlu0 %3785
  %v3787 = vmul.f32 %v3786, %v2472
  %v3788 = vmul.f32 %v3783, %v3783
  %v3789 = vsel %vm2462, %v3788, 0.0
  %3790 = vadd.xlane.f32.xlu0 %v3789
  %v3791 = vpop.xlane.xlu0 %3790
  %v3792 = vmul.f32 %v3791, %v2472
  %v3793 = vmul.f32 %v3787, %v3787
  %v3794 = vsub.f32 %v3792, %v3793
  %v3795 = vsub.f32 %v3783, %v3787
  %v3796 = vadd.f32 %v3794, 1e-05
  %v3797 = vrsqrt.pop %v3796
  %v3798 = vmul.f32 %v3797, %v3796
  %v3799 = vmul.f32 %v3798, %v3797
  %v3800 = vmul.f32 0.5, %v3799
  %v3801 = vsub.f32 1.5, %v3800
  %v3802 = vmul.f32 %v3797, %v3801
  %vm3803 = vweird.f32 %v3796
  %vm3804 = vweird.f32 %v3797
  %vm3805 = vmor %vm3803, %vm3804
  %v3806 = vsel %vm3805, %v3797, %v3802
  %v3807 = vmul.f32 %v3795, %v3806
  %3809 = vrot.lane.b32.xlu0 %v3783, 64
  %v3810 = vpop.permute.xlu0 %3809
  %v3812 = vsel %vm2462, %v3810, 0.0
  %3813 = vadd.xlane.f32.xlu0 %v3812
  %v3814 = vpop.xlane.xlu0 %3813
  %v3815 = vmul.f32 %v3814, %v2472
  %3817 = vrot.lane.b32.xlu0 %v3788, 64
  %v3818 = vpop.permute.xlu0 %3817
  %v3820 = vsel %vm2462, %v3818, 0.0
  %3821 = vadd.xlane.f32.xlu0 %v3820
  %v3822 = vpop.xlane.xlu0 %3821
  %v3823 = vmul.f32 %v3822, %v2472
  %v3824 = vmul.f32 %v3815, %v3815
  %v3825 = vsub.f32 %v3823, %v3824
  %v3826 = vsub.f32 %v3783, %v3815
  %v3827 = vadd.f32 %v3825, 1e-05
  %v3828 = vrsqrt.pop %v3827
  %v3829 = vmul.f32 %v3828, %v3827
  %v3830 = vmul.f32 %v3829, %v3828
  %v3831 = vmul.f32 0.5, %v3830
  %v3832 = vsub.f32 1.5, %v3831
  %v3833 = vmul.f32 %v3828, %v3832
  %vm3834 = vweird.f32 %v3827
  %vm3835 = vweird.f32 %v3828
  %vm3836 = vmor %vm3834, %vm3835
  %v3837 = vsel %vm3836, %v3828, %v3833
  %v3838 = vmul.f32 %v3826, %v3837
  %v3839 = vsel %vm2462, %v3807, %v3838
  %v3840 = vmul.f32 %v3839, %v413
  %v3841 = vadd.f32 %v3840, %v414
  %s3842 = smul.u32 3, 6
  %s3843 = smul.addr %s3842, 8
  %s3844 = scalar_lea.vmem [#allocation2], %s3843
  %v3845 = vld [vmem:[%s3844] sm:$0xff]
  %v3846 = vld [vmem:[%s3844 + $0x8] sm:$0xff]
  %v3847 = vld [vmem:[%s3844 + $0x10] sm:$0xff]
  %v3848 = vld [vmem:[%s3844 + $0x18] sm:$0xff]
  %v3849 = vld [vmem:[%s3844 + $0x20] sm:$0xff]
  %v3850 = vld [vmem:[%s3844 + $0x28] sm:$0xff]
  %3851 = vmatpush.bf16.msra.mxu0 %v852
  %3852 = vmatpush.bf16.msra.mxu0 %v846
  %3853 = vmatpush.bf16.msra.mxu0 %v840
  %3854 = vmatpush.bf16.msra.mxu0 %v834
  %3855 = vmatpush.bf16.msra.mxu0 %v828
  %3856 = vmatpush.bf16.msra.mxu0 %v822
  %3857 = vmatpush.bf16.msra.mxu0 %v816
  %3858 = vmatpush.bf16.msra.mxu0 %v810
  %3859 = vmatmul.bf16.gmra.mxu0 %v3499
  %v3860 = vpop.f32.mrf.mxu0
  %v3861 = vadd.f32 0.0, %v3860
  %v3862 = vpop.f32.mrf.mxu0
  %3863 = vdwg.mxu0
  %3864 = vmatpush.bf16.msra.mxu0 %v900
  %3865 = vmatpush.bf16.msra.mxu0 %v894
  %3866 = vmatpush.bf16.msra.mxu0 %v888
  %3867 = vmatpush.bf16.msra.mxu0 %v882
  %3868 = vmatpush.bf16.msra.mxu0 %v876
  %3869 = vmatpush.bf16.msra.mxu0 %v870
  %3870 = vmatpush.bf16.msra.mxu0 %v864
  %3871 = vmatpush.bf16.msra.mxu0 %v858
  %3872 = vmatmul.bf16.gmra.mxu0 %v3500
  %v3873 = vpop.f32.mrf.mxu0
  %v3874 = vadd.f32 %v3861, %v3873
  %v3875 = vpop.f32.mrf.mxu0
  %3876 = vdwg.mxu0
  %3877 = vmatpush.bf16.msra.mxu0 %v853
  %3878 = vmatpush.bf16.msra.mxu0 %v847
  %3879 = vmatpush.bf16.msra.mxu0 %v841
  %3880 = vmatpush.bf16.msra.mxu0 %v835
  %3881 = vmatpush.bf16.msra.mxu0 %v829
  %3882 = vmatpush.bf16.msra.mxu0 %v823
  %3883 = vmatpush.bf16.msra.mxu0 %v817
  %3884 = vmatpush.bf16.msra.mxu0 %v811
  %3885 = vmatmul.bf16.gmra.mxu0 %v3499
  %v3886 = vpop.f32.mrf.mxu0
  %v3887 = vadd.f32 0.0, %v3886
  %v3888 = vpop.f32.mrf.mxu0
  %3889 = vdwg.mxu0
  %3890 = vmatpush.bf16.msra.mxu0 %v901
  %3891 = vmatpush.bf16.msra.mxu0 %v895
  %3892 = vmatpush.bf16.msra.mxu0 %v889
  %3893 = vmatpush.bf16.msra.mxu0 %v883
  %3894 = vmatpush.bf16.msra.mxu0 %v877
  %3895 = vmatpush.bf16.msra.mxu0 %v871
  %3896 = vmatpush.bf16.msra.mxu0 %v865
  %3897 = vmatpush.bf16.msra.mxu0 %v859
  %3898 = vmatmul.bf16.gmra.mxu0 %v3500
  %v3899 = vpop.f32.mrf.mxu0
  %v3900 = vadd.f32 %v3887, %v3899
  %v3901 = vpop.f32.mrf.mxu0
  %3902 = vdwg.mxu0
  %3903 = vmatpush.bf16.msra.mxu0 %v854
  %3904 = vmatpush.bf16.msra.mxu0 %v848
  %3905 = vmatpush.bf16.msra.mxu0 %v842
  %3906 = vmatpush.bf16.msra.mxu0 %v836
  %3907 = vmatpush.bf16.msra.mxu0 %v830
  %3908 = vmatpush.bf16.msra.mxu0 %v824
  %3909 = vmatpush.bf16.msra.mxu0 %v818
  %3910 = vmatpush.bf16.msra.mxu0 %v812
  %3911 = vmatmul.bf16.gmra.mxu0 %v3499
  %v3912 = vpop.f32.mrf.mxu0
  %v3913 = vadd.f32 0.0, %v3912
  %v3914 = vpop.f32.mrf.mxu0
  %3915 = vdwg.mxu0
  %3916 = vmatpush.bf16.msra.mxu0 %v902
  %3917 = vmatpush.bf16.msra.mxu0 %v896
  %3918 = vmatpush.bf16.msra.mxu0 %v890
  %3919 = vmatpush.bf16.msra.mxu0 %v884
  %3920 = vmatpush.bf16.msra.mxu0 %v878
  %3921 = vmatpush.bf16.msra.mxu0 %v872
  %3922 = vmatpush.bf16.msra.mxu0 %v866
  %3923 = vmatpush.bf16.msra.mxu0 %v860
  %3924 = vmatmul.bf16.gmra.mxu0 %v3500
  %v3925 = vpop.f32.mrf.mxu0
  %v3926 = vadd.f32 %v3913, %v3925
  %v3927 = vpop.f32.mrf.mxu0
  %3928 = vdwg.mxu0
  %3929 = vmatpush.bf16.msra.mxu0 %v855
  %3930 = vmatpush.bf16.msra.mxu0 %v849
  %3931 = vmatpush.bf16.msra.mxu0 %v843
  %3932 = vmatpush.bf16.msra.mxu0 %v837
  %3933 = vmatpush.bf16.msra.mxu0 %v831
  %3934 = vmatpush.bf16.msra.mxu0 %v825
  %3935 = vmatpush.bf16.msra.mxu0 %v819
  %3936 = vmatpush.bf16.msra.mxu0 %v813
  %3937 = vmatmul.bf16.gmra.mxu0 %v3499
  %v3938 = vpop.f32.mrf.mxu0
  %v3939 = vadd.f32 0.0, %v3938
  %v3940 = vpop.f32.mrf.mxu0
  %3941 = vdwg.mxu0
  %3942 = vmatpush.bf16.msra.mxu0 %v903
  %3943 = vmatpush.bf16.msra.mxu0 %v897
  %3944 = vmatpush.bf16.msra.mxu0 %v891
  %3945 = vmatpush.bf16.msra.mxu0 %v885
  %3946 = vmatpush.bf16.msra.mxu0 %v879
  %3947 = vmatpush.bf16.msra.mxu0 %v873
  %3948 = vmatpush.bf16.msra.mxu0 %v867
  %3949 = vmatpush.bf16.msra.mxu0 %v861
  %3950 = vmatmul.bf16.gmra.mxu0 %v3500
  %v3951 = vpop.f32.mrf.mxu0
  %v3952 = vadd.f32 %v3939, %v3951
  %v3953 = vpop.f32.mrf.mxu0
  %3954 = vdwg.mxu0
  %3955 = vmatpush.bf16.msra.mxu0 %v856
  %3956 = vmatpush.bf16.msra.mxu0 %v850
  %3957 = vmatpush.bf16.msra.mxu0 %v844
  %3958 = vmatpush.bf16.msra.mxu0 %v838
  %3959 = vmatpush.bf16.msra.mxu0 %v832
  %3960 = vmatpush.bf16.msra.mxu0 %v826
  %3961 = vmatpush.bf16.msra.mxu0 %v820
  %3962 = vmatpush.bf16.msra.mxu0 %v814
  %3963 = vmatmul.bf16.gmra.mxu0 %v3499
  %v3964 = vpop.f32.mrf.mxu0
  %v3965 = vadd.f32 0.0, %v3964
  %v3966 = vpop.f32.mrf.mxu0
  %3967 = vdwg.mxu0
  %3968 = vmatpush.bf16.msra.mxu0 %v904
  %3969 = vmatpush.bf16.msra.mxu0 %v898
  %3970 = vmatpush.bf16.msra.mxu0 %v892
  %3971 = vmatpush.bf16.msra.mxu0 %v886
  %3972 = vmatpush.bf16.msra.mxu0 %v880
  %3973 = vmatpush.bf16.msra.mxu0 %v874
  %3974 = vmatpush.bf16.msra.mxu0 %v868
  %3975 = vmatpush.bf16.msra.mxu0 %v862
  %3976 = vmatmul.bf16.gmra.mxu0 %v3500
  %v3977 = vpop.f32.mrf.mxu0
  %v3978 = vadd.f32 %v3965, %v3977
  %v3979 = vpop.f32.mrf.mxu0
  %3980 = vdwg.mxu0
  %3981 = vmatpush.bf16.msra.mxu0 %v857
  %3982 = vmatpush.bf16.msra.mxu0 %v851
  %3983 = vmatpush.bf16.msra.mxu0 %v845
  %3984 = vmatpush.bf16.msra.mxu0 %v839
  %3985 = vmatpush.bf16.msra.mxu0 %v833
  %3986 = vmatpush.bf16.msra.mxu0 %v827
  %3987 = vmatpush.bf16.msra.mxu0 %v821
  %3988 = vmatpush.bf16.msra.mxu0 %v815
  %3989 = vmatmul.bf16.gmra.mxu0 %v3499
  %v3990 = vpop.f32.mrf.mxu0
  %v3991 = vadd.f32 0.0, %v3990
  %v3992 = vpop.f32.mrf.mxu0
  %3993 = vdwg.mxu0
  %3994 = vmatpush.bf16.msra.mxu0 %v905
  %3995 = vmatpush.bf16.msra.mxu0 %v899
  %3996 = vmatpush.bf16.msra.mxu0 %v893
  %3997 = vmatpush.bf16.msra.mxu0 %v887
  %3998 = vmatpush.bf16.msra.mxu0 %v881
  %3999 = vmatpush.bf16.msra.mxu0 %v875
  %4000 = vmatpush.bf16.msra.mxu0 %v869
  %4001 = vmatpush.bf16.msra.mxu0 %v863
  %4002 = vmatmul.bf16.gmra.mxu0 %v3500
  %v4003 = vpop.f32.mrf.mxu0
  %v4004 = vadd.f32 %v3991, %v4003
  %v4005 = vpop.f32.mrf.mxu0
  %4006 = vdwg.mxu0
  %v4007 = vadd.f32 %v3845, %v3874
  %v4008 = vadd.f32 %v3846, %v3900
  %v4009 = vadd.f32 %v3847, %v3926
  %v4010 = vadd.f32 %v3848, %v3952
  %v4011 = vxor.u32 %v4007, 2147483648
  %v4012 = vxor.u32 %v4008, 2147483648
  %v4013 = vxor.u32 %v4009, 2147483648
  %v4014 = vxor.u32 %v4010, 2147483648
  %v4015 = vmul.f32 %v4011, 1.442695
  %v4016 = vpow.pop %v4015
  %v4017 = vmul.f32 %v4012, 1.442695
  %v4018 = vpow.pop %v4017
  %v4019 = vmul.f32 %v4013, 1.442695
  %v4020 = vpow.pop %v4019
  %v4021 = vmul.f32 %v4014, 1.442695
  %v4022 = vpow.pop %v4021
  %v4023 = vadd.f32 %v4016, 1.0
  %v4024 = vadd.f32 %v4018, 1.0
  %v4025 = vadd.f32 %v4020, 1.0
  %v4026 = vadd.f32 %v4022, 1.0
  %v4027 = vrcp.pop %v4023
  %v4028 = vmul.f32 %v4023, %v4027
  %v4029 = vsub.f32 1.0, %v4028
  %v4030 = vmul.f32 %v4027, %v4029
  %v4031 = vadd.f32 %v4027, %v4030
  %vm4032 = vweird.f32 %v4023
  %vm4033 = vweird.f32 %v4027
  %vm4034 = vmor %vm4032, %vm4033
  %v4035 = vsel %vm4034, %v4027, %v4031
  %v4036 = vand.u32 2147483647, %v4023
  %vm4037 = vcmp.eq.f32.partialorder %v4036, 8.507059e+37
  %v4038 = vand.u32 %v4023, 2147483648
  %v4039 = vor.u32 1.1754944e-38, %v4038
  %v4040 = vsel %vm4037, %v4039, %v4035
  %v4041 = vmul.f32 1.0, %v4040
  %v4042 = vrcp.pop %v4024
  %v4043 = vmul.f32 %v4024, %v4042
  %v4044 = vsub.f32 1.0, %v4043
  %v4045 = vmul.f32 %v4042, %v4044
  %v4046 = vadd.f32 %v4042, %v4045
  %vm4047 = vweird.f32 %v4024
  %vm4048 = vweird.f32 %v4042
  %vm4049 = vmor %vm4047, %vm4048
  %v4050 = vsel %vm4049, %v4042, %v4046
  %v4051 = vand.u32 2147483647, %v4024
  %vm4052 = vcmp.eq.f32.partialorder %v4051, 8.507059e+37
  %v4053 = vand.u32 %v4024, 2147483648
  %v4054 = vor.u32 1.1754944e-38, %v4053
  %v4055 = vsel %vm4052, %v4054, %v4050
  %v4056 = vmul.f32 1.0, %v4055
  %v4057 = vrcp.pop %v4025
  %v4058 = vmul.f32 %v4025, %v4057
  %v4059 = vsub.f32 1.0, %v4058
  %v4060 = vmul.f32 %v4057, %v4059
  %v4061 = vadd.f32 %v4057, %v4060
  %vm4062 = vweird.f32 %v4025
  %vm4063 = vweird.f32 %v4057
  %vm4064 = vmor %vm4062, %vm4063
  %v4065 = vsel %vm4064, %v4057, %v4061
  %v4066 = vand.u32 2147483647, %v4025
  %vm4067 = vcmp.eq.f32.partialorder %v4066, 8.507059e+37
  %v4068 = vand.u32 %v4025, 2147483648
  %v4069 = vor.u32 1.1754944e-38, %v4068
  %v4070 = vsel %vm4067, %v4069, %v4065
  %v4071 = vmul.f32 1.0, %v4070
  %v4072 = vrcp.pop %v4026
  %v4073 = vmul.f32 %v4026, %v4072
  %v4074 = vsub.f32 1.0, %v4073
  %v4075 = vmul.f32 %v4072, %v4074
  %v4076 = vadd.f32 %v4072, %v4075
  %vm4077 = vweird.f32 %v4026
  %vm4078 = vweird.f32 %v4072
  %vm4079 = vmor %vm4077, %vm4078
  %v4080 = vsel %vm4079, %v4072, %v4076
  %v4081 = vand.u32 2147483647, %v4026
  %vm4082 = vcmp.eq.f32.partialorder %v4081, 8.507059e+37
  %v4083 = vand.u32 %v4026, 2147483648
  %v4084 = vor.u32 1.1754944e-38, %v4083
  %v4085 = vsel %vm4082, %v4084, %v4080
  %v4086 = vmul.f32 1.0, %v4085
  %v4087 = vadd.f32 %v3978, %v395
  %v4088 = vadd.f32 %v4004, %v396
  %v4089 = vmul.f32 %v4041, %v4087
  %v4090 = vmul.f32 %v4056, %v4088
  %v4091 = vadd.f32 %v3849, %v4089
  %v4092 = vadd.f32 %v3850, %v4090
  %v4093 = vtanh.pop %v4091
  %v4094 = vtanh.pop %v4092
  %v4095 = vsub.f32 1.0, %v4071
  %v4096 = vsub.f32 1.0, %v4086
  %v4097 = vmul.f32 %v4095, %v4093
  %v4098 = vmul.f32 %v4096, %v4094
  %v4099 = vmul.f32 %v4071, %v3492
  %v4100 = vmul.f32 %v4086, %v3493
  %v4101 = vadd.f32 %v4097, %v4099
  %v4102 = vadd.f32 %v4098, %v4100
  %4103 = vadd.xlane.f32.xlu0 %v4101
  %v4104 = vpop.xlane.xlu0 %4103
  %v4105 = vmul.f32 %v4104, %v1262
  %v4106 = vmul.f32 %v4101, %v4101
  %4107 = vadd.xlane.f32.xlu0 %v4106
  %v4108 = vpop.xlane.xlu0 %4107
  %v4109 = vmul.f32 %v4108, %v1262
  %v4110 = vmul.f32 %v4105, %v4105
  %v4111 = vsub.f32 %v4109, %v4110
  %v4112 = vsub.f32 %v4101, %v4105
  %v4113 = vadd.f32 %v4111, 1e-05
  %v4114 = vrsqrt.pop %v4113
  %v4115 = vmul.f32 %v4114, %v4113
  %v4116 = vmul.f32 %v4115, %v4114
  %v4117 = vmul.f32 0.5, %v4116
  %v4118 = vsub.f32 1.5, %v4117
  %v4119 = vmul.f32 %v4114, %v4118
  %vm4120 = vweird.f32 %v4113
  %vm4121 = vweird.f32 %v4114
  %vm4122 = vmor %vm4120, %vm4121
  %v4123 = vsel %vm4122, %v4114, %v4119
  %v4124 = vmul.f32 %v4112, %v4123
  %4125 = vadd.xlane.f32.xlu0 %v4102
  %v4126 = vpop.xlane.xlu0 %4125
  %v4127 = vmul.f32 %v4126, %v1262
  %v4128 = vmul.f32 %v4102, %v4102
  %4129 = vadd.xlane.f32.xlu0 %v4128
  %v4130 = vpop.xlane.xlu0 %4129
  %v4131 = vmul.f32 %v4130, %v1262
  %v4132 = vmul.f32 %v4127, %v4127
  %v4133 = vsub.f32 %v4131, %v4132
  %v4134 = vsub.f32 %v4102, %v4127
  %v4135 = vadd.f32 %v4133, 1e-05
  %v4136 = vrsqrt.pop %v4135
  %v4137 = vmul.f32 %v4136, %v4135
  %v4138 = vmul.f32 %v4137, %v4136
  %v4139 = vmul.f32 0.5, %v4138
  %v4140 = vsub.f32 1.5, %v4139
  %v4141 = vmul.f32 %v4136, %v4140
  %vm4142 = vweird.f32 %v4135
  %vm4143 = vweird.f32 %v4136
  %vm4144 = vmor %vm4142, %vm4143
  %v4145 = vsel %vm4144, %v4136, %v4141
  %v4146 = vmul.f32 %v4134, %v4145
  %v4147 = vmul.f32 %v4124, %v402
  %v4148 = vmul.f32 %v4146, %v403
  %v4149 = vadd.f32 %v4147, %v409
  %v4150 = vadd.f32 %v4148, %v410
  %v4151 = vpack.c.bf16 %v4150, %v4149
  %v4152 = vpack.c.bf16 %v3841, %v3841
  %v4154 = vunpack.c.l.b16 %v4151
  %v4155 = vunpack.c.h.b16 %v4151
  %v4156 = vpack.c.b16 %v4154, %v4154
  %v4157 = vpack.c.b16 %v4155, %v4155
  %4160 = vmatpush.bf16.msra.mxu0 %v1935
  %4161 = vmatpush.bf16.msra.mxu0 %v1929
  %4162 = vmatpush.bf16.msra.mxu0 %v1923
  %4163 = vmatpush.bf16.msra.mxu0 %v1917
  %4164 = vmatpush.bf16.msra.mxu0 %v1911
  %4165 = vmatpush.bf16.msra.mxu0 %v1905
  %4166 = vmatpush.bf16.msra.mxu0 %v1899
  %4167 = vmatpush.bf16.msra.mxu0 %v1893
  %4168 = vmatmul.bf16.gmra.mxu0 %v4156
  %v4169 = vpop.f32.mrf.mxu0
  %v4170 = vadd.f32 %v380, %v4169
  %v4171 = vpop.f32.mrf.mxu0
  %4172 = vdwg.mxu0
  %4173 = vmatpush.bf16.msra.mxu0 %v1983
  %4174 = vmatpush.bf16.msra.mxu0 %v1977
  %4175 = vmatpush.bf16.msra.mxu0 %v1971
  %4176 = vmatpush.bf16.msra.mxu0 %v1965
  %4177 = vmatpush.bf16.msra.mxu0 %v1959
  %4178 = vmatpush.bf16.msra.mxu0 %v1953
  %4179 = vmatpush.bf16.msra.mxu0 %v1947
  %4180 = vmatpush.bf16.msra.mxu0 %v1941
  %4181 = vmatmul.bf16.gmra.mxu0 %v4157
  %v4182 = vpop.f32.mrf.mxu0
  %v4183 = vadd.f32 %v4170, %v4182
  %v4184 = vpop.f32.mrf.mxu0
  %4185 = vdwg.mxu0
  %4186 = vmatpush.bf16.msra.mxu0 %v2031
  %4187 = vmatpush.bf16.msra.mxu0 %v2025
  %4188 = vmatpush.bf16.msra.mxu0 %v2019
  %4189 = vmatpush.bf16.msra.mxu0 %v2013
  %4190 = vmatpush.bf16.msra.mxu0 %v2007
  %4191 = vmatpush.bf16.msra.mxu0 %v2001
  %4192 = vmatpush.bf16.msra.mxu0 %v1995
  %4193 = vmatpush.bf16.msra.mxu0 %v1989
  %4194 = vmatmul.bf16.gmra.mxu0 %v4152
  %v4195 = vpop.f32.mrf.mxu0
  %v4196 = vadd.f32 %v4183, %v4195
  %v4197 = vpop.f32.mrf.mxu0
  %4198 = vdwg.mxu0
  %4199 = vmatpush.bf16.msra.mxu0 %v1936
  %4200 = vmatpush.bf16.msra.mxu0 %v1930
  %4201 = vmatpush.bf16.msra.mxu0 %v1924
  %4202 = vmatpush.bf16.msra.mxu0 %v1918
  %4203 = vmatpush.bf16.msra.mxu0 %v1912
  %4204 = vmatpush.bf16.msra.mxu0 %v1906
  %4205 = vmatpush.bf16.msra.mxu0 %v1900
  %4206 = vmatpush.bf16.msra.mxu0 %v1894
  %4207 = vmatmul.bf16.gmra.mxu0 %v4156
  %v4208 = vpop.f32.mrf.mxu0
  %v4209 = vadd.f32 %v381, %v4208
  %v4210 = vpop.f32.mrf.mxu0
  %4211 = vdwg.mxu0
  %4212 = vmatpush.bf16.msra.mxu0 %v1984
  %4213 = vmatpush.bf16.msra.mxu0 %v1978
  %4214 = vmatpush.bf16.msra.mxu0 %v1972
  %4215 = vmatpush.bf16.msra.mxu0 %v1966
  %4216 = vmatpush.bf16.msra.mxu0 %v1960
  %4217 = vmatpush.bf16.msra.mxu0 %v1954
  %4218 = vmatpush.bf16.msra.mxu0 %v1948
  %4219 = vmatpush.bf16.msra.mxu0 %v1942
  %4220 = vmatmul.bf16.gmra.mxu0 %v4157
  %v4221 = vpop.f32.mrf.mxu0
  %v4222 = vadd.f32 %v4209, %v4221
  %v4223 = vpop.f32.mrf.mxu0
  %4224 = vdwg.mxu0
  %4225 = vmatpush.bf16.msra.mxu0 %v2032
  %4226 = vmatpush.bf16.msra.mxu0 %v2026
  %4227 = vmatpush.bf16.msra.mxu0 %v2020
  %4228 = vmatpush.bf16.msra.mxu0 %v2014
  %4229 = vmatpush.bf16.msra.mxu0 %v2008
  %4230 = vmatpush.bf16.msra.mxu0 %v2002
  %4231 = vmatpush.bf16.msra.mxu0 %v1996
  %4232 = vmatpush.bf16.msra.mxu0 %v1990
  %4233 = vmatmul.bf16.gmra.mxu0 %v4152
  %v4234 = vpop.f32.mrf.mxu0
  %v4235 = vadd.f32 %v4222, %v4234
  %v4236 = vpop.f32.mrf.mxu0
  %4237 = vdwg.mxu0
  %4238 = vmatpush.bf16.msra.mxu0 %v1937
  %4239 = vmatpush.bf16.msra.mxu0 %v1931
  %4240 = vmatpush.bf16.msra.mxu0 %v1925
  %4241 = vmatpush.bf16.msra.mxu0 %v1919
  %4242 = vmatpush.bf16.msra.mxu0 %v1913
  %4243 = vmatpush.bf16.msra.mxu0 %v1907
  %4244 = vmatpush.bf16.msra.mxu0 %v1901
  %4245 = vmatpush.bf16.msra.mxu0 %v1895
  %4246 = vmatmul.bf16.gmra.mxu0 %v4156
  %v4247 = vpop.f32.mrf.mxu0
  %v4248 = vadd.f32 %v382, %v4247
  %v4249 = vpop.f32.mrf.mxu0
  %4250 = vdwg.mxu0
  %4251 = vmatpush.bf16.msra.mxu0 %v1985
  %4252 = vmatpush.bf16.msra.mxu0 %v1979
  %4253 = vmatpush.bf16.msra.mxu0 %v1973
  %4254 = vmatpush.bf16.msra.mxu0 %v1967
  %4255 = vmatpush.bf16.msra.mxu0 %v1961
  %4256 = vmatpush.bf16.msra.mxu0 %v1955
  %4257 = vmatpush.bf16.msra.mxu0 %v1949
  %4258 = vmatpush.bf16.msra.mxu0 %v1943
  %4259 = vmatmul.bf16.gmra.mxu0 %v4157
  %v4260 = vpop.f32.mrf.mxu0
  %v4261 = vadd.f32 %v4248, %v4260
  %v4262 = vpop.f32.mrf.mxu0
  %4263 = vdwg.mxu0
  %4264 = vmatpush.bf16.msra.mxu0 %v2033
  %4265 = vmatpush.bf16.msra.mxu0 %v2027
  %4266 = vmatpush.bf16.msra.mxu0 %v2021
  %4267 = vmatpush.bf16.msra.mxu0 %v2015
  %4268 = vmatpush.bf16.msra.mxu0 %v2009
  %4269 = vmatpush.bf16.msra.mxu0 %v2003
  %4270 = vmatpush.bf16.msra.mxu0 %v1997
  %4271 = vmatpush.bf16.msra.mxu0 %v1991
  %4272 = vmatmul.bf16.gmra.mxu0 %v4152
  %v4273 = vpop.f32.mrf.mxu0
  %v4274 = vadd.f32 %v4261, %v4273
  %v4275 = vpop.f32.mrf.mxu0
  %4276 = vdwg.mxu0
  %4277 = vmatpush.bf16.msra.mxu0 %v1938
  %4278 = vmatpush.bf16.msra.mxu0 %v1932
  %4279 = vmatpush.bf16.msra.mxu0 %v1926
  %4280 = vmatpush.bf16.msra.mxu0 %v1920
  %4281 = vmatpush.bf16.msra.mxu0 %v1914
  %4282 = vmatpush.bf16.msra.mxu0 %v1908
  %4283 = vmatpush.bf16.msra.mxu0 %v1902
  %4284 = vmatpush.bf16.msra.mxu0 %v1896
  %4285 = vmatmul.bf16.gmra.mxu0 %v4156
  %v4286 = vpop.f32.mrf.mxu0
  %v4287 = vadd.f32 %v383, %v4286
  %v4288 = vpop.f32.mrf.mxu0
  %4289 = vdwg.mxu0
  %4290 = vmatpush.bf16.msra.mxu0 %v1986
  %4291 = vmatpush.bf16.msra.mxu0 %v1980
  %4292 = vmatpush.bf16.msra.mxu0 %v1974
  %4293 = vmatpush.bf16.msra.mxu0 %v1968
  %4294 = vmatpush.bf16.msra.mxu0 %v1962
  %4295 = vmatpush.bf16.msra.mxu0 %v1956
  %4296 = vmatpush.bf16.msra.mxu0 %v1950
  %4297 = vmatpush.bf16.msra.mxu0 %v1944
  %4298 = vmatmul.bf16.gmra.mxu0 %v4157
  %v4299 = vpop.f32.mrf.mxu0
  %v4300 = vadd.f32 %v4287, %v4299
  %v4301 = vpop.f32.mrf.mxu0
  %4302 = vdwg.mxu0
  %4303 = vmatpush.bf16.msra.mxu0 %v2034
  %4304 = vmatpush.bf16.msra.mxu0 %v2028
  %4305 = vmatpush.bf16.msra.mxu0 %v2022
  %4306 = vmatpush.bf16.msra.mxu0 %v2016
  %4307 = vmatpush.bf16.msra.mxu0 %v2010
  %4308 = vmatpush.bf16.msra.mxu0 %v2004
  %4309 = vmatpush.bf16.msra.mxu0 %v1998
  %4310 = vmatpush.bf16.msra.mxu0 %v1992
  %4311 = vmatmul.bf16.gmra.mxu0 %v4152
  %v4312 = vpop.f32.mrf.mxu0
  %v4313 = vadd.f32 %v4300, %v4312
  %v4314 = vpop.f32.mrf.mxu0
  %4315 = vdwg.mxu0
  %4316 = vmatpush.bf16.msra.mxu0 %v1939
  %4317 = vmatpush.bf16.msra.mxu0 %v1933
  %4318 = vmatpush.bf16.msra.mxu0 %v1927
  %4319 = vmatpush.bf16.msra.mxu0 %v1921
  %4320 = vmatpush.bf16.msra.mxu0 %v1915
  %4321 = vmatpush.bf16.msra.mxu0 %v1909
  %4322 = vmatpush.bf16.msra.mxu0 %v1903
  %4323 = vmatpush.bf16.msra.mxu0 %v1897
  %4324 = vmatmul.bf16.gmra.mxu0 %v4156
  %v4325 = vpop.f32.mrf.mxu0
  %v4326 = vadd.f32 %v384, %v4325
  %v4327 = vpop.f32.mrf.mxu0
  %4328 = vdwg.mxu0
  %4329 = vmatpush.bf16.msra.mxu0 %v1987
  %4330 = vmatpush.bf16.msra.mxu0 %v1981
  %4331 = vmatpush.bf16.msra.mxu0 %v1975
  %4332 = vmatpush.bf16.msra.mxu0 %v1969
  %4333 = vmatpush.bf16.msra.mxu0 %v1963
  %4334 = vmatpush.bf16.msra.mxu0 %v1957
  %4335 = vmatpush.bf16.msra.mxu0 %v1951
  %4336 = vmatpush.bf16.msra.mxu0 %v1945
  %4337 = vmatmul.bf16.gmra.mxu0 %v4157
  %v4338 = vpop.f32.mrf.mxu0
  %v4339 = vadd.f32 %v4326, %v4338
  %v4340 = vpop.f32.mrf.mxu0
  %4341 = vdwg.mxu0
  %4342 = vmatpush.bf16.msra.mxu0 %v2035
  %4343 = vmatpush.bf16.msra.mxu0 %v2029
  %4344 = vmatpush.bf16.msra.mxu0 %v2023
  %4345 = vmatpush.bf16.msra.mxu0 %v2017
  %4346 = vmatpush.bf16.msra.mxu0 %v2011
  %4347 = vmatpush.bf16.msra.mxu0 %v2005
  %4348 = vmatpush.bf16.msra.mxu0 %v1999
  %4349 = vmatpush.bf16.msra.mxu0 %v1993
  %4350 = vmatmul.bf16.gmra.mxu0 %v4152
  %v4351 = vpop.f32.mrf.mxu0
  %v4352 = vadd.f32 %v4339, %v4351
  %v4353 = vpop.f32.mrf.mxu0
  %4354 = vdwg.mxu0
  %4355 = vmatpush.bf16.msra.mxu0 %v1940
  %4356 = vmatpush.bf16.msra.mxu0 %v1934
  %4357 = vmatpush.bf16.msra.mxu0 %v1928
  %4358 = vmatpush.bf16.msra.mxu0 %v1922
  %4359 = vmatpush.bf16.msra.mxu0 %v1916
  %4360 = vmatpush.bf16.msra.mxu0 %v1910
  %4361 = vmatpush.bf16.msra.mxu0 %v1904
  %4362 = vmatpush.bf16.msra.mxu0 %v1898
  %4363 = vmatmul.bf16.gmra.mxu0 %v4156
  %v4364 = vpop.f32.mrf.mxu0
  %v4365 = vadd.f32 %v385, %v4364
  %v4366 = vpop.f32.mrf.mxu0
  %4367 = vdwg.mxu0
  %4368 = vmatpush.bf16.msra.mxu0 %v1988
  %4369 = vmatpush.bf16.msra.mxu0 %v1982
  %4370 = vmatpush.bf16.msra.mxu0 %v1976
  %4371 = vmatpush.bf16.msra.mxu0 %v1970
  %4372 = vmatpush.bf16.msra.mxu0 %v1964
  %4373 = vmatpush.bf16.msra.mxu0 %v1958
  %4374 = vmatpush.bf16.msra.mxu0 %v1952
  %4375 = vmatpush.bf16.msra.mxu0 %v1946
  %4376 = vmatmul.bf16.gmra.mxu0 %v4157
  %v4377 = vpop.f32.mrf.mxu0
  %v4378 = vadd.f32 %v4365, %v4377
  %v4379 = vpop.f32.mrf.mxu0
  %4380 = vdwg.mxu0
  %4381 = vmatpush.bf16.msra.mxu0 %v2036
  %4382 = vmatpush.bf16.msra.mxu0 %v2030
  %4383 = vmatpush.bf16.msra.mxu0 %v2024
  %4384 = vmatpush.bf16.msra.mxu0 %v2018
  %4385 = vmatpush.bf16.msra.mxu0 %v2012
  %4386 = vmatpush.bf16.msra.mxu0 %v2006
  %4387 = vmatpush.bf16.msra.mxu0 %v2000
  %4388 = vmatpush.bf16.msra.mxu0 %v1994
  %4389 = vmatmul.bf16.gmra.mxu0 %v4152
  %v4390 = vpop.f32.mrf.mxu0
  %v4391 = vadd.f32 %v4378, %v4390
  %v4392 = vpop.f32.mrf.mxu0
  %4393 = vdwg.mxu0
  %v4394 = vadd.f32 %v4196, %v4313
  %v4395 = vadd.f32 %v4235, %v4352
  %v4396 = vxor.u32 %v4394, 2147483648
  %v4397 = vxor.u32 %v4395, 2147483648
  %v4398 = vmul.f32 %v4396, 1.442695
  %v4399 = vpow.pop %v4398
  %v4400 = vmul.f32 %v4397, 1.442695
  %v4401 = vpow.pop %v4400
  %v4402 = vadd.f32 %v4399, 1.0
  %v4403 = vadd.f32 %v4401, 1.0
  %v4404 = vrcp.pop %v4402
  %v4405 = vmul.f32 %v4402, %v4404
  %v4406 = vsub.f32 1.0, %v4405
  %v4407 = vmul.f32 %v4404, %v4406
  %v4408 = vadd.f32 %v4404, %v4407
  %vm4409 = vweird.f32 %v4402
  %vm4410 = vweird.f32 %v4404
  %vm4411 = vmor %vm4409, %vm4410
  %v4412 = vsel %vm4411, %v4404, %v4408
  %v4413 = vand.u32 2147483647, %v4402
  %vm4414 = vcmp.eq.f32.partialorder %v4413, 8.507059e+37
  %v4415 = vand.u32 %v4402, 2147483648
  %v4416 = vor.u32 1.1754944e-38, %v4415
  %v4417 = vsel %vm4414, %v4416, %v4412
  %v4418 = vmul.f32 1.0, %v4417
  %v4419 = vrcp.pop %v4403
  %v4420 = vmul.f32 %v4403, %v4419
  %v4421 = vsub.f32 1.0, %v4420
  %v4422 = vmul.f32 %v4419, %v4421
  %v4423 = vadd.f32 %v4419, %v4422
  %vm4424 = vweird.f32 %v4403
  %vm4425 = vweird.f32 %v4419
  %vm4426 = vmor %vm4424, %vm4425
  %v4427 = vsel %vm4426, %v4419, %v4423
  %v4428 = vand.u32 2147483647, %v4403
  %vm4429 = vcmp.eq.f32.partialorder %v4428, 8.507059e+37
  %v4430 = vand.u32 %v4403, 2147483648
  %v4431 = vor.u32 1.1754944e-38, %v4430
  %v4432 = vsel %vm4429, %v4431, %v4427
  %v4433 = vmul.f32 1.0, %v4432
  %v4434 = vmul.f32 %v4418, %v4391
  %v4435 = vadd.f32 %v4274, %v4434
  %v4436 = vtanh.pop %v4435
  %v4437 = vsub.f32 1.0, %v4433
  %v4438 = vmul.f32 %v4437, %v4436
  %v4439 = vmul.f32 %v4433, %v3841
  %v4440 = vadd.f32 %v4438, %v4439
  %v4441 = vsel %vm2462, %v4440, 0.0
  %4442 = vadd.xlane.f32.xlu0 %v4441
  %v4443 = vpop.xlane.xlu0 %4442
  %v4444 = vmul.f32 %v4443, %v2472
  %v4445 = vmul.f32 %v4440, %v4440
  %v4446 = vsel %vm2462, %v4445, 0.0
  %4447 = vadd.xlane.f32.xlu0 %v4446
  %v4448 = vpop.xlane.xlu0 %4447
  %v4449 = vmul.f32 %v4448, %v2472
  %v4450 = vmul.f32 %v4444, %v4444
  %v4451 = vsub.f32 %v4449, %v4450
  %v4452 = vsub.f32 %v4440, %v4444
  %v4453 = vadd.f32 %v4451, 1e-05
  %v4454 = vrsqrt.pop %v4453
  %v4455 = vmul.f32 %v4454, %v4453
  %v4456 = vmul.f32 %v4455, %v4454
  %v4457 = vmul.f32 0.5, %v4456
  %v4458 = vsub.f32 1.5, %v4457
  %v4459 = vmul.f32 %v4454, %v4458
  %vm4460 = vweird.f32 %v4453
  %vm4461 = vweird.f32 %v4454
  %vm4462 = vmor %vm4460, %vm4461
  %v4463 = vsel %vm4462, %v4454, %v4459
  %v4464 = vmul.f32 %v4452, %v4463
  %4466 = vrot.lane.b32.xlu0 %v4440, 64
  %v4467 = vpop.permute.xlu0 %4466
  %v4469 = vsel %vm2462, %v4467, 0.0
  %4470 = vadd.xlane.f32.xlu0 %v4469
  %v4471 = vpop.xlane.xlu0 %4470
  %v4472 = vmul.f32 %v4471, %v2472
  %4474 = vrot.lane.b32.xlu0 %v4445, 64
  %v4475 = vpop.permute.xlu0 %4474
  %v4477 = vsel %vm2462, %v4475, 0.0
  %4478 = vadd.xlane.f32.xlu0 %v4477
  %v4479 = vpop.xlane.xlu0 %4478
  %v4480 = vmul.f32 %v4479, %v2472
  %v4481 = vmul.f32 %v4472, %v4472
  %v4482 = vsub.f32 %v4480, %v4481
  %v4483 = vsub.f32 %v4440, %v4472
  %v4484 = vadd.f32 %v4482, 1e-05
  %v4485 = vrsqrt.pop %v4484
  %v4486 = vmul.f32 %v4485, %v4484
  %v4487 = vmul.f32 %v4486, %v4485
  %v4488 = vmul.f32 0.5, %v4487
  %v4489 = vsub.f32 1.5, %v4488
  %v4490 = vmul.f32 %v4485, %v4489
  %vm4491 = vweird.f32 %v4484
  %vm4492 = vweird.f32 %v4485
  %vm4493 = vmor %vm4491, %vm4492
  %v4494 = vsel %vm4493, %v4485, %v4490
  %v4495 = vmul.f32 %v4483, %v4494
  %v4496 = vsel %vm2462, %v4464, %v4495
  %v4497 = vmul.f32 %v4496, %v413
  %v4498 = vadd.f32 %v4497, %v414
  %s4499 = smul.u32 4, 6
  %s4500 = smul.addr %s4499, 8
  %s4501 = scalar_lea.vmem [#allocation2], %s4500
  %v4502 = vld [vmem:[%s4501] sm:$0xff]
  %v4503 = vld [vmem:[%s4501 + $0x8] sm:$0xff]
  %v4504 = vld [vmem:[%s4501 + $0x10] sm:$0xff]
  %v4505 = vld [vmem:[%s4501 + $0x18] sm:$0xff]
  %v4506 = vld [vmem:[%s4501 + $0x20] sm:$0xff]
  %v4507 = vld [vmem:[%s4501 + $0x28] sm:$0xff]
  %4508 = vmatpush.bf16.msra.mxu0 %v852
  %4509 = vmatpush.bf16.msra.mxu0 %v846
  %4510 = vmatpush.bf16.msra.mxu0 %v840
  %4511 = vmatpush.bf16.msra.mxu0 %v834
  %4512 = vmatpush.bf16.msra.mxu0 %v828
  %4513 = vmatpush.bf16.msra.mxu0 %v822
  %4514 = vmatpush.bf16.msra.mxu0 %v816
  %4515 = vmatpush.bf16.msra.mxu0 %v810
  %4516 = vmatmul.bf16.gmra.mxu0 %v4156
  %v4517 = vpop.f32.mrf.mxu0
  %v4518 = vadd.f32 0.0, %v4517
  %v4519 = vpop.f32.mrf.mxu0
  %4520 = vdwg.mxu0
  %4521 = vmatpush.bf16.msra.mxu0 %v900
  %4522 = vmatpush.bf16.msra.mxu0 %v894
  %4523 = vmatpush.bf16.msra.mxu0 %v888
  %4524 = vmatpush.bf16.msra.mxu0 %v882
  %4525 = vmatpush.bf16.msra.mxu0 %v876
  %4526 = vmatpush.bf16.msra.mxu0 %v870
  %4527 = vmatpush.bf16.msra.mxu0 %v864
  %4528 = vmatpush.bf16.msra.mxu0 %v858
  %4529 = vmatmul.bf16.gmra.mxu0 %v4157
  %v4530 = vpop.f32.mrf.mxu0
  %v4531 = vadd.f32 %v4518, %v4530
  %v4532 = vpop.f32.mrf.mxu0
  %4533 = vdwg.mxu0
  %4534 = vmatpush.bf16.msra.mxu0 %v853
  %4535 = vmatpush.bf16.msra.mxu0 %v847
  %4536 = vmatpush.bf16.msra.mxu0 %v841
  %4537 = vmatpush.bf16.msra.mxu0 %v835
  %4538 = vmatpush.bf16.msra.mxu0 %v829
  %4539 = vmatpush.bf16.msra.mxu0 %v823
  %4540 = vmatpush.bf16.msra.mxu0 %v817
  %4541 = vmatpush.bf16.msra.mxu0 %v811
  %4542 = vmatmul.bf16.gmra.mxu0 %v4156
  %v4543 = vpop.f32.mrf.mxu0
  %v4544 = vadd.f32 0.0, %v4543
  %v4545 = vpop.f32.mrf.mxu0
  %4546 = vdwg.mxu0
  %4547 = vmatpush.bf16.msra.mxu0 %v901
  %4548 = vmatpush.bf16.msra.mxu0 %v895
  %4549 = vmatpush.bf16.msra.mxu0 %v889
  %4550 = vmatpush.bf16.msra.mxu0 %v883
  %4551 = vmatpush.bf16.msra.mxu0 %v877
  %4552 = vmatpush.bf16.msra.mxu0 %v871
  %4553 = vmatpush.bf16.msra.mxu0 %v865
  %4554 = vmatpush.bf16.msra.mxu0 %v859
  %4555 = vmatmul.bf16.gmra.mxu0 %v4157
  %v4556 = vpop.f32.mrf.mxu0
  %v4557 = vadd.f32 %v4544, %v4556
  %v4558 = vpop.f32.mrf.mxu0
  %4559 = vdwg.mxu0
  %4560 = vmatpush.bf16.msra.mxu0 %v854
  %4561 = vmatpush.bf16.msra.mxu0 %v848
  %4562 = vmatpush.bf16.msra.mxu0 %v842
  %4563 = vmatpush.bf16.msra.mxu0 %v836
  %4564 = vmatpush.bf16.msra.mxu0 %v830
  %4565 = vmatpush.bf16.msra.mxu0 %v824
  %4566 = vmatpush.bf16.msra.mxu0 %v818
  %4567 = vmatpush.bf16.msra.mxu0 %v812
  %4568 = vmatmul.bf16.gmra.mxu0 %v4156
  %v4569 = vpop.f32.mrf.mxu0
  %v4570 = vadd.f32 0.0, %v4569
  %v4571 = vpop.f32.mrf.mxu0
  %4572 = vdwg.mxu0
  %4573 = vmatpush.bf16.msra.mxu0 %v902
  %4574 = vmatpush.bf16.msra.mxu0 %v896
  %4575 = vmatpush.bf16.msra.mxu0 %v890
  %4576 = vmatpush.bf16.msra.mxu0 %v884
  %4577 = vmatpush.bf16.msra.mxu0 %v878
  %4578 = vmatpush.bf16.msra.mxu0 %v872
  %4579 = vmatpush.bf16.msra.mxu0 %v866
  %4580 = vmatpush.bf16.msra.mxu0 %v860
  %4581 = vmatmul.bf16.gmra.mxu0 %v4157
  %v4582 = vpop.f32.mrf.mxu0
  %v4583 = vadd.f32 %v4570, %v4582
  %v4584 = vpop.f32.mrf.mxu0
  %4585 = vdwg.mxu0
  %4586 = vmatpush.bf16.msra.mxu0 %v855
  %4587 = vmatpush.bf16.msra.mxu0 %v849
  %4588 = vmatpush.bf16.msra.mxu0 %v843
  %4589 = vmatpush.bf16.msra.mxu0 %v837
  %4590 = vmatpush.bf16.msra.mxu0 %v831
  %4591 = vmatpush.bf16.msra.mxu0 %v825
  %4592 = vmatpush.bf16.msra.mxu0 %v819
  %4593 = vmatpush.bf16.msra.mxu0 %v813
  %4594 = vmatmul.bf16.gmra.mxu0 %v4156
  %v4595 = vpop.f32.mrf.mxu0
  %v4596 = vadd.f32 0.0, %v4595
  %v4597 = vpop.f32.mrf.mxu0
  %4598 = vdwg.mxu0
  %4599 = vmatpush.bf16.msra.mxu0 %v903
  %4600 = vmatpush.bf16.msra.mxu0 %v897
  %4601 = vmatpush.bf16.msra.mxu0 %v891
  %4602 = vmatpush.bf16.msra.mxu0 %v885
  %4603 = vmatpush.bf16.msra.mxu0 %v879
  %4604 = vmatpush.bf16.msra.mxu0 %v873
  %4605 = vmatpush.bf16.msra.mxu0 %v867
  %4606 = vmatpush.bf16.msra.mxu0 %v861
  %4607 = vmatmul.bf16.gmra.mxu0 %v4157
  %v4608 = vpop.f32.mrf.mxu0
  %v4609 = vadd.f32 %v4596, %v4608
  %v4610 = vpop.f32.mrf.mxu0
  %4611 = vdwg.mxu0
  %4612 = vmatpush.bf16.msra.mxu0 %v856
  %4613 = vmatpush.bf16.msra.mxu0 %v850
  %4614 = vmatpush.bf16.msra.mxu0 %v844
  %4615 = vmatpush.bf16.msra.mxu0 %v838
  %4616 = vmatpush.bf16.msra.mxu0 %v832
  %4617 = vmatpush.bf16.msra.mxu0 %v826
  %4618 = vmatpush.bf16.msra.mxu0 %v820
  %4619 = vmatpush.bf16.msra.mxu0 %v814
  %4620 = vmatmul.bf16.gmra.mxu0 %v4156
  %v4621 = vpop.f32.mrf.mxu0
  %v4622 = vadd.f32 0.0, %v4621
  %v4623 = vpop.f32.mrf.mxu0
  %4624 = vdwg.mxu0
  %4625 = vmatpush.bf16.msra.mxu0 %v904
  %4626 = vmatpush.bf16.msra.mxu0 %v898
  %4627 = vmatpush.bf16.msra.mxu0 %v892
  %4628 = vmatpush.bf16.msra.mxu0 %v886
  %4629 = vmatpush.bf16.msra.mxu0 %v880
  %4630 = vmatpush.bf16.msra.mxu0 %v874
  %4631 = vmatpush.bf16.msra.mxu0 %v868
  %4632 = vmatpush.bf16.msra.mxu0 %v862
  %4633 = vmatmul.bf16.gmra.mxu0 %v4157
  %v4634 = vpop.f32.mrf.mxu0
  %v4635 = vadd.f32 %v4622, %v4634
  %v4636 = vpop.f32.mrf.mxu0
  %4637 = vdwg.mxu0
  %4638 = vmatpush.bf16.msra.mxu0 %v857
  %4639 = vmatpush.bf16.msra.mxu0 %v851
  %4640 = vmatpush.bf16.msra.mxu0 %v845
  %4641 = vmatpush.bf16.msra.mxu0 %v839
  %4642 = vmatpush.bf16.msra.mxu0 %v833
  %4643 = vmatpush.bf16.msra.mxu0 %v827
  %4644 = vmatpush.bf16.msra.mxu0 %v821
  %4645 = vmatpush.bf16.msra.mxu0 %v815
  %4646 = vmatmul.bf16.gmra.mxu0 %v4156
  %v4647 = vpop.f32.mrf.mxu0
  %v4648 = vadd.f32 0.0, %v4647
  %v4649 = vpop.f32.mrf.mxu0
  %4650 = vdwg.mxu0
  %4651 = vmatpush.bf16.msra.mxu0 %v905
  %4652 = vmatpush.bf16.msra.mxu0 %v899
  %4653 = vmatpush.bf16.msra.mxu0 %v893
  %4654 = vmatpush.bf16.msra.mxu0 %v887
  %4655 = vmatpush.bf16.msra.mxu0 %v881
  %4656 = vmatpush.bf16.msra.mxu0 %v875
  %4657 = vmatpush.bf16.msra.mxu0 %v869
  %4658 = vmatpush.bf16.msra.mxu0 %v863
  %4659 = vmatmul.bf16.gmra.mxu0 %v4157
  %v4660 = vpop.f32.mrf.mxu0
  %v4661 = vadd.f32 %v4648, %v4660
  %v4662 = vpop.f32.mrf.mxu0
  %4663 = vdwg.mxu0
  %v4664 = vadd.f32 %v4502, %v4531
  %v4665 = vadd.f32 %v4503, %v4557
  %v4666 = vadd.f32 %v4504, %v4583
  %v4667 = vadd.f32 %v4505, %v4609
  %v4668 = vxor.u32 %v4664, 2147483648
  %v4669 = vxor.u32 %v4665, 2147483648
  %v4670 = vxor.u32 %v4666, 2147483648
  %v4671 = vxor.u32 %v4667, 2147483648
  %v4672 = vmul.f32 %v4668, 1.442695
  %v4673 = vpow.pop %v4672
  %v4674 = vmul.f32 %v4669, 1.442695
  %v4675 = vpow.pop %v4674
  %v4676 = vmul.f32 %v4670, 1.442695
  %v4677 = vpow.pop %v4676
  %v4678 = vmul.f32 %v4671, 1.442695
  %v4679 = vpow.pop %v4678
  %v4680 = vadd.f32 %v4673, 1.0
  %v4681 = vadd.f32 %v4675, 1.0
  %v4682 = vadd.f32 %v4677, 1.0
  %v4683 = vadd.f32 %v4679, 1.0
  %v4684 = vrcp.pop %v4680
  %v4685 = vmul.f32 %v4680, %v4684
  %v4686 = vsub.f32 1.0, %v4685
  %v4687 = vmul.f32 %v4684, %v4686
  %v4688 = vadd.f32 %v4684, %v4687
  %vm4689 = vweird.f32 %v4680
  %vm4690 = vweird.f32 %v4684
  %vm4691 = vmor %vm4689, %vm4690
  %v4692 = vsel %vm4691, %v4684, %v4688
  %v4693 = vand.u32 2147483647, %v4680
  %vm4694 = vcmp.eq.f32.partialorder %v4693, 8.507059e+37
  %v4695 = vand.u32 %v4680, 2147483648
  %v4696 = vor.u32 1.1754944e-38, %v4695
  %v4697 = vsel %vm4694, %v4696, %v4692
  %v4698 = vmul.f32 1.0, %v4697
  %v4699 = vrcp.pop %v4681
  %v4700 = vmul.f32 %v4681, %v4699
  %v4701 = vsub.f32 1.0, %v4700
  %v4702 = vmul.f32 %v4699, %v4701
  %v4703 = vadd.f32 %v4699, %v4702
  %vm4704 = vweird.f32 %v4681
  %vm4705 = vweird.f32 %v4699
  %vm4706 = vmor %vm4704, %vm4705
  %v4707 = vsel %vm4706, %v4699, %v4703
  %v4708 = vand.u32 2147483647, %v4681
  %vm4709 = vcmp.eq.f32.partialorder %v4708, 8.507059e+37
  %v4710 = vand.u32 %v4681, 2147483648
  %v4711 = vor.u32 1.1754944e-38, %v4710
  %v4712 = vsel %vm4709, %v4711, %v4707
  %v4713 = vmul.f32 1.0, %v4712
  %v4714 = vrcp.pop %v4682
  %v4715 = vmul.f32 %v4682, %v4714
  %v4716 = vsub.f32 1.0, %v4715
  %v4717 = vmul.f32 %v4714, %v4716
  %v4718 = vadd.f32 %v4714, %v4717
  %vm4719 = vweird.f32 %v4682
  %vm4720 = vweird.f32 %v4714
  %vm4721 = vmor %vm4719, %vm4720
  %v4722 = vsel %vm4721, %v4714, %v4718
  %v4723 = vand.u32 2147483647, %v4682
  %vm4724 = vcmp.eq.f32.partialorder %v4723, 8.507059e+37
  %v4725 = vand.u32 %v4682, 2147483648
  %v4726 = vor.u32 1.1754944e-38, %v4725
  %v4727 = vsel %vm4724, %v4726, %v4722
  %v4728 = vmul.f32 1.0, %v4727
  %v4729 = vrcp.pop %v4683
  %v4730 = vmul.f32 %v4683, %v4729
  %v4731 = vsub.f32 1.0, %v4730
  %v4732 = vmul.f32 %v4729, %v4731
  %v4733 = vadd.f32 %v4729, %v4732
  %vm4734 = vweird.f32 %v4683
  %vm4735 = vweird.f32 %v4729
  %vm4736 = vmor %vm4734, %vm4735
  %v4737 = vsel %vm4736, %v4729, %v4733
  %v4738 = vand.u32 2147483647, %v4683
  %vm4739 = vcmp.eq.f32.partialorder %v4738, 8.507059e+37
  %v4740 = vand.u32 %v4683, 2147483648
  %v4741 = vor.u32 1.1754944e-38, %v4740
  %v4742 = vsel %vm4739, %v4741, %v4737
  %v4743 = vmul.f32 1.0, %v4742
  %v4744 = vadd.f32 %v4635, %v395
  %v4745 = vadd.f32 %v4661, %v396
  %v4746 = vmul.f32 %v4698, %v4744
  %v4747 = vmul.f32 %v4713, %v4745
  %v4748 = vadd.f32 %v4506, %v4746
  %v4749 = vadd.f32 %v4507, %v4747
  %v4750 = vtanh.pop %v4748
  %v4751 = vtanh.pop %v4749
  %v4752 = vsub.f32 1.0, %v4728
  %v4753 = vsub.f32 1.0, %v4743
  %v4754 = vmul.f32 %v4752, %v4750
  %v4755 = vmul.f32 %v4753, %v4751
  %v4756 = vmul.f32 %v4728, %v4149
  %v4757 = vmul.f32 %v4743, %v4150
  %v4758 = vadd.f32 %v4754, %v4756
  %v4759 = vadd.f32 %v4755, %v4757
  %4760 = vadd.xlane.f32.xlu0 %v4758
  %v4761 = vpop.xlane.xlu0 %4760
  %v4762 = vmul.f32 %v4761, %v1262
  %v4763 = vmul.f32 %v4758, %v4758
  %4764 = vadd.xlane.f32.xlu0 %v4763
  %v4765 = vpop.xlane.xlu0 %4764
  %v4766 = vmul.f32 %v4765, %v1262
  %v4767 = vmul.f32 %v4762, %v4762
  %v4768 = vsub.f32 %v4766, %v4767
  %v4769 = vsub.f32 %v4758, %v4762
  %v4770 = vadd.f32 %v4768, 1e-05
  %v4771 = vrsqrt.pop %v4770
  %v4772 = vmul.f32 %v4771, %v4770
  %v4773 = vmul.f32 %v4772, %v4771
  %v4774 = vmul.f32 0.5, %v4773
  %v4775 = vsub.f32 1.5, %v4774
  %v4776 = vmul.f32 %v4771, %v4775
  %vm4777 = vweird.f32 %v4770
  %vm4778 = vweird.f32 %v4771
  %vm4779 = vmor %vm4777, %vm4778
  %v4780 = vsel %vm4779, %v4771, %v4776
  %v4781 = vmul.f32 %v4769, %v4780
  %4782 = vadd.xlane.f32.xlu0 %v4759
  %v4783 = vpop.xlane.xlu0 %4782
  %v4784 = vmul.f32 %v4783, %v1262
  %v4785 = vmul.f32 %v4759, %v4759
  %4786 = vadd.xlane.f32.xlu0 %v4785
  %v4787 = vpop.xlane.xlu0 %4786
  %v4788 = vmul.f32 %v4787, %v1262
  %v4789 = vmul.f32 %v4784, %v4784
  %v4790 = vsub.f32 %v4788, %v4789
  %v4791 = vsub.f32 %v4759, %v4784
  %v4792 = vadd.f32 %v4790, 1e-05
  %v4793 = vrsqrt.pop %v4792
  %v4794 = vmul.f32 %v4793, %v4792
  %v4795 = vmul.f32 %v4794, %v4793
  %v4796 = vmul.f32 0.5, %v4795
  %v4797 = vsub.f32 1.5, %v4796
  %v4798 = vmul.f32 %v4793, %v4797
  %vm4799 = vweird.f32 %v4792
  %vm4800 = vweird.f32 %v4793
  %vm4801 = vmor %vm4799, %vm4800
  %v4802 = vsel %vm4801, %v4793, %v4798
  %v4803 = vmul.f32 %v4791, %v4802
  %v4804 = vmul.f32 %v4781, %v402
  %v4805 = vmul.f32 %v4803, %v403
  %v4806 = vadd.f32 %v4804, %v409
  %v4807 = vadd.f32 %v4805, %v410
  %v4808 = vpack.c.bf16 %v4807, %v4806
  %v4809 = vpack.c.bf16 %v4498, %v4498
  %v4811 = vunpack.c.l.b16 %v4808
  %v4812 = vunpack.c.h.b16 %v4808
  %v4813 = vpack.c.b16 %v4811, %v4811
  %v4814 = vpack.c.b16 %v4812, %v4812
  %4817 = vmatpush.bf16.msra.mxu0 %v1935
  %4818 = vmatpush.bf16.msra.mxu0 %v1929
  %4819 = vmatpush.bf16.msra.mxu0 %v1923
  %4820 = vmatpush.bf16.msra.mxu0 %v1917
  %4821 = vmatpush.bf16.msra.mxu0 %v1911
  %4822 = vmatpush.bf16.msra.mxu0 %v1905
  %4823 = vmatpush.bf16.msra.mxu0 %v1899
  %4824 = vmatpush.bf16.msra.mxu0 %v1893
  %4825 = vmatmul.bf16.gmra.mxu0 %v4813
  %v4826 = vpop.f32.mrf.mxu0
  %v4827 = vadd.f32 %v380, %v4826
  %v4828 = vpop.f32.mrf.mxu0
  %4829 = vdwg.mxu0
  %4830 = vmatpush.bf16.msra.mxu0 %v1983
  %4831 = vmatpush.bf16.msra.mxu0 %v1977
  %4832 = vmatpush.bf16.msra.mxu0 %v1971
  %4833 = vmatpush.bf16.msra.mxu0 %v1965
  %4834 = vmatpush.bf16.msra.mxu0 %v1959
  %4835 = vmatpush.bf16.msra.mxu0 %v1953
  %4836 = vmatpush.bf16.msra.mxu0 %v1947
  %4837 = vmatpush.bf16.msra.mxu0 %v1941
  %4838 = vmatmul.bf16.gmra.mxu0 %v4814
  %v4839 = vpop.f32.mrf.mxu0
  %v4840 = vadd.f32 %v4827, %v4839
  %v4841 = vpop.f32.mrf.mxu0
  %4842 = vdwg.mxu0
  %4843 = vmatpush.bf16.msra.mxu0 %v2031
  %4844 = vmatpush.bf16.msra.mxu0 %v2025
  %4845 = vmatpush.bf16.msra.mxu0 %v2019
  %4846 = vmatpush.bf16.msra.mxu0 %v2013
  %4847 = vmatpush.bf16.msra.mxu0 %v2007
  %4848 = vmatpush.bf16.msra.mxu0 %v2001
  %4849 = vmatpush.bf16.msra.mxu0 %v1995
  %4850 = vmatpush.bf16.msra.mxu0 %v1989
  %4851 = vmatmul.bf16.gmra.mxu0 %v4809
  %v4852 = vpop.f32.mrf.mxu0
  %v4853 = vadd.f32 %v4840, %v4852
  %v4854 = vpop.f32.mrf.mxu0
  %4855 = vdwg.mxu0
  %4856 = vmatpush.bf16.msra.mxu0 %v1936
  %4857 = vmatpush.bf16.msra.mxu0 %v1930
  %4858 = vmatpush.bf16.msra.mxu0 %v1924
  %4859 = vmatpush.bf16.msra.mxu0 %v1918
  %4860 = vmatpush.bf16.msra.mxu0 %v1912
  %4861 = vmatpush.bf16.msra.mxu0 %v1906
  %4862 = vmatpush.bf16.msra.mxu0 %v1900
  %4863 = vmatpush.bf16.msra.mxu0 %v1894
  %4864 = vmatmul.bf16.gmra.mxu0 %v4813
  %v4865 = vpop.f32.mrf.mxu0
  %v4866 = vadd.f32 %v381, %v4865
  %v4867 = vpop.f32.mrf.mxu0
  %4868 = vdwg.mxu0
  %4869 = vmatpush.bf16.msra.mxu0 %v1984
  %4870 = vmatpush.bf16.msra.mxu0 %v1978
  %4871 = vmatpush.bf16.msra.mxu0 %v1972
  %4872 = vmatpush.bf16.msra.mxu0 %v1966
  %4873 = vmatpush.bf16.msra.mxu0 %v1960
  %4874 = vmatpush.bf16.msra.mxu0 %v1954
  %4875 = vmatpush.bf16.msra.mxu0 %v1948
  %4876 = vmatpush.bf16.msra.mxu0 %v1942
  %4877 = vmatmul.bf16.gmra.mxu0 %v4814
  %v4878 = vpop.f32.mrf.mxu0
  %v4879 = vadd.f32 %v4866, %v4878
  %v4880 = vpop.f32.mrf.mxu0
  %4881 = vdwg.mxu0
  %4882 = vmatpush.bf16.msra.mxu0 %v2032
  %4883 = vmatpush.bf16.msra.mxu0 %v2026
  %4884 = vmatpush.bf16.msra.mxu0 %v2020
  %4885 = vmatpush.bf16.msra.mxu0 %v2014
  %4886 = vmatpush.bf16.msra.mxu0 %v2008
  %4887 = vmatpush.bf16.msra.mxu0 %v2002
  %4888 = vmatpush.bf16.msra.mxu0 %v1996
  %4889 = vmatpush.bf16.msra.mxu0 %v1990
  %4890 = vmatmul.bf16.gmra.mxu0 %v4809
  %v4891 = vpop.f32.mrf.mxu0
  %v4892 = vadd.f32 %v4879, %v4891
  %v4893 = vpop.f32.mrf.mxu0
  %4894 = vdwg.mxu0
  %4895 = vmatpush.bf16.msra.mxu0 %v1937
  %4896 = vmatpush.bf16.msra.mxu0 %v1931
  %4897 = vmatpush.bf16.msra.mxu0 %v1925
  %4898 = vmatpush.bf16.msra.mxu0 %v1919
  %4899 = vmatpush.bf16.msra.mxu0 %v1913
  %4900 = vmatpush.bf16.msra.mxu0 %v1907
  %4901 = vmatpush.bf16.msra.mxu0 %v1901
  %4902 = vmatpush.bf16.msra.mxu0 %v1895
  %4903 = vmatmul.bf16.gmra.mxu0 %v4813
  %v4904 = vpop.f32.mrf.mxu0
  %v4905 = vadd.f32 %v382, %v4904
  %v4906 = vpop.f32.mrf.mxu0
  %4907 = vdwg.mxu0
  %4908 = vmatpush.bf16.msra.mxu0 %v1985
  %4909 = vmatpush.bf16.msra.mxu0 %v1979
  %4910 = vmatpush.bf16.msra.mxu0 %v1973
  %4911 = vmatpush.bf16.msra.mxu0 %v1967
  %4912 = vmatpush.bf16.msra.mxu0 %v1961
  %4913 = vmatpush.bf16.msra.mxu0 %v1955
  %4914 = vmatpush.bf16.msra.mxu0 %v1949
  %4915 = vmatpush.bf16.msra.mxu0 %v1943
  %4916 = vmatmul.bf16.gmra.mxu0 %v4814
  %v4917 = vpop.f32.mrf.mxu0
  %v4918 = vadd.f32 %v4905, %v4917
  %v4919 = vpop.f32.mrf.mxu0
  %4920 = vdwg.mxu0
  %4921 = vmatpush.bf16.msra.mxu0 %v2033
  %4922 = vmatpush.bf16.msra.mxu0 %v2027
  %4923 = vmatpush.bf16.msra.mxu0 %v2021
  %4924 = vmatpush.bf16.msra.mxu0 %v2015
  %4925 = vmatpush.bf16.msra.mxu0 %v2009
  %4926 = vmatpush.bf16.msra.mxu0 %v2003
  %4927 = vmatpush.bf16.msra.mxu0 %v1997
  %4928 = vmatpush.bf16.msra.mxu0 %v1991
  %4929 = vmatmul.bf16.gmra.mxu0 %v4809
  %v4930 = vpop.f32.mrf.mxu0
  %v4931 = vadd.f32 %v4918, %v4930
  %v4932 = vpop.f32.mrf.mxu0
  %4933 = vdwg.mxu0
  %4934 = vmatpush.bf16.msra.mxu0 %v1938
  %4935 = vmatpush.bf16.msra.mxu0 %v1932
  %4936 = vmatpush.bf16.msra.mxu0 %v1926
  %4937 = vmatpush.bf16.msra.mxu0 %v1920
  %4938 = vmatpush.bf16.msra.mxu0 %v1914
  %4939 = vmatpush.bf16.msra.mxu0 %v1908
  %4940 = vmatpush.bf16.msra.mxu0 %v1902
  %4941 = vmatpush.bf16.msra.mxu0 %v1896
  %4942 = vmatmul.bf16.gmra.mxu0 %v4813
  %v4943 = vpop.f32.mrf.mxu0
  %v4944 = vadd.f32 %v383, %v4943
  %v4945 = vpop.f32.mrf.mxu0
  %4946 = vdwg.mxu0
  %4947 = vmatpush.bf16.msra.mxu0 %v1986
  %4948 = vmatpush.bf16.msra.mxu0 %v1980
  %4949 = vmatpush.bf16.msra.mxu0 %v1974
  %4950 = vmatpush.bf16.msra.mxu0 %v1968
  %4951 = vmatpush.bf16.msra.mxu0 %v1962
  %4952 = vmatpush.bf16.msra.mxu0 %v1956
  %4953 = vmatpush.bf16.msra.mxu0 %v1950
  %4954 = vmatpush.bf16.msra.mxu0 %v1944
  %4955 = vmatmul.bf16.gmra.mxu0 %v4814
  %v4956 = vpop.f32.mrf.mxu0
  %v4957 = vadd.f32 %v4944, %v4956
  %v4958 = vpop.f32.mrf.mxu0
  %4959 = vdwg.mxu0
  %4960 = vmatpush.bf16.msra.mxu0 %v2034
  %4961 = vmatpush.bf16.msra.mxu0 %v2028
  %4962 = vmatpush.bf16.msra.mxu0 %v2022
  %4963 = vmatpush.bf16.msra.mxu0 %v2016
  %4964 = vmatpush.bf16.msra.mxu0 %v2010
  %4965 = vmatpush.bf16.msra.mxu0 %v2004
  %4966 = vmatpush.bf16.msra.mxu0 %v1998
  %4967 = vmatpush.bf16.msra.mxu0 %v1992
  %4968 = vmatmul.bf16.gmra.mxu0 %v4809
  %v4969 = vpop.f32.mrf.mxu0
  %v4970 = vadd.f32 %v4957, %v4969
  %v4971 = vpop.f32.mrf.mxu0
  %4972 = vdwg.mxu0
  %4973 = vmatpush.bf16.msra.mxu0 %v1939
  %4974 = vmatpush.bf16.msra.mxu0 %v1933
  %4975 = vmatpush.bf16.msra.mxu0 %v1927
  %4976 = vmatpush.bf16.msra.mxu0 %v1921
  %4977 = vmatpush.bf16.msra.mxu0 %v1915
  %4978 = vmatpush.bf16.msra.mxu0 %v1909
  %4979 = vmatpush.bf16.msra.mxu0 %v1903
  %4980 = vmatpush.bf16.msra.mxu0 %v1897
  %4981 = vmatmul.bf16.gmra.mxu0 %v4813
  %v4982 = vpop.f32.mrf.mxu0
  %v4983 = vadd.f32 %v384, %v4982
  %v4984 = vpop.f32.mrf.mxu0
  %4985 = vdwg.mxu0
  %4986 = vmatpush.bf16.msra.mxu0 %v1987
  %4987 = vmatpush.bf16.msra.mxu0 %v1981
  %4988 = vmatpush.bf16.msra.mxu0 %v1975
  %4989 = vmatpush.bf16.msra.mxu0 %v1969
  %4990 = vmatpush.bf16.msra.mxu0 %v1963
  %4991 = vmatpush.bf16.msra.mxu0 %v1957
  %4992 = vmatpush.bf16.msra.mxu0 %v1951
  %4993 = vmatpush.bf16.msra.mxu0 %v1945
  %4994 = vmatmul.bf16.gmra.mxu0 %v4814
  %v4995 = vpop.f32.mrf.mxu0
  %v4996 = vadd.f32 %v4983, %v4995
  %v4997 = vpop.f32.mrf.mxu0
  %4998 = vdwg.mxu0
  %4999 = vmatpush.bf16.msra.mxu0 %v2035
  %5000 = vmatpush.bf16.msra.mxu0 %v2029
  %5001 = vmatpush.bf16.msra.mxu0 %v2023
  %5002 = vmatpush.bf16.msra.mxu0 %v2017
  %5003 = vmatpush.bf16.msra.mxu0 %v2011
  %5004 = vmatpush.bf16.msra.mxu0 %v2005
  %5005 = vmatpush.bf16.msra.mxu0 %v1999
  %5006 = vmatpush.bf16.msra.mxu0 %v1993
  %5007 = vmatmul.bf16.gmra.mxu0 %v4809
  %v5008 = vpop.f32.mrf.mxu0
  %v5009 = vadd.f32 %v4996, %v5008
  %v5010 = vpop.f32.mrf.mxu0
  %5011 = vdwg.mxu0
  %5012 = vmatpush.bf16.msra.mxu0 %v1940
  %5013 = vmatpush.bf16.msra.mxu0 %v1934
  %5014 = vmatpush.bf16.msra.mxu0 %v1928
  %5015 = vmatpush.bf16.msra.mxu0 %v1922
  %5016 = vmatpush.bf16.msra.mxu0 %v1916
  %5017 = vmatpush.bf16.msra.mxu0 %v1910
  %5018 = vmatpush.bf16.msra.mxu0 %v1904
  %5019 = vmatpush.bf16.msra.mxu0 %v1898
  %5020 = vmatmul.bf16.gmra.mxu0 %v4813
  %v5021 = vpop.f32.mrf.mxu0
  %v5022 = vadd.f32 %v385, %v5021
  %v5023 = vpop.f32.mrf.mxu0
  %5024 = vdwg.mxu0
  %5025 = vmatpush.bf16.msra.mxu0 %v1988
  %5026 = vmatpush.bf16.msra.mxu0 %v1982
  %5027 = vmatpush.bf16.msra.mxu0 %v1976
  %5028 = vmatpush.bf16.msra.mxu0 %v1970
  %5029 = vmatpush.bf16.msra.mxu0 %v1964
  %5030 = vmatpush.bf16.msra.mxu0 %v1958
  %5031 = vmatpush.bf16.msra.mxu0 %v1952
  %5032 = vmatpush.bf16.msra.mxu0 %v1946
  %5033 = vmatmul.bf16.gmra.mxu0 %v4814
  %v5034 = vpop.f32.mrf.mxu0
  %v5035 = vadd.f32 %v5022, %v5034
  %v5036 = vpop.f32.mrf.mxu0
  %5037 = vdwg.mxu0
  %5038 = vmatpush.bf16.msra.mxu0 %v2036
  %5039 = vmatpush.bf16.msra.mxu0 %v2030
  %5040 = vmatpush.bf16.msra.mxu0 %v2024
  %5041 = vmatpush.bf16.msra.mxu0 %v2018
  %5042 = vmatpush.bf16.msra.mxu0 %v2012
  %5043 = vmatpush.bf16.msra.mxu0 %v2006
  %5044 = vmatpush.bf16.msra.mxu0 %v2000
  %5045 = vmatpush.bf16.msra.mxu0 %v1994
  %5046 = vmatmul.bf16.gmra.mxu0 %v4809
  %v5047 = vpop.f32.mrf.mxu0
  %v5048 = vadd.f32 %v5035, %v5047
  %v5049 = vpop.f32.mrf.mxu0
  %5050 = vdwg.mxu0
  %v5051 = vadd.f32 %v4853, %v4970
  %v5052 = vadd.f32 %v4892, %v5009
  %v5053 = vxor.u32 %v5051, 2147483648
  %v5054 = vxor.u32 %v5052, 2147483648
  %v5055 = vmul.f32 %v5053, 1.442695
  %v5056 = vpow.pop %v5055
  %v5057 = vmul.f32 %v5054, 1.442695
  %v5058 = vpow.pop %v5057
  %v5059 = vadd.f32 %v5056, 1.0
  %v5060 = vadd.f32 %v5058, 1.0
  %v5061 = vrcp.pop %v5059
  %v5062 = vmul.f32 %v5059, %v5061
  %v5063 = vsub.f32 1.0, %v5062
  %v5064 = vmul.f32 %v5061, %v5063
  %v5065 = vadd.f32 %v5061, %v5064
  %vm5066 = vweird.f32 %v5059
  %vm5067 = vweird.f32 %v5061
  %vm5068 = vmor %vm5066, %vm5067
  %v5069 = vsel %vm5068, %v5061, %v5065
  %v5070 = vand.u32 2147483647, %v5059
  %vm5071 = vcmp.eq.f32.partialorder %v5070, 8.507059e+37
  %v5072 = vand.u32 %v5059, 2147483648
  %v5073 = vor.u32 1.1754944e-38, %v5072
  %v5074 = vsel %vm5071, %v5073, %v5069
  %v5075 = vmul.f32 1.0, %v5074
  %v5076 = vrcp.pop %v5060
  %v5077 = vmul.f32 %v5060, %v5076
  %v5078 = vsub.f32 1.0, %v5077
  %v5079 = vmul.f32 %v5076, %v5078
  %v5080 = vadd.f32 %v5076, %v5079
  %vm5081 = vweird.f32 %v5060
  %vm5082 = vweird.f32 %v5076
  %vm5083 = vmor %vm5081, %vm5082
  %v5084 = vsel %vm5083, %v5076, %v5080
  %v5085 = vand.u32 2147483647, %v5060
  %vm5086 = vcmp.eq.f32.partialorder %v5085, 8.507059e+37
  %v5087 = vand.u32 %v5060, 2147483648
  %v5088 = vor.u32 1.1754944e-38, %v5087
  %v5089 = vsel %vm5086, %v5088, %v5084
  %v5090 = vmul.f32 1.0, %v5089
  %v5091 = vmul.f32 %v5075, %v5048
  %v5092 = vadd.f32 %v4931, %v5091
  %v5093 = vtanh.pop %v5092
  %v5094 = vsub.f32 1.0, %v5090
  %v5095 = vmul.f32 %v5094, %v5093
  %v5096 = vmul.f32 %v5090, %v4498
  %v5097 = vadd.f32 %v5095, %v5096
  %v5098 = vsel %vm2462, %v5097, 0.0
  %5099 = vadd.xlane.f32.xlu0 %v5098
  %v5100 = vpop.xlane.xlu0 %5099
  %v5101 = vmul.f32 %v5100, %v2472
  %v5102 = vmul.f32 %v5097, %v5097
  %v5103 = vsel %vm2462, %v5102, 0.0
  %5104 = vadd.xlane.f32.xlu0 %v5103
  %v5105 = vpop.xlane.xlu0 %5104
  %v5106 = vmul.f32 %v5105, %v2472
  %v5107 = vmul.f32 %v5101, %v5101
  %v5108 = vsub.f32 %v5106, %v5107
  %v5109 = vsub.f32 %v5097, %v5101
  %v5110 = vadd.f32 %v5108, 1e-05
  %v5111 = vrsqrt.pop %v5110
  %v5112 = vmul.f32 %v5111, %v5110
  %v5113 = vmul.f32 %v5112, %v5111
  %v5114 = vmul.f32 0.5, %v5113
  %v5115 = vsub.f32 1.5, %v5114
  %v5116 = vmul.f32 %v5111, %v5115
  %vm5117 = vweird.f32 %v5110
  %vm5118 = vweird.f32 %v5111
  %vm5119 = vmor %vm5117, %vm5118
  %v5120 = vsel %vm5119, %v5111, %v5116
  %v5121 = vmul.f32 %v5109, %v5120
  %5123 = vrot.lane.b32.xlu0 %v5097, 64
  %v5124 = vpop.permute.xlu0 %5123
  %v5126 = vsel %vm2462, %v5124, 0.0
  %5127 = vadd.xlane.f32.xlu0 %v5126
  %v5128 = vpop.xlane.xlu0 %5127
  %v5129 = vmul.f32 %v5128, %v2472
  %5131 = vrot.lane.b32.xlu0 %v5102, 64
  %v5132 = vpop.permute.xlu0 %5131
  %v5134 = vsel %vm2462, %v5132, 0.0
  %5135 = vadd.xlane.f32.xlu0 %v5134
  %v5136 = vpop.xlane.xlu0 %5135
  %v5137 = vmul.f32 %v5136, %v2472
  %v5138 = vmul.f32 %v5129, %v5129
  %v5139 = vsub.f32 %v5137, %v5138
  %v5140 = vsub.f32 %v5097, %v5129
  %v5141 = vadd.f32 %v5139, 1e-05
  %v5142 = vrsqrt.pop %v5141
  %v5143 = vmul.f32 %v5142, %v5141
  %v5144 = vmul.f32 %v5143, %v5142
  %v5145 = vmul.f32 0.5, %v5144
  %v5146 = vsub.f32 1.5, %v5145
  %v5147 = vmul.f32 %v5142, %v5146
  %vm5148 = vweird.f32 %v5141
  %vm5149 = vweird.f32 %v5142
  %vm5150 = vmor %vm5148, %vm5149
  %v5151 = vsel %vm5150, %v5142, %v5147
  %v5152 = vmul.f32 %v5140, %v5151
  %v5153 = vsel %vm2462, %v5121, %v5152
  %v5154 = vmul.f32 %v5153, %v413
  %v5155 = vadd.f32 %v5154, %v414
  %s5156 = smul.u32 5, 6
  %s5157 = smul.addr %s5156, 8
  %s5158 = scalar_lea.vmem [#allocation2], %s5157
  %v5159 = vld [vmem:[%s5158] sm:$0xff]
  %v5160 = vld [vmem:[%s5158 + $0x8] sm:$0xff]
  %v5161 = vld [vmem:[%s5158 + $0x10] sm:$0xff]
  %v5162 = vld [vmem:[%s5158 + $0x18] sm:$0xff]
  %v5163 = vld [vmem:[%s5158 + $0x20] sm:$0xff]
  %v5164 = vld [vmem:[%s5158 + $0x28] sm:$0xff]
  %5165 = vmatpush.bf16.msra.mxu0 %v852
  %5166 = vmatpush.bf16.msra.mxu0 %v846
  %5167 = vmatpush.bf16.msra.mxu0 %v840
  %5168 = vmatpush.bf16.msra.mxu0 %v834
  %5169 = vmatpush.bf16.msra.mxu0 %v828
  %5170 = vmatpush.bf16.msra.mxu0 %v822
  %5171 = vmatpush.bf16.msra.mxu0 %v816
  %5172 = vmatpush.bf16.msra.mxu0 %v810
  %5173 = vmatmul.bf16.gmra.mxu0 %v4813
  %v5174 = vpop.f32.mrf.mxu0
  %v5175 = vadd.f32 0.0, %v5174
  %v5176 = vpop.f32.mrf.mxu0
  %5177 = vdwg.mxu0
  %5178 = vmatpush.bf16.msra.mxu0 %v900
  %5179 = vmatpush.bf16.msra.mxu0 %v894
  %5180 = vmatpush.bf16.msra.mxu0 %v888
  %5181 = vmatpush.bf16.msra.mxu0 %v882
  %5182 = vmatpush.bf16.msra.mxu0 %v876
  %5183 = vmatpush.bf16.msra.mxu0 %v870
  %5184 = vmatpush.bf16.msra.mxu0 %v864
  %5185 = vmatpush.bf16.msra.mxu0 %v858
  %5186 = vmatmul.bf16.gmra.mxu0 %v4814
  %v5187 = vpop.f32.mrf.mxu0
  %v5188 = vadd.f32 %v5175, %v5187
  %v5189 = vpop.f32.mrf.mxu0
  %5190 = vdwg.mxu0
  %5191 = vmatpush.bf16.msra.mxu0 %v853
  %5192 = vmatpush.bf16.msra.mxu0 %v847
  %5193 = vmatpush.bf16.msra.mxu0 %v841
  %5194 = vmatpush.bf16.msra.mxu0 %v835
  %5195 = vmatpush.bf16.msra.mxu0 %v829
  %5196 = vmatpush.bf16.msra.mxu0 %v823
  %5197 = vmatpush.bf16.msra.mxu0 %v817
  %5198 = vmatpush.bf16.msra.mxu0 %v811
  %5199 = vmatmul.bf16.gmra.mxu0 %v4813
  %v5200 = vpop.f32.mrf.mxu0
  %v5201 = vadd.f32 0.0, %v5200
  %v5202 = vpop.f32.mrf.mxu0
  %5203 = vdwg.mxu0
  %5204 = vmatpush.bf16.msra.mxu0 %v901
  %5205 = vmatpush.bf16.msra.mxu0 %v895
  %5206 = vmatpush.bf16.msra.mxu0 %v889
  %5207 = vmatpush.bf16.msra.mxu0 %v883
  %5208 = vmatpush.bf16.msra.mxu0 %v877
  %5209 = vmatpush.bf16.msra.mxu0 %v871
  %5210 = vmatpush.bf16.msra.mxu0 %v865
  %5211 = vmatpush.bf16.msra.mxu0 %v859
  %5212 = vmatmul.bf16.gmra.mxu0 %v4814
  %v5213 = vpop.f32.mrf.mxu0
  %v5214 = vadd.f32 %v5201, %v5213
  %v5215 = vpop.f32.mrf.mxu0
  %5216 = vdwg.mxu0
  %5217 = vmatpush.bf16.msra.mxu0 %v854
  %5218 = vmatpush.bf16.msra.mxu0 %v848
  %5219 = vmatpush.bf16.msra.mxu0 %v842
  %5220 = vmatpush.bf16.msra.mxu0 %v836
  %5221 = vmatpush.bf16.msra.mxu0 %v830
  %5222 = vmatpush.bf16.msra.mxu0 %v824
  %5223 = vmatpush.bf16.msra.mxu0 %v818
  %5224 = vmatpush.bf16.msra.mxu0 %v812
  %5225 = vmatmul.bf16.gmra.mxu0 %v4813
  %v5226 = vpop.f32.mrf.mxu0
  %v5227 = vadd.f32 0.0, %v5226
  %v5228 = vpop.f32.mrf.mxu0
  %5229 = vdwg.mxu0
  %5230 = vmatpush.bf16.msra.mxu0 %v902
  %5231 = vmatpush.bf16.msra.mxu0 %v896
  %5232 = vmatpush.bf16.msra.mxu0 %v890
  %5233 = vmatpush.bf16.msra.mxu0 %v884
  %5234 = vmatpush.bf16.msra.mxu0 %v878
  %5235 = vmatpush.bf16.msra.mxu0 %v872
  %5236 = vmatpush.bf16.msra.mxu0 %v866
  %5237 = vmatpush.bf16.msra.mxu0 %v860
  %5238 = vmatmul.bf16.gmra.mxu0 %v4814
  %v5239 = vpop.f32.mrf.mxu0
  %v5240 = vadd.f32 %v5227, %v5239
  %v5241 = vpop.f32.mrf.mxu0
  %5242 = vdwg.mxu0
  %5243 = vmatpush.bf16.msra.mxu0 %v855
  %5244 = vmatpush.bf16.msra.mxu0 %v849
  %5245 = vmatpush.bf16.msra.mxu0 %v843
  %5246 = vmatpush.bf16.msra.mxu0 %v837
  %5247 = vmatpush.bf16.msra.mxu0 %v831
  %5248 = vmatpush.bf16.msra.mxu0 %v825
  %5249 = vmatpush.bf16.msra.mxu0 %v819
  %5250 = vmatpush.bf16.msra.mxu0 %v813
  %5251 = vmatmul.bf16.gmra.mxu0 %v4813
  %v5252 = vpop.f32.mrf.mxu0
  %v5253 = vadd.f32 0.0, %v5252
  %v5254 = vpop.f32.mrf.mxu0
  %5255 = vdwg.mxu0
  %5256 = vmatpush.bf16.msra.mxu0 %v903
  %5257 = vmatpush.bf16.msra.mxu0 %v897
  %5258 = vmatpush.bf16.msra.mxu0 %v891
  %5259 = vmatpush.bf16.msra.mxu0 %v885
  %5260 = vmatpush.bf16.msra.mxu0 %v879
  %5261 = vmatpush.bf16.msra.mxu0 %v873
  %5262 = vmatpush.bf16.msra.mxu0 %v867
  %5263 = vmatpush.bf16.msra.mxu0 %v861
  %5264 = vmatmul.bf16.gmra.mxu0 %v4814
  %v5265 = vpop.f32.mrf.mxu0
  %v5266 = vadd.f32 %v5253, %v5265
  %v5267 = vpop.f32.mrf.mxu0
  %5268 = vdwg.mxu0
  %5269 = vmatpush.bf16.msra.mxu0 %v856
  %5270 = vmatpush.bf16.msra.mxu0 %v850
  %5271 = vmatpush.bf16.msra.mxu0 %v844
  %5272 = vmatpush.bf16.msra.mxu0 %v838
  %5273 = vmatpush.bf16.msra.mxu0 %v832
  %5274 = vmatpush.bf16.msra.mxu0 %v826
  %5275 = vmatpush.bf16.msra.mxu0 %v820
  %5276 = vmatpush.bf16.msra.mxu0 %v814
  %5277 = vmatmul.bf16.gmra.mxu0 %v4813
  %v5278 = vpop.f32.mrf.mxu0
  %v5279 = vadd.f32 0.0, %v5278
  %v5280 = vpop.f32.mrf.mxu0
  %5281 = vdwg.mxu0
  %5282 = vmatpush.bf16.msra.mxu0 %v904
  %5283 = vmatpush.bf16.msra.mxu0 %v898
  %5284 = vmatpush.bf16.msra.mxu0 %v892
  %5285 = vmatpush.bf16.msra.mxu0 %v886
  %5286 = vmatpush.bf16.msra.mxu0 %v880
  %5287 = vmatpush.bf16.msra.mxu0 %v874
  %5288 = vmatpush.bf16.msra.mxu0 %v868
  %5289 = vmatpush.bf16.msra.mxu0 %v862
  %5290 = vmatmul.bf16.gmra.mxu0 %v4814
  %v5291 = vpop.f32.mrf.mxu0
  %v5292 = vadd.f32 %v5279, %v5291
  %v5293 = vpop.f32.mrf.mxu0
  %5294 = vdwg.mxu0
  %5295 = vmatpush.bf16.msra.mxu0 %v857
  %5296 = vmatpush.bf16.msra.mxu0 %v851
  %5297 = vmatpush.bf16.msra.mxu0 %v845
  %5298 = vmatpush.bf16.msra.mxu0 %v839
  %5299 = vmatpush.bf16.msra.mxu0 %v833
  %5300 = vmatpush.bf16.msra.mxu0 %v827
  %5301 = vmatpush.bf16.msra.mxu0 %v821
  %5302 = vmatpush.bf16.msra.mxu0 %v815
  %5303 = vmatmul.bf16.gmra.mxu0 %v4813
  %v5304 = vpop.f32.mrf.mxu0
  %v5305 = vadd.f32 0.0, %v5304
  %v5306 = vpop.f32.mrf.mxu0
  %5307 = vdwg.mxu0
  %5308 = vmatpush.bf16.msra.mxu0 %v905
  %5309 = vmatpush.bf16.msra.mxu0 %v899
  %5310 = vmatpush.bf16.msra.mxu0 %v893
  %5311 = vmatpush.bf16.msra.mxu0 %v887
  %5312 = vmatpush.bf16.msra.mxu0 %v881
  %5313 = vmatpush.bf16.msra.mxu0 %v875
  %5314 = vmatpush.bf16.msra.mxu0 %v869
  %5315 = vmatpush.bf16.msra.mxu0 %v863
  %5316 = vmatmul.bf16.gmra.mxu0 %v4814
  %v5317 = vpop.f32.mrf.mxu0
  %v5318 = vadd.f32 %v5305, %v5317
  %v5319 = vpop.f32.mrf.mxu0
  %5320 = vdwg.mxu0
  %v5321 = vadd.f32 %v5159, %v5188
  %v5322 = vadd.f32 %v5160, %v5214
  %v5323 = vadd.f32 %v5161, %v5240
  %v5324 = vadd.f32 %v5162, %v5266
  %v5325 = vxor.u32 %v5321, 2147483648
  %v5326 = vxor.u32 %v5322, 2147483648
  %v5327 = vxor.u32 %v5323, 2147483648
  %v5328 = vxor.u32 %v5324, 2147483648
  %v5329 = vmul.f32 %v5325, 1.442695
  %v5330 = vpow.pop %v5329
  %v5331 = vmul.f32 %v5326, 1.442695
  %v5332 = vpow.pop %v5331
  %v5333 = vmul.f32 %v5327, 1.442695
  %v5334 = vpow.pop %v5333
  %v5335 = vmul.f32 %v5328, 1.442695
  %v5336 = vpow.pop %v5335
  %v5337 = vadd.f32 %v5330, 1.0
  %v5338 = vadd.f32 %v5332, 1.0
  %v5339 = vadd.f32 %v5334, 1.0
  %v5340 = vadd.f32 %v5336, 1.0
  %v5341 = vrcp.pop %v5337
  %v5342 = vmul.f32 %v5337, %v5341
  %v5343 = vsub.f32 1.0, %v5342
  %v5344 = vmul.f32 %v5341, %v5343
  %v5345 = vadd.f32 %v5341, %v5344
  %vm5346 = vweird.f32 %v5337
  %vm5347 = vweird.f32 %v5341
  %vm5348 = vmor %vm5346, %vm5347
  %v5349 = vsel %vm5348, %v5341, %v5345
  %v5350 = vand.u32 2147483647, %v5337
  %vm5351 = vcmp.eq.f32.partialorder %v5350, 8.507059e+37
  %v5352 = vand.u32 %v5337, 2147483648
  %v5353 = vor.u32 1.1754944e-38, %v5352
  %v5354 = vsel %vm5351, %v5353, %v5349
  %v5355 = vmul.f32 1.0, %v5354
  %v5356 = vrcp.pop %v5338
  %v5357 = vmul.f32 %v5338, %v5356
  %v5358 = vsub.f32 1.0, %v5357
  %v5359 = vmul.f32 %v5356, %v5358
  %v5360 = vadd.f32 %v5356, %v5359
  %vm5361 = vweird.f32 %v5338
  %vm5362 = vweird.f32 %v5356
  %vm5363 = vmor %vm5361, %vm5362
  %v5364 = vsel %vm5363, %v5356, %v5360
  %v5365 = vand.u32 2147483647, %v5338
  %vm5366 = vcmp.eq.f32.partialorder %v5365, 8.507059e+37
  %v5367 = vand.u32 %v5338, 2147483648
  %v5368 = vor.u32 1.1754944e-38, %v5367
  %v5369 = vsel %vm5366, %v5368, %v5364
  %v5370 = vmul.f32 1.0, %v5369
  %v5371 = vrcp.pop %v5339
  %v5372 = vmul.f32 %v5339, %v5371
  %v5373 = vsub.f32 1.0, %v5372
  %v5374 = vmul.f32 %v5371, %v5373
  %v5375 = vadd.f32 %v5371, %v5374
  %vm5376 = vweird.f32 %v5339
  %vm5377 = vweird.f32 %v5371
  %vm5378 = vmor %vm5376, %vm5377
  %v5379 = vsel %vm5378, %v5371, %v5375
  %v5380 = vand.u32 2147483647, %v5339
  %vm5381 = vcmp.eq.f32.partialorder %v5380, 8.507059e+37
  %v5382 = vand.u32 %v5339, 2147483648
  %v5383 = vor.u32 1.1754944e-38, %v5382
  %v5384 = vsel %vm5381, %v5383, %v5379
  %v5385 = vmul.f32 1.0, %v5384
  %v5386 = vrcp.pop %v5340
  %v5387 = vmul.f32 %v5340, %v5386
  %v5388 = vsub.f32 1.0, %v5387
  %v5389 = vmul.f32 %v5386, %v5388
  %v5390 = vadd.f32 %v5386, %v5389
  %vm5391 = vweird.f32 %v5340
  %vm5392 = vweird.f32 %v5386
  %vm5393 = vmor %vm5391, %vm5392
  %v5394 = vsel %vm5393, %v5386, %v5390
  %v5395 = vand.u32 2147483647, %v5340
  %vm5396 = vcmp.eq.f32.partialorder %v5395, 8.507059e+37
  %v5397 = vand.u32 %v5340, 2147483648
  %v5398 = vor.u32 1.1754944e-38, %v5397
  %v5399 = vsel %vm5396, %v5398, %v5394
  %v5400 = vmul.f32 1.0, %v5399
  %v5401 = vadd.f32 %v5292, %v395
  %v5402 = vadd.f32 %v5318, %v396
  %v5403 = vmul.f32 %v5355, %v5401
  %v5404 = vmul.f32 %v5370, %v5402
  %v5405 = vadd.f32 %v5163, %v5403
  %v5406 = vadd.f32 %v5164, %v5404
  %v5407 = vtanh.pop %v5405
  %v5408 = vtanh.pop %v5406
  %v5409 = vsub.f32 1.0, %v5385
  %v5410 = vsub.f32 1.0, %v5400
  %v5411 = vmul.f32 %v5409, %v5407
  %v5412 = vmul.f32 %v5410, %v5408
  %v5413 = vmul.f32 %v5385, %v4806
  %v5414 = vmul.f32 %v5400, %v4807
  %v5415 = vadd.f32 %v5411, %v5413
  %v5416 = vadd.f32 %v5412, %v5414
  %5417 = vadd.xlane.f32.xlu0 %v5415
  %v5418 = vpop.xlane.xlu0 %5417
  %v5419 = vmul.f32 %v5418, %v1262
  %v5420 = vmul.f32 %v5415, %v5415
  %5421 = vadd.xlane.f32.xlu0 %v5420
  %v5422 = vpop.xlane.xlu0 %5421
  %v5423 = vmul.f32 %v5422, %v1262
  %v5424 = vmul.f32 %v5419, %v5419
  %v5425 = vsub.f32 %v5423, %v5424
  %v5426 = vsub.f32 %v5415, %v5419
  %v5427 = vadd.f32 %v5425, 1e-05
  %v5428 = vrsqrt.pop %v5427
  %v5429 = vmul.f32 %v5428, %v5427
  %v5430 = vmul.f32 %v5429, %v5428
  %v5431 = vmul.f32 0.5, %v5430
  %v5432 = vsub.f32 1.5, %v5431
  %v5433 = vmul.f32 %v5428, %v5432
  %vm5434 = vweird.f32 %v5427
  %vm5435 = vweird.f32 %v5428
  %vm5436 = vmor %vm5434, %vm5435
  %v5437 = vsel %vm5436, %v5428, %v5433
  %v5438 = vmul.f32 %v5426, %v5437
  %5439 = vadd.xlane.f32.xlu0 %v5416
  %v5440 = vpop.xlane.xlu0 %5439
  %v5441 = vmul.f32 %v5440, %v1262
  %v5442 = vmul.f32 %v5416, %v5416
  %5443 = vadd.xlane.f32.xlu0 %v5442
  %v5444 = vpop.xlane.xlu0 %5443
  %v5445 = vmul.f32 %v5444, %v1262
  %v5446 = vmul.f32 %v5441, %v5441
  %v5447 = vsub.f32 %v5445, %v5446
  %v5448 = vsub.f32 %v5416, %v5441
  %v5449 = vadd.f32 %v5447, 1e-05
  %v5450 = vrsqrt.pop %v5449
  %v5451 = vmul.f32 %v5450, %v5449
  %v5452 = vmul.f32 %v5451, %v5450
  %v5453 = vmul.f32 0.5, %v5452
  %v5454 = vsub.f32 1.5, %v5453
  %v5455 = vmul.f32 %v5450, %v5454
  %vm5456 = vweird.f32 %v5449
  %vm5457 = vweird.f32 %v5450
  %vm5458 = vmor %vm5456, %vm5457
  %v5459 = vsel %vm5458, %v5450, %v5455
  %v5460 = vmul.f32 %v5448, %v5459
  %v5461 = vmul.f32 %v5438, %v402
  %v5462 = vmul.f32 %v5460, %v403
  %v5463 = vadd.f32 %v5461, %v409
  %v5464 = vadd.f32 %v5462, %v410
  %v5465 = vpack.c.bf16 %v5464, %v5463
  %v5466 = vpack.c.bf16 %v5155, %v5155
  %v5468 = vunpack.c.l.b16 %v5465
  %v5469 = vunpack.c.h.b16 %v5465
  %v5470 = vpack.c.b16 %v5468, %v5468
  %v5471 = vpack.c.b16 %v5469, %v5469
  %5474 = vmatpush.bf16.msra.mxu0 %v1935
  %5475 = vmatpush.bf16.msra.mxu0 %v1929
  %5476 = vmatpush.bf16.msra.mxu0 %v1923
  %5477 = vmatpush.bf16.msra.mxu0 %v1917
  %5478 = vmatpush.bf16.msra.mxu0 %v1911
  %5479 = vmatpush.bf16.msra.mxu0 %v1905
  %5480 = vmatpush.bf16.msra.mxu0 %v1899
  %5481 = vmatpush.bf16.msra.mxu0 %v1893
  %5482 = vmatmul.bf16.gmra.mxu0 %v5470
  %v5483 = vpop.f32.mrf.mxu0
  %v5484 = vadd.f32 %v380, %v5483
  %v5485 = vpop.f32.mrf.mxu0
  %5486 = vdwg.mxu0
  %5487 = vmatpush.bf16.msra.mxu0 %v1983
  %5488 = vmatpush.bf16.msra.mxu0 %v1977
  %5489 = vmatpush.bf16.msra.mxu0 %v1971
  %5490 = vmatpush.bf16.msra.mxu0 %v1965
  %5491 = vmatpush.bf16.msra.mxu0 %v1959
  %5492 = vmatpush.bf16.msra.mxu0 %v1953
  %5493 = vmatpush.bf16.msra.mxu0 %v1947
  %5494 = vmatpush.bf16.msra.mxu0 %v1941
  %5495 = vmatmul.bf16.gmra.mxu0 %v5471
  %v5496 = vpop.f32.mrf.mxu0
  %v5497 = vadd.f32 %v5484, %v5496
  %v5498 = vpop.f32.mrf.mxu0
  %5499 = vdwg.mxu0
  %5500 = vmatpush.bf16.msra.mxu0 %v2031
  %5501 = vmatpush.bf16.msra.mxu0 %v2025
  %5502 = vmatpush.bf16.msra.mxu0 %v2019
  %5503 = vmatpush.bf16.msra.mxu0 %v2013
  %5504 = vmatpush.bf16.msra.mxu0 %v2007
  %5505 = vmatpush.bf16.msra.mxu0 %v2001
  %5506 = vmatpush.bf16.msra.mxu0 %v1995
  %5507 = vmatpush.bf16.msra.mxu0 %v1989
  %5508 = vmatmul.bf16.gmra.mxu0 %v5466
  %v5509 = vpop.f32.mrf.mxu0
  %v5510 = vadd.f32 %v5497, %v5509
  %v5511 = vpop.f32.mrf.mxu0
  %5512 = vdwg.mxu0
  %5513 = vmatpush.bf16.msra.mxu0 %v1936
  %5514 = vmatpush.bf16.msra.mxu0 %v1930
  %5515 = vmatpush.bf16.msra.mxu0 %v1924
  %5516 = vmatpush.bf16.msra.mxu0 %v1918
  %5517 = vmatpush.bf16.msra.mxu0 %v1912
  %5518 = vmatpush.bf16.msra.mxu0 %v1906
  %5519 = vmatpush.bf16.msra.mxu0 %v1900
  %5520 = vmatpush.bf16.msra.mxu0 %v1894
  %5521 = vmatmul.bf16.gmra.mxu0 %v5470
  %v5522 = vpop.f32.mrf.mxu0
  %v5523 = vadd.f32 %v381, %v5522
  %v5524 = vpop.f32.mrf.mxu0
  %5525 = vdwg.mxu0
  %5526 = vmatpush.bf16.msra.mxu0 %v1984
  %5527 = vmatpush.bf16.msra.mxu0 %v1978
  %5528 = vmatpush.bf16.msra.mxu0 %v1972
  %5529 = vmatpush.bf16.msra.mxu0 %v1966
  %5530 = vmatpush.bf16.msra.mxu0 %v1960
  %5531 = vmatpush.bf16.msra.mxu0 %v1954
  %5532 = vmatpush.bf16.msra.mxu0 %v1948
  %5533 = vmatpush.bf16.msra.mxu0 %v1942
  %5534 = vmatmul.bf16.gmra.mxu0 %v5471
  %v5535 = vpop.f32.mrf.mxu0
  %v5536 = vadd.f32 %v5523, %v5535
  %v5537 = vpop.f32.mrf.mxu0
  %5538 = vdwg.mxu0
  %5539 = vmatpush.bf16.msra.mxu0 %v2032
  %5540 = vmatpush.bf16.msra.mxu0 %v2026
  %5541 = vmatpush.bf16.msra.mxu0 %v2020
  %5542 = vmatpush.bf16.msra.mxu0 %v2014
  %5543 = vmatpush.bf16.msra.mxu0 %v2008
  %5544 = vmatpush.bf16.msra.mxu0 %v2002
  %5545 = vmatpush.bf16.msra.mxu0 %v1996
  %5546 = vmatpush.bf16.msra.mxu0 %v1990
  %5547 = vmatmul.bf16.gmra.mxu0 %v5466
  %v5548 = vpop.f32.mrf.mxu0
  %v5549 = vadd.f32 %v5536, %v5548
  %v5550 = vpop.f32.mrf.mxu0
  %5551 = vdwg.mxu0
  %5552 = vmatpush.bf16.msra.mxu0 %v1937
  %5553 = vmatpush.bf16.msra.mxu0 %v1931
  %5554 = vmatpush.bf16.msra.mxu0 %v1925
  %5555 = vmatpush.bf16.msra.mxu0 %v1919
  %5556 = vmatpush.bf16.msra.mxu0 %v1913
  %5557 = vmatpush.bf16.msra.mxu0 %v1907
  %5558 = vmatpush.bf16.msra.mxu0 %v1901
  %5559 = vmatpush.bf16.msra.mxu0 %v1895
  %5560 = vmatmul.bf16.gmra.mxu0 %v5470
  %v5561 = vpop.f32.mrf.mxu0
  %v5562 = vadd.f32 %v382, %v5561
  %v5563 = vpop.f32.mrf.mxu0
  %5564 = vdwg.mxu0
  %5565 = vmatpush.bf16.msra.mxu0 %v1985
  %5566 = vmatpush.bf16.msra.mxu0 %v1979
  %5567 = vmatpush.bf16.msra.mxu0 %v1973
  %5568 = vmatpush.bf16.msra.mxu0 %v1967
  %5569 = vmatpush.bf16.msra.mxu0 %v1961
  %5570 = vmatpush.bf16.msra.mxu0 %v1955
  %5571 = vmatpush.bf16.msra.mxu0 %v1949
  %5572 = vmatpush.bf16.msra.mxu0 %v1943
  %5573 = vmatmul.bf16.gmra.mxu0 %v5471
  %v5574 = vpop.f32.mrf.mxu0
  %v5575 = vadd.f32 %v5562, %v5574
  %v5576 = vpop.f32.mrf.mxu0
  %5577 = vdwg.mxu0
  %5578 = vmatpush.bf16.msra.mxu0 %v2033
  %5579 = vmatpush.bf16.msra.mxu0 %v2027
  %5580 = vmatpush.bf16.msra.mxu0 %v2021
  %5581 = vmatpush.bf16.msra.mxu0 %v2015
  %5582 = vmatpush.bf16.msra.mxu0 %v2009
  %5583 = vmatpush.bf16.msra.mxu0 %v2003
  %5584 = vmatpush.bf16.msra.mxu0 %v1997
  %5585 = vmatpush.bf16.msra.mxu0 %v1991
  %5586 = vmatmul.bf16.gmra.mxu0 %v5466
  %v5587 = vpop.f32.mrf.mxu0
  %v5588 = vadd.f32 %v5575, %v5587
  %v5589 = vpop.f32.mrf.mxu0
  %5590 = vdwg.mxu0
  %5591 = vmatpush.bf16.msra.mxu0 %v1938
  %5592 = vmatpush.bf16.msra.mxu0 %v1932
  %5593 = vmatpush.bf16.msra.mxu0 %v1926
  %5594 = vmatpush.bf16.msra.mxu0 %v1920
  %5595 = vmatpush.bf16.msra.mxu0 %v1914
  %5596 = vmatpush.bf16.msra.mxu0 %v1908
  %5597 = vmatpush.bf16.msra.mxu0 %v1902
  %5598 = vmatpush.bf16.msra.mxu0 %v1896
  %5599 = vmatmul.bf16.gmra.mxu0 %v5470
  %v5600 = vpop.f32.mrf.mxu0
  %v5601 = vadd.f32 %v383, %v5600
  %v5602 = vpop.f32.mrf.mxu0
  %5603 = vdwg.mxu0
  %5604 = vmatpush.bf16.msra.mxu0 %v1986
  %5605 = vmatpush.bf16.msra.mxu0 %v1980
  %5606 = vmatpush.bf16.msra.mxu0 %v1974
  %5607 = vmatpush.bf16.msra.mxu0 %v1968
  %5608 = vmatpush.bf16.msra.mxu0 %v1962
  %5609 = vmatpush.bf16.msra.mxu0 %v1956
  %5610 = vmatpush.bf16.msra.mxu0 %v1950
  %5611 = vmatpush.bf16.msra.mxu0 %v1944
  %5612 = vmatmul.bf16.gmra.mxu0 %v5471
  %v5613 = vpop.f32.mrf.mxu0
  %v5614 = vadd.f32 %v5601, %v5613
  %v5615 = vpop.f32.mrf.mxu0
  %5616 = vdwg.mxu0
  %5617 = vmatpush.bf16.msra.mxu0 %v2034
  %5618 = vmatpush.bf16.msra.mxu0 %v2028
  %5619 = vmatpush.bf16.msra.mxu0 %v2022
  %5620 = vmatpush.bf16.msra.mxu0 %v2016
  %5621 = vmatpush.bf16.msra.mxu0 %v2010
  %5622 = vmatpush.bf16.msra.mxu0 %v2004
  %5623 = vmatpush.bf16.msra.mxu0 %v1998
  %5624 = vmatpush.bf16.msra.mxu0 %v1992
  %5625 = vmatmul.bf16.gmra.mxu0 %v5466
  %v5626 = vpop.f32.mrf.mxu0
  %v5627 = vadd.f32 %v5614, %v5626
  %v5628 = vpop.f32.mrf.mxu0
  %5629 = vdwg.mxu0
  %5630 = vmatpush.bf16.msra.mxu0 %v1939
  %5631 = vmatpush.bf16.msra.mxu0 %v1933
  %5632 = vmatpush.bf16.msra.mxu0 %v1927
  %5633 = vmatpush.bf16.msra.mxu0 %v1921
  %5634 = vmatpush.bf16.msra.mxu0 %v1915
  %5635 = vmatpush.bf16.msra.mxu0 %v1909
  %5636 = vmatpush.bf16.msra.mxu0 %v1903
  %5637 = vmatpush.bf16.msra.mxu0 %v1897
  %5638 = vmatmul.bf16.gmra.mxu0 %v5470
  %v5639 = vpop.f32.mrf.mxu0
  %v5640 = vadd.f32 %v384, %v5639
  %v5641 = vpop.f32.mrf.mxu0
  %5642 = vdwg.mxu0
  %5643 = vmatpush.bf16.msra.mxu0 %v1987
  %5644 = vmatpush.bf16.msra.mxu0 %v1981
  %5645 = vmatpush.bf16.msra.mxu0 %v1975
  %5646 = vmatpush.bf16.msra.mxu0 %v1969
  %5647 = vmatpush.bf16.msra.mxu0 %v1963
  %5648 = vmatpush.bf16.msra.mxu0 %v1957
  %5649 = vmatpush.bf16.msra.mxu0 %v1951
  %5650 = vmatpush.bf16.msra.mxu0 %v1945
  %5651 = vmatmul.bf16.gmra.mxu0 %v5471
  %v5652 = vpop.f32.mrf.mxu0
  %v5653 = vadd.f32 %v5640, %v5652
  %v5654 = vpop.f32.mrf.mxu0
  %5655 = vdwg.mxu0
  %5656 = vmatpush.bf16.msra.mxu0 %v2035
  %5657 = vmatpush.bf16.msra.mxu0 %v2029
  %5658 = vmatpush.bf16.msra.mxu0 %v2023
  %5659 = vmatpush.bf16.msra.mxu0 %v2017
  %5660 = vmatpush.bf16.msra.mxu0 %v2011
  %5661 = vmatpush.bf16.msra.mxu0 %v2005
  %5662 = vmatpush.bf16.msra.mxu0 %v1999
  %5663 = vmatpush.bf16.msra.mxu0 %v1993
  %5664 = vmatmul.bf16.gmra.mxu0 %v5466
  %v5665 = vpop.f32.mrf.mxu0
  %v5666 = vadd.f32 %v5653, %v5665
  %v5667 = vpop.f32.mrf.mxu0
  %5668 = vdwg.mxu0
  %5669 = vmatpush.bf16.msra.mxu0 %v1940
  %5670 = vmatpush.bf16.msra.mxu0 %v1934
  %5671 = vmatpush.bf16.msra.mxu0 %v1928
  %5672 = vmatpush.bf16.msra.mxu0 %v1922
  %5673 = vmatpush.bf16.msra.mxu0 %v1916
  %5674 = vmatpush.bf16.msra.mxu0 %v1910
  %5675 = vmatpush.bf16.msra.mxu0 %v1904
  %5676 = vmatpush.bf16.msra.mxu0 %v1898
  %5677 = vmatmul.bf16.gmra.mxu0 %v5470
  %v5678 = vpop.f32.mrf.mxu0
  %v5679 = vadd.f32 %v385, %v5678
  %v5680 = vpop.f32.mrf.mxu0
  %5681 = vdwg.mxu0
  %5682 = vmatpush.bf16.msra.mxu0 %v1988
  %5683 = vmatpush.bf16.msra.mxu0 %v1982
  %5684 = vmatpush.bf16.msra.mxu0 %v1976
  %5685 = vmatpush.bf16.msra.mxu0 %v1970
  %5686 = vmatpush.bf16.msra.mxu0 %v1964
  %5687 = vmatpush.bf16.msra.mxu0 %v1958
  %5688 = vmatpush.bf16.msra.mxu0 %v1952
  %5689 = vmatpush.bf16.msra.mxu0 %v1946
  %5690 = vmatmul.bf16.gmra.mxu0 %v5471
  %v5691 = vpop.f32.mrf.mxu0
  %v5692 = vadd.f32 %v5679, %v5691
  %v5693 = vpop.f32.mrf.mxu0
  %5694 = vdwg.mxu0
  %5695 = vmatpush.bf16.msra.mxu0 %v2036
  %5696 = vmatpush.bf16.msra.mxu0 %v2030
  %5697 = vmatpush.bf16.msra.mxu0 %v2024
  %5698 = vmatpush.bf16.msra.mxu0 %v2018
  %5699 = vmatpush.bf16.msra.mxu0 %v2012
  %5700 = vmatpush.bf16.msra.mxu0 %v2006
  %5701 = vmatpush.bf16.msra.mxu0 %v2000
  %5702 = vmatpush.bf16.msra.mxu0 %v1994
  %5703 = vmatmul.bf16.gmra.mxu0 %v5466
  %v5704 = vpop.f32.mrf.mxu0
  %v5705 = vadd.f32 %v5692, %v5704
  %v5706 = vpop.f32.mrf.mxu0
  %5707 = vdwg.mxu0
  %v5708 = vadd.f32 %v5510, %v5627
  %v5709 = vadd.f32 %v5549, %v5666
  %v5710 = vxor.u32 %v5708, 2147483648
  %v5711 = vxor.u32 %v5709, 2147483648
  %v5712 = vmul.f32 %v5710, 1.442695
  %v5713 = vpow.pop %v5712
  %v5714 = vmul.f32 %v5711, 1.442695
  %v5715 = vpow.pop %v5714
  %v5716 = vadd.f32 %v5713, 1.0
  %v5717 = vadd.f32 %v5715, 1.0
  %v5718 = vrcp.pop %v5716
  %v5719 = vmul.f32 %v5716, %v5718
  %v5720 = vsub.f32 1.0, %v5719
  %v5721 = vmul.f32 %v5718, %v5720
  %v5722 = vadd.f32 %v5718, %v5721
  %vm5723 = vweird.f32 %v5716
  %vm5724 = vweird.f32 %v5718
  %vm5725 = vmor %vm5723, %vm5724
  %v5726 = vsel %vm5725, %v5718, %v5722
  %v5727 = vand.u32 2147483647, %v5716
  %vm5728 = vcmp.eq.f32.partialorder %v5727, 8.507059e+37
  %v5729 = vand.u32 %v5716, 2147483648
  %v5730 = vor.u32 1.1754944e-38, %v5729
  %v5731 = vsel %vm5728, %v5730, %v5726
  %v5732 = vmul.f32 1.0, %v5731
  %v5733 = vrcp.pop %v5717
  %v5734 = vmul.f32 %v5717, %v5733
  %v5735 = vsub.f32 1.0, %v5734
  %v5736 = vmul.f32 %v5733, %v5735
  %v5737 = vadd.f32 %v5733, %v5736
  %vm5738 = vweird.f32 %v5717
  %vm5739 = vweird.f32 %v5733
  %vm5740 = vmor %vm5738, %vm5739
  %v5741 = vsel %vm5740, %v5733, %v5737
  %v5742 = vand.u32 2147483647, %v5717
  %vm5743 = vcmp.eq.f32.partialorder %v5742, 8.507059e+37
  %v5744 = vand.u32 %v5717, 2147483648
  %v5745 = vor.u32 1.1754944e-38, %v5744
  %v5746 = vsel %vm5743, %v5745, %v5741
  %v5747 = vmul.f32 1.0, %v5746
  %v5748 = vmul.f32 %v5732, %v5705
  %v5749 = vadd.f32 %v5588, %v5748
  %v5750 = vtanh.pop %v5749
  %v5751 = vsub.f32 1.0, %v5747
  %v5752 = vmul.f32 %v5751, %v5750
  %v5753 = vmul.f32 %v5747, %v5155
  %v5754 = vadd.f32 %v5752, %v5753
  %v5755 = vsel %vm2462, %v5754, 0.0
  %5756 = vadd.xlane.f32.xlu0 %v5755
  %v5757 = vpop.xlane.xlu0 %5756
  %v5758 = vmul.f32 %v5757, %v2472
  %v5759 = vmul.f32 %v5754, %v5754
  %v5760 = vsel %vm2462, %v5759, 0.0
  %5761 = vadd.xlane.f32.xlu0 %v5760
  %v5762 = vpop.xlane.xlu0 %5761
  %v5763 = vmul.f32 %v5762, %v2472
  %v5764 = vmul.f32 %v5758, %v5758
  %v5765 = vsub.f32 %v5763, %v5764
  %v5766 = vsub.f32 %v5754, %v5758
  %v5767 = vadd.f32 %v5765, 1e-05
  %v5768 = vrsqrt.pop %v5767
  %v5769 = vmul.f32 %v5768, %v5767
  %v5770 = vmul.f32 %v5769, %v5768
  %v5771 = vmul.f32 0.5, %v5770
  %v5772 = vsub.f32 1.5, %v5771
  %v5773 = vmul.f32 %v5768, %v5772
  %vm5774 = vweird.f32 %v5767
  %vm5775 = vweird.f32 %v5768
  %vm5776 = vmor %vm5774, %vm5775
  %v5777 = vsel %vm5776, %v5768, %v5773
  %v5778 = vmul.f32 %v5766, %v5777
  %5780 = vrot.lane.b32.xlu0 %v5754, 64
  %v5781 = vpop.permute.xlu0 %5780
  %v5783 = vsel %vm2462, %v5781, 0.0
  %5784 = vadd.xlane.f32.xlu0 %v5783
  %v5785 = vpop.xlane.xlu0 %5784
  %v5786 = vmul.f32 %v5785, %v2472
  %5788 = vrot.lane.b32.xlu0 %v5759, 64
  %v5789 = vpop.permute.xlu0 %5788
  %v5791 = vsel %vm2462, %v5789, 0.0
  %5792 = vadd.xlane.f32.xlu0 %v5791
  %v5793 = vpop.xlane.xlu0 %5792
  %v5794 = vmul.f32 %v5793, %v2472
  %v5795 = vmul.f32 %v5786, %v5786
  %v5796 = vsub.f32 %v5794, %v5795
  %v5797 = vsub.f32 %v5754, %v5786
  %v5798 = vadd.f32 %v5796, 1e-05
  %v5799 = vrsqrt.pop %v5798
  %v5800 = vmul.f32 %v5799, %v5798
  %v5801 = vmul.f32 %v5800, %v5799
  %v5802 = vmul.f32 0.5, %v5801
  %v5803 = vsub.f32 1.5, %v5802
  %v5804 = vmul.f32 %v5799, %v5803
  %vm5805 = vweird.f32 %v5798
  %vm5806 = vweird.f32 %v5799
  %vm5807 = vmor %vm5805, %vm5806
  %v5808 = vsel %vm5807, %v5799, %v5804
  %v5809 = vmul.f32 %v5797, %v5808
  %v5810 = vsel %vm2462, %v5778, %v5809
  %v5811 = vmul.f32 %v5810, %v413
  %v5812 = vadd.f32 %v5811, %v414
  %s5813 = smul.u32 6, 6
  %s5814 = smul.addr %s5813, 8
  %s5815 = scalar_lea.vmem [#allocation2], %s5814
  %v5816 = vld [vmem:[%s5815] sm:$0xff]
  %v5817 = vld [vmem:[%s5815 + $0x8] sm:$0xff]
  %v5818 = vld [vmem:[%s5815 + $0x10] sm:$0xff]
  %v5819 = vld [vmem:[%s5815 + $0x18] sm:$0xff]
  %v5820 = vld [vmem:[%s5815 + $0x20] sm:$0xff]
  %v5821 = vld [vmem:[%s5815 + $0x28] sm:$0xff]
  %5822 = vmatpush.bf16.msra.mxu0 %v852
  %5823 = vmatpush.bf16.msra.mxu0 %v846
  %5824 = vmatpush.bf16.msra.mxu0 %v840
  %5825 = vmatpush.bf16.msra.mxu0 %v834
  %5826 = vmatpush.bf16.msra.mxu0 %v828
  %5827 = vmatpush.bf16.msra.mxu0 %v822
  %5828 = vmatpush.bf16.msra.mxu0 %v816
  %5829 = vmatpush.bf16.msra.mxu0 %v810
  %5830 = vmatmul.bf16.gmra.mxu0 %v5470
  %v5831 = vpop.f32.mrf.mxu0
  %v5832 = vadd.f32 0.0, %v5831
  %v5833 = vpop.f32.mrf.mxu0
  %5834 = vdwg.mxu0
  %5835 = vmatpush.bf16.msra.mxu0 %v900
  %5836 = vmatpush.bf16.msra.mxu0 %v894
  %5837 = vmatpush.bf16.msra.mxu0 %v888
  %5838 = vmatpush.bf16.msra.mxu0 %v882
  %5839 = vmatpush.bf16.msra.mxu0 %v876
  %5840 = vmatpush.bf16.msra.mxu0 %v870
  %5841 = vmatpush.bf16.msra.mxu0 %v864
  %5842 = vmatpush.bf16.msra.mxu0 %v858
  %5843 = vmatmul.bf16.gmra.mxu0 %v5471
  %v5844 = vpop.f32.mrf.mxu0
  %v5845 = vadd.f32 %v5832, %v5844
  %v5846 = vpop.f32.mrf.mxu0
  %5847 = vdwg.mxu0
  %5848 = vmatpush.bf16.msra.mxu0 %v853
  %5849 = vmatpush.bf16.msra.mxu0 %v847
  %5850 = vmatpush.bf16.msra.mxu0 %v841
  %5851 = vmatpush.bf16.msra.mxu0 %v835
  %5852 = vmatpush.bf16.msra.mxu0 %v829
  %5853 = vmatpush.bf16.msra.mxu0 %v823
  %5854 = vmatpush.bf16.msra.mxu0 %v817
  %5855 = vmatpush.bf16.msra.mxu0 %v811
  %5856 = vmatmul.bf16.gmra.mxu0 %v5470
  %v5857 = vpop.f32.mrf.mxu0
  %v5858 = vadd.f32 0.0, %v5857
  %v5859 = vpop.f32.mrf.mxu0
  %5860 = vdwg.mxu0
  %5861 = vmatpush.bf16.msra.mxu0 %v901
  %5862 = vmatpush.bf16.msra.mxu0 %v895
  %5863 = vmatpush.bf16.msra.mxu0 %v889
  %5864 = vmatpush.bf16.msra.mxu0 %v883
  %5865 = vmatpush.bf16.msra.mxu0 %v877
  %5866 = vmatpush.bf16.msra.mxu0 %v871
  %5867 = vmatpush.bf16.msra.mxu0 %v865
  %5868 = vmatpush.bf16.msra.mxu0 %v859
  %5869 = vmatmul.bf16.gmra.mxu0 %v5471
  %v5870 = vpop.f32.mrf.mxu0
  %v5871 = vadd.f32 %v5858, %v5870
  %v5872 = vpop.f32.mrf.mxu0
  %5873 = vdwg.mxu0
  %5874 = vmatpush.bf16.msra.mxu0 %v854
  %5875 = vmatpush.bf16.msra.mxu0 %v848
  %5876 = vmatpush.bf16.msra.mxu0 %v842
  %5877 = vmatpush.bf16.msra.mxu0 %v836
  %5878 = vmatpush.bf16.msra.mxu0 %v830
  %5879 = vmatpush.bf16.msra.mxu0 %v824
  %5880 = vmatpush.bf16.msra.mxu0 %v818
  %5881 = vmatpush.bf16.msra.mxu0 %v812
  %5882 = vmatmul.bf16.gmra.mxu0 %v5470
  %v5883 = vpop.f32.mrf.mxu0
  %v5884 = vadd.f32 0.0, %v5883
  %v5885 = vpop.f32.mrf.mxu0
  %5886 = vdwg.mxu0
  %5887 = vmatpush.bf16.msra.mxu0 %v902
  %5888 = vmatpush.bf16.msra.mxu0 %v896
  %5889 = vmatpush.bf16.msra.mxu0 %v890
  %5890 = vmatpush.bf16.msra.mxu0 %v884
  %5891 = vmatpush.bf16.msra.mxu0 %v878
  %5892 = vmatpush.bf16.msra.mxu0 %v872
  %5893 = vmatpush.bf16.msra.mxu0 %v866
  %5894 = vmatpush.bf16.msra.mxu0 %v860
  %5895 = vmatmul.bf16.gmra.mxu0 %v5471
  %v5896 = vpop.f32.mrf.mxu0
  %v5897 = vadd.f32 %v5884, %v5896
  %v5898 = vpop.f32.mrf.mxu0
  %5899 = vdwg.mxu0
  %5900 = vmatpush.bf16.msra.mxu0 %v855
  %5901 = vmatpush.bf16.msra.mxu0 %v849
  %5902 = vmatpush.bf16.msra.mxu0 %v843
  %5903 = vmatpush.bf16.msra.mxu0 %v837
  %5904 = vmatpush.bf16.msra.mxu0 %v831
  %5905 = vmatpush.bf16.msra.mxu0 %v825
  %5906 = vmatpush.bf16.msra.mxu0 %v819
  %5907 = vmatpush.bf16.msra.mxu0 %v813
  %5908 = vmatmul.bf16.gmra.mxu0 %v5470
  %v5909 = vpop.f32.mrf.mxu0
  %v5910 = vadd.f32 0.0, %v5909
  %v5911 = vpop.f32.mrf.mxu0
  %5912 = vdwg.mxu0
  %5913 = vmatpush.bf16.msra.mxu0 %v903
  %5914 = vmatpush.bf16.msra.mxu0 %v897
  %5915 = vmatpush.bf16.msra.mxu0 %v891
  %5916 = vmatpush.bf16.msra.mxu0 %v885
  %5917 = vmatpush.bf16.msra.mxu0 %v879
  %5918 = vmatpush.bf16.msra.mxu0 %v873
  %5919 = vmatpush.bf16.msra.mxu0 %v867
  %5920 = vmatpush.bf16.msra.mxu0 %v861
  %5921 = vmatmul.bf16.gmra.mxu0 %v5471
  %v5922 = vpop.f32.mrf.mxu0
  %v5923 = vadd.f32 %v5910, %v5922
  %v5924 = vpop.f32.mrf.mxu0
  %5925 = vdwg.mxu0
  %5926 = vmatpush.bf16.msra.mxu0 %v856
  %5927 = vmatpush.bf16.msra.mxu0 %v850
  %5928 = vmatpush.bf16.msra.mxu0 %v844
  %5929 = vmatpush.bf16.msra.mxu0 %v838
  %5930 = vmatpush.bf16.msra.mxu0 %v832
  %5931 = vmatpush.bf16.msra.mxu0 %v826
  %5932 = vmatpush.bf16.msra.mxu0 %v820
  %5933 = vmatpush.bf16.msra.mxu0 %v814
  %5934 = vmatmul.bf16.gmra.mxu0 %v5470
  %v5935 = vpop.f32.mrf.mxu0
  %v5936 = vadd.f32 0.0, %v5935
  %v5937 = vpop.f32.mrf.mxu0
  %5938 = vdwg.mxu0
  %5939 = vmatpush.bf16.msra.mxu0 %v904
  %5940 = vmatpush.bf16.msra.mxu0 %v898
  %5941 = vmatpush.bf16.msra.mxu0 %v892
  %5942 = vmatpush.bf16.msra.mxu0 %v886
  %5943 = vmatpush.bf16.msra.mxu0 %v880
  %5944 = vmatpush.bf16.msra.mxu0 %v874
  %5945 = vmatpush.bf16.msra.mxu0 %v868
  %5946 = vmatpush.bf16.msra.mxu0 %v862
  %5947 = vmatmul.bf16.gmra.mxu0 %v5471
  %v5948 = vpop.f32.mrf.mxu0
  %v5949 = vadd.f32 %v5936, %v5948
  %v5950 = vpop.f32.mrf.mxu0
  %5951 = vdwg.mxu0
  %5952 = vmatpush.bf16.msra.mxu0 %v857
  %5953 = vmatpush.bf16.msra.mxu0 %v851
  %5954 = vmatpush.bf16.msra.mxu0 %v845
  %5955 = vmatpush.bf16.msra.mxu0 %v839
  %5956 = vmatpush.bf16.msra.mxu0 %v833
  %5957 = vmatpush.bf16.msra.mxu0 %v827
  %5958 = vmatpush.bf16.msra.mxu0 %v821
  %5959 = vmatpush.bf16.msra.mxu0 %v815
  %5960 = vmatmul.bf16.gmra.mxu0 %v5470
  %v5961 = vpop.f32.mrf.mxu0
  %v5962 = vadd.f32 0.0, %v5961
  %v5963 = vpop.f32.mrf.mxu0
  %5964 = vdwg.mxu0
  %5965 = vmatpush.bf16.msra.mxu0 %v905
  %5966 = vmatpush.bf16.msra.mxu0 %v899
  %5967 = vmatpush.bf16.msra.mxu0 %v893
  %5968 = vmatpush.bf16.msra.mxu0 %v887
  %5969 = vmatpush.bf16.msra.mxu0 %v881
  %5970 = vmatpush.bf16.msra.mxu0 %v875
  %5971 = vmatpush.bf16.msra.mxu0 %v869
  %5972 = vmatpush.bf16.msra.mxu0 %v863
  %5973 = vmatmul.bf16.gmra.mxu0 %v5471
  %v5974 = vpop.f32.mrf.mxu0
  %v5975 = vadd.f32 %v5962, %v5974
  %v5976 = vpop.f32.mrf.mxu0
  %5977 = vdwg.mxu0
  %v5978 = vadd.f32 %v5816, %v5845
  %v5979 = vadd.f32 %v5817, %v5871
  %v5980 = vadd.f32 %v5818, %v5897
  %v5981 = vadd.f32 %v5819, %v5923
  %v5982 = vxor.u32 %v5978, 2147483648
  %v5983 = vxor.u32 %v5979, 2147483648
  %v5984 = vxor.u32 %v5980, 2147483648
  %v5985 = vxor.u32 %v5981, 2147483648
  %v5986 = vmul.f32 %v5982, 1.442695
  %v5987 = vpow.pop %v5986
  %v5988 = vmul.f32 %v5983, 1.442695
  %v5989 = vpow.pop %v5988
  %v5990 = vmul.f32 %v5984, 1.442695
  %v5991 = vpow.pop %v5990
  %v5992 = vmul.f32 %v5985, 1.442695
  %v5993 = vpow.pop %v5992
  %v5994 = vadd.f32 %v5987, 1.0
  %v5995 = vadd.f32 %v5989, 1.0
  %v5996 = vadd.f32 %v5991, 1.0
  %v5997 = vadd.f32 %v5993, 1.0
  %v5998 = vrcp.pop %v5994
  %v5999 = vmul.f32 %v5994, %v5998
  %v6000 = vsub.f32 1.0, %v5999
  %v6001 = vmul.f32 %v5998, %v6000
  %v6002 = vadd.f32 %v5998, %v6001
  %vm6003 = vweird.f32 %v5994
  %vm6004 = vweird.f32 %v5998
  %vm6005 = vmor %vm6003, %vm6004
  %v6006 = vsel %vm6005, %v5998, %v6002
  %v6007 = vand.u32 2147483647, %v5994
  %vm6008 = vcmp.eq.f32.partialorder %v6007, 8.507059e+37
  %v6009 = vand.u32 %v5994, 2147483648
  %v6010 = vor.u32 1.1754944e-38, %v6009
  %v6011 = vsel %vm6008, %v6010, %v6006
  %v6012 = vmul.f32 1.0, %v6011
  %v6013 = vrcp.pop %v5995
  %v6014 = vmul.f32 %v5995, %v6013
  %v6015 = vsub.f32 1.0, %v6014
  %v6016 = vmul.f32 %v6013, %v6015
  %v6017 = vadd.f32 %v6013, %v6016
  %vm6018 = vweird.f32 %v5995
  %vm6019 = vweird.f32 %v6013
  %vm6020 = vmor %vm6018, %vm6019
  %v6021 = vsel %vm6020, %v6013, %v6017
  %v6022 = vand.u32 2147483647, %v5995
  %vm6023 = vcmp.eq.f32.partialorder %v6022, 8.507059e+37
  %v6024 = vand.u32 %v5995, 2147483648
  %v6025 = vor.u32 1.1754944e-38, %v6024
  %v6026 = vsel %vm6023, %v6025, %v6021
  %v6027 = vmul.f32 1.0, %v6026
  %v6028 = vrcp.pop %v5996
  %v6029 = vmul.f32 %v5996, %v6028
  %v6030 = vsub.f32 1.0, %v6029
  %v6031 = vmul.f32 %v6028, %v6030
  %v6032 = vadd.f32 %v6028, %v6031
  %vm6033 = vweird.f32 %v5996
  %vm6034 = vweird.f32 %v6028
  %vm6035 = vmor %vm6033, %vm6034
  %v6036 = vsel %vm6035, %v6028, %v6032
  %v6037 = vand.u32 2147483647, %v5996
  %vm6038 = vcmp.eq.f32.partialorder %v6037, 8.507059e+37
  %v6039 = vand.u32 %v5996, 2147483648
  %v6040 = vor.u32 1.1754944e-38, %v6039
  %v6041 = vsel %vm6038, %v6040, %v6036
  %v6042 = vmul.f32 1.0, %v6041
  %v6043 = vrcp.pop %v5997
  %v6044 = vmul.f32 %v5997, %v6043
  %v6045 = vsub.f32 1.0, %v6044
  %v6046 = vmul.f32 %v6043, %v6045
  %v6047 = vadd.f32 %v6043, %v6046
  %vm6048 = vweird.f32 %v5997
  %vm6049 = vweird.f32 %v6043
  %vm6050 = vmor %vm6048, %vm6049
  %v6051 = vsel %vm6050, %v6043, %v6047
  %v6052 = vand.u32 2147483647, %v5997
  %vm6053 = vcmp.eq.f32.partialorder %v6052, 8.507059e+37
  %v6054 = vand.u32 %v5997, 2147483648
  %v6055 = vor.u32 1.1754944e-38, %v6054
  %v6056 = vsel %vm6053, %v6055, %v6051
  %v6057 = vmul.f32 1.0, %v6056
  %v6058 = vadd.f32 %v5949, %v395
  %v6059 = vadd.f32 %v5975, %v396
  %v6060 = vmul.f32 %v6012, %v6058
  %v6061 = vmul.f32 %v6027, %v6059
  %v6062 = vadd.f32 %v5820, %v6060
  %v6063 = vadd.f32 %v5821, %v6061
  %v6064 = vtanh.pop %v6062
  %v6065 = vtanh.pop %v6063
  %v6066 = vsub.f32 1.0, %v6042
  %v6067 = vsub.f32 1.0, %v6057
  %v6068 = vmul.f32 %v6066, %v6064
  %v6069 = vmul.f32 %v6067, %v6065
  %v6070 = vmul.f32 %v6042, %v5463
  %v6071 = vmul.f32 %v6057, %v5464
  %v6072 = vadd.f32 %v6068, %v6070
  %v6073 = vadd.f32 %v6069, %v6071
  %6074 = vadd.xlane.f32.xlu0 %v6072
  %v6075 = vpop.xlane.xlu0 %6074
  %v6076 = vmul.f32 %v6075, %v1262
  %v6077 = vmul.f32 %v6072, %v6072
  %6078 = vadd.xlane.f32.xlu0 %v6077
  %v6079 = vpop.xlane.xlu0 %6078
  %v6080 = vmul.f32 %v6079, %v1262
  %v6081 = vmul.f32 %v6076, %v6076
  %v6082 = vsub.f32 %v6080, %v6081
  %v6083 = vsub.f32 %v6072, %v6076
  %v6084 = vadd.f32 %v6082, 1e-05
  %v6085 = vrsqrt.pop %v6084
  %v6086 = vmul.f32 %v6085, %v6084
  %v6087 = vmul.f32 %v6086, %v6085
  %v6088 = vmul.f32 0.5, %v6087
  %v6089 = vsub.f32 1.5, %v6088
  %v6090 = vmul.f32 %v6085, %v6089
  %vm6091 = vweird.f32 %v6084
  %vm6092 = vweird.f32 %v6085
  %vm6093 = vmor %vm6091, %vm6092
  %v6094 = vsel %vm6093, %v6085, %v6090
  %v6095 = vmul.f32 %v6083, %v6094
  %6096 = vadd.xlane.f32.xlu0 %v6073
  %v6097 = vpop.xlane.xlu0 %6096
  %v6098 = vmul.f32 %v6097, %v1262
  %v6099 = vmul.f32 %v6073, %v6073
  %6100 = vadd.xlane.f32.xlu0 %v6099
  %v6101 = vpop.xlane.xlu0 %6100
  %v6102 = vmul.f32 %v6101, %v1262
  %v6103 = vmul.f32 %v6098, %v6098
  %v6104 = vsub.f32 %v6102, %v6103
  %v6105 = vsub.f32 %v6073, %v6098
  %v6106 = vadd.f32 %v6104, 1e-05
  %v6107 = vrsqrt.pop %v6106
  %v6108 = vmul.f32 %v6107, %v6106
  %v6109 = vmul.f32 %v6108, %v6107
  %v6110 = vmul.f32 0.5, %v6109
  %v6111 = vsub.f32 1.5, %v6110
  %v6112 = vmul.f32 %v6107, %v6111
  %vm6113 = vweird.f32 %v6106
  %vm6114 = vweird.f32 %v6107
  %vm6115 = vmor %vm6113, %vm6114
  %v6116 = vsel %vm6115, %v6107, %v6112
  %v6117 = vmul.f32 %v6105, %v6116
  %v6118 = vmul.f32 %v6095, %v402
  %v6119 = vmul.f32 %v6117, %v403
  %v6120 = vadd.f32 %v6118, %v409
  %v6121 = vadd.f32 %v6119, %v410
  %v6122 = vpack.c.bf16 %v6121, %v6120
  %v6123 = vpack.c.bf16 %v5812, %v5812
  %v6125 = vunpack.c.l.b16 %v6122
  %v6126 = vunpack.c.h.b16 %v6122
  %v6127 = vpack.c.b16 %v6125, %v6125
  %v6128 = vpack.c.b16 %v6126, %v6126
  %6131 = vmatpush.bf16.msra.mxu0 %v1935
  %6132 = vmatpush.bf16.msra.mxu0 %v1929
  %6133 = vmatpush.bf16.msra.mxu0 %v1923
  %6134 = vmatpush.bf16.msra.mxu0 %v1917
  %6135 = vmatpush.bf16.msra.mxu0 %v1911
  %6136 = vmatpush.bf16.msra.mxu0 %v1905
  %6137 = vmatpush.bf16.msra.mxu0 %v1899
  %6138 = vmatpush.bf16.msra.mxu0 %v1893
  %6139 = vmatmul.bf16.gmra.mxu0 %v6127
  %v6140 = vpop.f32.mrf.mxu0
  %v6141 = vadd.f32 %v380, %v6140
  %v6142 = vpop.f32.mrf.mxu0
  %6143 = vdwg.mxu0
  %6144 = vmatpush.bf16.msra.mxu0 %v1983
  %6145 = vmatpush.bf16.msra.mxu0 %v1977
  %6146 = vmatpush.bf16.msra.mxu0 %v1971
  %6147 = vmatpush.bf16.msra.mxu0 %v1965
  %6148 = vmatpush.bf16.msra.mxu0 %v1959
  %6149 = vmatpush.bf16.msra.mxu0 %v1953
  %6150 = vmatpush.bf16.msra.mxu0 %v1947
  %6151 = vmatpush.bf16.msra.mxu0 %v1941
  %6152 = vmatmul.bf16.gmra.mxu0 %v6128
  %v6153 = vpop.f32.mrf.mxu0
  %v6154 = vadd.f32 %v6141, %v6153
  %v6155 = vpop.f32.mrf.mxu0
  %6156 = vdwg.mxu0
  %6157 = vmatpush.bf16.msra.mxu0 %v2031
  %6158 = vmatpush.bf16.msra.mxu0 %v2025
  %6159 = vmatpush.bf16.msra.mxu0 %v2019
  %6160 = vmatpush.bf16.msra.mxu0 %v2013
  %6161 = vmatpush.bf16.msra.mxu0 %v2007
  %6162 = vmatpush.bf16.msra.mxu0 %v2001
  %6163 = vmatpush.bf16.msra.mxu0 %v1995
  %6164 = vmatpush.bf16.msra.mxu0 %v1989
  %6165 = vmatmul.bf16.gmra.mxu0 %v6123
  %v6166 = vpop.f32.mrf.mxu0
  %v6167 = vadd.f32 %v6154, %v6166
  %v6168 = vpop.f32.mrf.mxu0
  %6169 = vdwg.mxu0
  %6170 = vmatpush.bf16.msra.mxu0 %v1936
  %6171 = vmatpush.bf16.msra.mxu0 %v1930
  %6172 = vmatpush.bf16.msra.mxu0 %v1924
  %6173 = vmatpush.bf16.msra.mxu0 %v1918
  %6174 = vmatpush.bf16.msra.mxu0 %v1912
  %6175 = vmatpush.bf16.msra.mxu0 %v1906
  %6176 = vmatpush.bf16.msra.mxu0 %v1900
  %6177 = vmatpush.bf16.msra.mxu0 %v1894
  %6178 = vmatmul.bf16.gmra.mxu0 %v6127
  %v6179 = vpop.f32.mrf.mxu0
  %v6180 = vadd.f32 %v381, %v6179
  %v6181 = vpop.f32.mrf.mxu0
  %6182 = vdwg.mxu0
  %6183 = vmatpush.bf16.msra.mxu0 %v1984
  %6184 = vmatpush.bf16.msra.mxu0 %v1978
  %6185 = vmatpush.bf16.msra.mxu0 %v1972
  %6186 = vmatpush.bf16.msra.mxu0 %v1966
  %6187 = vmatpush.bf16.msra.mxu0 %v1960
  %6188 = vmatpush.bf16.msra.mxu0 %v1954
  %6189 = vmatpush.bf16.msra.mxu0 %v1948
  %6190 = vmatpush.bf16.msra.mxu0 %v1942
  %6191 = vmatmul.bf16.gmra.mxu0 %v6128
  %v6192 = vpop.f32.mrf.mxu0
  %v6193 = vadd.f32 %v6180, %v6192
  %v6194 = vpop.f32.mrf.mxu0
  %6195 = vdwg.mxu0
  %6196 = vmatpush.bf16.msra.mxu0 %v2032
  %6197 = vmatpush.bf16.msra.mxu0 %v2026
  %6198 = vmatpush.bf16.msra.mxu0 %v2020
  %6199 = vmatpush.bf16.msra.mxu0 %v2014
  %6200 = vmatpush.bf16.msra.mxu0 %v2008
  %6201 = vmatpush.bf16.msra.mxu0 %v2002
  %6202 = vmatpush.bf16.msra.mxu0 %v1996
  %6203 = vmatpush.bf16.msra.mxu0 %v1990
  %6204 = vmatmul.bf16.gmra.mxu0 %v6123
  %v6205 = vpop.f32.mrf.mxu0
  %v6206 = vadd.f32 %v6193, %v6205
  %v6207 = vpop.f32.mrf.mxu0
  %6208 = vdwg.mxu0
  %6209 = vmatpush.bf16.msra.mxu0 %v1937
  %6210 = vmatpush.bf16.msra.mxu0 %v1931
  %6211 = vmatpush.bf16.msra.mxu0 %v1925
  %6212 = vmatpush.bf16.msra.mxu0 %v1919
  %6213 = vmatpush.bf16.msra.mxu0 %v1913
  %6214 = vmatpush.bf16.msra.mxu0 %v1907
  %6215 = vmatpush.bf16.msra.mxu0 %v1901
  %6216 = vmatpush.bf16.msra.mxu0 %v1895
  %6217 = vmatmul.bf16.gmra.mxu0 %v6127
  %v6218 = vpop.f32.mrf.mxu0
  %v6219 = vadd.f32 %v382, %v6218
  %v6220 = vpop.f32.mrf.mxu0
  %6221 = vdwg.mxu0
  %6222 = vmatpush.bf16.msra.mxu0 %v1985
  %6223 = vmatpush.bf16.msra.mxu0 %v1979
  %6224 = vmatpush.bf16.msra.mxu0 %v1973
  %6225 = vmatpush.bf16.msra.mxu0 %v1967
  %6226 = vmatpush.bf16.msra.mxu0 %v1961
  %6227 = vmatpush.bf16.msra.mxu0 %v1955
  %6228 = vmatpush.bf16.msra.mxu0 %v1949
  %6229 = vmatpush.bf16.msra.mxu0 %v1943
  %6230 = vmatmul.bf16.gmra.mxu0 %v6128
  %v6231 = vpop.f32.mrf.mxu0
  %v6232 = vadd.f32 %v6219, %v6231
  %v6233 = vpop.f32.mrf.mxu0
  %6234 = vdwg.mxu0
  %6235 = vmatpush.bf16.msra.mxu0 %v2033
  %6236 = vmatpush.bf16.msra.mxu0 %v2027
  %6237 = vmatpush.bf16.msra.mxu0 %v2021
  %6238 = vmatpush.bf16.msra.mxu0 %v2015
  %6239 = vmatpush.bf16.msra.mxu0 %v2009
  %6240 = vmatpush.bf16.msra.mxu0 %v2003
  %6241 = vmatpush.bf16.msra.mxu0 %v1997
  %6242 = vmatpush.bf16.msra.mxu0 %v1991
  %6243 = vmatmul.bf16.gmra.mxu0 %v6123
  %v6244 = vpop.f32.mrf.mxu0
  %v6245 = vadd.f32 %v6232, %v6244
  %v6246 = vpop.f32.mrf.mxu0
  %6247 = vdwg.mxu0
  %6248 = vmatpush.bf16.msra.mxu0 %v1938
  %6249 = vmatpush.bf16.msra.mxu0 %v1932
  %6250 = vmatpush.bf16.msra.mxu0 %v1926
  %6251 = vmatpush.bf16.msra.mxu0 %v1920
  %6252 = vmatpush.bf16.msra.mxu0 %v1914
  %6253 = vmatpush.bf16.msra.mxu0 %v1908
  %6254 = vmatpush.bf16.msra.mxu0 %v1902
  %6255 = vmatpush.bf16.msra.mxu0 %v1896
  %6256 = vmatmul.bf16.gmra.mxu0 %v6127
  %v6257 = vpop.f32.mrf.mxu0
  %v6258 = vadd.f32 %v383, %v6257
  %v6259 = vpop.f32.mrf.mxu0
  %6260 = vdwg.mxu0
  %6261 = vmatpush.bf16.msra.mxu0 %v1986
  %6262 = vmatpush.bf16.msra.mxu0 %v1980
  %6263 = vmatpush.bf16.msra.mxu0 %v1974
  %6264 = vmatpush.bf16.msra.mxu0 %v1968
  %6265 = vmatpush.bf16.msra.mxu0 %v1962
  %6266 = vmatpush.bf16.msra.mxu0 %v1956
  %6267 = vmatpush.bf16.msra.mxu0 %v1950
  %6268 = vmatpush.bf16.msra.mxu0 %v1944
  %6269 = vmatmul.bf16.gmra.mxu0 %v6128
  %v6270 = vpop.f32.mrf.mxu0
  %v6271 = vadd.f32 %v6258, %v6270
  %v6272 = vpop.f32.mrf.mxu0
  %6273 = vdwg.mxu0
  %6274 = vmatpush.bf16.msra.mxu0 %v2034
  %6275 = vmatpush.bf16.msra.mxu0 %v2028
  %6276 = vmatpush.bf16.msra.mxu0 %v2022
  %6277 = vmatpush.bf16.msra.mxu0 %v2016
  %6278 = vmatpush.bf16.msra.mxu0 %v2010
  %6279 = vmatpush.bf16.msra.mxu0 %v2004
  %6280 = vmatpush.bf16.msra.mxu0 %v1998
  %6281 = vmatpush.bf16.msra.mxu0 %v1992
  %6282 = vmatmul.bf16.gmra.mxu0 %v6123
  %v6283 = vpop.f32.mrf.mxu0
  %v6284 = vadd.f32 %v6271, %v6283
  %v6285 = vpop.f32.mrf.mxu0
  %6286 = vdwg.mxu0
  %6287 = vmatpush.bf16.msra.mxu0 %v1939
  %6288 = vmatpush.bf16.msra.mxu0 %v1933
  %6289 = vmatpush.bf16.msra.mxu0 %v1927
  %6290 = vmatpush.bf16.msra.mxu0 %v1921
  %6291 = vmatpush.bf16.msra.mxu0 %v1915
  %6292 = vmatpush.bf16.msra.mxu0 %v1909
  %6293 = vmatpush.bf16.msra.mxu0 %v1903
  %6294 = vmatpush.bf16.msra.mxu0 %v1897
  %6295 = vmatmul.bf16.gmra.mxu0 %v6127
  %v6296 = vpop.f32.mrf.mxu0
  %v6297 = vadd.f32 %v384, %v6296
  %v6298 = vpop.f32.mrf.mxu0
  %6299 = vdwg.mxu0
  %6300 = vmatpush.bf16.msra.mxu0 %v1987
  %6301 = vmatpush.bf16.msra.mxu0 %v1981
  %6302 = vmatpush.bf16.msra.mxu0 %v1975
  %6303 = vmatpush.bf16.msra.mxu0 %v1969
  %6304 = vmatpush.bf16.msra.mxu0 %v1963
  %6305 = vmatpush.bf16.msra.mxu0 %v1957
  %6306 = vmatpush.bf16.msra.mxu0 %v1951
  %6307 = vmatpush.bf16.msra.mxu0 %v1945
  %6308 = vmatmul.bf16.gmra.mxu0 %v6128
  %v6309 = vpop.f32.mrf.mxu0
  %v6310 = vadd.f32 %v6297, %v6309
  %v6311 = vpop.f32.mrf.mxu0
  %6312 = vdwg.mxu0
  %6313 = vmatpush.bf16.msra.mxu0 %v2035
  %6314 = vmatpush.bf16.msra.mxu0 %v2029
  %6315 = vmatpush.bf16.msra.mxu0 %v2023
  %6316 = vmatpush.bf16.msra.mxu0 %v2017
  %6317 = vmatpush.bf16.msra.mxu0 %v2011
  %6318 = vmatpush.bf16.msra.mxu0 %v2005
  %6319 = vmatpush.bf16.msra.mxu0 %v1999
  %6320 = vmatpush.bf16.msra.mxu0 %v1993
  %6321 = vmatmul.bf16.gmra.mxu0 %v6123
  %v6322 = vpop.f32.mrf.mxu0
  %v6323 = vadd.f32 %v6310, %v6322
  %v6324 = vpop.f32.mrf.mxu0
  %6325 = vdwg.mxu0
  %6326 = vmatpush.bf16.msra.mxu0 %v1940
  %6327 = vmatpush.bf16.msra.mxu0 %v1934
  %6328 = vmatpush.bf16.msra.mxu0 %v1928
  %6329 = vmatpush.bf16.msra.mxu0 %v1922
  %6330 = vmatpush.bf16.msra.mxu0 %v1916
  %6331 = vmatpush.bf16.msra.mxu0 %v1910
  %6332 = vmatpush.bf16.msra.mxu0 %v1904
  %6333 = vmatpush.bf16.msra.mxu0 %v1898
  %6334 = vmatmul.bf16.gmra.mxu0 %v6127
  %v6335 = vpop.f32.mrf.mxu0
  %v6336 = vadd.f32 %v385, %v6335
  %v6337 = vpop.f32.mrf.mxu0
  %6338 = vdwg.mxu0
  %6339 = vmatpush.bf16.msra.mxu0 %v1988
  %6340 = vmatpush.bf16.msra.mxu0 %v1982
  %6341 = vmatpush.bf16.msra.mxu0 %v1976
  %6342 = vmatpush.bf16.msra.mxu0 %v1970
  %6343 = vmatpush.bf16.msra.mxu0 %v1964
  %6344 = vmatpush.bf16.msra.mxu0 %v1958
  %6345 = vmatpush.bf16.msra.mxu0 %v1952
  %6346 = vmatpush.bf16.msra.mxu0 %v1946
  %6347 = vmatmul.bf16.gmra.mxu0 %v6128
  %v6348 = vpop.f32.mrf.mxu0
  %v6349 = vadd.f32 %v6336, %v6348
  %v6350 = vpop.f32.mrf.mxu0
  %6351 = vdwg.mxu0
  %6352 = vmatpush.bf16.msra.mxu0 %v2036
  %6353 = vmatpush.bf16.msra.mxu0 %v2030
  %6354 = vmatpush.bf16.msra.mxu0 %v2024
  %6355 = vmatpush.bf16.msra.mxu0 %v2018
  %6356 = vmatpush.bf16.msra.mxu0 %v2012
  %6357 = vmatpush.bf16.msra.mxu0 %v2006
  %6358 = vmatpush.bf16.msra.mxu0 %v2000
  %6359 = vmatpush.bf16.msra.mxu0 %v1994
  %6360 = vmatmul.bf16.gmra.mxu0 %v6123
  %v6361 = vpop.f32.mrf.mxu0
  %v6362 = vadd.f32 %v6349, %v6361
  %v6363 = vpop.f32.mrf.mxu0
  %6364 = vdwg.mxu0
  %v6365 = vadd.f32 %v6167, %v6284
  %v6366 = vadd.f32 %v6206, %v6323
  %v6367 = vxor.u32 %v6365, 2147483648
  %v6368 = vxor.u32 %v6366, 2147483648
  %v6369 = vmul.f32 %v6367, 1.442695
  %v6370 = vpow.pop %v6369
  %v6371 = vmul.f32 %v6368, 1.442695
  %v6372 = vpow.pop %v6371
  %v6373 = vadd.f32 %v6370, 1.0
  %v6374 = vadd.f32 %v6372, 1.0
  %v6375 = vrcp.pop %v6373
  %v6376 = vmul.f32 %v6373, %v6375
  %v6377 = vsub.f32 1.0, %v6376
  %v6378 = vmul.f32 %v6375, %v6377
  %v6379 = vadd.f32 %v6375, %v6378
  %vm6380 = vweird.f32 %v6373
  %vm6381 = vweird.f32 %v6375
  %vm6382 = vmor %vm6380, %vm6381
  %v6383 = vsel %vm6382, %v6375, %v6379
  %v6384 = vand.u32 2147483647, %v6373
  %vm6385 = vcmp.eq.f32.partialorder %v6384, 8.507059e+37
  %v6386 = vand.u32 %v6373, 2147483648
  %v6387 = vor.u32 1.1754944e-38, %v6386
  %v6388 = vsel %vm6385, %v6387, %v6383
  %v6389 = vmul.f32 1.0, %v6388
  %v6390 = vrcp.pop %v6374
  %v6391 = vmul.f32 %v6374, %v6390
  %v6392 = vsub.f32 1.0, %v6391
  %v6393 = vmul.f32 %v6390, %v6392
  %v6394 = vadd.f32 %v6390, %v6393
  %vm6395 = vweird.f32 %v6374
  %vm6396 = vweird.f32 %v6390
  %vm6397 = vmor %vm6395, %vm6396
  %v6398 = vsel %vm6397, %v6390, %v6394
  %v6399 = vand.u32 2147483647, %v6374
  %vm6400 = vcmp.eq.f32.partialorder %v6399, 8.507059e+37
  %v6401 = vand.u32 %v6374, 2147483648
  %v6402 = vor.u32 1.1754944e-38, %v6401
  %v6403 = vsel %vm6400, %v6402, %v6398
  %v6404 = vmul.f32 1.0, %v6403
  %v6405 = vmul.f32 %v6389, %v6362
  %v6406 = vadd.f32 %v6245, %v6405
  %v6407 = vtanh.pop %v6406
  %v6408 = vsub.f32 1.0, %v6404
  %v6409 = vmul.f32 %v6408, %v6407
  %v6410 = vmul.f32 %v6404, %v5812
  %v6411 = vadd.f32 %v6409, %v6410
  %v6412 = vsel %vm2462, %v6411, 0.0
  %6413 = vadd.xlane.f32.xlu0 %v6412
  %v6414 = vpop.xlane.xlu0 %6413
  %v6415 = vmul.f32 %v6414, %v2472
  %v6416 = vmul.f32 %v6411, %v6411
  %v6417 = vsel %vm2462, %v6416, 0.0
  %6418 = vadd.xlane.f32.xlu0 %v6417
  %v6419 = vpop.xlane.xlu0 %6418
  %v6420 = vmul.f32 %v6419, %v2472
  %v6421 = vmul.f32 %v6415, %v6415
  %v6422 = vsub.f32 %v6420, %v6421
  %v6423 = vsub.f32 %v6411, %v6415
  %v6424 = vadd.f32 %v6422, 1e-05
  %v6425 = vrsqrt.pop %v6424
  %v6426 = vmul.f32 %v6425, %v6424
  %v6427 = vmul.f32 %v6426, %v6425
  %v6428 = vmul.f32 0.5, %v6427
  %v6429 = vsub.f32 1.5, %v6428
  %v6430 = vmul.f32 %v6425, %v6429
  %vm6431 = vweird.f32 %v6424
  %vm6432 = vweird.f32 %v6425
  %vm6433 = vmor %vm6431, %vm6432
  %v6434 = vsel %vm6433, %v6425, %v6430
  %v6435 = vmul.f32 %v6423, %v6434
  %6437 = vrot.lane.b32.xlu0 %v6411, 64
  %v6438 = vpop.permute.xlu0 %6437
  %v6440 = vsel %vm2462, %v6438, 0.0
  %6441 = vadd.xlane.f32.xlu0 %v6440
  %v6442 = vpop.xlane.xlu0 %6441
  %v6443 = vmul.f32 %v6442, %v2472
  %6445 = vrot.lane.b32.xlu0 %v6416, 64
  %v6446 = vpop.permute.xlu0 %6445
  %v6448 = vsel %vm2462, %v6446, 0.0
  %6449 = vadd.xlane.f32.xlu0 %v6448
  %v6450 = vpop.xlane.xlu0 %6449
  %v6451 = vmul.f32 %v6450, %v2472
  %v6452 = vmul.f32 %v6443, %v6443
  %v6453 = vsub.f32 %v6451, %v6452
  %v6454 = vsub.f32 %v6411, %v6443
  %v6455 = vadd.f32 %v6453, 1e-05
  %v6456 = vrsqrt.pop %v6455
  %v6457 = vmul.f32 %v6456, %v6455
  %v6458 = vmul.f32 %v6457, %v6456
  %v6459 = vmul.f32 0.5, %v6458
  %v6460 = vsub.f32 1.5, %v6459
  %v6461 = vmul.f32 %v6456, %v6460
  %vm6462 = vweird.f32 %v6455
  %vm6463 = vweird.f32 %v6456
  %vm6464 = vmor %vm6462, %vm6463
  %v6465 = vsel %vm6464, %v6456, %v6461
  %v6466 = vmul.f32 %v6454, %v6465
  %v6467 = vsel %vm2462, %v6435, %v6466
  %v6468 = vmul.f32 %v6467, %v413
  %v6469 = vadd.f32 %v6468, %v414
  %s6470 = smul.u32 7, 6
  %s6471 = smul.addr %s6470, 8
  %s6472 = scalar_lea.vmem [#allocation2], %s6471
  %v6473 = vld [vmem:[%s6472] sm:$0xff]
  %v6474 = vld [vmem:[%s6472 + $0x8] sm:$0xff]
  %v6475 = vld [vmem:[%s6472 + $0x10] sm:$0xff]
  %v6476 = vld [vmem:[%s6472 + $0x18] sm:$0xff]
  %v6477 = vld [vmem:[%s6472 + $0x20] sm:$0xff]
  %v6478 = vld [vmem:[%s6472 + $0x28] sm:$0xff]
  %6479 = vmatpush.bf16.msra.mxu0 %v852
  %6480 = vmatpush.bf16.msra.mxu0 %v846
  %6481 = vmatpush.bf16.msra.mxu0 %v840
  %6482 = vmatpush.bf16.msra.mxu0 %v834
  %6483 = vmatpush.bf16.msra.mxu0 %v828
  %6484 = vmatpush.bf16.msra.mxu0 %v822
  %6485 = vmatpush.bf16.msra.mxu0 %v816
  %6486 = vmatpush.bf16.msra.mxu0 %v810
  %6487 = vmatmul.bf16.gmra.mxu0 %v6127
  %v6488 = vpop.f32.mrf.mxu0
  %v6489 = vadd.f32 0.0, %v6488
  %v6490 = vpop.f32.mrf.mxu0
  %6491 = vdwg.mxu0
  %6492 = vmatpush.bf16.msra.mxu0 %v900
  %6493 = vmatpush.bf16.msra.mxu0 %v894
  %6494 = vmatpush.bf16.msra.mxu0 %v888
  %6495 = vmatpush.bf16.msra.mxu0 %v882
  %6496 = vmatpush.bf16.msra.mxu0 %v876
  %6497 = vmatpush.bf16.msra.mxu0 %v870
  %6498 = vmatpush.bf16.msra.mxu0 %v864
  %6499 = vmatpush.bf16.msra.mxu0 %v858
  %6500 = vmatmul.bf16.gmra.mxu0 %v6128
  %v6501 = vpop.f32.mrf.mxu0
  %v6502 = vadd.f32 %v6489, %v6501
  %v6503 = vpop.f32.mrf.mxu0
  %6504 = vdwg.mxu0
  %6505 = vmatpush.bf16.msra.mxu0 %v853
  %6506 = vmatpush.bf16.msra.mxu0 %v847
  %6507 = vmatpush.bf16.msra.mxu0 %v841
  %6508 = vmatpush.bf16.msra.mxu0 %v835
  %6509 = vmatpush.bf16.msra.mxu0 %v829
  %6510 = vmatpush.bf16.msra.mxu0 %v823
  %6511 = vmatpush.bf16.msra.mxu0 %v817
  %6512 = vmatpush.bf16.msra.mxu0 %v811
  %6513 = vmatmul.bf16.gmra.mxu0 %v6127
  %v6514 = vpop.f32.mrf.mxu0
  %v6515 = vadd.f32 0.0, %v6514
  %v6516 = vpop.f32.mrf.mxu0
  %6517 = vdwg.mxu0
  %6518 = vmatpush.bf16.msra.mxu0 %v901
  %6519 = vmatpush.bf16.msra.mxu0 %v895
  %6520 = vmatpush.bf16.msra.mxu0 %v889
  %6521 = vmatpush.bf16.msra.mxu0 %v883
  %6522 = vmatpush.bf16.msra.mxu0 %v877
  %6523 = vmatpush.bf16.msra.mxu0 %v871
  %6524 = vmatpush.bf16.msra.mxu0 %v865
  %6525 = vmatpush.bf16.msra.mxu0 %v859
  %6526 = vmatmul.bf16.gmra.mxu0 %v6128
  %v6527 = vpop.f32.mrf.mxu0
  %v6528 = vadd.f32 %v6515, %v6527
  %v6529 = vpop.f32.mrf.mxu0
  %6530 = vdwg.mxu0
  %6531 = vmatpush.bf16.msra.mxu0 %v854
  %6532 = vmatpush.bf16.msra.mxu0 %v848
  %6533 = vmatpush.bf16.msra.mxu0 %v842
  %6534 = vmatpush.bf16.msra.mxu0 %v836
  %6535 = vmatpush.bf16.msra.mxu0 %v830
  %6536 = vmatpush.bf16.msra.mxu0 %v824
  %6537 = vmatpush.bf16.msra.mxu0 %v818
  %6538 = vmatpush.bf16.msra.mxu0 %v812
  %6539 = vmatmul.bf16.gmra.mxu0 %v6127
  %v6540 = vpop.f32.mrf.mxu0
  %v6541 = vadd.f32 0.0, %v6540
  %v6542 = vpop.f32.mrf.mxu0
  %6543 = vdwg.mxu0
  %6544 = vmatpush.bf16.msra.mxu0 %v902
  %6545 = vmatpush.bf16.msra.mxu0 %v896
  %6546 = vmatpush.bf16.msra.mxu0 %v890
  %6547 = vmatpush.bf16.msra.mxu0 %v884
  %6548 = vmatpush.bf16.msra.mxu0 %v878
  %6549 = vmatpush.bf16.msra.mxu0 %v872
  %6550 = vmatpush.bf16.msra.mxu0 %v866
  %6551 = vmatpush.bf16.msra.mxu0 %v860
  %6552 = vmatmul.bf16.gmra.mxu0 %v6128
  %v6553 = vpop.f32.mrf.mxu0
  %v6554 = vadd.f32 %v6541, %v6553
  %v6555 = vpop.f32.mrf.mxu0
  %6556 = vdwg.mxu0
  %6557 = vmatpush.bf16.msra.mxu0 %v855
  %6558 = vmatpush.bf16.msra.mxu0 %v849
  %6559 = vmatpush.bf16.msra.mxu0 %v843
  %6560 = vmatpush.bf16.msra.mxu0 %v837
  %6561 = vmatpush.bf16.msra.mxu0 %v831
  %6562 = vmatpush.bf16.msra.mxu0 %v825
  %6563 = vmatpush.bf16.msra.mxu0 %v819
  %6564 = vmatpush.bf16.msra.mxu0 %v813
  %6565 = vmatmul.bf16.gmra.mxu0 %v6127
  %v6566 = vpop.f32.mrf.mxu0
  %v6567 = vadd.f32 0.0, %v6566
  %v6568 = vpop.f32.mrf.mxu0
  %6569 = vdwg.mxu0
  %6570 = vmatpush.bf16.msra.mxu0 %v903
  %6571 = vmatpush.bf16.msra.mxu0 %v897
  %6572 = vmatpush.bf16.msra.mxu0 %v891
  %6573 = vmatpush.bf16.msra.mxu0 %v885
  %6574 = vmatpush.bf16.msra.mxu0 %v879
  %6575 = vmatpush.bf16.msra.mxu0 %v873
  %6576 = vmatpush.bf16.msra.mxu0 %v867
  %6577 = vmatpush.bf16.msra.mxu0 %v861
  %6578 = vmatmul.bf16.gmra.mxu0 %v6128
  %v6579 = vpop.f32.mrf.mxu0
  %v6580 = vadd.f32 %v6567, %v6579
  %v6581 = vpop.f32.mrf.mxu0
  %6582 = vdwg.mxu0
  %6583 = vmatpush.bf16.msra.mxu0 %v856
  %6584 = vmatpush.bf16.msra.mxu0 %v850
  %6585 = vmatpush.bf16.msra.mxu0 %v844
  %6586 = vmatpush.bf16.msra.mxu0 %v838
  %6587 = vmatpush.bf16.msra.mxu0 %v832
  %6588 = vmatpush.bf16.msra.mxu0 %v826
  %6589 = vmatpush.bf16.msra.mxu0 %v820
  %6590 = vmatpush.bf16.msra.mxu0 %v814
  %6591 = vmatmul.bf16.gmra.mxu0 %v6127
  %v6592 = vpop.f32.mrf.mxu0
  %v6593 = vadd.f32 0.0, %v6592
  %v6594 = vpop.f32.mrf.mxu0
  %6595 = vdwg.mxu0
  %6596 = vmatpush.bf16.msra.mxu0 %v904
  %6597 = vmatpush.bf16.msra.mxu0 %v898
  %6598 = vmatpush.bf16.msra.mxu0 %v892
  %6599 = vmatpush.bf16.msra.mxu0 %v886
  %6600 = vmatpush.bf16.msra.mxu0 %v880
  %6601 = vmatpush.bf16.msra.mxu0 %v874
  %6602 = vmatpush.bf16.msra.mxu0 %v868
  %6603 = vmatpush.bf16.msra.mxu0 %v862
  %6604 = vmatmul.bf16.gmra.mxu0 %v6128
  %v6605 = vpop.f32.mrf.mxu0
  %v6606 = vadd.f32 %v6593, %v6605
  %v6607 = vpop.f32.mrf.mxu0
  %6608 = vdwg.mxu0
  %6609 = vmatpush.bf16.msra.mxu0 %v857
  %6610 = vmatpush.bf16.msra.mxu0 %v851
  %6611 = vmatpush.bf16.msra.mxu0 %v845
  %6612 = vmatpush.bf16.msra.mxu0 %v839
  %6613 = vmatpush.bf16.msra.mxu0 %v833
  %6614 = vmatpush.bf16.msra.mxu0 %v827
  %6615 = vmatpush.bf16.msra.mxu0 %v821
  %6616 = vmatpush.bf16.msra.mxu0 %v815
  %6617 = vmatmul.bf16.gmra.mxu0 %v6127
  %v6618 = vpop.f32.mrf.mxu0
  %v6619 = vadd.f32 0.0, %v6618
  %v6620 = vpop.f32.mrf.mxu0
  %6621 = vdwg.mxu0
  %6622 = vmatpush.bf16.msra.mxu0 %v905
  %6623 = vmatpush.bf16.msra.mxu0 %v899
  %6624 = vmatpush.bf16.msra.mxu0 %v893
  %6625 = vmatpush.bf16.msra.mxu0 %v887
  %6626 = vmatpush.bf16.msra.mxu0 %v881
  %6627 = vmatpush.bf16.msra.mxu0 %v875
  %6628 = vmatpush.bf16.msra.mxu0 %v869
  %6629 = vmatpush.bf16.msra.mxu0 %v863
  %6630 = vmatmul.bf16.gmra.mxu0 %v6128
  %v6631 = vpop.f32.mrf.mxu0
  %v6632 = vadd.f32 %v6619, %v6631
  %v6633 = vpop.f32.mrf.mxu0
  %6634 = vdwg.mxu0
  %v6635 = vadd.f32 %v6473, %v6502
  %v6636 = vadd.f32 %v6474, %v6528
  %v6637 = vadd.f32 %v6475, %v6554
  %v6638 = vadd.f32 %v6476, %v6580
  %v6639 = vxor.u32 %v6635, 2147483648
  %v6640 = vxor.u32 %v6636, 2147483648
  %v6641 = vxor.u32 %v6637, 2147483648
  %v6642 = vxor.u32 %v6638, 2147483648
  %v6643 = vmul.f32 %v6639, 1.442695
  %v6644 = vpow.pop %v6643
  %v6645 = vmul.f32 %v6640, 1.442695
  %v6646 = vpow.pop %v6645
  %v6647 = vmul.f32 %v6641, 1.442695
  %v6648 = vpow.pop %v6647
  %v6649 = vmul.f32 %v6642, 1.442695
  %v6650 = vpow.pop %v6649
  %v6651 = vadd.f32 %v6644, 1.0
  %v6652 = vadd.f32 %v6646, 1.0
  %v6653 = vadd.f32 %v6648, 1.0
  %v6654 = vadd.f32 %v6650, 1.0
  %v6655 = vrcp.pop %v6651
  %v6656 = vmul.f32 %v6651, %v6655
  %v6657 = vsub.f32 1.0, %v6656
  %v6658 = vmul.f32 %v6655, %v6657
  %v6659 = vadd.f32 %v6655, %v6658
  %vm6660 = vweird.f32 %v6651
  %vm6661 = vweird.f32 %v6655
  %vm6662 = vmor %vm6660, %vm6661
  %v6663 = vsel %vm6662, %v6655, %v6659
  %v6664 = vand.u32 2147483647, %v6651
  %vm6665 = vcmp.eq.f32.partialorder %v6664, 8.507059e+37
  %v6666 = vand.u32 %v6651, 2147483648
  %v6667 = vor.u32 1.1754944e-38, %v6666
  %v6668 = vsel %vm6665, %v6667, %v6663
  %v6669 = vmul.f32 1.0, %v6668
  %v6670 = vrcp.pop %v6652
  %v6671 = vmul.f32 %v6652, %v6670
  %v6672 = vsub.f32 1.0, %v6671
  %v6673 = vmul.f32 %v6670, %v6672
  %v6674 = vadd.f32 %v6670, %v6673
  %vm6675 = vweird.f32 %v6652
  %vm6676 = vweird.f32 %v6670
  %vm6677 = vmor %vm6675, %vm6676
  %v6678 = vsel %vm6677, %v6670, %v6674
  %v6679 = vand.u32 2147483647, %v6652
  %vm6680 = vcmp.eq.f32.partialorder %v6679, 8.507059e+37
  %v6681 = vand.u32 %v6652, 2147483648
  %v6682 = vor.u32 1.1754944e-38, %v6681
  %v6683 = vsel %vm6680, %v6682, %v6678
  %v6684 = vmul.f32 1.0, %v6683
  %v6685 = vrcp.pop %v6653
  %v6686 = vmul.f32 %v6653, %v6685
  %v6687 = vsub.f32 1.0, %v6686
  %v6688 = vmul.f32 %v6685, %v6687
  %v6689 = vadd.f32 %v6685, %v6688
  %vm6690 = vweird.f32 %v6653
  %vm6691 = vweird.f32 %v6685
  %vm6692 = vmor %vm6690, %vm6691
  %v6693 = vsel %vm6692, %v6685, %v6689
  %v6694 = vand.u32 2147483647, %v6653
  %vm6695 = vcmp.eq.f32.partialorder %v6694, 8.507059e+37
  %v6696 = vand.u32 %v6653, 2147483648
  %v6697 = vor.u32 1.1754944e-38, %v6696
  %v6698 = vsel %vm6695, %v6697, %v6693
  %v6699 = vmul.f32 1.0, %v6698
  %v6700 = vrcp.pop %v6654
  %v6701 = vmul.f32 %v6654, %v6700
  %v6702 = vsub.f32 1.0, %v6701
  %v6703 = vmul.f32 %v6700, %v6702
  %v6704 = vadd.f32 %v6700, %v6703
  %vm6705 = vweird.f32 %v6654
  %vm6706 = vweird.f32 %v6700
  %vm6707 = vmor %vm6705, %vm6706
  %v6708 = vsel %vm6707, %v6700, %v6704
  %v6709 = vand.u32 2147483647, %v6654
  %vm6710 = vcmp.eq.f32.partialorder %v6709, 8.507059e+37
  %v6711 = vand.u32 %v6654, 2147483648
  %v6712 = vor.u32 1.1754944e-38, %v6711
  %v6713 = vsel %vm6710, %v6712, %v6708
  %v6714 = vmul.f32 1.0, %v6713
  %v6715 = vadd.f32 %v6606, %v395
  %v6716 = vadd.f32 %v6632, %v396
  %v6717 = vmul.f32 %v6669, %v6715
  %v6718 = vmul.f32 %v6684, %v6716
  %v6719 = vadd.f32 %v6477, %v6717
  %v6720 = vadd.f32 %v6478, %v6718
  %v6721 = vtanh.pop %v6719
  %v6722 = vtanh.pop %v6720
  %v6723 = vsub.f32 1.0, %v6699
  %v6724 = vsub.f32 1.0, %v6714
  %v6725 = vmul.f32 %v6723, %v6721
  %v6726 = vmul.f32 %v6724, %v6722
  %v6727 = vmul.f32 %v6699, %v6120
  %v6728 = vmul.f32 %v6714, %v6121
  %v6729 = vadd.f32 %v6725, %v6727
  %v6730 = vadd.f32 %v6726, %v6728
  %6731 = vadd.xlane.f32.xlu0 %v6729
  %v6732 = vpop.xlane.xlu0 %6731
  %v6733 = vmul.f32 %v6732, %v1262
  %v6734 = vmul.f32 %v6729, %v6729
  %6735 = vadd.xlane.f32.xlu0 %v6734
  %v6736 = vpop.xlane.xlu0 %6735
  %v6737 = vmul.f32 %v6736, %v1262
  %v6738 = vmul.f32 %v6733, %v6733
  %v6739 = vsub.f32 %v6737, %v6738
  %v6740 = vsub.f32 %v6729, %v6733
  %v6741 = vadd.f32 %v6739, 1e-05
  %v6742 = vrsqrt.pop %v6741
  %v6743 = vmul.f32 %v6742, %v6741
  %v6744 = vmul.f32 %v6743, %v6742
  %v6745 = vmul.f32 0.5, %v6744
  %v6746 = vsub.f32 1.5, %v6745
  %v6747 = vmul.f32 %v6742, %v6746
  %vm6748 = vweird.f32 %v6741
  %vm6749 = vweird.f32 %v6742
  %vm6750 = vmor %vm6748, %vm6749
  %v6751 = vsel %vm6750, %v6742, %v6747
  %v6752 = vmul.f32 %v6740, %v6751
  %6753 = vadd.xlane.f32.xlu0 %v6730
  %v6754 = vpop.xlane.xlu0 %6753
  %v6755 = vmul.f32 %v6754, %v1262
  %v6756 = vmul.f32 %v6730, %v6730
  %6757 = vadd.xlane.f32.xlu0 %v6756
  %v6758 = vpop.xlane.xlu0 %6757
  %v6759 = vmul.f32 %v6758, %v1262
  %v6760 = vmul.f32 %v6755, %v6755
  %v6761 = vsub.f32 %v6759, %v6760
  %v6762 = vsub.f32 %v6730, %v6755
  %v6763 = vadd.f32 %v6761, 1e-05
  %v6764 = vrsqrt.pop %v6763
  %v6765 = vmul.f32 %v6764, %v6763
  %v6766 = vmul.f32 %v6765, %v6764
  %v6767 = vmul.f32 0.5, %v6766
  %v6768 = vsub.f32 1.5, %v6767
  %v6769 = vmul.f32 %v6764, %v6768
  %vm6770 = vweird.f32 %v6763
  %vm6771 = vweird.f32 %v6764
  %vm6772 = vmor %vm6770, %vm6771
  %v6773 = vsel %vm6772, %v6764, %v6769
  %v6774 = vmul.f32 %v6762, %v6773
  %v6775 = vmul.f32 %v6752, %v402
  %v6776 = vmul.f32 %v6774, %v403
  %v6777 = vadd.f32 %v6775, %v409
  %v6778 = vadd.f32 %v6776, %v410
  %v6779 = vpack.c.bf16 %v6778, %v6777
  %v6780 = vpack.c.bf16 %v6469, %v6469
  %v6782 = vunpack.c.l.b16 %v6779
  %v6783 = vunpack.c.h.b16 %v6779
  %v6784 = vpack.c.b16 %v6782, %v6782
  %v6785 = vpack.c.b16 %v6783, %v6783
  %6788 = vmatpush.bf16.msra.mxu0 %v1935
  %6789 = vmatpush.bf16.msra.mxu0 %v1929
  %6790 = vmatpush.bf16.msra.mxu0 %v1923
  %6791 = vmatpush.bf16.msra.mxu0 %v1917
  %6792 = vmatpush.bf16.msra.mxu0 %v1911
  %6793 = vmatpush.bf16.msra.mxu0 %v1905
  %6794 = vmatpush.bf16.msra.mxu0 %v1899
  %6795 = vmatpush.bf16.msra.mxu0 %v1893
  %6796 = vmatmul.bf16.gmra.mxu0 %v6784
  %v6797 = vpop.f32.mrf.mxu0
  %v6798 = vadd.f32 %v380, %v6797
  %v6799 = vpop.f32.mrf.mxu0
  %6800 = vdwg.mxu0
  %6801 = vmatpush.bf16.msra.mxu0 %v1983
  %6802 = vmatpush.bf16.msra.mxu0 %v1977
  %6803 = vmatpush.bf16.msra.mxu0 %v1971
  %6804 = vmatpush.bf16.msra.mxu0 %v1965
  %6805 = vmatpush.bf16.msra.mxu0 %v1959
  %6806 = vmatpush.bf16.msra.mxu0 %v1953
  %6807 = vmatpush.bf16.msra.mxu0 %v1947
  %6808 = vmatpush.bf16.msra.mxu0 %v1941
  %6809 = vmatmul.bf16.gmra.mxu0 %v6785
  %v6810 = vpop.f32.mrf.mxu0
  %v6811 = vadd.f32 %v6798, %v6810
  %v6812 = vpop.f32.mrf.mxu0
  %6813 = vdwg.mxu0
  %6814 = vmatpush.bf16.msra.mxu0 %v2031
  %6815 = vmatpush.bf16.msra.mxu0 %v2025
  %6816 = vmatpush.bf16.msra.mxu0 %v2019
  %6817 = vmatpush.bf16.msra.mxu0 %v2013
  %6818 = vmatpush.bf16.msra.mxu0 %v2007
  %6819 = vmatpush.bf16.msra.mxu0 %v2001
  %6820 = vmatpush.bf16.msra.mxu0 %v1995
  %6821 = vmatpush.bf16.msra.mxu0 %v1989
  %6822 = vmatmul.bf16.gmra.mxu0 %v6780
  %v6823 = vpop.f32.mrf.mxu0
  %v6824 = vadd.f32 %v6811, %v6823
  %v6825 = vpop.f32.mrf.mxu0
  %6826 = vdwg.mxu0
  %6827 = vmatpush.bf16.msra.mxu0 %v1936
  %6828 = vmatpush.bf16.msra.mxu0 %v1930
  %6829 = vmatpush.bf16.msra.mxu0 %v1924
  %6830 = vmatpush.bf16.msra.mxu0 %v1918
  %6831 = vmatpush.bf16.msra.mxu0 %v1912
  %6832 = vmatpush.bf16.msra.mxu0 %v1906
  %6833 = vmatpush.bf16.msra.mxu0 %v1900
  %6834 = vmatpush.bf16.msra.mxu0 %v1894
  %6835 = vmatmul.bf16.gmra.mxu0 %v6784
  %v6836 = vpop.f32.mrf.mxu0
  %v6837 = vadd.f32 %v381, %v6836
  %v6838 = vpop.f32.mrf.mxu0
  %6839 = vdwg.mxu0
  %6840 = vmatpush.bf16.msra.mxu0 %v1984
  %6841 = vmatpush.bf16.msra.mxu0 %v1978
  %6842 = vmatpush.bf16.msra.mxu0 %v1972
  %6843 = vmatpush.bf16.msra.mxu0 %v1966
  %6844 = vmatpush.bf16.msra.mxu0 %v1960
  %6845 = vmatpush.bf16.msra.mxu0 %v1954
  %6846 = vmatpush.bf16.msra.mxu0 %v1948
  %6847 = vmatpush.bf16.msra.mxu0 %v1942
  %6848 = vmatmul.bf16.gmra.mxu0 %v6785
  %v6849 = vpop.f32.mrf.mxu0
  %v6850 = vadd.f32 %v6837, %v6849
  %v6851 = vpop.f32.mrf.mxu0
  %6852 = vdwg.mxu0
  %6853 = vmatpush.bf16.msra.mxu0 %v2032
  %6854 = vmatpush.bf16.msra.mxu0 %v2026
  %6855 = vmatpush.bf16.msra.mxu0 %v2020
  %6856 = vmatpush.bf16.msra.mxu0 %v2014
  %6857 = vmatpush.bf16.msra.mxu0 %v2008
  %6858 = vmatpush.bf16.msra.mxu0 %v2002
  %6859 = vmatpush.bf16.msra.mxu0 %v1996
  %6860 = vmatpush.bf16.msra.mxu0 %v1990
  %6861 = vmatmul.bf16.gmra.mxu0 %v6780
  %v6862 = vpop.f32.mrf.mxu0
  %v6863 = vadd.f32 %v6850, %v6862
  %v6864 = vpop.f32.mrf.mxu0
  %6865 = vdwg.mxu0
  %6866 = vmatpush.bf16.msra.mxu0 %v1937
  %6867 = vmatpush.bf16.msra.mxu0 %v1931
  %6868 = vmatpush.bf16.msra.mxu0 %v1925
  %6869 = vmatpush.bf16.msra.mxu0 %v1919
  %6870 = vmatpush.bf16.msra.mxu0 %v1913
  %6871 = vmatpush.bf16.msra.mxu0 %v1907
  %6872 = vmatpush.bf16.msra.mxu0 %v1901
  %6873 = vmatpush.bf16.msra.mxu0 %v1895
  %6874 = vmatmul.bf16.gmra.mxu0 %v6784
  %v6875 = vpop.f32.mrf.mxu0
  %v6876 = vadd.f32 %v382, %v6875
  %v6877 = vpop.f32.mrf.mxu0
  %6878 = vdwg.mxu0
  %6879 = vmatpush.bf16.msra.mxu0 %v1985
  %6880 = vmatpush.bf16.msra.mxu0 %v1979
  %6881 = vmatpush.bf16.msra.mxu0 %v1973
  %6882 = vmatpush.bf16.msra.mxu0 %v1967
  %6883 = vmatpush.bf16.msra.mxu0 %v1961
  %6884 = vmatpush.bf16.msra.mxu0 %v1955
  %6885 = vmatpush.bf16.msra.mxu0 %v1949
  %6886 = vmatpush.bf16.msra.mxu0 %v1943
  %6887 = vmatmul.bf16.gmra.mxu0 %v6785
  %v6888 = vpop.f32.mrf.mxu0
  %v6889 = vadd.f32 %v6876, %v6888
  %v6890 = vpop.f32.mrf.mxu0
  %6891 = vdwg.mxu0
  %6892 = vmatpush.bf16.msra.mxu0 %v2033
  %6893 = vmatpush.bf16.msra.mxu0 %v2027
  %6894 = vmatpush.bf16.msra.mxu0 %v2021
  %6895 = vmatpush.bf16.msra.mxu0 %v2015
  %6896 = vmatpush.bf16.msra.mxu0 %v2009
  %6897 = vmatpush.bf16.msra.mxu0 %v2003
  %6898 = vmatpush.bf16.msra.mxu0 %v1997
  %6899 = vmatpush.bf16.msra.mxu0 %v1991
  %6900 = vmatmul.bf16.gmra.mxu0 %v6780
  %v6901 = vpop.f32.mrf.mxu0
  %v6902 = vadd.f32 %v6889, %v6901
  %v6903 = vpop.f32.mrf.mxu0
  %6904 = vdwg.mxu0
  %6905 = vmatpush.bf16.msra.mxu0 %v1938
  %6906 = vmatpush.bf16.msra.mxu0 %v1932
  %6907 = vmatpush.bf16.msra.mxu0 %v1926
  %6908 = vmatpush.bf16.msra.mxu0 %v1920
  %6909 = vmatpush.bf16.msra.mxu0 %v1914
  %6910 = vmatpush.bf16.msra.mxu0 %v1908
  %6911 = vmatpush.bf16.msra.mxu0 %v1902
  %6912 = vmatpush.bf16.msra.mxu0 %v1896
  %6913 = vmatmul.bf16.gmra.mxu0 %v6784
  %v6914 = vpop.f32.mrf.mxu0
  %v6915 = vadd.f32 %v383, %v6914
  %v6916 = vpop.f32.mrf.mxu0
  %6917 = vdwg.mxu0
  %6918 = vmatpush.bf16.msra.mxu0 %v1986
  %6919 = vmatpush.bf16.msra.mxu0 %v1980
  %6920 = vmatpush.bf16.msra.mxu0 %v1974
  %6921 = vmatpush.bf16.msra.mxu0 %v1968
  %6922 = vmatpush.bf16.msra.mxu0 %v1962
  %6923 = vmatpush.bf16.msra.mxu0 %v1956
  %6924 = vmatpush.bf16.msra.mxu0 %v1950
  %6925 = vmatpush.bf16.msra.mxu0 %v1944
  %6926 = vmatmul.bf16.gmra.mxu0 %v6785
  %v6927 = vpop.f32.mrf.mxu0
  %v6928 = vadd.f32 %v6915, %v6927
  %v6929 = vpop.f32.mrf.mxu0
  %6930 = vdwg.mxu0
  %6931 = vmatpush.bf16.msra.mxu0 %v2034
  %6932 = vmatpush.bf16.msra.mxu0 %v2028
  %6933 = vmatpush.bf16.msra.mxu0 %v2022
  %6934 = vmatpush.bf16.msra.mxu0 %v2016
  %6935 = vmatpush.bf16.msra.mxu0 %v2010
  %6936 = vmatpush.bf16.msra.mxu0 %v2004
  %6937 = vmatpush.bf16.msra.mxu0 %v1998
  %6938 = vmatpush.bf16.msra.mxu0 %v1992
  %6939 = vmatmul.bf16.gmra.mxu0 %v6780
  %v6940 = vpop.f32.mrf.mxu0
  %v6941 = vadd.f32 %v6928, %v6940
  %v6942 = vpop.f32.mrf.mxu0
  %6943 = vdwg.mxu0
  %6944 = vmatpush.bf16.msra.mxu0 %v1939
  %6945 = vmatpush.bf16.msra.mxu0 %v1933
  %6946 = vmatpush.bf16.msra.mxu0 %v1927
  %6947 = vmatpush.bf16.msra.mxu0 %v1921
  %6948 = vmatpush.bf16.msra.mxu0 %v1915
  %6949 = vmatpush.bf16.msra.mxu0 %v1909
  %6950 = vmatpush.bf16.msra.mxu0 %v1903
  %6951 = vmatpush.bf16.msra.mxu0 %v1897
  %6952 = vmatmul.bf16.gmra.mxu0 %v6784
  %v6953 = vpop.f32.mrf.mxu0
  %v6954 = vadd.f32 %v384, %v6953
  %v6955 = vpop.f32.mrf.mxu0
  %6956 = vdwg.mxu0
  %6957 = vmatpush.bf16.msra.mxu0 %v1987
  %6958 = vmatpush.bf16.msra.mxu0 %v1981
  %6959 = vmatpush.bf16.msra.mxu0 %v1975
  %6960 = vmatpush.bf16.msra.mxu0 %v1969
  %6961 = vmatpush.bf16.msra.mxu0 %v1963
  %6962 = vmatpush.bf16.msra.mxu0 %v1957
  %6963 = vmatpush.bf16.msra.mxu0 %v1951
  %6964 = vmatpush.bf16.msra.mxu0 %v1945
  %6965 = vmatmul.bf16.gmra.mxu0 %v6785
  %v6966 = vpop.f32.mrf.mxu0
  %v6967 = vadd.f32 %v6954, %v6966
  %v6968 = vpop.f32.mrf.mxu0
  %6969 = vdwg.mxu0
  %6970 = vmatpush.bf16.msra.mxu0 %v2035
  %6971 = vmatpush.bf16.msra.mxu0 %v2029
  %6972 = vmatpush.bf16.msra.mxu0 %v2023
  %6973 = vmatpush.bf16.msra.mxu0 %v2017
  %6974 = vmatpush.bf16.msra.mxu0 %v2011
  %6975 = vmatpush.bf16.msra.mxu0 %v2005
  %6976 = vmatpush.bf16.msra.mxu0 %v1999
  %6977 = vmatpush.bf16.msra.mxu0 %v1993
  %6978 = vmatmul.bf16.gmra.mxu0 %v6780
  %v6979 = vpop.f32.mrf.mxu0
  %v6980 = vadd.f32 %v6967, %v6979
  %v6981 = vpop.f32.mrf.mxu0
  %6982 = vdwg.mxu0
  %6983 = vmatpush.bf16.msra.mxu0 %v1940
  %6984 = vmatpush.bf16.msra.mxu0 %v1934
  %6985 = vmatpush.bf16.msra.mxu0 %v1928
  %6986 = vmatpush.bf16.msra.mxu0 %v1922
  %6987 = vmatpush.bf16.msra.mxu0 %v1916
  %6988 = vmatpush.bf16.msra.mxu0 %v1910
  %6989 = vmatpush.bf16.msra.mxu0 %v1904
  %6990 = vmatpush.bf16.msra.mxu0 %v1898
  %6991 = vmatmul.bf16.gmra.mxu0 %v6784
  %v6992 = vpop.f32.mrf.mxu0
  %v6993 = vadd.f32 %v385, %v6992
  %v6994 = vpop.f32.mrf.mxu0
  %6995 = vdwg.mxu0
  %6996 = vmatpush.bf16.msra.mxu0 %v1988
  %6997 = vmatpush.bf16.msra.mxu0 %v1982
  %6998 = vmatpush.bf16.msra.mxu0 %v1976
  %6999 = vmatpush.bf16.msra.mxu0 %v1970
  %7000 = vmatpush.bf16.msra.mxu0 %v1964
  %7001 = vmatpush.bf16.msra.mxu0 %v1958
  %7002 = vmatpush.bf16.msra.mxu0 %v1952
  %7003 = vmatpush.bf16.msra.mxu0 %v1946
  %7004 = vmatmul.bf16.gmra.mxu0 %v6785
  %v7005 = vpop.f32.mrf.mxu0
  %v7006 = vadd.f32 %v6993, %v7005
  %v7007 = vpop.f32.mrf.mxu0
  %7008 = vdwg.mxu0
  %7009 = vmatpush.bf16.msra.mxu0 %v2036
  %7010 = vmatpush.bf16.msra.mxu0 %v2030
  %7011 = vmatpush.bf16.msra.mxu0 %v2024
  %7012 = vmatpush.bf16.msra.mxu0 %v2018
  %7013 = vmatpush.bf16.msra.mxu0 %v2012
  %7014 = vmatpush.bf16.msra.mxu0 %v2006
  %7015 = vmatpush.bf16.msra.mxu0 %v2000
  %7016 = vmatpush.bf16.msra.mxu0 %v1994
  %7017 = vmatmul.bf16.gmra.mxu0 %v6780
  %v7018 = vpop.f32.mrf.mxu0
  %v7019 = vadd.f32 %v7006, %v7018
  %v7020 = vpop.f32.mrf.mxu0
  %7021 = vdwg.mxu0
  %v7022 = vadd.f32 %v6824, %v6941
  %v7023 = vadd.f32 %v6863, %v6980
  %v7024 = vxor.u32 %v7022, 2147483648
  %v7025 = vxor.u32 %v7023, 2147483648
  %v7026 = vmul.f32 %v7024, 1.442695
  %v7027 = vpow.pop %v7026
  %v7028 = vmul.f32 %v7025, 1.442695
  %v7029 = vpow.pop %v7028
  %v7030 = vadd.f32 %v7027, 1.0
  %v7031 = vadd.f32 %v7029, 1.0
  %v7032 = vrcp.pop %v7030
  %v7033 = vmul.f32 %v7030, %v7032
  %v7034 = vsub.f32 1.0, %v7033
  %v7035 = vmul.f32 %v7032, %v7034
  %v7036 = vadd.f32 %v7032, %v7035
  %vm7037 = vweird.f32 %v7030
  %vm7038 = vweird.f32 %v7032
  %vm7039 = vmor %vm7037, %vm7038
  %v7040 = vsel %vm7039, %v7032, %v7036
  %v7041 = vand.u32 2147483647, %v7030
  %vm7042 = vcmp.eq.f32.partialorder %v7041, 8.507059e+37
  %v7043 = vand.u32 %v7030, 2147483648
  %v7044 = vor.u32 1.1754944e-38, %v7043
  %v7045 = vsel %vm7042, %v7044, %v7040
  %v7046 = vmul.f32 1.0, %v7045
  %v7047 = vrcp.pop %v7031
  %v7048 = vmul.f32 %v7031, %v7047
  %v7049 = vsub.f32 1.0, %v7048
  %v7050 = vmul.f32 %v7047, %v7049
  %v7051 = vadd.f32 %v7047, %v7050
  %vm7052 = vweird.f32 %v7031
  %vm7053 = vweird.f32 %v7047
  %vm7054 = vmor %vm7052, %vm7053
  %v7055 = vsel %vm7054, %v7047, %v7051
  %v7056 = vand.u32 2147483647, %v7031
  %vm7057 = vcmp.eq.f32.partialorder %v7056, 8.507059e+37
  %v7058 = vand.u32 %v7031, 2147483648
  %v7059 = vor.u32 1.1754944e-38, %v7058
  %v7060 = vsel %vm7057, %v7059, %v7055
  %v7061 = vmul.f32 1.0, %v7060
  %v7062 = vmul.f32 %v7046, %v7019
  %v7063 = vadd.f32 %v6902, %v7062
  %v7064 = vtanh.pop %v7063
  %v7065 = vsub.f32 1.0, %v7061
  %v7066 = vmul.f32 %v7065, %v7064
  %v7067 = vmul.f32 %v7061, %v6469
  %v7068 = vadd.f32 %v7066, %v7067
  %v7069 = vsel %vm2462, %v7068, 0.0
  %7070 = vadd.xlane.f32.xlu0 %v7069
  %v7071 = vpop.xlane.xlu0 %7070
  %v7072 = vmul.f32 %v7071, %v2472
  %v7073 = vmul.f32 %v7068, %v7068
  %v7074 = vsel %vm2462, %v7073, 0.0
  %7075 = vadd.xlane.f32.xlu0 %v7074
  %v7076 = vpop.xlane.xlu0 %7075
  %v7077 = vmul.f32 %v7076, %v2472
  %v7078 = vmul.f32 %v7072, %v7072
  %v7079 = vsub.f32 %v7077, %v7078
  %v7080 = vsub.f32 %v7068, %v7072
  %v7081 = vadd.f32 %v7079, 1e-05
  %v7082 = vrsqrt.pop %v7081
  %v7083 = vmul.f32 %v7082, %v7081
  %v7084 = vmul.f32 %v7083, %v7082
  %v7085 = vmul.f32 0.5, %v7084
  %v7086 = vsub.f32 1.5, %v7085
  %v7087 = vmul.f32 %v7082, %v7086
  %vm7088 = vweird.f32 %v7081
  %vm7089 = vweird.f32 %v7082
  %vm7090 = vmor %vm7088, %vm7089
  %v7091 = vsel %vm7090, %v7082, %v7087
  %v7092 = vmul.f32 %v7080, %v7091
  %7094 = vrot.lane.b32.xlu0 %v7068, 64
  %v7095 = vpop.permute.xlu0 %7094
  %v7097 = vsel %vm2462, %v7095, 0.0
  %7098 = vadd.xlane.f32.xlu0 %v7097
  %v7099 = vpop.xlane.xlu0 %7098
  %v7100 = vmul.f32 %v7099, %v2472
  %7102 = vrot.lane.b32.xlu0 %v7073, 64
  %v7103 = vpop.permute.xlu0 %7102
  %v7105 = vsel %vm2462, %v7103, 0.0
  %7106 = vadd.xlane.f32.xlu0 %v7105
  %v7107 = vpop.xlane.xlu0 %7106
  %v7108 = vmul.f32 %v7107, %v2472
  %v7109 = vmul.f32 %v7100, %v7100
  %v7110 = vsub.f32 %v7108, %v7109
  %v7111 = vsub.f32 %v7068, %v7100
  %v7112 = vadd.f32 %v7110, 1e-05
  %v7113 = vrsqrt.pop %v7112
  %v7114 = vmul.f32 %v7113, %v7112
  %v7115 = vmul.f32 %v7114, %v7113
  %v7116 = vmul.f32 0.5, %v7115
  %v7117 = vsub.f32 1.5, %v7116
  %v7118 = vmul.f32 %v7113, %v7117
  %vm7119 = vweird.f32 %v7112
  %vm7120 = vweird.f32 %v7113
  %vm7121 = vmor %vm7119, %vm7120
  %v7122 = vsel %vm7121, %v7113, %v7118
  %v7123 = vmul.f32 %v7111, %v7122
  %v7124 = vsel %vm2462, %v7092, %v7123
  %v7125 = vmul.f32 %v7124, %v413
  %v7126 = vadd.f32 %v7125, %v414
  %v7127 = vpack.c.bf16 %v7126, %v7126
  %v7128 = vld [vmem:[%s4] sm:$0xf]
  %v7129 = vld [vmem:[%s4 + $0x4] sm:$0xf]
  %v7130 = vld [vmem:[%s4 + $0x8] sm:$0xf]
  %v7131 = vld [vmem:[%s4 + $0xc] sm:$0xf]
  %v7132 = vld [vmem:[%s4 + $0x10] sm:$0xf]
  %v7133 = vld [vmem:[%s4 + $0x14] sm:$0xf]
  %v7134 = vld [vmem:[%s4 + $0x18] sm:$0xf]
  %v7135 = vld [vmem:[%s4 + $0x1c] sm:$0xf]
  %v7136 = vld [vmem:[%s4 + $0x20] sm:$0xf]
  %v7137 = vld [vmem:[%s4 + $0x24] sm:$0xf]
  %v7138 = vld [vmem:[%s4 + $0x28] sm:$0xf]
  %v7139 = vld [vmem:[%s4 + $0x2c] sm:$0xf]
  %v7140 = vld [vmem:[%s4 + $0x30] sm:$0xf]
  %v7141 = vld [vmem:[%s4 + $0x34] sm:$0xf]
  %v7142 = vld [vmem:[%s4 + $0x38] sm:$0xf]
  %v7143 = vld [vmem:[%s4 + $0x3c] sm:$0xf]
  %v7160 = vunpack.c.l.b16 %v7128
  %v7161 = vunpack.c.l.b16 %v7129
  %v7162 = vunpack.c.l.b16 %v7130
  %v7163 = vunpack.c.l.b16 %v7131
  %v7164 = vunpack.c.l.b16 %v7132
  %v7165 = vunpack.c.l.b16 %v7133
  %v7166 = vunpack.c.l.b16 %v7134
  %v7167 = vunpack.c.l.b16 %v7135
  %v7168 = vunpack.c.l.b16 %v7136
  %v7169 = vunpack.c.l.b16 %v7137
  %v7170 = vunpack.c.l.b16 %v7138
  %v7171 = vunpack.c.l.b16 %v7139
  %v7172 = vunpack.c.l.b16 %v7140
  %v7173 = vunpack.c.l.b16 %v7141
  %v7174 = vunpack.c.l.b16 %v7142
  %v7175 = vunpack.c.l.b16 %v7143
  %v7176 = vpack.c.b16 %v7161, %v7160
  %v7177 = vpack.c.b16 %v7163, %v7162
  %v7178 = vpack.c.b16 %v7165, %v7164
  %v7179 = vpack.c.b16 %v7167, %v7166
  %v7180 = vpack.c.b16 %v7169, %v7168
  %v7181 = vpack.c.b16 %v7171, %v7170
  %v7182 = vpack.c.b16 %v7173, %v7172
  %v7183 = vpack.c.b16 %v7175, %v7174
  %7192 = vmatpush.bf16.msra.mxu0 %v7183
  %7193 = vmatpush.bf16.msra.mxu0 %v7182
  %7194 = vmatpush.bf16.msra.mxu0 %v7181
  %7195 = vmatpush.bf16.msra.mxu0 %v7180
  %7196 = vmatpush.bf16.msra.mxu0 %v7179
  %7197 = vmatpush.bf16.msra.mxu0 %v7178
  %7198 = vmatpush.bf16.msra.mxu0 %v7177
  %7199 = vmatpush.bf16.msra.mxu0 %v7176
  %7200 = vmatmul.bf16.gmra.mxu0 %v7127
  %v7201 = vpop.f32.mrf.mxu0
  %v7202 = vadd.f32 %v415, %v7201
  %v7203 = vpop.f32.mrf.mxu0
  %7204 = vdwg.mxu0
  %v7205 = vmax.f32 %v7202, 0.0
  %v7206 = vpack.c.bf16 %v7205, %v7205
  %v7207 = vld [vmem:[%s4 + $0x40] sm:$0xf]
  %v7208 = vld [vmem:[%s4 + $0x44] sm:$0xf]
  %v7209 = vld [vmem:[%s4 + $0x48] sm:$0xf]
  %v7210 = vld [vmem:[%s4 + $0x4c] sm:$0xf]
  %v7211 = vld [vmem:[%s4 + $0x50] sm:$0xf]
  %v7212 = vld [vmem:[%s4 + $0x54] sm:$0xf]
  %v7213 = vld [vmem:[%s4 + $0x58] sm:$0xf]
  %v7214 = vld [vmem:[%s4 + $0x5c] sm:$0xf]
  %v7215 = vld [vmem:[%s4 + $0x60] sm:$0xf]
  %v7216 = vld [vmem:[%s4 + $0x64] sm:$0xf]
  %v7217 = vld [vmem:[%s4 + $0x68] sm:$0xf]
  %v7218 = vld [vmem:[%s4 + $0x6c] sm:$0xf]
  %v7219 = vld [vmem:[%s4 + $0x70] sm:$0xf]
  %v7220 = vld [vmem:[%s4 + $0x74] sm:$0xf]
  %v7221 = vld [vmem:[%s4 + $0x78] sm:$0xf]
  %v7222 = vld [vmem:[%s4 + $0x7c] sm:$0xf]
  %v7239 = vunpack.c.l.b16 %v7207
  %v7240 = vunpack.c.l.b16 %v7208
  %v7241 = vunpack.c.l.b16 %v7209
  %v7242 = vunpack.c.l.b16 %v7210
  %v7243 = vunpack.c.l.b16 %v7211
  %v7244 = vunpack.c.l.b16 %v7212
  %v7245 = vunpack.c.l.b16 %v7213
  %v7246 = vunpack.c.l.b16 %v7214
  %v7247 = vunpack.c.l.b16 %v7215
  %v7248 = vunpack.c.l.b16 %v7216
  %v7249 = vunpack.c.l.b16 %v7217
  %v7250 = vunpack.c.l.b16 %v7218
  %v7251 = vunpack.c.l.b16 %v7219
  %v7252 = vunpack.c.l.b16 %v7220
  %v7253 = vunpack.c.l.b16 %v7221
  %v7254 = vunpack.c.l.b16 %v7222
  %v7255 = vpack.c.b16 %v7240, %v7239
  %v7256 = vpack.c.b16 %v7242, %v7241
  %v7257 = vpack.c.b16 %v7244, %v7243
  %v7258 = vpack.c.b16 %v7246, %v7245
  %v7259 = vpack.c.b16 %v7248, %v7247
  %v7260 = vpack.c.b16 %v7250, %v7249
  %v7261 = vpack.c.b16 %v7252, %v7251
  %v7262 = vpack.c.b16 %v7254, %v7253
  %7271 = vmatpush.bf16.msra.mxu0 %v7262
  %7272 = vmatpush.bf16.msra.mxu0 %v7261
  %7273 = vmatpush.bf16.msra.mxu0 %v7260
  %7274 = vmatpush.bf16.msra.mxu0 %v7259
  %7275 = vmatpush.bf16.msra.mxu0 %v7258
  %7276 = vmatpush.bf16.msra.mxu0 %v7257
  %7277 = vmatpush.bf16.msra.mxu0 %v7256
  %7278 = vmatpush.bf16.msra.mxu0 %v7255
  %7279 = vmatmul.bf16.gmra.mxu0 %v7206
  %v7280 = vpop.f32.mrf.mxu0
  %v7281 = vadd.f32 %v416, %v7280
  %v7282 = vpop.f32.mrf.mxu0
  %7283 = vdwg.mxu0
  %7284 = vst [vmem:[%s6] sm:$0xff] %v7281
  // Predicated region
  $region26: #{gru_birnn_forward.1} parent=0 // pred_check
    _
  $region27: #{gru_birnn_forward.1} parent=0 // pred_check_branch
    %7286 = sbr.rel (0) target = $region29
  $region28: #{gru_birnn_forward.1} parent=0 // pred_region
    _
  $region29: #{gru_birnn_forward.1} parent=0 // pred_fallthru
    _
  // Predicated region
  $region30: #{gru_birnn_forward.1} parent=0 // pred_check
    _
  $region31: #{gru_birnn_forward.1} parent=0 // pred_check_branch
    %7288 = sbr.rel (0) target = $region33
  $region32: #{gru_birnn_forward.1} parent=0 // pred_region
    _
  $region33: #{gru_birnn_forward.1} parent=0 // pred_fallthru
    _

</llo_original>
